<compile_context>
chip_gen: v7x
topology: tpu7x:2x2x1
jax: 0.10.0
libtpu: 0.0.40
codegen_flags: <defaults>
</compile_context>

<pallas_src>
import functools
import math

import jax
import jax.numpy as jnp
from jax import lax
from jax.experimental import pallas as pl
from jax.experimental.pallas import tpu as pltpu

_LRELU_SLOPE = 0.2
_RES_SCALE = 0.2


# ----------------------------------------------------------------------------
# In-kernel helpers
# ----------------------------------------------------------------------------
def _shifted(v):
    """prev[i] = v[i-1], nxt[i] = v[i+1], with zero boundary rows (conv pad=1)."""
    L = v.shape[0]
    row = lax.broadcasted_iota(jnp.int32, v.shape, 0)
    prev = pltpu.roll(v, 1, 0)          # prev[i] = v[(i-1) % L]  (jnp.roll semantics)
    prev = jnp.where(row == 0, 0.0, prev)
    nxt = pltpu.roll(v, L - 1, 0)       # nxt[i]  = v[(i+1) % L]
    nxt = jnp.where(row == L - 1, 0.0, nxt)
    return prev, nxt


def _conv3(v, w_ref, b_ref):
    """k=3 / pad=1 conv as one MXU matmul with the taps folded into K = 3*Cin.

    v: (L, Cin) f32 value; w_ref: (3*Cin, Cout) ref (tap-major rows);
    b_ref: (1, Cout) ref.  Returns (L, Cout) f32.
    """
    prev, nxt = _shifted(v)
    op = jnp.concatenate([prev, v, nxt], axis=-1)            # (L, 3*Cin)
    acc = jnp.dot(op, w_ref[...], preferred_element_type=jnp.float32)
    return acc + b_ref[...]


def _lrelu(y):
    return jnp.where(y > 0, y, _LRELU_SLOPE * y)


# ----------------------------------------------------------------------------
# Pallas kernels
# ----------------------------------------------------------------------------
def _conv_kernel(x_ref, w_ref, b_ref, o_ref, *, lrelu):
    y = _conv3(x_ref[0].astype(jnp.float32), w_ref, b_ref)
    if lrelu:
        y = _lrelu(y)
    o_ref[0] = y.astype(o_ref.dtype)


def _conv_residual_kernel(x_ref, w_ref, b_ref, r_ref, o_ref, *, lrelu):
    y = _conv3(x_ref[0].astype(jnp.float32), w_ref, b_ref)
    y = y + r_ref[0].astype(jnp.float32)
    if lrelu:
        y = _lrelu(y)
    o_ref[0] = y.astype(o_ref.dtype)


def _rrdb_kernel(x_ref, *refs):
    """One full RRDB: 3 x ResidualDenseBlock_5C + outer 0.2 residual, fused."""
    o_ref = refs[-1]
    wb = refs[:-1]                        # 3 RDBs x 5 convs x (w, b), in order
    x = x_ref[0].astype(jnp.float32)      # (L, nf)

    h = x
    idx = 0
    for _ in range(3):                    # the 3 RDBs
        feats = [h]
        for c in range(5):
            w_ref, b_ref = wb[idx], wb[idx + 1]
            idx += 2
            # Dense-block input = lane concat of all previous features
            # (stays in VMEM/vregs, never materialized in HBM).
            v = feats[0] if len(feats) == 1 else jnp.concatenate(feats, axis=-1)
            y = _conv3(v, w_ref, b_ref)
            if c < 4:
                feats.append(_lrelu(y))
            else:
                h = y * _RES_SCALE + h            # RDB residual (x5*0.2 + x)
    o_ref[0] = (h * _RES_SCALE + x).astype(o_ref.dtype)   # RRDB residual


# ----------------------------------------------------------------------------
# pallas_call wrappers
# ----------------------------------------------------------------------------
def _bcast_spec(shape):
    zeros = (0,) * len(shape)
    return pl.BlockSpec(shape, lambda n: zeros)


def conv1d_pallas(x, w, b, *, lrelu=False, residual=None):
    """x: (N, L, Cin) NLC; w: (3, Cin, Cout); b: (Cout,) -> (N, L, Cout).

    Padding is handled in-kernel; LeakyReLU(0.2) and an optional elementwise
    residual add are fused into the conv epilogue.
    """
    N, L, Cin = x.shape
    Cout = w.shape[-1]
    w_folded = w.reshape(3 * Cin, Cout)      # tap-major rows, matches _conv3
    b2 = b.reshape(1, Cout)

    in_specs = [
        pl.BlockSpec((1, L, Cin), lambda n: (n, 0, 0)),
        _bcast_spec((3 * Cin, Cout)),
        _bcast_spec((1, Cout)),
    ]
    args = [x, w_folded, b2]
    if residual is None:
        kernel = functools.partial(_conv_kernel, lrelu=lrelu)
    else:
        kernel = functools.partial(_conv_residual_kernel, lrelu=lrelu)
        in_specs.append(pl.BlockSpec((1, L, Cout), lambda n: (n, 0, 0)))
        args.append(residual)

    # TODO(synk): for long sequences add an L-tile grid axis (with a 1-row halo)
    # and bf16 operands so v7x's 64 MiB VMEM / 2 TCs are fully used.
    return pl.pallas_call(
        kernel,
        out_shape=jax.ShapeDtypeStruct((N, L, Cout), x.dtype),
        grid=(N,),
        in_specs=in_specs,
        out_specs=pl.BlockSpec((1, L, Cout), lambda n: (n, 0, 0)),
        compiler_params=pltpu.CompilerParams(
            dimension_semantics=("parallel",)),
    )(*args)


def rrdb_pallas(p_rrdb, x):
    """One fused RRDB block: (N, L, nf) -> (N, L, nf) in a single pallas_call."""
    N, L, nf = x.shape
    flat_args = []
    in_specs = [pl.BlockSpec((1, L, nf), lambda n: (n, 0, 0))]
    for rdb_name in ("RDB1", "RDB2", "RDB3"):
        for conv_name in ("conv1", "conv2", "conv3", "conv4", "conv5"):
            w, b = p_rrdb[rdb_name][conv_name]
            k, cin, cout = w.shape
            flat_args += [w.reshape(k * cin, cout), b.reshape(1, cout)]
            in_specs += [_bcast_spec((k * cin, cout)), _bcast_spec((1, cout))]

    return pl.pallas_call(
        _rrdb_kernel,
        out_shape=jax.ShapeDtypeStruct((N, L, nf), x.dtype),
        grid=(N,),
        in_specs=in_specs,
        out_specs=pl.BlockSpec((1, L, nf), lambda n: (n, 0, 0)),
        compiler_params=pltpu.CompilerParams(
            dimension_semantics=("parallel",)),
    )(x, *flat_args)


# ----------------------------------------------------------------------------
# Deterministic synthetic parameter init.
# Note: the reference initialize_weights() only touches nn.Conv2d / Linear /
# BatchNorm2d, so the nn.Conv1d layers keep PyTorch's default init; the exact
# init does not change the forward-pass semantics we implement here.
# ----------------------------------------------------------------------------
def _init_conv(key, cin, cout, k=3):
    fan_in = cin * k
    std = math.sqrt(2.0 / fan_in)
    w = jax.random.normal(key, (k, cin, cout), jnp.float32) * std
    b = jnp.zeros((cout,), jnp.float32)
    return w, b


def init_rdb_params(key, nf, gc):
    ks = jax.random.split(key, 5)
    return {
        "conv1": _init_conv(ks[0], nf, gc),
        "conv2": _init_conv(ks[1], nf + gc, gc),
        "conv3": _init_conv(ks[2], nf + 2 * gc, gc),
        "conv4": _init_conv(ks[3], nf + 3 * gc, gc),
        "conv5": _init_conv(ks[4], nf + 4 * gc, nf),
    }


def init_rrdb_params(key, nf, gc):
    ks = jax.random.split(key, 3)
    return {f"RDB{i + 1}": init_rdb_params(ks[i], nf, gc) for i in range(3)}


def init_rrdbnet_params(key, in_nc, out_nc, nf, nb, gc):
    ks = jax.random.split(key, 6 + nb)
    return {
        "conv_first": _init_conv(ks[0], in_nc, nf),
        "trunk_conv": _init_conv(ks[1], nf, nf),
        "upconv1": _init_conv(ks[2], nf, nf),
        "upconv2": _init_conv(ks[3], nf, nf),
        "HRconv": _init_conv(ks[4], nf, nf),
        "conv_last": _init_conv(ks[5], nf, out_nc),
        "trunk": [init_rrdb_params(ks[6 + i], nf, gc) for i in range(nb)],
    }


# ----------------------------------------------------------------------------
# Forward pass (hot path in Pallas; only transposes / upsample repeat in XLA)
# ----------------------------------------------------------------------------
def nearest_upsample_x2(x):
    # (N, L, C) -> (N, 2L, C); nearest neighbour == repeat each position twice.
    # TODO(synk): fuse the x2 nearest upsample into the following upconv kernel
    # (even/odd factored taps) to remove this one XLA materialization.
    return jnp.repeat(x, 2, axis=1)


def rrdbnet_forward(params, x_ncl):
    x = jnp.transpose(x_ncl, (0, 2, 1))                 # NCL -> NLC

    fea = conv1d_pallas(x, *params["conv_first"])

    trunk = fea
    for p_rrdb in params["trunk"]:
        trunk = rrdb_pallas(p_rrdb, trunk)              # one kernel per RRDB
    # trunk_conv fused with the `fea + trunk` residual add.
    fea = conv1d_pallas(trunk, *params["trunk_conv"], residual=fea)

    fea = conv1d_pallas(nearest_upsample_x2(fea), *params["upconv1"], lrelu=True)
    fea = conv1d_pallas(nearest_upsample_x2(fea), *params["upconv2"], lrelu=True)
    hr = conv1d_pallas(fea, *params["HRconv"], lrelu=True)
    out = conv1d_pallas(hr, *params["conv_last"])

    return jnp.transpose(out, (0, 2, 1))                # NLC -> NCL


rrdbnet_forward_jit = jax.jit(rrdbnet_forward)


# ----------------------------------------------------------------------------
if __name__ == "__main__":
    # Small, forward-consistent shapes.
    N, in_nc, out_nc, nf, nb, gc, L = 2, 4, 4, 32, 1, 16, 16

    key = jax.random.PRNGKey(0)
    k_param, k_x = jax.random.split(key)

    params = init_rrdbnet_params(k_param, in_nc, out_nc, nf, nb, gc)

    # PyTorch NCL input: (batch, channels, length)
    x = jax.random.normal(k_x, (N, in_nc, L), jnp.float32)

    out = rrdbnet_forward_jit(params, x)
    out = jax.block_until_ready(out)

    expected_shape = (N, out_nc, 4 * L)   # two x2 nearest upsamples
    assert out.shape == expected_shape, (out.shape, expected_shape)
    assert bool(jnp.all(jnp.isfinite(out)))

    print("KERNEL_OK")
</pallas_src>

<mosaic_0001>
module attributes {stable_mosaic.version = 11 : i64} {
  func.func @_conv_kernel(%arg0: i32, %arg1: memref<1x16x4xf32, #tpu.memory_space<vmem>>, %arg2: memref<12x32xf32, #tpu.memory_space<vmem>>, %arg3: memref<1x32xf32, #tpu.memory_space<vmem>>, %arg4: memref<1x16x32xf32, #tpu.memory_space<vmem>>) attributes {dimension_semantics = [#tpu.dimension_semantics<parallel>], iteration_bounds = array<i64: 2>, scalar_prefetch = 0 : i64, scratch_operands = 0 : i64, tpu.core_type = #tpu.core_type<tc>, window_params = [{transform_indices = @transform_0, window_bounds = array<i64: 1, 16, 4>}, {pipeline_mode = #tpu.pipeline_mode<synchronous>, transform_indices = @transform_1, window_bounds = array<i64: 12, 32>}, {pipeline_mode = #tpu.pipeline_mode<synchronous>, transform_indices = @transform_2, window_bounds = array<i64: 1, 32>}, {transform_indices = @transform_3, window_bounds = array<i64: 1, 16, 32>}]} {
    %c0 = arith.constant 0 : index
    %c0_0 = arith.constant 0 : index
    %c0_1 = arith.constant 0 : index
    %0 = vector.load %arg1[%c0, %c0_0, %c0_1] : memref<1x16x4xf32, #tpu.memory_space<vmem>>, vector<1x16x4xf32>
    %1 = vector.shape_cast %0 : vector<1x16x4xf32> to vector<16x4xf32>
    %2 = tpu.iota {dimensions = array<i32: 0>} : vector<16x4xi32>
    %c1_i32 = arith.constant 1 : i32
    %3 = tpu.dynamic_rotate %1 by %c1_i32 dim 0 : vector<16x4xf32>, i32 -> vector<16x4xf32>
    %c0_i32 = arith.constant 0 : i32
    %4 = vector.broadcast %c0_i32 : i32 to vector<16x4xi32>
    %5 = arith.cmpi eq, %2, %4 : vector<16x4xi32>
    %cst = arith.constant 0.000000e+00 : f32
    %6 = vector.broadcast %cst : f32 to vector<16x4xf32>
    %7 = arith.select %5, %6, %3 : vector<16x4xi1>, vector<16x4xf32>
    %c15_i32 = arith.constant 15 : i32
    %8 = tpu.dynamic_rotate %1 by %c15_i32 dim 0 : vector<16x4xf32>, i32 -> vector<16x4xf32>
    %c15_i32_2 = arith.constant 15 : i32
    %9 = vector.broadcast %c15_i32_2 : i32 to vector<16x4xi32>
    %10 = arith.cmpi eq, %2, %9 : vector<16x4xi32>
    %cst_3 = arith.constant 0.000000e+00 : f32
    %11 = vector.broadcast %cst_3 : f32 to vector<16x4xf32>
    %12 = arith.select %10, %11, %8 : vector<16x4xi1>, vector<16x4xf32>
    %13 = tpu.concatenate %7, %1, %12 in 1 : vector<16x4xf32>, vector<16x4xf32>, vector<16x4xf32> -> vector<16x12xf32>
    %c0_4 = arith.constant 0 : index
    %c0_5 = arith.constant 0 : index
    %14 = vector.load %arg2[%c0_4, %c0_5] : memref<12x32xf32, #tpu.memory_space<vmem>>, vector<12x32xf32>
    %cst_6 = arith.constant dense<0.000000e+00> : vector<16x32xf32>
    %15 = tpu.matmul %13, %14, %cst_6 {dimension_numbers = #tpu.dot_dimension_numbers<[1], [0], [0], [1], [0, 0, 1, 1], [], []>} : vector<16x12xf32>, vector<12x32xf32>, vector<16x32xf32> -> vector<16x32xf32>
    %c0_7 = arith.constant 0 : index
    %c0_8 = arith.constant 0 : index
    %16 = vector.load %arg3[%c0_7, %c0_8] : memref<1x32xf32, #tpu.memory_space<vmem>>, vector<1x32xf32>
    %17 = vector.broadcast %16 : vector<1x32xf32> to vector<16x32xf32>
    %18 = arith.addf %15, %17 : vector<16x32xf32>
    %c0_9 = arith.constant 0 : index
    %c0_10 = arith.constant 0 : index
    %c0_11 = arith.constant 0 : index
    %19 = vector.load %arg4[%c0_9, %c0_10, %c0_11] : memref<1x16x32xf32, #tpu.memory_space<vmem>>, vector<1x16x32xf32>
    %20 = vector.shape_cast %19 : vector<1x16x32xf32> to vector<16x32xf32>
    %21 = vector.shape_cast %18 : vector<16x32xf32> to vector<1x16x32xf32>
    tpu.vector_store %arg4[%c0_9, %c0_10, %c0_11], %21 {strides = array<i32>} : memref<1x16x32xf32, #tpu.memory_space<vmem>>, vector<1x16x32xf32>,
    return
  }
  func.func @transform_0(%arg0: i32) -> (i32, i32, i32) {
    %c0_i32 = arith.constant 0 : i32
    %c0_i32_0 = arith.constant 0 : i32
    %c0_i32_1 = arith.constant 0 : i32
    return %arg0, %c0_i32, %c0_i32_0 : i32, i32, i32
  }
  func.func @transform_1(%arg0: i32) -> (i32, i32) {
    %c0_i32 = arith.constant 0 : i32
    %c0_i32_0 = arith.constant 0 : i32
    %c0_i32_1 = arith.constant 0 : i32
    return %c0_i32, %c0_i32_0 : i32, i32
  }
  func.func @transform_2(%arg0: i32) -> (i32, i32) {
    %c0_i32 = arith.constant 0 : i32
    %c0_i32_0 = arith.constant 0 : i32
    %c0_i32_1 = arith.constant 0 : i32
    return %c0_i32, %c0_i32_0 : i32, i32
  }
  func.func @transform_3(%arg0: i32) -> (i32, i32, i32) {
    %c0_i32 = arith.constant 0 : i32
    %c0_i32_0 = arith.constant 0 : i32
    %c0_i32_1 = arith.constant 0 : i32
    return %arg0, %c0_i32, %c0_i32_0 : i32, i32, i32
  }
}

module attributes {stable_mosaic.version = 11 : i64} {
  func.func @_rrdb_kernel(%arg0: i32, %arg1: memref<1x16x32xf32, #tpu.memory_space<vmem>>, %arg2: memref<96x16xf32, #tpu.memory_space<vmem>>, %arg3: memref<1x16xf32, #tpu.memory_space<vmem>>, %arg4: memref<144x16xf32, #tpu.memory_space<vmem>>, %arg5: memref<1x16xf32, #tpu.memory_space<vmem>>, %arg6: memref<192x16xf32, #tpu.memory_space<vmem>>, %arg7: memref<1x16xf32, #tpu.memory_space<vmem>>, %arg8: memref<240x16xf32, #tpu.memory_space<vmem>>, %arg9: memref<1x16xf32, #tpu.memory_space<vmem>>, %arg10: memref<288x32xf32, #tpu.memory_space<vmem>>, %arg11: memref<1x32xf32, #tpu.memory_space<vmem>>, %arg12: memref<96x16xf32, #tpu.memory_space<vmem>>, %arg13: memref<1x16xf32, #tpu.memory_space<vmem>>, %arg14: memref<144x16xf32, #tpu.memory_space<vmem>>, %arg15: memref<1x16xf32, #tpu.memory_space<vmem>>, %arg16: memref<192x16xf32, #tpu.memory_space<vmem>>, %arg17: memref<1x16xf32, #tpu.memory_space<vmem>>, %arg18: memref<240x16xf32, #tpu.memory_space<vmem>>, %arg19: memref<1x16xf32, #tpu.memory_space<vmem>>, %arg20: memref<288x32xf32, #tpu.memory_space<vmem>>, %arg21: memref<1x32xf32, #tpu.memory_space<vmem>>, %arg22: memref<96x16xf32, #tpu.memory_space<vmem>>, %arg23: memref<1x16xf32, #tpu.memory_space<vmem>>, %arg24: memref<144x16xf32, #tpu.memory_space<vmem>>, %arg25: memref<1x16xf32, #tpu.memory_space<vmem>>, %arg26: memref<192x16xf32, #tpu.memory_space<vmem>>, %arg27: memref<1x16xf32, #tpu.memory_space<vmem>>, %arg28: memref<240x16xf32, #tpu.memory_space<vmem>>, %arg29: memref<1x16xf32, #tpu.memory_space<vmem>>, %arg30: memref<288x32xf32, #tpu.memory_space<vmem>>, %arg31: memref<1x32xf32, #tpu.memory_space<vmem>>, %arg32: memref<1x16x32xf32, #tpu.memory_space<vmem>>) attributes {dimension_semantics = [#tpu.dimension_semantics<parallel>], iteration_bounds = array<i64: 2>, scalar_prefetch = 0 : i64, scratch_operands = 0 : i64, tpu.core_type = #tpu.core_type<tc>, window_params = [{transform_indices = @transform_0, window_bounds = array<i64: 1, 16, 32>}, {pipeline_mode = #tpu.pipeline_mode<synchronous>, transform_indices = @transform_1, window_bounds = array<i64: 96, 16>}, {pipeline_mode = #tpu.pipeline_mode<synchronous>, transform_indices = @transform_2, window_bounds = array<i64: 1, 16>}, {pipeline_mode = #tpu.pipeline_mode<synchronous>, transform_indices = @transform_3, window_bounds = array<i64: 144, 16>}, {pipeline_mode = #tpu.pipeline_mode<synchronous>, transform_indices = @transform_4, window_bounds = array<i64: 1, 16>}, {pipeline_mode = #tpu.pipeline_mode<synchronous>, transform_indices = @transform_5, window_bounds = array<i64: 192, 16>}, {pipeline_mode = #tpu.pipeline_mode<synchronous>, transform_indices = @transform_6, window_bounds = array<i64: 1, 16>}, {pipeline_mode = #tpu.pipeline_mode<synchronous>, transform_indices = @transform_7, window_bounds = array<i64: 240, 16>}, {pipeline_mode = #tpu.pipeline_mode<synchronous>, transform_indices = @transform_8, window_bounds = array<i64: 1, 16>}, {pipeline_mode = #tpu.pipeline_mode<synchronous>, transform_indices = @transform_9, window_bounds = array<i64: 288, 32>}, {pipeline_mode = #tpu.pipeline_mode<synchronous>, transform_indices = @transform_10, window_bounds = array<i64: 1, 32>}, {pipeline_mode = #tpu.pipeline_mode<synchronous>, transform_indices = @transform_11, window_bounds = array<i64: 96, 16>}, {pipeline_mode = #tpu.pipeline_mode<synchronous>, transform_indices = @transform_12, window_bounds = array<i64: 1, 16>}, {pipeline_mode = #tpu.pipeline_mode<synchronous>, transform_indices = @transform_13, window_bounds = array<i64: 144, 16>}, {pipeline_mode = #tpu.pipeline_mode<synchronous>, transform_indices = @transform_14, window_bounds = array<i64: 1, 16>}, {pipeline_mode = #tpu.pipeline_mode<synchronous>, transform_indices = @transform_15, window_bounds = array<i64: 192, 16>}, {pipeline_mode = #tpu.pipeline_mode<synchronous>, transform_indices = @transform_16, window_bounds = array<i64: 1, 16>}, {pipeline_mode = #tpu.pipeline_mode<synchronous>, transform_indices = @transform_17, window_bounds = array<i64: 240, 16>}, {pipeline_mode = #tpu.pipeline_mode<synchronous>, transform_indices = @transform_18, window_bounds = array<i64: 1, 16>}, {pipeline_mode = #tpu.pipeline_mode<synchronous>, transform_indices = @transform_19, window_bounds = array<i64: 288, 32>}, {pipeline_mode = #tpu.pipeline_mode<synchronous>, transform_indices = @transform_20, window_bounds = array<i64: 1, 32>}, {pipeline_mode = #tpu.pipeline_mode<synchronous>, transform_indices = @transform_21, window_bounds = array<i64: 96, 16>}, {pipeline_mode = #tpu.pipeline_mode<synchronous>, transform_indices = @transform_22, window_bounds = array<i64: 1, 16>}, {pipeline_mode = #tpu.pipeline_mode<synchronous>, transform_indices = @transform_23, window_bounds = array<i64: 144, 16>}, {pipeline_mode = #tpu.pipeline_mode<synchronous>, transform_indices = @transform_24, window_bounds = array<i64: 1, 16>}, {pipeline_mode = #tpu.pipeline_mode<synchronous>, transform_indices = @transform_25, window_bounds = array<i64: 192, 16>}, {pipeline_mode = #tpu.pipeline_mode<synchronous>, transform_indices = @transform_26, window_bounds = array<i64: 1, 16>}, {pipeline_mode = #tpu.pipeline_mode<synchronous>, transform_indices = @transform_27, window_bounds = array<i64: 240, 16>}, {pipeline_mode = #tpu.pipeline_mode<synchronous>, transform_indices = @transform_28, window_bounds = array<i64: 1, 16>}, {pipeline_mode = #tpu.pipeline_mode<synchronous>, transform_indices = @transform_29, window_bounds = array<i64: 288, 32>}, {pipeline_mode = #tpu.pipeline_mode<synchronous>, transform_indices = @transform_30, window_bounds = array<i64: 1, 32>}, {transform_indices = @transform_31, window_bounds = array<i64: 1, 16, 32>}]} {
    %c0 = arith.constant 0 : index
    %c0_0 = arith.constant 0 : index
    %c0_1 = arith.constant 0 : index
    %0 = vector.load %arg1[%c0, %c0_0, %c0_1] : memref<1x16x32xf32, #tpu.memory_space<vmem>>, vector<1x16x32xf32>
    %1 = vector.shape_cast %0 : vector<1x16x32xf32> to vector<16x32xf32>
    %2 = tpu.iota {dimensions = array<i32: 0>} : vector<16x32xi32>
    %c1_i32 = arith.constant 1 : i32
    %3 = tpu.dynamic_rotate %1 by %c1_i32 dim 0 : vector<16x32xf32>, i32 -> vector<16x32xf32>
    %c0_i32 = arith.constant 0 : i32
    %4 = vector.broadcast %c0_i32 : i32 to vector<16x32xi32>
    %5 = arith.cmpi eq, %2, %4 : vector<16x32xi32>
    %cst = arith.constant 0.000000e+00 : f32
    %6 = vector.broadcast %cst : f32 to vector<16x32xf32>
    %7 = arith.select %5, %6, %3 : vector<16x32xi1>, vector<16x32xf32>
    %c15_i32 = arith.constant 15 : i32
    %8 = tpu.dynamic_rotate %1 by %c15_i32 dim 0 : vector<16x32xf32>, i32 -> vector<16x32xf32>
    %c15_i32_2 = arith.constant 15 : i32
    %9 = vector.broadcast %c15_i32_2 : i32 to vector<16x32xi32>
    %10 = arith.cmpi eq, %2, %9 : vector<16x32xi32>
    %cst_3 = arith.constant 0.000000e+00 : f32
    %11 = vector.broadcast %cst_3 : f32 to vector<16x32xf32>
    %12 = arith.select %10, %11, %8 : vector<16x32xi1>, vector<16x32xf32>
    %13 = tpu.concatenate %7, %1, %12 in 1 : vector<16x32xf32>, vector<16x32xf32>, vector<16x32xf32> -> vector<16x96xf32>
    %c0_4 = arith.constant 0 : index
    %c0_5 = arith.constant 0 : index
    %14 = vector.load %arg2[%c0_4, %c0_5] : memref<96x16xf32, #tpu.memory_space<vmem>>, vector<96x16xf32>
    %cst_6 = arith.constant dense<0.000000e+00> : vector<16x16xf32>
    %15 = tpu.matmul %13, %14, %cst_6 {dimension_numbers = #tpu.dot_dimension_numbers<[1], [0], [0], [1], [0, 0, 1, 1], [], []>} : vector<16x96xf32>, vector<96x16xf32>, vector<16x16xf32> -> vector<16x16xf32>
    %c0_7 = arith.constant 0 : index
    %c0_8 = arith.constant 0 : index
    %16 = vector.load %arg3[%c0_7, %c0_8] : memref<1x16xf32, #tpu.memory_space<vmem>>, vector<1x16xf32>
    %17 = vector.broadcast %16 : vector<1x16xf32> to vector<16x16xf32>
    %18 = arith.addf %15, %17 : vector<16x16xf32>
    %cst_9 = arith.constant 0.000000e+00 : f32
    %19 = vector.broadcast %cst_9 : f32 to vector<16x16xf32>
    %20 = arith.cmpf ogt, %18, %19 : vector<16x16xf32>
    %cst_10 = arith.constant 2.000000e-01 : f32
    %21 = vector.broadcast %cst_10 : f32 to vector<16x16xf32>
    %22 = arith.mulf %21, %18 : vector<16x16xf32>
    %23 = arith.select %20, %18, %22 : vector<16x16xi1>, vector<16x16xf32>
    %24 = tpu.concatenate %1, %23 in 1 : vector<16x32xf32>, vector<16x16xf32> -> vector<16x48xf32>
    %25 = tpu.iota {dimensions = array<i32: 0>} : vector<16x48xi32>
    %c1_i32_11 = arith.constant 1 : i32
    %26 = tpu.dynamic_rotate %24 by %c1_i32_11 dim 0 : vector<16x48xf32>, i32 -> vector<16x48xf32>
    %c0_i32_12 = arith.constant 0 : i32
    %27 = vector.broadcast %c0_i32_12 : i32 to vector<16x48xi32>
    %28 = arith.cmpi eq, %25, %27 : vector<16x48xi32>
    %cst_13 = arith.constant 0.000000e+00 : f32
    %29 = vector.broadcast %cst_13 : f32 to vector<16x48xf32>
    %30 = arith.select %28, %29, %26 : vector<16x48xi1>, vector<16x48xf32>
    %c15_i32_14 = arith.constant 15 : i32
    %31 = tpu.dynamic_rotate %24 by %c15_i32_14 dim 0 : vector<16x48xf32>, i32 -> vector<16x48xf32>
    %c15_i32_15 = arith.constant 15 : i32
    %32 = vector.broadcast %c15_i32_15 : i32 to vector<16x48xi32>
    %33 = arith.cmpi eq, %25, %32 : vector<16x48xi32>
    %cst_16 = arith.constant 0.000000e+00 : f32
    %34 = vector.broadcast %cst_16 : f32 to vector<16x48xf32>
    %35 = arith.select %33, %34, %31 : vector<16x48xi1>, vector<16x48xf32>
    %36 = tpu.concatenate %30, %24, %35 in 1 : vector<16x48xf32>, vector<16x48xf32>, vector<16x48xf32> -> vector<16x144xf32>
    %c0_17 = arith.constant 0 : index
    %c0_18 = arith.constant 0 : index
    %37 = vector.load %arg4[%c0_17, %c0_18] : memref<144x16xf32, #tpu.memory_space<vmem>>, vector<144x16xf32>
    %cst_19 = arith.constant dense<0.000000e+00> : vector<16x16xf32>
    %38 = tpu.matmul %36, %37, %cst_19 {dimension_numbers = #tpu.dot_dimension_numbers<[1], [0], [0], [1], [0, 0, 1, 1], [], []>} : vector<16x144xf32>, vector<144x16xf32>, vector<16x16xf32> -> vector<16x16xf32>
    %c0_20 = arith.constant 0 : index
    %c0_21 = arith.constant 0 : index
    %39 = vector.load %arg5[%c0_20, %c0_21] : memref<1x16xf32, #tpu.memory_space<vmem>>, vector<1x16xf32>
    %40 = vector.broadcast %39 : vector<1x16xf32> to vector<16x16xf32>
    %41 = arith.addf %38, %40 : vector<16x16xf32>
    %cst_22 = arith.constant 0.000000e+00 : f32
    %42 = vector.broadcast %cst_22 : f32 to vector<16x16xf32>
    %43 = arith.cmpf ogt, %41, %42 : vector<16x16xf32>
    %cst_23 = arith.constant 2.000000e-01 : f32
    %44 = vector.broadcast %cst_23 : f32 to vector<16x16xf32>
    %45 = arith.mulf %44, %41 : vector<16x16xf32>
    %46 = arith.select %43, %41, %45 : vector<16x16xi1>, vector<16x16xf32>
    %47 = tpu.concatenate %1, %23, %46 in 1 : vector<16x32xf32>, vector<16x16xf32>, vector<16x16xf32> -> vector<16x64xf32>
    %48 = tpu.iota {dimensions = array<i32: 0>} : vector<16x64xi32>
    %c1_i32_24 = arith.constant 1 : i32
    %49 = tpu.dynamic_rotate %47 by %c1_i32_24 dim 0 : vector<16x64xf32>, i32 -> vector<16x64xf32>
    %c0_i32_25 = arith.constant 0 : i32
    %50 = vector.broadcast %c0_i32_25 : i32 to vector<16x64xi32>
    %51 = arith.cmpi eq, %48, %50 : vector<16x64xi32>
    %cst_26 = arith.constant 0.000000e+00 : f32
    %52 = vector.broadcast %cst_26 : f32 to vector<16x64xf32>
    %53 = arith.select %51, %52, %49 : vector<16x64xi1>, vector<16x64xf32>
    %c15_i32_27 = arith.constant 15 : i32
    %54 = tpu.dynamic_rotate %47 by %c15_i32_27 dim 0 : vector<16x64xf32>, i32 -> vector<16x64xf32>
    %c15_i32_28 = arith.constant 15 : i32
    %55 = vector.broadcast %c15_i32_28 : i32 to vector<16x64xi32>
    %56 = arith.cmpi eq, %48, %55 : vector<16x64xi32>
    %cst_29 = arith.constant 0.000000e+00 : f32
    %57 = vector.broadcast %cst_29 : f32 to vector<16x64xf32>
    %58 = arith.select %56, %57, %54 : vector<16x64xi1>, vector<16x64xf32>
    %59 = tpu.concatenate %53, %47, %58 in 1 : vector<16x64xf32>, vector<16x64xf32>, vector<16x64xf32> -> vector<16x192xf32>
    %c0_30 = arith.constant 0 : index
    %c0_31 = arith.constant 0 : index
    %60 = vector.load %arg6[%c0_30, %c0_31] : memref<192x16xf32, #tpu.memory_space<vmem>>, vector<192x16xf32>
    %cst_32 = arith.constant dense<0.000000e+00> : vector<16x16xf32>
    %61 = tpu.matmul %59, %60, %cst_32 {dimension_numbers = #tpu.dot_dimension_numbers<[1], [0], [0], [1], [0, 0, 1, 1], [], []>} : vector<16x192xf32>, vector<192x16xf32>, vector<16x16xf32> -> vector<16x16xf32>
    %c0_33 = arith.constant 0 : index
    %c0_34 = arith.constant 0 : index
    %62 = vector.load %arg7[%c0_33, %c0_34] : memref<1x16xf32, #tpu.memory_space<vmem>>, vector<1x16xf32>
    %63 = vector.broadcast %62 : vector<1x16xf32> to vector<16x16xf32>
    %64 = arith.addf %61, %63 : vector<16x16xf32>
    %cst_35 = arith.constant 0.000000e+00 : f32
    %65 = vector.broadcast %cst_35 : f32 to vector<16x16xf32>
    %66 = arith.cmpf ogt, %64, %65 : vector<16x16xf32>
    %cst_36 = arith.constant 2.000000e-01 : f32
    %67 = vector.broadcast %cst_36 : f32 to vector<16x16xf32>
    %68 = arith.mulf %67, %64 : vector<16x16xf32>
    %69 = arith.select %66, %64, %68 : vector<16x16xi1>, vector<16x16xf32>
    %70 = tpu.concatenate %1, %23, %46, %69 in 1 : vector<16x32xf32>, vector<16x16xf32>, vector<16x16xf32>, vector<16x16xf32> -> vector<16x80xf32>
    %71 = tpu.iota {dimensions = array<i32: 0>} : vector<16x80xi32>
    %c1_i32_37 = arith.constant 1 : i32
    %72 = tpu.dynamic_rotate %70 by %c1_i32_37 dim 0 : vector<16x80xf32>, i32 -> vector<16x80xf32>
    %c0_i32_38 = arith.constant 0 : i32
    %73 = vector.broadcast %c0_i32_38 : i32 to vector<16x80xi32>
    %74 = arith.cmpi eq, %71, %73 : vector<16x80xi32>
    %cst_39 = arith.constant 0.000000e+00 : f32
    %75 = vector.broadcast %cst_39 : f32 to vector<16x80xf32>
    %76 = arith.select %74, %75, %72 : vector<16x80xi1>, vector<16x80xf32>
    %c15_i32_40 = arith.constant 15 : i32
    %77 = tpu.dynamic_rotate %70 by %c15_i32_40 dim 0 : vector<16x80xf32>, i32 -> vector<16x80xf32>
    %c15_i32_41 = arith.constant 15 : i32
    %78 = vector.broadcast %c15_i32_41 : i32 to vector<16x80xi32>
    %79 = arith.cmpi eq, %71, %78 : vector<16x80xi32>
    %cst_42 = arith.constant 0.000000e+00 : f32
    %80 = vector.broadcast %cst_42 : f32 to vector<16x80xf32>
    %81 = arith.select %79, %80, %77 : vector<16x80xi1>, vector<16x80xf32>
    %82 = tpu.concatenate %76, %70, %81 in 1 : vector<16x80xf32>, vector<16x80xf32>, vector<16x80xf32> -> vector<16x240xf32>
    %c0_43 = arith.constant 0 : index
    %c0_44 = arith.constant 0 : index
    %83 = vector.load %arg8[%c0_43, %c0_44] : memref<240x16xf32, #tpu.memory_space<vmem>>, vector<240x16xf32>
    %cst_45 = arith.constant dense<0.000000e+00> : vector<16x16xf32>
    %84 = tpu.matmul %82, %83, %cst_45 {dimension_numbers = #tpu.dot_dimension_numbers<[1], [0], [0], [1], [0, 0, 1, 1], [], []>} : vector<16x240xf32>, vector<240x16xf32>, vector<16x16xf32> -> vector<16x16xf32>
    %c0_46 = arith.constant 0 : index
    %c0_47 = arith.constant 0 : index
    %85 = vector.load %arg9[%c0_46, %c0_47] : memref<1x16xf32, #tpu.memory_space<vmem>>, vector<1x16xf32>
    %86 = vector.broadcast %85 : vector<1x16xf32> to vector<16x16xf32>
    %87 = arith.addf %84, %86 : vector<16x16xf32>
    %cst_48 = arith.constant 0.000000e+00 : f32
    %88 = vector.broadcast %cst_48 : f32 to vector<16x16xf32>
    %89 = arith.cmpf ogt, %87, %88 : vector<16x16xf32>
    %cst_49 = arith.constant 2.000000e-01 : f32
    %90 = vector.broadcast %cst_49 : f32 to vector<16x16xf32>
    %91 = arith.mulf %90, %87 : vector<16x16xf32>
    %92 = arith.select %89, %87, %91 : vector<16x16xi1>, vector<16x16xf32>
    %93 = tpu.concatenate %1, %23, %46, %69, %92 in 1 : vector<16x32xf32>, vector<16x16xf32>, vector<16x16xf32>, vector<16x16xf32>, vector<16x16xf32> -> vector<16x96xf32>
    %94 = tpu.iota {dimensions = array<i32: 0>} : vector<16x96xi32>
    %c1_i32_50 = arith.constant 1 : i32
    %95 = tpu.dynamic_rotate %93 by %c1_i32_50 dim 0 : vector<16x96xf32>, i32 -> vector<16x96xf32>
    %c0_i32_51 = arith.constant 0 : i32
    %96 = vector.broadcast %c0_i32_51 : i32 to vector<16x96xi32>
    %97 = arith.cmpi eq, %94, %96 : vector<16x96xi32>
    %cst_52 = arith.constant 0.000000e+00 : f32
    %98 = vector.broadcast %cst_52 : f32 to vector<16x96xf32>
    %99 = arith.select %97, %98, %95 : vector<16x96xi1>, vector<16x96xf32>
    %c15_i32_53 = arith.constant 15 : i32
    %100 = tpu.dynamic_rotate %93 by %c15_i32_53 dim 0 : vector<16x96xf32>, i32 -> vector<16x96xf32>
    %c15_i32_54 = arith.constant 15 : i32
    %101 = vector.broadcast %c15_i32_54 : i32 to vector<16x96xi32>
    %102 = arith.cmpi eq, %94, %101 : vector<16x96xi32>
    %cst_55 = arith.constant 0.000000e+00 : f32
    %103 = vector.broadcast %cst_55 : f32 to vector<16x96xf32>
    %104 = arith.select %102, %103, %100 : vector<16x96xi1>, vector<16x96xf32>
    %105 = tpu.concatenate %99, %93, %104 in 1 : vector<16x96xf32>, vector<16x96xf32>, vector<16x96xf32> -> vector<16x288xf32>
    %c0_56 = arith.constant 0 : index
    %c0_57 = arith.constant 0 : index
    %106 = vector.load %arg10[%c0_56, %c0_57] : memref<288x32xf32, #tpu.memory_space<vmem>>, vector<288x32xf32>
    %cst_58 = arith.constant dense<0.000000e+00> : vector<16x32xf32>
    %107 = tpu.matmul %105, %106, %cst_58 {dimension_numbers = #tpu.dot_dimension_numbers<[1], [0], [0], [1], [0, 0, 1, 1], [], []>} : vector<16x288xf32>, vector<288x32xf32>, vector<16x32xf32> -> vector<16x32xf32>
    %c0_59 = arith.constant 0 : index
    %c0_60 = arith.constant 0 : index
    %108 = vector.load %arg11[%c0_59, %c0_60] : memref<1x32xf32, #tpu.memory_space<vmem>>, vector<1x32xf32>
    %109 = vector.broadcast %108 : vector<1x32xf32> to vector<16x32xf32>
    %110 = arith.addf %107, %109 : vector<16x32xf32>
    %cst_61 = arith.constant 2.000000e-01 : f32
    %111 = vector.broadcast %cst_61 : f32 to vector<16x32xf32>
    %112 = arith.mulf %110, %111 : vector<16x32xf32>
    %113 = arith.addf %112, %1 : vector<16x32xf32>
    %114 = tpu.iota {dimensions = array<i32: 0>} : vector<16x32xi32>
    %c1_i32_62 = arith.constant 1 : i32
    %115 = tpu.dynamic_rotate %113 by %c1_i32_62 dim 0 : vector<16x32xf32>, i32 -> vector<16x32xf32>
    %c0_i32_63 = arith.constant 0 : i32
    %116 = vector.broadcast %c0_i32_63 : i32 to vector<16x32xi32>
    %117 = arith.cmpi eq, %114, %116 : vector<16x32xi32>
    %cst_64 = arith.constant 0.000000e+00 : f32
    %118 = vector.broadcast %cst_64 : f32 to vector<16x32xf32>
    %119 = arith.select %117, %118, %115 : vector<16x32xi1>, vector<16x32xf32>
    %c15_i32_65 = arith.constant 15 : i32
    %120 = tpu.dynamic_rotate %113 by %c15_i32_65 dim 0 : vector<16x32xf32>, i32 -> vector<16x32xf32>
    %c15_i32_66 = arith.constant 15 : i32
    %121 = vector.broadcast %c15_i32_66 : i32 to vector<16x32xi32>
    %122 = arith.cmpi eq, %114, %121 : vector<16x32xi32>
    %cst_67 = arith.constant 0.000000e+00 : f32
    %123 = vector.broadcast %cst_67 : f32 to vector<16x32xf32>
    %124 = arith.select %122, %123, %120 : vector<16x32xi1>, vector<16x32xf32>
    %125 = tpu.concatenate %119, %113, %124 in 1 : vector<16x32xf32>, vector<16x32xf32>, vector<16x32xf32> -> vector<16x96xf32>
    %c0_68 = arith.constant 0 : index
    %c0_69 = arith.constant 0 : index
    %126 = vector.load %arg12[%c0_68, %c0_69] : memref<96x16xf32, #tpu.memory_space<vmem>>, vector<96x16xf32>
    %cst_70 = arith.constant dense<0.000000e+00> : vector<16x16xf32>
    %127 = tpu.matmul %125, %126, %cst_70 {dimension_numbers = #tpu.dot_dimension_numbers<[1], [0], [0], [1], [0, 0, 1, 1], [], []>} : vector<16x96xf32>, vector<96x16xf32>, vector<16x16xf32> -> vector<16x16xf32>
    %c0_71 = arith.constant 0 : index
    %c0_72 = arith.constant 0 : index
    %128 = vector.load %arg13[%c0_71, %c0_72] : memref<1x16xf32, #tpu.memory_space<vmem>>, vector<1x16xf32>
    %129 = vector.broadcast %128 : vector<1x16xf32> to vector<16x16xf32>
    %130 = arith.addf %127, %129 : vector<16x16xf32>
    %cst_73 = arith.constant 0.000000e+00 : f32
    %131 = vector.broadcast %cst_73 : f32 to vector<16x16xf32>
    %132 = arith.cmpf ogt, %130, %131 : vector<16x16xf32>
    %cst_74 = arith.constant 2.000000e-01 : f32
    %133 = vector.broadcast %cst_74 : f32 to vector<16x16xf32>
    %134 = arith.mulf %133, %130 : vector<16x16xf32>
    %135 = arith.select %132, %130, %134 : vector<16x16xi1>, vector<16x16xf32>
    %136 = tpu.concatenate %113, %135 in 1 : vector<16x32xf32>, vector<16x16xf32> -> vector<16x48xf32>
    %137 = tpu.iota {dimensions = array<i32: 0>} : vector<16x48xi32>
    %c1_i32_75 = arith.constant 1 : i32
    %138 = tpu.dynamic_rotate %136 by %c1_i32_75 dim 0 : vector<16x48xf32>, i32 -> vector<16x48xf32>
    %c0_i32_76 = arith.constant 0 : i32
    %139 = vector.broadcast %c0_i32_76 : i32 to vector<16x48xi32>
    %140 = arith.cmpi eq, %137, %139 : vector<16x48xi32>
    %cst_77 = arith.constant 0.000000e+00 : f32
    %141 = vector.broadcast %cst_77 : f32 to vector<16x48xf32>
    %142 = arith.select %140, %141, %138 : vector<16x48xi1>, vector<16x48xf32>
    %c15_i32_78 = arith.constant 15 : i32
    %143 = tpu.dynamic_rotate %136 by %c15_i32_78 dim 0 : vector<16x48xf32>, i32 -> vector<16x48xf32>
    %c15_i32_79 = arith.constant 15 : i32
    %144 = vector.broadcast %c15_i32_79 : i32 to vector<16x48xi32>
    %145 = arith.cmpi eq, %137, %144 : vector<16x48xi32>
    %cst_80 = arith.constant 0.000000e+00 : f32
    %146 = vector.broadcast %cst_80 : f32 to vector<16x48xf32>
    %147 = arith.select %145, %146, %143 : vector<16x48xi1>, vector<16x48xf32>
    %148 = tpu.concatenate %142, %136, %147 in 1 : vector<16x48xf32>, vector<16x48xf32>, vector<16x48xf32> -> vector<16x144xf32>
    %c0_81 = arith.constant 0 : index
    %c0_82 = arith.constant 0 : index
    %149 = vector.load %arg14[%c0_81, %c0_82] : memref<144x16xf32, #tpu.memory_space<vmem>>, vector<144x16xf32>
    %cst_83 = arith.constant dense<0.000000e+00> : vector<16x16xf32>
    %150 = tpu.matmul %148, %149, %cst_83 {dimension_numbers = #tpu.dot_dimension_numbers<[1], [0], [0], [1], [0, 0, 1, 1], [], []>} : vector<16x144xf32>, vector<144x16xf32>, vector<16x16xf32> -> vector<16x16xf32>
    %c0_84 = arith.constant 0 : index
    %c0_85 = arith.constant 0 : index
    %151 = vector.load %arg15[%c0_84, %c0_85] : memref<1x16xf32, #tpu.memory_space<vmem>>, vector<1x16xf32>
    %152 = vector.broadcast %151 : vector<1x16xf32> to vector<16x16xf32>
    %153 = arith.addf %150, %152 : vector<16x16xf32>
    %cst_86 = arith.constant 0.000000e+00 : f32
    %154 = vector.broadcast %cst_86 : f32 to vector<16x16xf32>
    %155 = arith.cmpf ogt, %153, %154 : vector<16x16xf32>
    %cst_87 = arith.constant 2.000000e-01 : f32
    %156 = vector.broadcast %cst_87 : f32 to vector<16x16xf32>
    %157 = arith.mulf %156, %153 : vector<16x16xf32>
    %158 = arith.select %155, %153, %157 : vector<16x16xi1>, vector<16x16xf32>
    %159 = tpu.concatenate %113, %135, %158 in 1 : vector<16x32xf32>, vector<16x16xf32>, vector<16x16xf32> -> vector<16x64xf32>
    %160 = tpu.iota {dimensions = array<i32: 0>} : vector<16x64xi32>
    %c1_i32_88 = arith.constant 1 : i32
    %161 = tpu.dynamic_rotate %159 by %c1_i32_88 dim 0 : vector<16x64xf32>, i32 -> vector<16x64xf32>
    %c0_i32_89 = arith.constant 0 : i32
    %162 = vector.broadcast %c0_i32_89 : i32 to vector<16x64xi32>
    %163 = arith.cmpi eq, %160, %162 : vector<16x64xi32>
    %cst_90 = arith.constant 0.000000e+00 : f32
    %164 = vector.broadcast %cst_90 : f32 to vector<16x64xf32>
    %165 = arith.select %163, %164, %161 : vector<16x64xi1>, vector<16x64xf32>
    %c15_i32_91 = arith.constant 15 : i32
    %166 = tpu.dynamic_rotate %159 by %c15_i32_91 dim 0 : vector<16x64xf32>, i32 -> vector<16x64xf32>
    %c15_i32_92 = arith.constant 15 : i32
    %167 = vector.broadcast %c15_i32_92 : i32 to vector<16x64xi32>
    %168 = arith.cmpi eq, %160, %167 : vector<16x64xi32>
    %cst_93 = arith.constant 0.000000e+00 : f32
    %169 = vector.broadcast %cst_93 : f32 to vector<16x64xf32>
    %170 = arith.select %168, %169, %166 : vector<16x64xi1>, vector<16x64xf32>
    %171 = tpu.concatenate %165, %159, %170 in 1 : vector<16x64xf32>, vector<16x64xf32>, vector<16x64xf32> -> vector<16x192xf32>
    %c0_94 = arith.constant 0 : index
    %c0_95 = arith.constant 0 : index
    %172 = vector.load %arg16[%c0_94, %c0_95] : memref<192x16xf32, #tpu.memory_space<vmem>>, vector<192x16xf32>
    %cst_96 = arith.constant dense<0.000000e+00> : vector<16x16xf32>
    %173 = tpu.matmul %171, %172, %cst_96 {dimension_numbers = #tpu.dot_dimension_numbers<[1], [0], [0], [1], [0, 0, 1, 1], [], []>} : vector<16x192xf32>, vector<192x16xf32>, vector<16x16xf32> -> vector<16x16xf32>
    %c0_97 = arith.constant 0 : index
    %c0_98 = arith.constant 0 : index
    %174 = vector.load %arg17[%c0_97, %c0_98] : memref<1x16xf32, #tpu.memory_space<vmem>>, vector<1x16xf32>
    %175 = vector.broadcast %174 : vector<1x16xf32> to vector<16x16xf32>
    %176 = arith.addf %173, %175 : vector<16x16xf32>
    %cst_99 = arith.constant 0.000000e+00 : f32
    %177 = vector.broadcast %cst_99 : f32 to vector<16x16xf32>
    %178 = arith.cmpf ogt, %176, %177 : vector<16x16xf32>
    %cst_100 = arith.constant 2.000000e-01 : f32
    %179 = vector.broadcast %cst_100 : f32 to vector<16x16xf32>
    %180 = arith.mulf %179, %176 : vector<16x16xf32>
    %181 = arith.select %178, %176, %180 : vector<16x16xi1>, vector<16x16xf32>
    %182 = tpu.concatenate %113, %135, %158, %181 in 1 : vector<16x32xf32>, vector<16x16xf32>, vector<16x16xf32>, vector<16x16xf32> -> vector<16x80xf32>
    %183 = tpu.iota {dimensions = array<i32: 0>} : vector<16x80xi32>
    %c1_i32_101 = arith.constant 1 : i32
    %184 = tpu.dynamic_rotate %182 by %c1_i32_101 dim 0 : vector<16x80xf32>, i32 -> vector<16x80xf32>
    %c0_i32_102 = arith.constant 0 : i32
    %185 = vector.broadcast %c0_i32_102 : i32 to vector<16x80xi32>
    %186 = arith.cmpi eq, %183, %185 : vector<16x80xi32>
    %cst_103 = arith.constant 0.000000e+00 : f32
    %187 = vector.broadcast %cst_103 : f32 to vector<16x80xf32>
    %188 = arith.select %186, %187, %184 : vector<16x80xi1>, vector<16x80xf32>
    %c15_i32_104 = arith.constant 15 : i32
    %189 = tpu.dynamic_rotate %182 by %c15_i32_104 dim 0 : vector<16x80xf32>, i32 -> vector<16x80xf32>
    %c15_i32_105 = arith.constant 15 : i32
    %190 = vector.broadcast %c15_i32_105 : i32 to vector<16x80xi32>
    %191 = arith.cmpi eq, %183, %190 : vector<16x80xi32>
    %cst_106 = arith.constant 0.000000e+00 : f32
    %192 = vector.broadcast %cst_106 : f32 to vector<16x80xf32>
    %193 = arith.select %191, %192, %189 : vector<16x80xi1>, vector<16x80xf32>
    %194 = tpu.concatenate %188, %182, %193 in 1 : vector<16x80xf32>, vector<16x80xf32>, vector<16x80xf32> -> vector<16x240xf32>
    %c0_107 = arith.constant 0 : index
    %c0_108 = arith.constant 0 : index
    %195 = vector.load %arg18[%c0_107, %c0_108] : memref<240x16xf32, #tpu.memory_space<vmem>>, vector<240x16xf32>
    %cst_109 = arith.constant dense<0.000000e+00> : vector<16x16xf32>
    %196 = tpu.matmul %194, %195, %cst_109 {dimension_numbers = #tpu.dot_dimension_numbers<[1], [0], [0], [1], [0, 0, 1, 1], [], []>} : vector<16x240xf32>, vector<240x16xf32>, vector<16x16xf32> -> vector<16x16xf32>
    %c0_110 = arith.constant 0 : index
    %c0_111 = arith.constant 0 : index
    %197 = vector.load %arg19[%c0_110, %c0_111] : memref<1x16xf32, #tpu.memory_space<vmem>>, vector<1x16xf32>
    %198 = vector.broadcast %197 : vector<1x16xf32> to vector<16x16xf32>
    %199 = arith.addf %196, %198 : vector<16x16xf32>
    %cst_112 = arith.constant 0.000000e+00 : f32
    %200 = vector.broadcast %cst_112 : f32 to vector<16x16xf32>
    %201 = arith.cmpf ogt, %199, %200 : vector<16x16xf32>
    %cst_113 = arith.constant 2.000000e-01 : f32
    %202 = vector.broadcast %cst_113 : f32 to vector<16x16xf32>
    %203 = arith.mulf %202, %199 : vector<16x16xf32>
    %204 = arith.select %201, %199, %203 : vector<16x16xi1>, vector<16x16xf32>
    %205 = tpu.concatenate %113, %135, %158, %181, %204 in 1 : vector<16x32xf32>, vector<16x16xf32>, vector<16x16xf32>, vector<16x16xf32>, vector<16x16xf32> -> vector<16x96xf32>
    %206 = tpu.iota {dimensions = array<i32: 0>} : vector<16x96xi32>
    %c1_i32_114 = arith.constant 1 : i32
    %207 = tpu.dynamic_rotate %205 by %c1_i32_114 dim 0 : vector<16x96xf32>, i32 -> vector<16x96xf32>
    %c0_i32_115 = arith.constant 0 : i32
    %208 = vector.broadcast %c0_i32_115 : i32 to vector<16x96xi32>
    %209 = arith.cmpi eq, %206, %208 : vector<16x96xi32>
    %cst_116 = arith.constant 0.000000e+00 : f32
    %210 = vector.broadcast %cst_116 : f32 to vector<16x96xf32>
    %211 = arith.select %209, %210, %207 : vector<16x96xi1>, vector<16x96xf32>
    %c15_i32_117 = arith.constant 15 : i32
    %212 = tpu.dynamic_rotate %205 by %c15_i32_117 dim 0 : vector<16x96xf32>, i32 -> vector<16x96xf32>
    %c15_i32_118 = arith.constant 15 : i32
    %213 = vector.broadcast %c15_i32_118 : i32 to vector<16x96xi32>
    %214 = arith.cmpi eq, %206, %213 : vector<16x96xi32>
    %cst_119 = arith.constant 0.000000e+00 : f32
    %215 = vector.broadcast %cst_119 : f32 to vector<16x96xf32>
    %216 = arith.select %214, %215, %212 : vector<16x96xi1>, vector<16x96xf32>
    %217 = tpu.concatenate %211, %205, %216 in 1 : vector<16x96xf32>, vector<16x96xf32>, vector<16x96xf32> -> vector<16x288xf32>
    %c0_120 = arith.constant 0 : index
    %c0_121 = arith.constant 0 : index
    %218 = vector.load %arg20[%c0_120, %c0_121] : memref<288x32xf32, #tpu.memory_space<vmem>>, vector<288x32xf32>
    %cst_122 = arith.constant dense<0.000000e+00> : vector<16x32xf32>
    %219 = tpu.matmul %217, %218, %cst_122 {dimension_numbers = #tpu.dot_dimension_numbers<[1], [0], [0], [1], [0, 0, 1, 1], [], []>} : vector<16x288xf32>, vector<288x32xf32>, vector<16x32xf32> -> vector<16x32xf32>
    %c0_123 = arith.constant 0 : index
    %c0_124 = arith.constant 0 : index
    %220 = vector.load %arg21[%c0_123, %c0_124] : memref<1x32xf32, #tpu.memory_space<vmem>>, vector<1x32xf32>
    %221 = vector.broadcast %220 : vector<1x32xf32> to vector<16x32xf32>
    %222 = arith.addf %219, %221 : vector<16x32xf32>
    %cst_125 = arith.constant 2.000000e-01 : f32
    %223 = vector.broadcast %cst_125 : f32 to vector<16x32xf32>
    %224 = arith.mulf %222, %223 : vector<16x32xf32>
    %225 = arith.addf %224, %113 : vector<16x32xf32>
    %226 = tpu.iota {dimensions = array<i32: 0>} : vector<16x32xi32>
    %c1_i32_126 = arith.constant 1 : i32
    %227 = tpu.dynamic_rotate %225 by %c1_i32_126 dim 0 : vector<16x32xf32>, i32 -> vector<16x32xf32>
    %c0_i32_127 = arith.constant 0 : i32
    %228 = vector.broadcast %c0_i32_127 : i32 to vector<16x32xi32>
    %229 = arith.cmpi eq, %226, %228 : vector<16x32xi32>
    %cst_128 = arith.constant 0.000000e+00 : f32
    %230 = vector.broadcast %cst_128 : f32 to vector<16x32xf32>
    %231 = arith.select %229, %230, %227 : vector<16x32xi1>, vector<16x32xf32>
    %c15_i32_129 = arith.constant 15 : i32
    %232 = tpu.dynamic_rotate %225 by %c15_i32_129 dim 0 : vector<16x32xf32>, i32 -> vector<16x32xf32>
    %c15_i32_130 = arith.constant 15 : i32
    %233 = vector.broadcast %c15_i32_130 : i32 to vector<16x32xi32>
    %234 = arith.cmpi eq, %226, %233 : vector<16x32xi32>
    %cst_131 = arith.constant 0.000000e+00 : f32
    %235 = vector.broadcast %cst_131 : f32 to vector<16x32xf32>
    %236 = arith.select %234, %235, %232 : vector<16x32xi1>, vector<16x32xf32>
    %237 = tpu.concatenate %231, %225, %236 in 1 : vector<16x32xf32>, vector<16x32xf32>, vector<16x32xf32> -> vector<16x96xf32>
    %c0_132 = arith.constant 0 : index
    %c0_133 = arith.constant 0 : index
    %238 = vector.load %arg22[%c0_132, %c0_133] : memref<96x16xf32, #tpu.memory_space<vmem>>, vector<96x16xf32>
    %cst_134 = arith.constant dense<0.000000e+00> : vector<16x16xf32>
    %239 = tpu.matmul %237, %238, %cst_134 {dimension_numbers = #tpu.dot_dimension_numbers<[1], [0], [0], [1], [0, 0, 1, 1], [], []>} : vector<16x96xf32>, vector<96x16xf32>, vector<16x16xf32> -> vector<16x16xf32>
    %c0_135 = arith.constant 0 : index
    %c0_136 = arith.constant 0 : index
    %240 = vector.load %arg23[%c0_135, %c0_136] : memref<1x16xf32, #tpu.memory_space<vmem>>, vector<1x16xf32>
    %241 = vector.broadcast %240 : vector<1x16xf32> to vector<16x16xf32>
    %242 = arith.addf %239, %241 : vector<16x16xf32>
    %cst_137 = arith.constant 0.000000e+00 : f32
    %243 = vector.broadcast %cst_137 : f32 to vector<16x16xf32>
    %244 = arith.cmpf ogt, %242, %243 : vector<16x16xf32>
    %cst_138 = arith.constant 2.000000e-01 : f32
    %245 = vector.broadcast %cst_138 : f32 to vector<16x16xf32>
    %246 = arith.mulf %245, %242 : vector<16x16xf32>
    %247 = arith.select %244, %242, %246 : vector<16x16xi1>, vector<16x16xf32>
    %248 = tpu.concatenate %225, %247 in 1 : vector<16x32xf32>, vector<16x16xf32> -> vector<16x48xf32>
    %249 = tpu.iota {dimensions = array<i32: 0>} : vector<16x48xi32>
    %c1_i32_139 = arith.constant 1 : i32
    %250 = tpu.dynamic_rotate %248 by %c1_i32_139 dim 0 : vector<16x48xf32>, i32 -> vector<16x48xf32>
    %c0_i32_140 = arith.constant 0 : i32
    %251 = vector.broadcast %c0_i32_140 : i32 to vector<16x48xi32>
    %252 = arith.cmpi eq, %249, %251 : vector<16x48xi32>
    %cst_141 = arith.constant 0.000000e+00 : f32
    %253 = vector.broadcast %cst_141 : f32 to vector<16x48xf32>
    %254 = arith.select %252, %253, %250 : vector<16x48xi1>, vector<16x48xf32>
    %c15_i32_142 = arith.constant 15 : i32
    %255 = tpu.dynamic_rotate %248 by %c15_i32_142 dim 0 : vector<16x48xf32>, i32 -> vector<16x48xf32>
    %c15_i32_143 = arith.constant 15 : i32
    %256 = vector.broadcast %c15_i32_143 : i32 to vector<16x48xi32>
    %257 = arith.cmpi eq, %249, %256 : vector<16x48xi32>
    %cst_144 = arith.constant 0.000000e+00 : f32
    %258 = vector.broadcast %cst_144 : f32 to vector<16x48xf32>
    %259 = arith.select %257, %258, %255 : vector<16x48xi1>, vector<16x48xf32>
    %260 = tpu.concatenate %254, %248, %259 in 1 : vector<16x48xf32>, vector<16x48xf32>, vector<16x48xf32> -> vector<16x144xf32>
    %c0_145 = arith.constant 0 : index
    %c0_146 = arith.constant 0 : index
    %261 = vector.load %arg24[%c0_145, %c0_146] : memref<144x16xf32, #tpu.memory_space<vmem>>, vector<144x16xf32>
    %cst_147 = arith.constant dense<0.000000e+00> : vector<16x16xf32>
    %262 = tpu.matmul %260, %261, %cst_147 {dimension_numbers = #tpu.dot_dimension_numbers<[1], [0], [0], [1], [0, 0, 1, 1], [], []>} : vector<16x144xf32>, vector<144x16xf32>, vector<16x16xf32> -> vector<16x16xf32>
    %c0_148 = arith.constant 0 : index
    %c0_149 = arith.constant 0 : index
    %263 = vector.load %arg25[%c0_148, %c0_149] : memref<1x16xf32, #tpu.memory_space<vmem>>, vector<1x16xf32>
    %264 = vector.broadcast %263 : vector<1x16xf32> to vector<16x16xf32>
    %265 = arith.addf %262, %264 : vector<16x16xf32>
    %cst_150 = arith.constant 0.000000e+00 : f32
    %266 = vector.broadcast %cst_150 : f32 to vector<16x16xf32>
    %267 = arith.cmpf ogt, %265, %266 : vector<16x16xf32>
    %cst_151 = arith.constant 2.000000e-01 : f32
    %268 = vector.broadcast %cst_151 : f32 to vector<16x16xf32>
    %269 = arith.mulf %268, %265 : vector<16x16xf32>
    %270 = arith.select %267, %265, %269 : vector<16x16xi1>, vector<16x16xf32>
    %271 = tpu.concatenate %225, %247, %270 in 1 : vector<16x32xf32>, vector<16x16xf32>, vector<16x16xf32> -> vector<16x64xf32>
    %272 = tpu.iota {dimensions = array<i32: 0>} : vector<16x64xi32>
    %c1_i32_152 = arith.constant 1 : i32
    %273 = tpu.dynamic_rotate %271 by %c1_i32_152 dim 0 : vector<16x64xf32>, i32 -> vector<16x64xf32>
    %c0_i32_153 = arith.constant 0 : i32
    %274 = vector.broadcast %c0_i32_153 : i32 to vector<16x64xi32>
    %275 = arith.cmpi eq, %272, %274 : vector<16x64xi32>
    %cst_154 = arith.constant 0.000000e+00 : f32
    %276 = vector.broadcast %cst_154 : f32 to vector<16x64xf32>
    %277 = arith.select %275, %276, %273 : vector<16x64xi1>, vector<16x64xf32>
    %c15_i32_155 = arith.constant 15 : i32
    %278 = tpu.dynamic_rotate %271 by %c15_i32_155 dim 0 : vector<16x64xf32>, i32 -> vector<16x64xf32>
    %c15_i32_156 = arith.constant 15 : i32
    %279 = vector.broadcast %c15_i32_156 : i32 to vector<16x64xi32>
    %280 = arith.cmpi eq, %272, %279 : vector<16x64xi32>
    %cst_157 = arith.constant 0.000000e+00 : f32
    %281 = vector.broadcast %cst_157 : f32 to vector<16x64xf32>
    %282 = arith.select %280, %281, %278 : vector<16x64xi1>, vector<16x64xf32>
    %283 = tpu.concatenate %277, %271, %282 in 1 : vector<16x64xf32>, vector<16x64xf32>, vector<16x64xf32> -> vector<16x192xf32>
    %c0_158 = arith.constant 0 : index
    %c0_159 = arith.constant 0 : index
    %284 = vector.load %arg26[%c0_158, %c0_159] : memref<192x16xf32, #tpu.memory_space<vmem>>, vector<192x16xf32>
    %cst_160 = arith.constant dense<0.000000e+00> : vector<16x16xf32>
    %285 = tpu.matmul %283, %284, %cst_160 {dimension_numbers = #tpu.dot_dimension_numbers<[1], [0], [0], [1], [0, 0, 1, 1], [], []>} : vector<16x192xf32>, vector<192x16xf32>, vector<16x16xf32> -> vector<16x16xf32>
    %c0_161 = arith.constant 0 : index
    %c0_162 = arith.constant 0 : index
    %286 = vector.load %arg27[%c0_161, %c0_162] : memref<1x16xf32, #tpu.memory_space<vmem>>, vector<1x16xf32>
    %287 = vector.broadcast %286 : vector<1x16xf32> to vector<16x16xf32>
    %288 = arith.addf %285, %287 : vector<16x16xf32>
    %cst_163 = arith.constant 0.000000e+00 : f32
    %289 = vector.broadcast %cst_163 : f32 to vector<16x16xf32>
    %290 = arith.cmpf ogt, %288, %289 : vector<16x16xf32>
    %cst_164 = arith.constant 2.000000e-01 : f32
    %291 = vector.broadcast %cst_164 : f32 to vector<16x16xf32>
    %292 = arith.mulf %291, %288 : vector<16x16xf32>
    %293 = arith.select %290, %288, %292 : vector<16x16xi1>, vector<16x16xf32>
    %294 = tpu.concatenate %225, %247, %270, %293 in 1 : vector<16x32xf32>, vector<16x16xf32>, vector<16x16xf32>, vector<16x16xf32> -> vector<16x80xf32>
    %295 = tpu.iota {dimensions = array<i32: 0>} : vector<16x80xi32>
    %c1_i32_165 = arith.constant 1 : i32
    %296 = tpu.dynamic_rotate %294 by %c1_i32_165 dim 0 : vector<16x80xf32>, i32 -> vector<16x80xf32>
    %c0_i32_166 = arith.constant 0 : i32
    %297 = vector.broadcast %c0_i32_166 : i32 to vector<16x80xi32>
    %298 = arith.cmpi eq, %295, %297 : vector<16x80xi32>
    %cst_167 = arith.constant 0.000000e+00 : f32
    %299 = vector.broadcast %cst_167 : f32 to vector<16x80xf32>
    %300 = arith.select %298, %299, %296 : vector<16x80xi1>, vector<16x80xf32>
    %c15_i32_168 = arith.constant 15 : i32
    %301 = tpu.dynamic_rotate %294 by %c15_i32_168 dim 0 : vector<16x80xf32>, i32 -> vector<16x80xf32>
    %c15_i32_169 = arith.constant 15 : i32
    %302 = vector.broadcast %c15_i32_169 : i32 to vector<16x80xi32>
    %303 = arith.cmpi eq, %295, %302 : vector<16x80xi32>
    %cst_170 = arith.constant 0.000000e+00 : f32
    %304 = vector.broadcast %cst_170 : f32 to vector<16x80xf32>
    %305 = arith.select %303, %304, %301 : vector<16x80xi1>, vector<16x80xf32>
    %306 = tpu.concatenate %300, %294, %305 in 1 : vector<16x80xf32>, vector<16x80xf32>, vector<16x80xf32> -> vector<16x240xf32>
    %c0_171 = arith.constant 0 : index
    %c0_172 = arith.constant 0 : index
    %307 = vector.load %arg28[%c0_171, %c0_172] : memref<240x16xf32, #tpu.memory_space<vmem>>, vector<240x16xf32>
    %cst_173 = arith.constant dense<0.000000e+00> : vector<16x16xf32>
    %308 = tpu.matmul %306, %307, %cst_173 {dimension_numbers = #tpu.dot_dimension_numbers<[1], [0], [0], [1], [0, 0, 1, 1], [], []>} : vector<16x240xf32>, vector<240x16xf32>, vector<16x16xf32> -> vector<16x16xf32>
    %c0_174 = arith.constant 0 : index
    %c0_175 = arith.constant 0 : index
    %309 = vector.load %arg29[%c0_174, %c0_175] : memref<1x16xf32, #tpu.memory_space<vmem>>, vector<1x16xf32>
    %310 = vector.broadcast %309 : vector<1x16xf32> to vector<16x16xf32>
    %311 = arith.addf %308, %310 : vector<16x16xf32>
    %cst_176 = arith.constant 0.000000e+00 : f32
    %312 = vector.broadcast %cst_176 : f32 to vector<16x16xf32>
    %313 = arith.cmpf ogt, %311, %312 : vector<16x16xf32>
    %cst_177 = arith.constant 2.000000e-01 : f32
    %314 = vector.broadcast %cst_177 : f32 to vector<16x16xf32>
    %315 = arith.mulf %314, %311 : vector<16x16xf32>
    %316 = arith.select %313, %311, %315 : vector<16x16xi1>, vector<16x16xf32>
    %317 = tpu.concatenate %225, %247, %270, %293, %316 in 1 : vector<16x32xf32>, vector<16x16xf32>, vector<16x16xf32>, vector<16x16xf32>, vector<16x16xf32> -> vector<16x96xf32>
    %318 = tpu.iota {dimensions = array<i32: 0>} : vector<16x96xi32>
    %c1_i32_178 = arith.constant 1 : i32
    %319 = tpu.dynamic_rotate %317 by %c1_i32_178 dim 0 : vector<16x96xf32>, i32 -> vector<16x96xf32>
    %c0_i32_179 = arith.constant 0 : i32
    %320 = vector.broadcast %c0_i32_179 : i32 to vector<16x96xi32>
    %321 = arith.cmpi eq, %318, %320 : vector<16x96xi32>
    %cst_180 = arith.constant 0.000000e+00 : f32
    %322 = vector.broadcast %cst_180 : f32 to vector<16x96xf32>
    %323 = arith.select %321, %322, %319 : vector<16x96xi1>, vector<16x96xf32>
    %c15_i32_181 = arith.constant 15 : i32
    %324 = tpu.dynamic_rotate %317 by %c15_i32_181 dim 0 : vector<16x96xf32>, i32 -> vector<16x96xf32>
    %c15_i32_182 = arith.constant 15 : i32
    %325 = vector.broadcast %c15_i32_182 : i32 to vector<16x96xi32>
    %326 = arith.cmpi eq, %318, %325 : vector<16x96xi32>
    %cst_183 = arith.constant 0.000000e+00 : f32
    %327 = vector.broadcast %cst_183 : f32 to vector<16x96xf32>
    %328 = arith.select %326, %327, %324 : vector<16x96xi1>, vector<16x96xf32>
    %329 = tpu.concatenate %323, %317, %328 in 1 : vector<16x96xf32>, vector<16x96xf32>, vector<16x96xf32> -> vector<16x288xf32>
    %c0_184 = arith.constant 0 : index
    %c0_185 = arith.constant 0 : index
    %330 = vector.load %arg30[%c0_184, %c0_185] : memref<288x32xf32, #tpu.memory_space<vmem>>, vector<288x32xf32>
    %cst_186 = arith.constant dense<0.000000e+00> : vector<16x32xf32>
    %331 = tpu.matmul %329, %330, %cst_186 {dimension_numbers = #tpu.dot_dimension_numbers<[1], [0], [0], [1], [0, 0, 1, 1], [], []>} : vector<16x288xf32>, vector<288x32xf32>, vector<16x32xf32> -> vector<16x32xf32>
    %c0_187 = arith.constant 0 : index
    %c0_188 = arith.constant 0 : index
    %332 = vector.load %arg31[%c0_187, %c0_188] : memref<1x32xf32, #tpu.memory_space<vmem>>, vector<1x32xf32>
    %333 = vector.broadcast %332 : vector<1x32xf32> to vector<16x32xf32>
    %334 = arith.addf %331, %333 : vector<16x32xf32>
    %cst_189 = arith.constant 2.000000e-01 : f32
    %335 = vector.broadcast %cst_189 : f32 to vector<16x32xf32>
    %336 = arith.mulf %334, %335 : vector<16x32xf32>
    %337 = arith.addf %336, %225 : vector<16x32xf32>
    %cst_190 = arith.constant 2.000000e-01 : f32
    %338 = vector.broadcast %cst_190 : f32 to vector<16x32xf32>
    %339 = arith.mulf %337, %338 : vector<16x32xf32>
    %340 = arith.addf %339, %1 : vector<16x32xf32>
    %c0_191 = arith.constant 0 : index
    %c0_192 = arith.constant 0 : index
    %c0_193 = arith.constant 0 : index
    %341 = vector.load %arg32[%c0_191, %c0_192, %c0_193] : memref<1x16x32xf32, #tpu.memory_space<vmem>>, vector<1x16x32xf32>
    %342 = vector.shape_cast %341 : vector<1x16x32xf32> to vector<16x32xf32>
    %343 = vector.shape_cast %340 : vector<16x32xf32> to vector<1x16x32xf32>
    tpu.vector_store %arg32[%c0_191, %c0_192, %c0_193], %343 {strides = array<i32>} : memref<1x16x32xf32, #tpu.memory_space<vmem>>, vector<1x16x32xf32>,
    return
  }
  func.func @transform_0(%arg0: i32) -> (i32, i32, i32) {
    %c0_i32 = arith.constant 0 : i32
    %c0_i32_0 = arith.constant 0 : i32
    %c0_i32_1 = arith.constant 0 : i32
    return %arg0, %c0_i32, %c0_i32_0 : i32, i32, i32
  }
  func.func @transform_1(%arg0: i32) -> (i32, i32) {
    %c0_i32 = arith.constant 0 : i32
    %c0_i32_0 = arith.constant 0 : i32
    %c0_i32_1 = arith.constant 0 : i32
    return %c0_i32, %c0_i32_0 : i32, i32
  }
  func.func @transform_2(%arg0: i32) -> (i32, i32) {
    %c0_i32 = arith.constant 0 : i32
    %c0_i32_0 = arith.constant 0 : i32
    %c0_i32_1 = arith.constant 0 : i32
    return %c0_i32, %c0_i32_0 : i32, i32
  }
  func.func @transform_3(%arg0: i32) -> (i32, i32) {
    %c0_i32 = arith.constant 0 : i32
    %c0_i32_0 = arith.constant 0 : i32
    %c0_i32_1 = arith.constant 0 : i32
    return %c0_i32, %c0_i32_0 : i32, i32
  }
  func.func @transform_4(%arg0: i32) -> (i32, i32) {
    %c0_i32 = arith.constant 0 : i32
    %c0_i32_0 = arith.constant 0 : i32
    %c0_i32_1 = arith.constant 0 : i32
    return %c0_i32, %c0_i32_0 : i32, i32
  }
  func.func @transform_5(%arg0: i32) -> (i32, i32) {
    %c0_i32 = arith.constant 0 : i32
    %c0_i32_0 = arith.constant 0 : i32
    %c0_i32_1 = arith.constant 0 : i32
    return %c0_i32, %c0_i32_0 : i32, i32
  }
  func.func @transform_6(%arg0: i32) -> (i32, i32) {
    %c0_i32 = arith.constant 0 : i32
    %c0_i32_0 = arith.constant 0 : i32
    %c0_i32_1 = arith.constant 0 : i32
    return %c0_i32, %c0_i32_0 : i32, i32
  }
  func.func @transform_7(%arg0: i32) -> (i32, i32) {
    %c0_i32 = arith.constant 0 : i32
    %c0_i32_0 = arith.constant 0 : i32
    %c0_i32_1 = arith.constant 0 : i32
    return %c0_i32, %c0_i32_0 : i32, i32
  }
  func.func @transform_8(%arg0: i32) -> (i32, i32) {
    %c0_i32 = arith.constant 0 : i32
    %c0_i32_0 = arith.constant 0 : i32
    %c0_i32_1 = arith.constant 0 : i32
    return %c0_i32, %c0_i32_0 : i32, i32
  }
  func.func @transform_9(%arg0: i32) -> (i32, i32) {
    %c0_i32 = arith.constant 0 : i32
    %c0_i32_0 = arith.constant 0 : i32
    %c0_i32_1 = arith.constant 0 : i32
    return %c0_i32, %c0_i32_0 : i32, i32
  }
  func.func @transform_10(%arg0: i32) -> (i32, i32) {
    %c0_i32 = arith.constant 0 : i32
    %c0_i32_0 = arith.constant 0 : i32
    %c0_i32_1 = arith.constant 0 : i32
    return %c0_i32, %c0_i32_0 : i32, i32
  }
  func.func @transform_11(%arg0: i32) -> (i32, i32) {
    %c0_i32 = arith.constant 0 : i32
    %c0_i32_0 = arith.constant 0 : i32
    %c0_i32_1 = arith.constant 0 : i32
    return %c0_i32, %c0_i32_0 : i32, i32
  }
  func.func @transform_12(%arg0: i32) -> (i32, i32) {
    %c0_i32 = arith.constant 0 : i32
    %c0_i32_0 = arith.constant 0 : i32
    %c0_i32_1 = arith.constant 0 : i32
    return %c0_i32, %c0_i32_0 : i32, i32
  }
  func.func @transform_13(%arg0: i32) -> (i32, i32) {
    %c0_i32 = arith.constant 0 : i32
    %c0_i32_0 = arith.constant 0 : i32
    %c0_i32_1 = arith.constant 0 : i32
    return %c0_i32, %c0_i32_0 : i32, i32
  }
  func.func @transform_14(%arg0: i32) -> (i32, i32) {
    %c0_i32 = arith.constant 0 : i32
    %c0_i32_0 = arith.constant 0 : i32
    %c0_i32_1 = arith.constant 0 : i32
    return %c0_i32, %c0_i32_0 : i32, i32
  }
  func.func @transform_15(%arg0: i32) -> (i32, i32) {
    %c0_i32 = arith.constant 0 : i32
    %c0_i32_0 = arith.constant 0 : i32
    %c0_i32_1 = arith.constant 0 : i32
    return %c0_i32, %c0_i32_0 : i32, i32
  }
  func.func @transform_16(%arg0: i32) -> (i32, i32) {
    %c0_i32 = arith.constant 0 : i32
    %c0_i32_0 = arith.constant 0 : i32
    %c0_i32_1 = arith.constant 0 : i32
    return %c0_i32, %c0_i32_0 : i32, i32
  }
  func.func @transform_17(%arg0: i32) -> (i32, i32) {
    %c0_i32 = arith.constant 0 : i32
    %c0_i32_0 = arith.constant 0 : i32
    %c0_i32_1 = arith.constant 0 : i32
    return %c0_i32, %c0_i32_0 : i32, i32
  }
  func.func @transform_18(%arg0: i32) -> (i32, i32) {
    %c0_i32 = arith.constant 0 : i32
    %c0_i32_0 = arith.constant 0 : i32
    %c0_i32_1 = arith.constant 0 : i32
    return %c0_i32, %c0_i32_0 : i32, i32
  }
  func.func @transform_19(%arg0: i32) -> (i32, i32) {
    %c0_i32 = arith.constant 0 : i32
    %c0_i32_0 = arith.constant 0 : i32
    %c0_i32_1 = arith.constant 0 : i32
    return %c0_i32, %c0_i32_0 : i32, i32
  }
  func.func @transform_20(%arg0: i32) -> (i32, i32) {
    %c0_i32 = arith.constant 0 : i32
    %c0_i32_0 = arith.constant 0 : i32
    %c0_i32_1 = arith.constant 0 : i32
    return %c0_i32, %c0_i32_0 : i32, i32
  }
  func.func @transform_21(%arg0: i32) -> (i32, i32) {
    %c0_i32 = arith.constant 0 : i32
    %c0_i32_0 = arith.constant 0 : i32
    %c0_i32_1 = arith.constant 0 : i32
    return %c0_i32, %c0_i32_0 : i32, i32
  }
  func.func @transform_22(%arg0: i32) -> (i32, i32) {
    %c0_i32 = arith.constant 0 : i32
    %c0_i32_0 = arith.constant 0 : i32
    %c0_i32_1 = arith.constant 0 : i32
    return %c0_i32, %c0_i32_0 : i32, i32
  }
  func.func @transform_23(%arg0: i32) -> (i32, i32) {
    %c0_i32 = arith.constant 0 : i32
    %c0_i32_0 = arith.constant 0 : i32
    %c0_i32_1 = arith.constant 0 : i32
    return %c0_i32, %c0_i32_0 : i32, i32
  }
  func.func @transform_24(%arg0: i32) -> (i32, i32) {
    %c0_i32 = arith.constant 0 : i32
    %c0_i32_0 = arith.constant 0 : i32
    %c0_i32_1 = arith.constant 0 : i32
    return %c0_i32, %c0_i32_0 : i32, i32
  }
  func.func @transform_25(%arg0: i32) -> (i32, i32) {
    %c0_i32 = arith.constant 0 : i32
    %c0_i32_0 = arith.constant 0 : i32
    %c0_i32_1 = arith.constant 0 : i32
    return %c0_i32, %c0_i32_0 : i32, i32
  }
  func.func @transform_26(%arg0: i32) -> (i32, i32) {
    %c0_i32 = arith.constant 0 : i32
    %c0_i32_0 = arith.constant 0 : i32
    %c0_i32_1 = arith.constant 0 : i32
    return %c0_i32, %c0_i32_0 : i32, i32
  }
  func.func @transform_27(%arg0: i32) -> (i32, i32) {
    %c0_i32 = arith.constant 0 : i32
    %c0_i32_0 = arith.constant 0 : i32
    %c0_i32_1 = arith.constant 0 : i32
    return %c0_i32, %c0_i32_0 : i32, i32
  }
  func.func @transform_28(%arg0: i32) -> (i32, i32) {
    %c0_i32 = arith.constant 0 : i32
    %c0_i32_0 = arith.constant 0 : i32
    %c0_i32_1 = arith.constant 0 : i32
    return %c0_i32, %c0_i32_0 : i32, i32
  }
  func.func @transform_29(%arg0: i32) -> (i32, i32) {
    %c0_i32 = arith.constant 0 : i32
    %c0_i32_0 = arith.constant 0 : i32
    %c0_i32_1 = arith.constant 0 : i32
    return %c0_i32, %c0_i32_0 : i32, i32
  }
  func.func @transform_30(%arg0: i32) -> (i32, i32) {
    %c0_i32 = arith.constant 0 : i32
    %c0_i32_0 = arith.constant 0 : i32
    %c0_i32_1 = arith.constant 0 : i32
    return %c0_i32, %c0_i32_0 : i32, i32
  }
  func.func @transform_31(%arg0: i32) -> (i32, i32, i32) {
    %c0_i32 = arith.constant 0 : i32
    %c0_i32_0 = arith.constant 0 : i32
    %c0_i32_1 = arith.constant 0 : i32
    return %arg0, %c0_i32, %c0_i32_0 : i32, i32, i32
  }
}

module attributes {stable_mosaic.version = 11 : i64} {
  func.func @_conv_residual_kernel(%arg0: i32, %arg1: memref<1x16x32xf32, #tpu.memory_space<vmem>>, %arg2: memref<96x32xf32, #tpu.memory_space<vmem>>, %arg3: memref<1x32xf32, #tpu.memory_space<vmem>>, %arg4: memref<1x16x32xf32, #tpu.memory_space<vmem>>, %arg5: memref<1x16x32xf32, #tpu.memory_space<vmem>>) attributes {dimension_semantics = [#tpu.dimension_semantics<parallel>], iteration_bounds = array<i64: 2>, scalar_prefetch = 0 : i64, scratch_operands = 0 : i64, tpu.core_type = #tpu.core_type<tc>, window_params = [{transform_indices = @transform_0, window_bounds = array<i64: 1, 16, 32>}, {pipeline_mode = #tpu.pipeline_mode<synchronous>, transform_indices = @transform_1, window_bounds = array<i64: 96, 32>}, {pipeline_mode = #tpu.pipeline_mode<synchronous>, transform_indices = @transform_2, window_bounds = array<i64: 1, 32>}, {transform_indices = @transform_3, window_bounds = array<i64: 1, 16, 32>}, {transform_indices = @transform_4, window_bounds = array<i64: 1, 16, 32>}]} {
    %c0 = arith.constant 0 : index
    %c0_0 = arith.constant 0 : index
    %c0_1 = arith.constant 0 : index
    %0 = vector.load %arg1[%c0, %c0_0, %c0_1] : memref<1x16x32xf32, #tpu.memory_space<vmem>>, vector<1x16x32xf32>
    %1 = vector.shape_cast %0 : vector<1x16x32xf32> to vector<16x32xf32>
    %2 = tpu.iota {dimensions = array<i32: 0>} : vector<16x32xi32>
    %c1_i32 = arith.constant 1 : i32
    %3 = tpu.dynamic_rotate %1 by %c1_i32 dim 0 : vector<16x32xf32>, i32 -> vector<16x32xf32>
    %c0_i32 = arith.constant 0 : i32
    %4 = vector.broadcast %c0_i32 : i32 to vector<16x32xi32>
    %5 = arith.cmpi eq, %2, %4 : vector<16x32xi32>
    %cst = arith.constant 0.000000e+00 : f32
    %6 = vector.broadcast %cst : f32 to vector<16x32xf32>
    %7 = arith.select %5, %6, %3 : vector<16x32xi1>, vector<16x32xf32>
    %c15_i32 = arith.constant 15 : i32
    %8 = tpu.dynamic_rotate %1 by %c15_i32 dim 0 : vector<16x32xf32>, i32 -> vector<16x32xf32>
    %c15_i32_2 = arith.constant 15 : i32
    %9 = vector.broadcast %c15_i32_2 : i32 to vector<16x32xi32>
    %10 = arith.cmpi eq, %2, %9 : vector<16x32xi32>
    %cst_3 = arith.constant 0.000000e+00 : f32
    %11 = vector.broadcast %cst_3 : f32 to vector<16x32xf32>
    %12 = arith.select %10, %11, %8 : vector<16x32xi1>, vector<16x32xf32>
    %13 = tpu.concatenate %7, %1, %12 in 1 : vector<16x32xf32>, vector<16x32xf32>, vector<16x32xf32> -> vector<16x96xf32>
    %c0_4 = arith.constant 0 : index
    %c0_5 = arith.constant 0 : index
    %14 = vector.load %arg2[%c0_4, %c0_5] : memref<96x32xf32, #tpu.memory_space<vmem>>, vector<96x32xf32>
    %cst_6 = arith.constant dense<0.000000e+00> : vector<16x32xf32>
    %15 = tpu.matmul %13, %14, %cst_6 {dimension_numbers = #tpu.dot_dimension_numbers<[1], [0], [0], [1], [0, 0, 1, 1], [], []>} : vector<16x96xf32>, vector<96x32xf32>, vector<16x32xf32> -> vector<16x32xf32>
    %c0_7 = arith.constant 0 : index
    %c0_8 = arith.constant 0 : index
    %16 = vector.load %arg3[%c0_7, %c0_8] : memref<1x32xf32, #tpu.memory_space<vmem>>, vector<1x32xf32>
    %17 = vector.broadcast %16 : vector<1x32xf32> to vector<16x32xf32>
    %18 = arith.addf %15, %17 : vector<16x32xf32>
    %c0_9 = arith.constant 0 : index
    %c0_10 = arith.constant 0 : index
    %c0_11 = arith.constant 0 : index
    %19 = vector.load %arg4[%c0_9, %c0_10, %c0_11] : memref<1x16x32xf32, #tpu.memory_space<vmem>>, vector<1x16x32xf32>
    %20 = vector.shape_cast %19 : vector<1x16x32xf32> to vector<16x32xf32>
    %21 = arith.addf %18, %20 : vector<16x32xf32>
    %c0_12 = arith.constant 0 : index
    %c0_13 = arith.constant 0 : index
    %c0_14 = arith.constant 0 : index
    %22 = vector.load %arg5[%c0_12, %c0_13, %c0_14] : memref<1x16x32xf32, #tpu.memory_space<vmem>>, vector<1x16x32xf32>
    %23 = vector.shape_cast %22 : vector<1x16x32xf32> to vector<16x32xf32>
    %24 = vector.shape_cast %21 : vector<16x32xf32> to vector<1x16x32xf32>
    tpu.vector_store %arg5[%c0_12, %c0_13, %c0_14], %24 {strides = array<i32>} : memref<1x16x32xf32, #tpu.memory_space<vmem>>, vector<1x16x32xf32>,
    return
  }
  func.func @transform_0(%arg0: i32) -> (i32, i32, i32) {
    %c0_i32 = arith.constant 0 : i32
    %c0_i32_0 = arith.constant 0 : i32
    %c0_i32_1 = arith.constant 0 : i32
    return %arg0, %c0_i32, %c0_i32_0 : i32, i32, i32
  }
  func.func @transform_1(%arg0: i32) -> (i32, i32) {
    %c0_i32 = arith.constant 0 : i32
    %c0_i32_0 = arith.constant 0 : i32
    %c0_i32_1 = arith.constant 0 : i32
    return %c0_i32, %c0_i32_0 : i32, i32
  }
  func.func @transform_2(%arg0: i32) -> (i32, i32) {
    %c0_i32 = arith.constant 0 : i32
    %c0_i32_0 = arith.constant 0 : i32
    %c0_i32_1 = arith.constant 0 : i32
    return %c0_i32, %c0_i32_0 : i32, i32
  }
  func.func @transform_3(%arg0: i32) -> (i32, i32, i32) {
    %c0_i32 = arith.constant 0 : i32
    %c0_i32_0 = arith.constant 0 : i32
    %c0_i32_1 = arith.constant 0 : i32
    return %arg0, %c0_i32, %c0_i32_0 : i32, i32, i32
  }
  func.func @transform_4(%arg0: i32) -> (i32, i32, i32) {
    %c0_i32 = arith.constant 0 : i32
    %c0_i32_0 = arith.constant 0 : i32
    %c0_i32_1 = arith.constant 0 : i32
    return %arg0, %c0_i32, %c0_i32_0 : i32, i32, i32
  }
}

module attributes {stable_mosaic.version = 11 : i64} {
  func.func @_conv_kernel(%arg0: i32, %arg1: memref<1x32x32xf32, #tpu.memory_space<vmem>>, %arg2: memref<96x32xf32, #tpu.memory_space<vmem>>, %arg3: memref<1x32xf32, #tpu.memory_space<vmem>>, %arg4: memref<1x32x32xf32, #tpu.memory_space<vmem>>) attributes {dimension_semantics = [#tpu.dimension_semantics<parallel>], iteration_bounds = array<i64: 2>, scalar_prefetch = 0 : i64, scratch_operands = 0 : i64, tpu.core_type = #tpu.core_type<tc>, window_params = [{transform_indices = @transform_0, window_bounds = array<i64: 1, 32, 32>}, {pipeline_mode = #tpu.pipeline_mode<synchronous>, transform_indices = @transform_1, window_bounds = array<i64: 96, 32>}, {pipeline_mode = #tpu.pipeline_mode<synchronous>, transform_indices = @transform_2, window_bounds = array<i64: 1, 32>}, {transform_indices = @transform_3, window_bounds = array<i64: 1, 32, 32>}]} {
    %c0 = arith.constant 0 : index
    %c0_0 = arith.constant 0 : index
    %c0_1 = arith.constant 0 : index
    %0 = vector.load %arg1[%c0, %c0_0, %c0_1] : memref<1x32x32xf32, #tpu.memory_space<vmem>>, vector<1x32x32xf32>
    %1 = vector.shape_cast %0 : vector<1x32x32xf32> to vector<32x32xf32>
    %2 = tpu.iota {dimensions = array<i32: 0>} : vector<32x32xi32>
    %c1_i32 = arith.constant 1 : i32
    %3 = tpu.dynamic_rotate %1 by %c1_i32 dim 0 : vector<32x32xf32>, i32 -> vector<32x32xf32>
    %c0_i32 = arith.constant 0 : i32
    %4 = vector.broadcast %c0_i32 : i32 to vector<32x32xi32>
    %5 = arith.cmpi eq, %2, %4 : vector<32x32xi32>
    %cst = arith.constant 0.000000e+00 : f32
    %6 = vector.broadcast %cst : f32 to vector<32x32xf32>
    %7 = arith.select %5, %6, %3 : vector<32x32xi1>, vector<32x32xf32>
    %c31_i32 = arith.constant 31 : i32
    %8 = tpu.dynamic_rotate %1 by %c31_i32 dim 0 : vector<32x32xf32>, i32 -> vector<32x32xf32>
    %c31_i32_2 = arith.constant 31 : i32
    %9 = vector.broadcast %c31_i32_2 : i32 to vector<32x32xi32>
    %10 = arith.cmpi eq, %2, %9 : vector<32x32xi32>
    %cst_3 = arith.constant 0.000000e+00 : f32
    %11 = vector.broadcast %cst_3 : f32 to vector<32x32xf32>
    %12 = arith.select %10, %11, %8 : vector<32x32xi1>, vector<32x32xf32>
    %13 = tpu.concatenate %7, %1, %12 in 1 : vector<32x32xf32>, vector<32x32xf32>, vector<32x32xf32> -> vector<32x96xf32>
    %c0_4 = arith.constant 0 : index
    %c0_5 = arith.constant 0 : index
    %14 = vector.load %arg2[%c0_4, %c0_5] : memref<96x32xf32, #tpu.memory_space<vmem>>, vector<96x32xf32>
    %cst_6 = arith.constant dense<0.000000e+00> : vector<32x32xf32>
    %15 = tpu.matmul %13, %14, %cst_6 {dimension_numbers = #tpu.dot_dimension_numbers<[1], [0], [0], [1], [0, 0, 1, 1], [], []>} : vector<32x96xf32>, vector<96x32xf32>, vector<32x32xf32> -> vector<32x32xf32>
    %c0_7 = arith.constant 0 : index
    %c0_8 = arith.constant 0 : index
    %16 = vector.load %arg3[%c0_7, %c0_8] : memref<1x32xf32, #tpu.memory_space<vmem>>, vector<1x32xf32>
    %17 = vector.broadcast %16 : vector<1x32xf32> to vector<32x32xf32>
    %18 = arith.addf %15, %17 : vector<32x32xf32>
    %cst_9 = arith.constant 0.000000e+00 : f32
    %19 = vector.broadcast %cst_9 : f32 to vector<32x32xf32>
    %20 = arith.cmpf ogt, %18, %19 : vector<32x32xf32>
    %cst_10 = arith.constant 2.000000e-01 : f32
    %21 = vector.broadcast %cst_10 : f32 to vector<32x32xf32>
    %22 = arith.mulf %21, %18 : vector<32x32xf32>
    %23 = arith.select %20, %18, %22 : vector<32x32xi1>, vector<32x32xf32>
    %c0_11 = arith.constant 0 : index
    %c0_12 = arith.constant 0 : index
    %c0_13 = arith.constant 0 : index
    %24 = vector.load %arg4[%c0_11, %c0_12, %c0_13] : memref<1x32x32xf32, #tpu.memory_space<vmem>>, vector<1x32x32xf32>
    %25 = vector.shape_cast %24 : vector<1x32x32xf32> to vector<32x32xf32>
    %26 = vector.shape_cast %23 : vector<32x32xf32> to vector<1x32x32xf32>
    tpu.vector_store %arg4[%c0_11, %c0_12, %c0_13], %26 {strides = array<i32>} : memref<1x32x32xf32, #tpu.memory_space<vmem>>, vector<1x32x32xf32>,
    return
  }
  func.func @transform_0(%arg0: i32) -> (i32, i32, i32) {
    %c0_i32 = arith.constant 0 : i32
    %c0_i32_0 = arith.constant 0 : i32
    %c0_i32_1 = arith.constant 0 : i32
    return %arg0, %c0_i32, %c0_i32_0 : i32, i32, i32
  }
  func.func @transform_1(%arg0: i32) -> (i32, i32) {
    %c0_i32 = arith.constant 0 : i32
    %c0_i32_0 = arith.constant 0 : i32
    %c0_i32_1 = arith.constant 0 : i32
    return %c0_i32, %c0_i32_0 : i32, i32
  }
  func.func @transform_2(%arg0: i32) -> (i32, i32) {
    %c0_i32 = arith.constant 0 : i32
    %c0_i32_0 = arith.constant 0 : i32
    %c0_i32_1 = arith.constant 0 : i32
    return %c0_i32, %c0_i32_0 : i32, i32
  }
  func.func @transform_3(%arg0: i32) -> (i32, i32, i32) {
    %c0_i32 = arith.constant 0 : i32
    %c0_i32_0 = arith.constant 0 : i32
    %c0_i32_1 = arith.constant 0 : i32
    return %arg0, %c0_i32, %c0_i32_0 : i32, i32, i32
  }
}

module attributes {stable_mosaic.version = 11 : i64} {
  func.func @_conv_kernel(%arg0: i32, %arg1: memref<1x64x32xf32, #tpu.memory_space<vmem>>, %arg2: memref<96x32xf32, #tpu.memory_space<vmem>>, %arg3: memref<1x32xf32, #tpu.memory_space<vmem>>, %arg4: memref<1x64x32xf32, #tpu.memory_space<vmem>>) attributes {dimension_semantics = [#tpu.dimension_semantics<parallel>], iteration_bounds = array<i64: 2>, scalar_prefetch = 0 : i64, scratch_operands = 0 : i64, tpu.core_type = #tpu.core_type<tc>, window_params = [{transform_indices = @transform_0, window_bounds = array<i64: 1, 64, 32>}, {pipeline_mode = #tpu.pipeline_mode<synchronous>, transform_indices = @transform_1, window_bounds = array<i64: 96, 32>}, {pipeline_mode = #tpu.pipeline_mode<synchronous>, transform_indices = @transform_2, window_bounds = array<i64: 1, 32>}, {transform_indices = @transform_3, window_bounds = array<i64: 1, 64, 32>}]} {
    %c0 = arith.constant 0 : index
    %c0_0 = arith.constant 0 : index
    %c0_1 = arith.constant 0 : index
    %0 = vector.load %arg1[%c0, %c0_0, %c0_1] : memref<1x64x32xf32, #tpu.memory_space<vmem>>, vector<1x64x32xf32>
    %1 = vector.shape_cast %0 : vector<1x64x32xf32> to vector<64x32xf32>
    %2 = tpu.iota {dimensions = array<i32: 0>} : vector<64x32xi32>
    %c1_i32 = arith.constant 1 : i32
    %3 = tpu.dynamic_rotate %1 by %c1_i32 dim 0 : vector<64x32xf32>, i32 -> vector<64x32xf32>
    %c0_i32 = arith.constant 0 : i32
    %4 = vector.broadcast %c0_i32 : i32 to vector<64x32xi32>
    %5 = arith.cmpi eq, %2, %4 : vector<64x32xi32>
    %cst = arith.constant 0.000000e+00 : f32
    %6 = vector.broadcast %cst : f32 to vector<64x32xf32>
    %7 = arith.select %5, %6, %3 : vector<64x32xi1>, vector<64x32xf32>
    %c63_i32 = arith.constant 63 : i32
    %8 = tpu.dynamic_rotate %1 by %c63_i32 dim 0 : vector<64x32xf32>, i32 -> vector<64x32xf32>
    %c63_i32_2 = arith.constant 63 : i32
    %9 = vector.broadcast %c63_i32_2 : i32 to vector<64x32xi32>
    %10 = arith.cmpi eq, %2, %9 : vector<64x32xi32>
    %cst_3 = arith.constant 0.000000e+00 : f32
    %11 = vector.broadcast %cst_3 : f32 to vector<64x32xf32>
    %12 = arith.select %10, %11, %8 : vector<64x32xi1>, vector<64x32xf32>
    %13 = tpu.concatenate %7, %1, %12 in 1 : vector<64x32xf32>, vector<64x32xf32>, vector<64x32xf32> -> vector<64x96xf32>
    %c0_4 = arith.constant 0 : index
    %c0_5 = arith.constant 0 : index
    %14 = vector.load %arg2[%c0_4, %c0_5] : memref<96x32xf32, #tpu.memory_space<vmem>>, vector<96x32xf32>
    %cst_6 = arith.constant dense<0.000000e+00> : vector<64x32xf32>
    %15 = tpu.matmul %13, %14, %cst_6 {dimension_numbers = #tpu.dot_dimension_numbers<[1], [0], [0], [1], [0, 0, 1, 1], [], []>} : vector<64x96xf32>, vector<96x32xf32>, vector<64x32xf32> -> vector<64x32xf32>
    %c0_7 = arith.constant 0 : index
    %c0_8 = arith.constant 0 : index
    %16 = vector.load %arg3[%c0_7, %c0_8] : memref<1x32xf32, #tpu.memory_space<vmem>>, vector<1x32xf32>
    %17 = vector.broadcast %16 : vector<1x32xf32> to vector<64x32xf32>
    %18 = arith.addf %15, %17 : vector<64x32xf32>
    %cst_9 = arith.constant 0.000000e+00 : f32
    %19 = vector.broadcast %cst_9 : f32 to vector<64x32xf32>
    %20 = arith.cmpf ogt, %18, %19 : vector<64x32xf32>
    %cst_10 = arith.constant 2.000000e-01 : f32
    %21 = vector.broadcast %cst_10 : f32 to vector<64x32xf32>
    %22 = arith.mulf %21, %18 : vector<64x32xf32>
    %23 = arith.select %20, %18, %22 : vector<64x32xi1>, vector<64x32xf32>
    %c0_11 = arith.constant 0 : index
    %c0_12 = arith.constant 0 : index
    %c0_13 = arith.constant 0 : index
    %24 = vector.load %arg4[%c0_11, %c0_12, %c0_13] : memref<1x64x32xf32, #tpu.memory_space<vmem>>, vector<1x64x32xf32>
    %25 = vector.shape_cast %24 : vector<1x64x32xf32> to vector<64x32xf32>
    %26 = vector.shape_cast %23 : vector<64x32xf32> to vector<1x64x32xf32>
    tpu.vector_store %arg4[%c0_11, %c0_12, %c0_13], %26 {strides = array<i32>} : memref<1x64x32xf32, #tpu.memory_space<vmem>>, vector<1x64x32xf32>,
    return
  }
  func.func @transform_0(%arg0: i32) -> (i32, i32, i32) {
    %c0_i32 = arith.constant 0 : i32
    %c0_i32_0 = arith.constant 0 : i32
    %c0_i32_1 = arith.constant 0 : i32
    return %arg0, %c0_i32, %c0_i32_0 : i32, i32, i32
  }
  func.func @transform_1(%arg0: i32) -> (i32, i32) {
    %c0_i32 = arith.constant 0 : i32
    %c0_i32_0 = arith.constant 0 : i32
    %c0_i32_1 = arith.constant 0 : i32
    return %c0_i32, %c0_i32_0 : i32, i32
  }
  func.func @transform_2(%arg0: i32) -> (i32, i32) {
    %c0_i32 = arith.constant 0 : i32
    %c0_i32_0 = arith.constant 0 : i32
    %c0_i32_1 = arith.constant 0 : i32
    return %c0_i32, %c0_i32_0 : i32, i32
  }
  func.func @transform_3(%arg0: i32) -> (i32, i32, i32) {
    %c0_i32 = arith.constant 0 : i32
    %c0_i32_0 = arith.constant 0 : i32
    %c0_i32_1 = arith.constant 0 : i32
    return %arg0, %c0_i32, %c0_i32_0 : i32, i32, i32
  }
}

module attributes {stable_mosaic.version = 11 : i64} {
  func.func @_conv_kernel(%arg0: i32, %arg1: memref<1x64x32xf32, #tpu.memory_space<vmem>>, %arg2: memref<96x4xf32, #tpu.memory_space<vmem>>, %arg3: memref<1x4xf32, #tpu.memory_space<vmem>>, %arg4: memref<1x64x4xf32, #tpu.memory_space<vmem>>) attributes {dimension_semantics = [#tpu.dimension_semantics<parallel>], iteration_bounds = array<i64: 2>, scalar_prefetch = 0 : i64, scratch_operands = 0 : i64, tpu.core_type = #tpu.core_type<tc>, window_params = [{transform_indices = @transform_0, window_bounds = array<i64: 1, 64, 32>}, {pipeline_mode = #tpu.pipeline_mode<synchronous>, transform_indices = @transform_1, window_bounds = array<i64: 96, 4>}, {pipeline_mode = #tpu.pipeline_mode<synchronous>, transform_indices = @transform_2, window_bounds = array<i64: 1, 4>}, {transform_indices = @transform_3, window_bounds = array<i64: 1, 64, 4>}]} {
    %c0 = arith.constant 0 : index
    %c0_0 = arith.constant 0 : index
    %c0_1 = arith.constant 0 : index
    %0 = vector.load %arg1[%c0, %c0_0, %c0_1] : memref<1x64x32xf32, #tpu.memory_space<vmem>>, vector<1x64x32xf32>
    %1 = vector.shape_cast %0 : vector<1x64x32xf32> to vector<64x32xf32>
    %2 = tpu.iota {dimensions = array<i32: 0>} : vector<64x32xi32>
    %c1_i32 = arith.constant 1 : i32
    %3 = tpu.dynamic_rotate %1 by %c1_i32 dim 0 : vector<64x32xf32>, i32 -> vector<64x32xf32>
    %c0_i32 = arith.constant 0 : i32
    %4 = vector.broadcast %c0_i32 : i32 to vector<64x32xi32>
    %5 = arith.cmpi eq, %2, %4 : vector<64x32xi32>
    %cst = arith.constant 0.000000e+00 : f32
    %6 = vector.broadcast %cst : f32 to vector<64x32xf32>
    %7 = arith.select %5, %6, %3 : vector<64x32xi1>, vector<64x32xf32>
    %c63_i32 = arith.constant 63 : i32
    %8 = tpu.dynamic_rotate %1 by %c63_i32 dim 0 : vector<64x32xf32>, i32 -> vector<64x32xf32>
    %c63_i32_2 = arith.constant 63 : i32
    %9 = vector.broadcast %c63_i32_2 : i32 to vector<64x32xi32>
    %10 = arith.cmpi eq, %2, %9 : vector<64x32xi32>
    %cst_3 = arith.constant 0.000000e+00 : f32
    %11 = vector.broadcast %cst_3 : f32 to vector<64x32xf32>
    %12 = arith.select %10, %11, %8 : vector<64x32xi1>, vector<64x32xf32>
    %13 = tpu.concatenate %7, %1, %12 in 1 : vector<64x32xf32>, vector<64x32xf32>, vector<64x32xf32> -> vector<64x96xf32>
    %c0_4 = arith.constant 0 : index
    %c0_5 = arith.constant 0 : index
    %14 = vector.load %arg2[%c0_4, %c0_5] : memref<96x4xf32, #tpu.memory_space<vmem>>, vector<96x4xf32>
    %cst_6 = arith.constant dense<0.000000e+00> : vector<64x4xf32>
    %15 = tpu.matmul %13, %14, %cst_6 {dimension_numbers = #tpu.dot_dimension_numbers<[1], [0], [0], [1], [0, 0, 1, 1], [], []>} : vector<64x96xf32>, vector<96x4xf32>, vector<64x4xf32> -> vector<64x4xf32>
    %c0_7 = arith.constant 0 : index
    %c0_8 = arith.constant 0 : index
    %16 = vector.load %arg3[%c0_7, %c0_8] : memref<1x4xf32, #tpu.memory_space<vmem>>, vector<1x4xf32>
    %17 = vector.broadcast %16 : vector<1x4xf32> to vector<64x4xf32>
    %18 = arith.addf %15, %17 : vector<64x4xf32>
    %c0_9 = arith.constant 0 : index
    %c0_10 = arith.constant 0 : index
    %c0_11 = arith.constant 0 : index
    %19 = vector.load %arg4[%c0_9, %c0_10, %c0_11] : memref<1x64x4xf32, #tpu.memory_space<vmem>>, vector<1x64x4xf32>
    %20 = vector.shape_cast %19 : vector<1x64x4xf32> to vector<64x4xf32>
    %21 = vector.shape_cast %18 : vector<64x4xf32> to vector<1x64x4xf32>
    tpu.vector_store %arg4[%c0_9, %c0_10, %c0_11], %21 {strides = array<i32>} : memref<1x64x4xf32, #tpu.memory_space<vmem>>, vector<1x64x4xf32>,
    return
  }
  func.func @transform_0(%arg0: i32) -> (i32, i32, i32) {
    %c0_i32 = arith.constant 0 : i32
    %c0_i32_0 = arith.constant 0 : i32
    %c0_i32_1 = arith.constant 0 : i32
    return %arg0, %c0_i32, %c0_i32_0 : i32, i32, i32
  }
  func.func @transform_1(%arg0: i32) -> (i32, i32) {
    %c0_i32 = arith.constant 0 : i32
    %c0_i32_0 = arith.constant 0 : i32
    %c0_i32_1 = arith.constant 0 : i32
    return %c0_i32, %c0_i32_0 : i32, i32
  }
  func.func @transform_2(%arg0: i32) -> (i32, i32) {
    %c0_i32 = arith.constant 0 : i32
    %c0_i32_0 = arith.constant 0 : i32
    %c0_i32_1 = arith.constant 0 : i32
    return %c0_i32, %c0_i32_0 : i32, i32
  }
  func.func @transform_3(%arg0: i32) -> (i32, i32, i32) {
    %c0_i32 = arith.constant 0 : i32
    %c0_i32_0 = arith.constant 0 : i32
    %c0_i32_1 = arith.constant 0 : i32
    return %arg0, %c0_i32, %c0_i32_0 : i32, i32, i32
  }
}

</mosaic_0001>

<llo_original>
// kernel: rrdbnet_forward.9
$region0: #{rrdbnet_forward.9}
  #allocation0 [shape = 'u32[]', space=smem, size = 0x4, offset = 0x4, fixed_abs, tag = 'smem constant byte address 0x4 - core index']
  #allocation1 [shape = 'u32[144,128]{1,0:T(1,128)}', space=vmem, size = 0x12000, scoped, tag = 'internal scratch']
  %s0 = inlined_call_operand.vmem [shape: f32[2,16,32], index: 0, kind: input, shape index: {}]
  %s1 = inlined_call_operand.vmem [shape: f32[96,32], index: 1, kind: input, shape index: {}]
  %s2 = inlined_call_operand.vmem [shape: f32[1,32], index: 2, kind: input, shape index: {}]
  %s3 = inlined_call_operand.vmem [shape: f32[2,16,32], index: 3, kind: input, shape index: {}]
  %s4 = inlined_call_operand.vmem [shape: f32[2,16,32], index: 4, kind: output, shape index: {}]
  %s5 = sld [smem:[#allocation0]]
  $region49: #{rrdbnet_forward.9} parent=0
    _
  %s7 = ssub.s32 1, %s5
  %s8 = scalar_select 0, %s7, %s5
  loop: start=0, step=1, limit=4
  $region2: #{rrdbnet_forward.9} parent=0 // loop_pre_header
    _
  $region3: #{rrdbnet_forward.9} parent=0 // loop_header
    %s10 = sphi 0, %s14
    %p11 = scmp.ge.s32.totalorder %s10, 4
    %s20 = sphi 0, %s22
    %s23 = sphi 0, %s20
    %s24 = sphi 0, %s23
    %s40 = sphi 0, %s24
    %s44 = sphi 0, %s44
    %s46 = sphi 0, %s44
    %s47 = sphi 0, %s46
    %s61 = sphi 0, %s47
    %s65 = sphi 0, %s65
    %s67 = sphi 0, %s65
    %s68 = sphi 0, %s67
    %s82 = sphi 0, %s68
    %s88 = sphi 0, %s90
    %s91 = sphi 0, %s88
    %s92 = sphi 0, %s91
    %s108 = sphi 0, %s92
    %s114 = sphi 0, %s116
    %s117 = sphi 0, %s114
    %s118 = sphi 0, %s117
    %s134 = sphi 0, %s118
  $region4: #{rrdbnet_forward.9} parent=0 // loop_header_branch
    %13 = sbr.rel (%p11) target = $region8
  $region5: #{rrdbnet_forward.9} parent=0 // loop_body
    %s15 = ssub.s32 %s10, 1
    %s16 = ssub.s32 %s10, 2
    %s17 = sadd.s32 %s10, 1
    %s18 = ssub.s32 %s10, %s17
    %p19 = scmp.eq.s32.totalorder %s18, 0
    %s21 = sadd.s32 %s20, 1
    %s22 = scalar_select %p19, %s20, %s21
    %p25 = pneg %p19
    %p26 = scmp.eq.s32.totalorder %s10, 1
    %p27 = por %p25, %p26
    %p28 = scmp.ne.s32.totalorder %s20, %s23
    %p29 = scmp.eq.s32.totalorder %s10, 0
    %p30 = por %p28, %p29
    %p31 = scmp.ne.s32.totalorder %s20, %s23
    %p32 = scmp.eq.s32.totalorder %s15, 1
    %p33 = por %p31, %p32
    %p34 = scmp.ne.s32.totalorder %s23, %s24
    %p35 = scmp.eq.s32.totalorder %s15, 0
    %p36 = por %p34, %p35
    %p37 = scmp.ne.s32.totalorder %s23, %s24
    %p38 = scmp.eq.s32.totalorder %s16, 1
    %p39 = por %p37, %p38
    %p41 = scmp.ne.s32.totalorder %s24, %s40
    %p42 = scmp.eq.s32.totalorder %s16, 0
    %p43 = por %p41, %p42
    %s45 = sadd.s32 %s44, 1
    %p48 = scmp.eq.s32.totalorder %s10, 1
    %p49 = scmp.ne.s32.totalorder %s44, %s46
    %p50 = scmp.eq.s32.totalorder %s10, 0
    %p51 = por %p49, %p50
    %p52 = scmp.ne.s32.totalorder %s44, %s46
    %p53 = scmp.eq.s32.totalorder %s15, 1
    %p54 = por %p52, %p53
    %p55 = scmp.ne.s32.totalorder %s46, %s47
    %p56 = scmp.eq.s32.totalorder %s15, 0
    %p57 = por %p55, %p56
    %p58 = scmp.ne.s32.totalorder %s46, %s47
    %p59 = scmp.eq.s32.totalorder %s16, 1
    %p60 = por %p58, %p59
    %p62 = scmp.ne.s32.totalorder %s47, %s61
    %p63 = scmp.eq.s32.totalorder %s16, 0
    %p64 = por %p62, %p63
    %s66 = sadd.s32 %s65, 1
    %p69 = scmp.eq.s32.totalorder %s10, 1
    %p70 = scmp.ne.s32.totalorder %s65, %s67
    %p71 = scmp.eq.s32.totalorder %s10, 0
    %p72 = por %p70, %p71
    %p73 = scmp.ne.s32.totalorder %s65, %s67
    %p74 = scmp.eq.s32.totalorder %s15, 1
    %p75 = por %p73, %p74
    %p76 = scmp.ne.s32.totalorder %s67, %s68
    %p77 = scmp.eq.s32.totalorder %s15, 0
    %p78 = por %p76, %p77
    %p79 = scmp.ne.s32.totalorder %s67, %s68
    %p80 = scmp.eq.s32.totalorder %s16, 1
    %p81 = por %p79, %p80
    %p83 = scmp.ne.s32.totalorder %s68, %s82
    %p84 = scmp.eq.s32.totalorder %s16, 0
    %p85 = por %p83, %p84
    %s86 = ssub.s32 %s10, %s17
    %p87 = scmp.eq.s32.totalorder %s86, 0
    %s89 = sadd.s32 %s88, 1
    %s90 = scalar_select %p87, %s88, %s89
    %p93 = pneg %p87
    %p94 = scmp.eq.s32.totalorder %s10, 1
    %p95 = por %p93, %p94
    %p96 = scmp.ne.s32.totalorder %s88, %s91
    %p97 = scmp.eq.s32.totalorder %s10, 0
    %p98 = por %p96, %p97
    %p99 = scmp.ne.s32.totalorder %s88, %s91
    %p100 = scmp.eq.s32.totalorder %s15, 1
    %p101 = por %p99, %p100
    %p102 = scmp.ne.s32.totalorder %s91, %s92
    %p103 = scmp.eq.s32.totalorder %s15, 0
    %p104 = por %p102, %p103
    %p105 = scmp.ne.s32.totalorder %s91, %s92
    %p106 = scmp.eq.s32.totalorder %s16, 1
    %p107 = por %p105, %p106
    %p109 = scmp.ne.s32.totalorder %s92, %s108
    %p110 = scmp.eq.s32.totalorder %s16, 0
    %p111 = por %p109, %p110
    %s112 = ssub.s32 %s10, %s17
    %p113 = scmp.eq.s32.totalorder %s112, 0
    %s115 = sadd.s32 %s114, 1
    %s116 = scalar_select %p113, %s114, %s115
    %p119 = pneg %p113
    %p120 = scmp.eq.s32.totalorder %s10, 1
    %p121 = por %p119, %p120
    %p122 = scmp.ne.s32.totalorder %s114, %s117
    %p123 = scmp.eq.s32.totalorder %s10, 0
    %p124 = por %p122, %p123
    %p125 = scmp.ne.s32.totalorder %s114, %s117
    %p126 = scmp.eq.s32.totalorder %s15, 1
    %p127 = por %p125, %p126
    %p128 = scmp.ne.s32.totalorder %s117, %s118
    %p129 = scmp.eq.s32.totalorder %s15, 0
    %p130 = por %p128, %p129
    %p131 = scmp.ne.s32.totalorder %s117, %s118
    %p132 = scmp.eq.s32.totalorder %s16, 1
    %p133 = por %p131, %p132
    %p135 = scmp.ne.s32.totalorder %s118, %s134
    %p136 = scmp.eq.s32.totalorder %s16, 0
    %p137 = por %p135, %p136
    %p138 = scmp.le.s32.totalorder 1, %s10
    %p139 = scmp.lt.s32.totalorder %s10, 3
    %p140 = pnand %p138, %p139
    %p141 = pneg %p140
    // Predicated region
    $region9: #{rrdbnet_forward.9} parent=5 // pred_check
      _
    $region10: #{rrdbnet_forward.9} parent=5 // pred_check_branch
      %143 = sbr.rel (%p140) target = $region12
    $region11: #{rrdbnet_forward.9} parent=5 // pred_region
      %s144 = ssub.s32 %s10, 1
      // Predicated region
      $region13: #{rrdbnet_forward.9} parent=11 // pred_check
        %p145 = pneg %p57
      $region14: #{rrdbnet_forward.9} parent=11 // pred_check_branch
        %147 = sbr.rel (%p145) target = $region16
      $region15: #{rrdbnet_forward.9} parent=11 // pred_region
        _
      $region16: #{rrdbnet_forward.9} parent=11 // pred_fallthru
        _
      // Predicated region
      $region17: #{rrdbnet_forward.9} parent=11 // pred_check
        %p148 = pneg %p78
      $region18: #{rrdbnet_forward.9} parent=11 // pred_check_branch
        %150 = sbr.rel (%p148) target = $region20
      $region19: #{rrdbnet_forward.9} parent=11 // pred_region
        _
      $region20: #{rrdbnet_forward.9} parent=11 // pred_fallthru
        _
    $region12: #{rrdbnet_forward.9} parent=5 // pred_fallthru
      _
    %p151 = scmp.lt.s32.totalorder %s10, 2
    // Predicated region
    $region21: #{rrdbnet_forward.9} parent=5 // pred_check
      %p152 = pneg %p151
    $region22: #{rrdbnet_forward.9} parent=5 // pred_check_branch
      %154 = sbr.rel (%p152) target = $region24
    $region23: #{rrdbnet_forward.9} parent=5 // pred_region
      // Predicated region
      $region25: #{rrdbnet_forward.9} parent=23 // pred_check
        %p155 = pneg %p30
      $region26: #{rrdbnet_forward.9} parent=23 // pred_check_branch
        %157 = sbr.rel (%p155) target = $region28
      $region27: #{rrdbnet_forward.9} parent=23 // pred_region
        %p158 = scmp.lt.s32.totalorder %s10, 1
        %s159 = scalar_select %p158, %s10, 1
        %s160 = smul.addr %s159, 2
        %s161 = smul.addr %s160, 8
        %s162 = scalar_lea.vmem %s0, %s161
      $region28: #{rrdbnet_forward.9} parent=23 // pred_fallthru
        _
      // Predicated region
      $region29: #{rrdbnet_forward.9} parent=23 // pred_check
        %p163 = pneg %p98
      $region30: #{rrdbnet_forward.9} parent=23 // pred_check_branch
        %165 = sbr.rel (%p163) target = $region32
      $region31: #{rrdbnet_forward.9} parent=23 // pred_region
        %p166 = scmp.lt.s32.totalorder %s10, 1
        %s167 = scalar_select %p166, %s10, 1
        %s168 = smul.addr %s167, 2
        %s169 = smul.addr %s168, 8
        %s170 = scalar_lea.vmem %s3, %s169
      $region32: #{rrdbnet_forward.9} parent=23 // pred_fallthru
        _
    $region24: #{rrdbnet_forward.9} parent=5 // pred_fallthru
      _
    %p171 = scmp.le.s32.totalorder 1, %s10
    %p172 = scmp.lt.s32.totalorder %s10, 3
    %p173 = pnand %p171, %p172
    %p174 = pneg %p173
    // Predicated region
    $region33: #{rrdbnet_forward.9} parent=5 // pred_check
      _
    $region34: #{rrdbnet_forward.9} parent=5 // pred_check_branch
      %176 = sbr.rel (%p173) target = $region36
    $region35: #{rrdbnet_forward.9} parent=5 // pred_region
      %s177 = ssub.s32 %s10, 1
      %p178 = scmp.lt.s32.totalorder %s15, 1
      %s179 = scalar_select %p178, %s15, 1
      %s180 = smul.addr %s179, 2
      %s181 = smul.addr %s180, 8
      %s182 = scalar_lea.vmem %s0, %s181
      %p183 = pneg %p36
      %p184 = pneg %p33
      %p185 = pneg %p57
      %p186 = pneg %p54
      %p187 = pneg %p78
      %p188 = pneg %p75
      %p189 = scmp.lt.s32.totalorder %s15, 1
      %s190 = scalar_select %p189, %s15, 1
      %s191 = smul.addr %s190, 2
      %s192 = smul.addr %s191, 8
      %s193 = scalar_lea.vmem %s3, %s192
      %p194 = pneg %p104
      %p195 = pneg %p101
      %p196 = pneg %p130
      %p197 = pneg %p127
      %p198 = scmp.lt.s32.totalorder %s15, 1
      %s199 = scalar_select %p198, %s15, 1
      %s200 = smul.addr %s199, 2
      %s201 = smul.addr %s200, 8
      %s202 = scalar_lea.vmem %s4, %s201
      %p203 = scmp.lt.s32.totalorder %s15, 1
      %s204 = scalar_select %p203, %s15, 1
      %s205 = smul.addr %s204, 2
      %s206 = smul.addr %s205, 8
      %s207 = scalar_lea.vmem %s0, %s206
      %p208 = scmp.lt.s32.totalorder %s15, 1
      %s209 = scalar_select %p208, %s15, 1
      %s210 = smul.addr %s209, 2
      %s211 = smul.addr %s210, 8
      %s212 = scalar_lea.vmem %s3, %s211
      %p213 = scmp.lt.s32.totalorder %s15, 1
      %s214 = scalar_select %p213, %s15, 1
      %s215 = smul.addr %s214, 2
      %s216 = smul.addr %s215, 8
      %s217 = scalar_lea.vmem %s4, %s216
      %v218 = vld [vmem:[%s207] sm:$0xff]
      %v219 = vld [vmem:[%s207 + $0x8] sm:$0xff]
      %v220 = vlaneseq
      %v221 = vshrl.u32 %v220, 7
      %v222 = vadd.s32 %v221, 8
      %v223 = vrot.slane %v218, 7
      %v224 = vrot.slane %v219, 7
      %vm225 = vcmp.lt.s32.totalorder %v221, 1
      %v226 = vsel %vm225, %v223, %v224
      %v227 = vsel %vm225, %v224, %v223
      %vm228 = vcmp.eq.s32.totalorder %v221, 0
      %vm229 = vcmp.eq.s32.totalorder %v222, 0
      %v230 = vsel %vm228, 0.0, %v227
      %v231 = vsel %vm229, 0.0, %v226
      %v232 = vrot.slane %v218, 1
      %v233 = vrot.slane %v219, 1
      %vm234 = vcmp.lt.s32.totalorder %v221, 7
      %v235 = vsel %vm234, %v232, %v233
      %v236 = vsel %vm234, %v233, %v232
      %vm237 = vcmp.eq.s32.totalorder %v221, 15
      %vm238 = vcmp.eq.s32.totalorder %v222, 15
      %v239 = vsel %vm237, 0.0, %v235
      %v240 = vsel %vm238, 0.0, %v236
      %243 = vrot.lane.b32.xlu0 %v218, 32
      %v244 = vpop.permute.xlu0 %243
      %245 = vrot.lane.b32.xlu0 %v219, 32
      %v246 = vpop.permute.xlu0 %245
      %251 = vrot.lane.b32.xlu0 %v239, 64
      %v252 = vpop.permute.xlu0 %251
      %253 = vrot.lane.b32.xlu0 %v240, 64
      %v254 = vpop.permute.xlu0 %253
      %vm257 = vcmask 261120
      %v258 = vsel %vm257, %v230, %v244
      %v259 = vsel %vm257, %v231, %v246
      %vm260 = vcmask 523264
      %v261 = vsel %vm260, %v258, %v252
      %v262 = vsel %vm260, %v259, %v254
      %v263 = vld [vmem:[%s1] sm:$0xff]
      %v264 = vld [vmem:[%s1 + $0x8] sm:$0xff]
      %v265 = vld [vmem:[%s1 + $0x10] sm:$0xff]
      %v266 = vld [vmem:[%s1 + $0x18] sm:$0xff]
      %v267 = vld [vmem:[%s1 + $0x20] sm:$0xff]
      %v268 = vld [vmem:[%s1 + $0x28] sm:$0xff]
      %v269 = vld [vmem:[%s1 + $0x30] sm:$0xff]
      %v270 = vld [vmem:[%s1 + $0x38] sm:$0xff]
      %v271 = vld [vmem:[%s1 + $0x40] sm:$0xff]
      %v272 = vld [vmem:[%s1 + $0x48] sm:$0xff]
      %v273 = vld [vmem:[%s1 + $0x50] sm:$0xff]
      %v274 = vld [vmem:[%s1 + $0x58] sm:$0xff]
      %v275 = vld [vmem:[%s2] sm:$0x1]
      %v277 = vlaneseq
      %v278 = vshrl.u32 %v277, 7
      %v279 = vsub.s32 0, %v278
      %v280 = vrot.slane %v275, %v279
      %vm282 = vcmask 785408
      %v284 = vsel %vm282, %v261, 0
      %v287 = vsel %vm282, %v262, 0
      %289 = vmatprep.subr.mxu0 0.0
      %290 = vmatpush1.msra.mxu0 %v263
      %291 = vmatprep.subr.mxu0 0.0
      %292 = vmatpush1.msra.mxu0 %v264
      %293 = vmatprep.subr.mxu0 0.0
      %294 = vmatpush1.msra.mxu0 %v265
      %295 = vmatprep.subr.mxu0 0.0
      %296 = vmatpush1.msra.mxu0 %v266
      %297 = vmatprep.subr.mxu0 0.0
      %298 = vmatpush1.msra.mxu0 %v267
      %299 = vmatprep.subr.mxu0 0.0
      %300 = vmatpush1.msra.mxu0 %v268
      %301 = vmatprep.subr.mxu0 0.0
      %302 = vmatpush1.msra.mxu0 %v269
      %303 = vmatprep.subr.mxu0 0.0
      %304 = vmatpush1.msra.mxu0 %v270
      %305 = vmatprep.subr.mxu0 0.0
      %306 = vmatpush1.msra.mxu0 %v271
      %307 = vmatprep.subr.mxu0 0.0
      %308 = vmatpush1.msra.mxu0 %v272
      %309 = vmatprep.subr.mxu0 0.0
      %310 = vmatpush1.msra.mxu0 %v273
      %311 = vmatprep.subr.mxu0 0.0
      %312 = vmatpush1.msra.mxu0 %v274
      %313 = vmatprep.subr.mxu0 0.0
      %314 = vmatpush1.msra.mxu0 0.0
      %315 = vmatprep.subr.mxu0 0.0
      %316 = vmatpush1.msra.mxu0 0.0
      %317 = vmatprep.subr.mxu0 0.0
      %318 = vmatpush1.msra.mxu0 0.0
      %319 = vmatprep.subr.mxu0 0.0
      %320 = vmatpush1.msra.mxu0 0.0
      %321 = vmatprep.subr.mxu0 0.0
      %322 = vmatpush1.msra.mxu0 0.0
      %323 = vmatprep.subr.mxu0 0.0
      %324 = vmatpush1.msra.mxu0 0.0
      %325 = vmatprep.subr.mxu0 0.0
      %326 = vmatpush1.msra.mxu0 0.0
      %327 = vmatprep.subr.mxu0 0.0
      %328 = vmatpush1.msra.mxu0 0.0
      %329 = vmatprep.subr.mxu0 0.0
      %330 = vmatpush1.msra.mxu0 0.0
      %331 = vmatprep.subr.mxu0 0.0
      %332 = vmatpush1.msra.mxu0 0.0
      %333 = vmatprep.subr.mxu0 0.0
      %334 = vmatpush1.msra.mxu0 0.0
      %335 = vmatprep.subr.mxu0 0.0
      %336 = vmatpush1.msra.mxu0 0.0
      %337 = vmatprep.subr.mxu0 0.0
      %338 = vmatpush1.msra.mxu0 0.0
      %339 = vmatprep.subr.mxu0 0.0
      %340 = vmatpush1.msra.mxu0 0.0
      %341 = vmatprep.subr.mxu0 0.0
      %342 = vmatpush1.msra.mxu0 0.0
      %343 = vmatprep.subr.mxu0 0.0
      %344 = vmatpush1.msra.mxu0 0.0
      %345 = vmatprep.subr.mxu0 0.0
      %346 = vmatpush1.msra.mxu0 0.0
      %347 = vmatprep.subr.mxu0 0.0
      %348 = vmatpush1.msra.mxu0 0.0
      %349 = vmatprep.subr.mxu0 0.0
      %350 = vmatpush1.msra.mxu0 0.0
      %351 = vmatprep.subr.mxu0 0.0
      %352 = vmatpush1.msra.mxu0 0.0
      %353 = vmatprep.mubr.f32.mxu0 0.0
      %354 = vmatmul.mubr.f32.gmra.mrb[0].mxu0 %v284
      %v355 = vpop.f32.mrb[0].mxu0
      %v356 = vadd.f32 %v280, %v355
      %v357 = vpop.f32.mrb[0].mxu0
      %358 = vmatprep.mubr.f32.mxu0 0.0
      %359 = vmatmul.mubr.f32.gmra.mrb[0].mxu0 %v287
      %v360 = vpop.f32.mrb[0].mxu0
      %v361 = vadd.f32 %v280, %v360
      %v362 = vpop.f32.mrb[0].mxu0
      %363 = vdwg.mxu0
      %v364 = vld [vmem:[%s212] sm:$0xff]
      %v365 = vld [vmem:[%s212 + $0x8] sm:$0xff]
      %v366 = vadd.f32 %v356, %v364
      %v367 = vadd.f32 %v361, %v365
      %368 = vst.msk [vmem:[%s217] sm:$0xff] %vm257, %v366
      %369 = vst.msk [vmem:[%s217 + $0x8] sm:$0xff] %vm257, %v367
      %p370 = scmp.lt.s32.totalorder %s15, 1
      %s371 = scalar_select %p370, %s15, 1
      %s372 = smul.addr %s371, 2
      %s373 = smul.addr %s372, 8
      %s374 = scalar_lea.vmem %s4, %s373
      // Predicated region
      $region37: #{rrdbnet_forward.9} parent=35 // pred_check
        %p375 = pneg %p127
      $region38: #{rrdbnet_forward.9} parent=35 // pred_check_branch
        %377 = sbr.rel (%p375) target = $region40
      $region39: #{rrdbnet_forward.9} parent=35 // pred_region
        _
      $region40: #{rrdbnet_forward.9} parent=35 // pred_fallthru
        _
    $region36: #{rrdbnet_forward.9} parent=5 // pred_fallthru
      _
    %p378 = scmp.le.s32.totalorder 2, %s10
    // Predicated region
    $region41: #{rrdbnet_forward.9} parent=5 // pred_check
      %p379 = pneg %p378
    $region42: #{rrdbnet_forward.9} parent=5 // pred_check_branch
      %381 = sbr.rel (%p379) target = $region44
    $region43: #{rrdbnet_forward.9} parent=5 // pred_region
      %s382 = ssub.s32 %s10, 2
      // Predicated region
      $region45: #{rrdbnet_forward.9} parent=43 // pred_check
        %p383 = pneg %p133
      $region46: #{rrdbnet_forward.9} parent=43 // pred_check_branch
        %385 = sbr.rel (%p383) target = $region48
      $region47: #{rrdbnet_forward.9} parent=43 // pred_region
        %p386 = scmp.lt.s32.totalorder %s16, 1
        %s387 = scalar_select %p386, %s16, 1
        %s388 = smul.addr %s387, 2
        %s389 = smul.addr %s388, 8
        %s390 = scalar_lea.vmem %s4, %s389
      $region48: #{rrdbnet_forward.9} parent=43 // pred_fallthru
        _
    $region44: #{rrdbnet_forward.9} parent=5 // pred_fallthru
      _
  $region6: #{rrdbnet_forward.9} parent=0 // loop_footer
    %s14 = sadd.s32 1, %s10
  $region7: #{rrdbnet_forward.9} parent=0 // loop_footer_branch
    %9 = sbr.rel target = $region3
  $region8: #{rrdbnet_forward.9} parent=0 // loop_exit
    _

// kernel: rrdbnet_forward.7
$region0: #{rrdbnet_forward.7}
  #allocation0 [shape = 'u32[]', space=smem, size = 0x4, offset = 0x4, fixed_abs, tag = 'smem constant byte address 0x4 - core index']
  #allocation1 [shape = 'u32[144,128]{1,0:T(1,128)}', space=vmem, size = 0x12000, scoped, tag = 'internal scratch']
  %s0 = inlined_call_operand.vmem [shape: f32[2,16,4], index: 0, kind: input, shape index: {}]
  %s1 = inlined_call_operand.vmem [shape: f32[12,32], index: 1, kind: input, shape index: {}]
  %s2 = inlined_call_operand.vmem [shape: f32[1,32], index: 2, kind: input, shape index: {}]
  %s3 = inlined_call_operand.vmem [shape: f32[2,16,32], index: 3, kind: output, shape index: {}]
  %s4 = sld [smem:[#allocation0]]
  $region45: #{rrdbnet_forward.7} parent=0
    _
  %s6 = ssub.s32 1, %s4
  %s7 = scalar_select 0, %s6, %s4
  loop: start=0, step=1, limit=4
  $region2: #{rrdbnet_forward.7} parent=0 // loop_pre_header
    _
  $region3: #{rrdbnet_forward.7} parent=0 // loop_header
    %s9 = sphi 0, %s13
    %p10 = scmp.ge.s32.totalorder %s9, 4
    %s19 = sphi 0, %s21
    %s22 = sphi 0, %s19
    %s23 = sphi 0, %s22
    %s39 = sphi 0, %s23
    %s43 = sphi 0, %s43
    %s45 = sphi 0, %s43
    %s46 = sphi 0, %s45
    %s60 = sphi 0, %s46
    %s64 = sphi 0, %s64
    %s66 = sphi 0, %s64
    %s67 = sphi 0, %s66
    %s81 = sphi 0, %s67
    %s87 = sphi 0, %s89
    %s90 = sphi 0, %s87
    %s91 = sphi 0, %s90
    %s107 = sphi 0, %s91
  $region4: #{rrdbnet_forward.7} parent=0 // loop_header_branch
    %12 = sbr.rel (%p10) target = $region8
  $region5: #{rrdbnet_forward.7} parent=0 // loop_body
    %s14 = ssub.s32 %s9, 1
    %s15 = ssub.s32 %s9, 2
    %s16 = sadd.s32 %s9, 1
    %s17 = ssub.s32 %s9, %s16
    %p18 = scmp.eq.s32.totalorder %s17, 0
    %s20 = sadd.s32 %s19, 1
    %s21 = scalar_select %p18, %s19, %s20
    %p24 = pneg %p18
    %p25 = scmp.eq.s32.totalorder %s9, 1
    %p26 = por %p24, %p25
    %p27 = scmp.ne.s32.totalorder %s19, %s22
    %p28 = scmp.eq.s32.totalorder %s9, 0
    %p29 = por %p27, %p28
    %p30 = scmp.ne.s32.totalorder %s19, %s22
    %p31 = scmp.eq.s32.totalorder %s14, 1
    %p32 = por %p30, %p31
    %p33 = scmp.ne.s32.totalorder %s22, %s23
    %p34 = scmp.eq.s32.totalorder %s14, 0
    %p35 = por %p33, %p34
    %p36 = scmp.ne.s32.totalorder %s22, %s23
    %p37 = scmp.eq.s32.totalorder %s15, 1
    %p38 = por %p36, %p37
    %p40 = scmp.ne.s32.totalorder %s23, %s39
    %p41 = scmp.eq.s32.totalorder %s15, 0
    %p42 = por %p40, %p41
    %s44 = sadd.s32 %s43, 1
    %p47 = scmp.eq.s32.totalorder %s9, 1
    %p48 = scmp.ne.s32.totalorder %s43, %s45
    %p49 = scmp.eq.s32.totalorder %s9, 0
    %p50 = por %p48, %p49
    %p51 = scmp.ne.s32.totalorder %s43, %s45
    %p52 = scmp.eq.s32.totalorder %s14, 1
    %p53 = por %p51, %p52
    %p54 = scmp.ne.s32.totalorder %s45, %s46
    %p55 = scmp.eq.s32.totalorder %s14, 0
    %p56 = por %p54, %p55
    %p57 = scmp.ne.s32.totalorder %s45, %s46
    %p58 = scmp.eq.s32.totalorder %s15, 1
    %p59 = por %p57, %p58
    %p61 = scmp.ne.s32.totalorder %s46, %s60
    %p62 = scmp.eq.s32.totalorder %s15, 0
    %p63 = por %p61, %p62
    %s65 = sadd.s32 %s64, 1
    %p68 = scmp.eq.s32.totalorder %s9, 1
    %p69 = scmp.ne.s32.totalorder %s64, %s66
    %p70 = scmp.eq.s32.totalorder %s9, 0
    %p71 = por %p69, %p70
    %p72 = scmp.ne.s32.totalorder %s64, %s66
    %p73 = scmp.eq.s32.totalorder %s14, 1
    %p74 = por %p72, %p73
    %p75 = scmp.ne.s32.totalorder %s66, %s67
    %p76 = scmp.eq.s32.totalorder %s14, 0
    %p77 = por %p75, %p76
    %p78 = scmp.ne.s32.totalorder %s66, %s67
    %p79 = scmp.eq.s32.totalorder %s15, 1
    %p80 = por %p78, %p79
    %p82 = scmp.ne.s32.totalorder %s67, %s81
    %p83 = scmp.eq.s32.totalorder %s15, 0
    %p84 = por %p82, %p83
    %s85 = ssub.s32 %s9, %s16
    %p86 = scmp.eq.s32.totalorder %s85, 0
    %s88 = sadd.s32 %s87, 1
    %s89 = scalar_select %p86, %s87, %s88
    %p92 = pneg %p86
    %p93 = scmp.eq.s32.totalorder %s9, 1
    %p94 = por %p92, %p93
    %p95 = scmp.ne.s32.totalorder %s87, %s90
    %p96 = scmp.eq.s32.totalorder %s9, 0
    %p97 = por %p95, %p96
    %p98 = scmp.ne.s32.totalorder %s87, %s90
    %p99 = scmp.eq.s32.totalorder %s14, 1
    %p100 = por %p98, %p99
    %p101 = scmp.ne.s32.totalorder %s90, %s91
    %p102 = scmp.eq.s32.totalorder %s14, 0
    %p103 = por %p101, %p102
    %p104 = scmp.ne.s32.totalorder %s90, %s91
    %p105 = scmp.eq.s32.totalorder %s15, 1
    %p106 = por %p104, %p105
    %p108 = scmp.ne.s32.totalorder %s91, %s107
    %p109 = scmp.eq.s32.totalorder %s15, 0
    %p110 = por %p108, %p109
    %p111 = scmp.le.s32.totalorder 1, %s9
    %p112 = scmp.lt.s32.totalorder %s9, 3
    %p113 = pnand %p111, %p112
    %p114 = pneg %p113
    // Predicated region
    $region9: #{rrdbnet_forward.7} parent=5 // pred_check
      _
    $region10: #{rrdbnet_forward.7} parent=5 // pred_check_branch
      %116 = sbr.rel (%p113) target = $region12
    $region11: #{rrdbnet_forward.7} parent=5 // pred_region
      %s117 = ssub.s32 %s9, 1
      // Predicated region
      $region13: #{rrdbnet_forward.7} parent=11 // pred_check
        %p118 = pneg %p56
      $region14: #{rrdbnet_forward.7} parent=11 // pred_check_branch
        %120 = sbr.rel (%p118) target = $region16
      $region15: #{rrdbnet_forward.7} parent=11 // pred_region
        _
      $region16: #{rrdbnet_forward.7} parent=11 // pred_fallthru
        _
      // Predicated region
      $region17: #{rrdbnet_forward.7} parent=11 // pred_check
        %p121 = pneg %p77
      $region18: #{rrdbnet_forward.7} parent=11 // pred_check_branch
        %123 = sbr.rel (%p121) target = $region20
      $region19: #{rrdbnet_forward.7} parent=11 // pred_region
        _
      $region20: #{rrdbnet_forward.7} parent=11 // pred_fallthru
        _
    $region12: #{rrdbnet_forward.7} parent=5 // pred_fallthru
      _
    %p124 = scmp.lt.s32.totalorder %s9, 2
    // Predicated region
    $region21: #{rrdbnet_forward.7} parent=5 // pred_check
      %p125 = pneg %p124
    $region22: #{rrdbnet_forward.7} parent=5 // pred_check_branch
      %127 = sbr.rel (%p125) target = $region24
    $region23: #{rrdbnet_forward.7} parent=5 // pred_region
      // Predicated region
      $region25: #{rrdbnet_forward.7} parent=23 // pred_check
        %p128 = pneg %p29
      $region26: #{rrdbnet_forward.7} parent=23 // pred_check_branch
        %130 = sbr.rel (%p128) target = $region28
      $region27: #{rrdbnet_forward.7} parent=23 // pred_region
        %p131 = scmp.lt.s32.totalorder %s9, 1
        %s132 = scalar_select %p131, %s9, 1
        %s133 = smul.addr %s132, 2
        %s134 = smul.addr %s133, 8
        %s135 = scalar_lea.vmem %s0, %s134
      $region28: #{rrdbnet_forward.7} parent=23 // pred_fallthru
        _
    $region24: #{rrdbnet_forward.7} parent=5 // pred_fallthru
      _
    %p136 = scmp.le.s32.totalorder 1, %s9
    %p137 = scmp.lt.s32.totalorder %s9, 3
    %p138 = pnand %p136, %p137
    %p139 = pneg %p138
    // Predicated region
    $region29: #{rrdbnet_forward.7} parent=5 // pred_check
      _
    $region30: #{rrdbnet_forward.7} parent=5 // pred_check_branch
      %141 = sbr.rel (%p138) target = $region32
    $region31: #{rrdbnet_forward.7} parent=5 // pred_region
      %s142 = ssub.s32 %s9, 1
      %p143 = scmp.lt.s32.totalorder %s14, 1
      %s144 = scalar_select %p143, %s14, 1
      %s145 = smul.addr %s144, 2
      %s146 = smul.addr %s145, 8
      %s147 = scalar_lea.vmem %s0, %s146
      %p148 = pneg %p35
      %p149 = pneg %p32
      %p150 = pneg %p56
      %p151 = pneg %p53
      %p152 = pneg %p77
      %p153 = pneg %p74
      %p154 = pneg %p103
      %p155 = pneg %p100
      %p156 = scmp.lt.s32.totalorder %s14, 1
      %s157 = scalar_select %p156, %s14, 1
      %s158 = smul.addr %s157, 2
      %s159 = smul.addr %s158, 8
      %s160 = scalar_lea.vmem %s3, %s159
      %p161 = scmp.lt.s32.totalorder %s14, 1
      %s162 = scalar_select %p161, %s14, 1
      %s163 = smul.addr %s162, 2
      %s164 = smul.addr %s163, 8
      %s165 = scalar_lea.vmem %s0, %s164
      %p166 = scmp.lt.s32.totalorder %s14, 1
      %s167 = scalar_select %p166, %s14, 1
      %s168 = smul.addr %s167, 2
      %s169 = smul.addr %s168, 8
      %s170 = scalar_lea.vmem %s3, %s169
      %v171 = vld [vmem:[%s165] sm:$0xff]
      %v172 = vld [vmem:[%s165 + $0x8] sm:$0xff]
      %v173 = vlaneseq
      %v174 = vshrl.u32 %v173, 7
      %v175 = vadd.s32 %v174, 8
      %v176 = vrot.slane %v171, 7
      %v177 = vrot.slane %v172, 7
      %vm178 = vcmp.lt.s32.totalorder %v174, 1
      %v179 = vsel %vm178, %v176, %v177
      %v180 = vsel %vm178, %v177, %v176
      %vm181 = vcmp.eq.s32.totalorder %v174, 0
      %vm182 = vcmp.eq.s32.totalorder %v175, 0
      %v183 = vsel %vm181, 0.0, %v180
      %v184 = vsel %vm182, 0.0, %v179
      %v185 = vrot.slane %v171, 1
      %v186 = vrot.slane %v172, 1
      %vm187 = vcmp.lt.s32.totalorder %v174, 7
      %v188 = vsel %vm187, %v185, %v186
      %v189 = vsel %vm187, %v186, %v185
      %vm190 = vcmp.eq.s32.totalorder %v174, 15
      %vm191 = vcmp.eq.s32.totalorder %v175, 15
      %v192 = vsel %vm190, 0.0, %v188
      %v193 = vsel %vm191, 0.0, %v189
      %196 = vrot.lane.b32.xlu0 %v171, 4
      %v197 = vpop.permute.xlu0 %196
      %198 = vrot.lane.b32.xlu0 %v172, 4
      %v199 = vpop.permute.xlu0 %198
      %204 = vrot.lane.b32.xlu0 %v192, 8
      %v205 = vpop.permute.xlu0 %204
      %206 = vrot.lane.b32.xlu0 %v193, 8
      %v207 = vpop.permute.xlu0 %206
      %vm210 = vcmask 31744
      %v211 = vsel %vm210, %v183, %v197
      %v212 = vsel %vm210, %v184, %v199
      %vm213 = vcmask 64512
      %v214 = vsel %vm213, %v211, %v205
      %v215 = vsel %vm213, %v212, %v207
      %v216 = vld [vmem:[%s1] sm:$0xff]
      %v217 = vld [vmem:[%s1 + $0x8] sm:$0xf]
      %v218 = vld [vmem:[%s2] sm:$0x1]
      %v220 = vlaneseq
      %v221 = vshrl.u32 %v220, 7
      %v222 = vsub.s32 0, %v221
      %v223 = vrot.slane %v218, %v222
      %vm225 = vcmask 97280
      %v227 = vsel %vm225, %v214, 0
      %v230 = vsel %vm225, %v215, 0
      %vm232 = vcmask 1043456
      %v234 = vsel %vm232, %v217, 0
      %236 = vmatprep.subr.mxu0 0.0
      %237 = vmatpush1.msra.mxu0 %v216
      %238 = vmatprep.subr.mxu0 0.0
      %239 = vmatpush1.msra.mxu0 %v234
      %240 = vmatprep.subr.mxu0 0.0
      %241 = vmatpush1.msra.mxu0 0.0
      %242 = vmatprep.subr.mxu0 0.0
      %243 = vmatpush1.msra.mxu0 0.0
      %244 = vmatprep.subr.mxu0 0.0
      %245 = vmatpush1.msra.mxu0 0.0
      %246 = vmatprep.subr.mxu0 0.0
      %247 = vmatpush1.msra.mxu0 0.0
      %248 = vmatprep.subr.mxu0 0.0
      %249 = vmatpush1.msra.mxu0 0.0
      %250 = vmatprep.subr.mxu0 0.0
      %251 = vmatpush1.msra.mxu0 0.0
      %252 = vmatprep.subr.mxu0 0.0
      %253 = vmatpush1.msra.mxu0 0.0
      %254 = vmatprep.subr.mxu0 0.0
      %255 = vmatpush1.msra.mxu0 0.0
      %256 = vmatprep.subr.mxu0 0.0
      %257 = vmatpush1.msra.mxu0 0.0
      %258 = vmatprep.subr.mxu0 0.0
      %259 = vmatpush1.msra.mxu0 0.0
      %260 = vmatprep.subr.mxu0 0.0
      %261 = vmatpush1.msra.mxu0 0.0
      %262 = vmatprep.subr.mxu0 0.0
      %263 = vmatpush1.msra.mxu0 0.0
      %264 = vmatprep.subr.mxu0 0.0
      %265 = vmatpush1.msra.mxu0 0.0
      %266 = vmatprep.subr.mxu0 0.0
      %267 = vmatpush1.msra.mxu0 0.0
      %268 = vmatprep.subr.mxu0 0.0
      %269 = vmatpush1.msra.mxu0 0.0
      %270 = vmatprep.subr.mxu0 0.0
      %271 = vmatpush1.msra.mxu0 0.0
      %272 = vmatprep.subr.mxu0 0.0
      %273 = vmatpush1.msra.mxu0 0.0
      %274 = vmatprep.subr.mxu0 0.0
      %275 = vmatpush1.msra.mxu0 0.0
      %276 = vmatprep.subr.mxu0 0.0
      %277 = vmatpush1.msra.mxu0 0.0
      %278 = vmatprep.subr.mxu0 0.0
      %279 = vmatpush1.msra.mxu0 0.0
      %280 = vmatprep.subr.mxu0 0.0
      %281 = vmatpush1.msra.mxu0 0.0
      %282 = vmatprep.subr.mxu0 0.0
      %283 = vmatpush1.msra.mxu0 0.0
      %284 = vmatprep.subr.mxu0 0.0
      %285 = vmatpush1.msra.mxu0 0.0
      %286 = vmatprep.subr.mxu0 0.0
      %287 = vmatpush1.msra.mxu0 0.0
      %288 = vmatprep.subr.mxu0 0.0
      %289 = vmatpush1.msra.mxu0 0.0
      %290 = vmatprep.subr.mxu0 0.0
      %291 = vmatpush1.msra.mxu0 0.0
      %292 = vmatprep.subr.mxu0 0.0
      %293 = vmatpush1.msra.mxu0 0.0
      %294 = vmatprep.subr.mxu0 0.0
      %295 = vmatpush1.msra.mxu0 0.0
      %296 = vmatprep.subr.mxu0 0.0
      %297 = vmatpush1.msra.mxu0 0.0
      %298 = vmatprep.subr.mxu0 0.0
      %299 = vmatpush1.msra.mxu0 0.0
      %300 = vmatprep.mubr.f32.mxu0 0.0
      %301 = vmatmul.mubr.f32.gmra.mrb[0].mxu0 %v227
      %v302 = vpop.f32.mrb[0].mxu0
      %v303 = vadd.f32 %v223, %v302
      %v304 = vpop.f32.mrb[0].mxu0
      %305 = vmatprep.mubr.f32.mxu0 0.0
      %306 = vmatmul.mubr.f32.gmra.mrb[0].mxu0 %v230
      %v307 = vpop.f32.mrb[0].mxu0
      %v308 = vadd.f32 %v223, %v307
      %v309 = vpop.f32.mrb[0].mxu0
      %310 = vdwg.mxu0
      %vm311 = vcmask 261120
      %312 = vst.msk [vmem:[%s170] sm:$0xff] %vm311, %v303
      %313 = vst.msk [vmem:[%s170 + $0x8] sm:$0xff] %vm311, %v308
      %p314 = scmp.lt.s32.totalorder %s14, 1
      %s315 = scalar_select %p314, %s14, 1
      %s316 = smul.addr %s315, 2
      %s317 = smul.addr %s316, 8
      %s318 = scalar_lea.vmem %s3, %s317
      // Predicated region
      $region33: #{rrdbnet_forward.7} parent=31 // pred_check
        %p319 = pneg %p100
      $region34: #{rrdbnet_forward.7} parent=31 // pred_check_branch
        %321 = sbr.rel (%p319) target = $region36
      $region35: #{rrdbnet_forward.7} parent=31 // pred_region
        _
      $region36: #{rrdbnet_forward.7} parent=31 // pred_fallthru
        _
    $region32: #{rrdbnet_forward.7} parent=5 // pred_fallthru
      _
    %p322 = scmp.le.s32.totalorder 2, %s9
    // Predicated region
    $region37: #{rrdbnet_forward.7} parent=5 // pred_check
      %p323 = pneg %p322
    $region38: #{rrdbnet_forward.7} parent=5 // pred_check_branch
      %325 = sbr.rel (%p323) target = $region40
    $region39: #{rrdbnet_forward.7} parent=5 // pred_region
      %s326 = ssub.s32 %s9, 2
      // Predicated region
      $region41: #{rrdbnet_forward.7} parent=39 // pred_check
        %p327 = pneg %p106
      $region42: #{rrdbnet_forward.7} parent=39 // pred_check_branch
        %329 = sbr.rel (%p327) target = $region44
      $region43: #{rrdbnet_forward.7} parent=39 // pred_region
        %p330 = scmp.lt.s32.totalorder %s15, 1
        %s331 = scalar_select %p330, %s15, 1
        %s332 = smul.addr %s331, 2
        %s333 = smul.addr %s332, 8
        %s334 = scalar_lea.vmem %s3, %s333
      $region44: #{rrdbnet_forward.7} parent=39 // pred_fallthru
        _
    $region40: #{rrdbnet_forward.7} parent=5 // pred_fallthru
      _
  $region6: #{rrdbnet_forward.7} parent=0 // loop_footer
    %s13 = sadd.s32 1, %s9
  $region7: #{rrdbnet_forward.7} parent=0 // loop_footer_branch
    %8 = sbr.rel target = $region3
  $region8: #{rrdbnet_forward.7} parent=0 // loop_exit
    _

// kernel: rrdbnet_forward.10
$region0: #{rrdbnet_forward.10}
  #allocation0 [shape = 'u32[]', space=smem, size = 0x4, offset = 0x4, fixed_abs, tag = 'smem constant byte address 0x4 - core index']
  #allocation1 [shape = 'u32[144,128]{1,0:T(1,128)}', space=vmem, size = 0x12000, scoped, tag = 'internal scratch']
  %s0 = inlined_call_operand.vmem [shape: f32[2,32,32], index: 0, kind: input, shape index: {}]
  %s1 = inlined_call_operand.vmem [shape: f32[96,32], index: 1, kind: input, shape index: {}]
  %s2 = inlined_call_operand.vmem [shape: f32[1,32], index: 2, kind: input, shape index: {}]
  %s3 = inlined_call_operand.vmem [shape: f32[2,32,32], index: 3, kind: output, shape index: {}]
  %s4 = sld [smem:[#allocation0]]
  $region45: #{rrdbnet_forward.10} parent=0
    _
  %s6 = ssub.s32 1, %s4
  %s7 = scalar_select 0, %s6, %s4
  loop: start=0, step=1, limit=4
  $region2: #{rrdbnet_forward.10} parent=0 // loop_pre_header
    _
  $region3: #{rrdbnet_forward.10} parent=0 // loop_header
    %s9 = sphi 0, %s13
    %p10 = scmp.ge.s32.totalorder %s9, 4
    %s19 = sphi 0, %s21
    %s22 = sphi 0, %s19
    %s23 = sphi 0, %s22
    %s39 = sphi 0, %s23
    %s43 = sphi 0, %s43
    %s45 = sphi 0, %s43
    %s46 = sphi 0, %s45
    %s60 = sphi 0, %s46
    %s64 = sphi 0, %s64
    %s66 = sphi 0, %s64
    %s67 = sphi 0, %s66
    %s81 = sphi 0, %s67
    %s87 = sphi 0, %s89
    %s90 = sphi 0, %s87
    %s91 = sphi 0, %s90
    %s107 = sphi 0, %s91
  $region4: #{rrdbnet_forward.10} parent=0 // loop_header_branch
    %12 = sbr.rel (%p10) target = $region8
  $region5: #{rrdbnet_forward.10} parent=0 // loop_body
    %s14 = ssub.s32 %s9, 1
    %s15 = ssub.s32 %s9, 2
    %s16 = sadd.s32 %s9, 1
    %s17 = ssub.s32 %s9, %s16
    %p18 = scmp.eq.s32.totalorder %s17, 0
    %s20 = sadd.s32 %s19, 1
    %s21 = scalar_select %p18, %s19, %s20
    %p24 = pneg %p18
    %p25 = scmp.eq.s32.totalorder %s9, 1
    %p26 = por %p24, %p25
    %p27 = scmp.ne.s32.totalorder %s19, %s22
    %p28 = scmp.eq.s32.totalorder %s9, 0
    %p29 = por %p27, %p28
    %p30 = scmp.ne.s32.totalorder %s19, %s22
    %p31 = scmp.eq.s32.totalorder %s14, 1
    %p32 = por %p30, %p31
    %p33 = scmp.ne.s32.totalorder %s22, %s23
    %p34 = scmp.eq.s32.totalorder %s14, 0
    %p35 = por %p33, %p34
    %p36 = scmp.ne.s32.totalorder %s22, %s23
    %p37 = scmp.eq.s32.totalorder %s15, 1
    %p38 = por %p36, %p37
    %p40 = scmp.ne.s32.totalorder %s23, %s39
    %p41 = scmp.eq.s32.totalorder %s15, 0
    %p42 = por %p40, %p41
    %s44 = sadd.s32 %s43, 1
    %p47 = scmp.eq.s32.totalorder %s9, 1
    %p48 = scmp.ne.s32.totalorder %s43, %s45
    %p49 = scmp.eq.s32.totalorder %s9, 0
    %p50 = por %p48, %p49
    %p51 = scmp.ne.s32.totalorder %s43, %s45
    %p52 = scmp.eq.s32.totalorder %s14, 1
    %p53 = por %p51, %p52
    %p54 = scmp.ne.s32.totalorder %s45, %s46
    %p55 = scmp.eq.s32.totalorder %s14, 0
    %p56 = por %p54, %p55
    %p57 = scmp.ne.s32.totalorder %s45, %s46
    %p58 = scmp.eq.s32.totalorder %s15, 1
    %p59 = por %p57, %p58
    %p61 = scmp.ne.s32.totalorder %s46, %s60
    %p62 = scmp.eq.s32.totalorder %s15, 0
    %p63 = por %p61, %p62
    %s65 = sadd.s32 %s64, 1
    %p68 = scmp.eq.s32.totalorder %s9, 1
    %p69 = scmp.ne.s32.totalorder %s64, %s66
    %p70 = scmp.eq.s32.totalorder %s9, 0
    %p71 = por %p69, %p70
    %p72 = scmp.ne.s32.totalorder %s64, %s66
    %p73 = scmp.eq.s32.totalorder %s14, 1
    %p74 = por %p72, %p73
    %p75 = scmp.ne.s32.totalorder %s66, %s67
    %p76 = scmp.eq.s32.totalorder %s14, 0
    %p77 = por %p75, %p76
    %p78 = scmp.ne.s32.totalorder %s66, %s67
    %p79 = scmp.eq.s32.totalorder %s15, 1
    %p80 = por %p78, %p79
    %p82 = scmp.ne.s32.totalorder %s67, %s81
    %p83 = scmp.eq.s32.totalorder %s15, 0
    %p84 = por %p82, %p83
    %s85 = ssub.s32 %s9, %s16
    %p86 = scmp.eq.s32.totalorder %s85, 0
    %s88 = sadd.s32 %s87, 1
    %s89 = scalar_select %p86, %s87, %s88
    %p92 = pneg %p86
    %p93 = scmp.eq.s32.totalorder %s9, 1
    %p94 = por %p92, %p93
    %p95 = scmp.ne.s32.totalorder %s87, %s90
    %p96 = scmp.eq.s32.totalorder %s9, 0
    %p97 = por %p95, %p96
    %p98 = scmp.ne.s32.totalorder %s87, %s90
    %p99 = scmp.eq.s32.totalorder %s14, 1
    %p100 = por %p98, %p99
    %p101 = scmp.ne.s32.totalorder %s90, %s91
    %p102 = scmp.eq.s32.totalorder %s14, 0
    %p103 = por %p101, %p102
    %p104 = scmp.ne.s32.totalorder %s90, %s91
    %p105 = scmp.eq.s32.totalorder %s15, 1
    %p106 = por %p104, %p105
    %p108 = scmp.ne.s32.totalorder %s91, %s107
    %p109 = scmp.eq.s32.totalorder %s15, 0
    %p110 = por %p108, %p109
    %p111 = scmp.le.s32.totalorder 1, %s9
    %p112 = scmp.lt.s32.totalorder %s9, 3
    %p113 = pnand %p111, %p112
    %p114 = pneg %p113
    // Predicated region
    $region9: #{rrdbnet_forward.10} parent=5 // pred_check
      _
    $region10: #{rrdbnet_forward.10} parent=5 // pred_check_branch
      %116 = sbr.rel (%p113) target = $region12
    $region11: #{rrdbnet_forward.10} parent=5 // pred_region
      %s117 = ssub.s32 %s9, 1
      // Predicated region
      $region13: #{rrdbnet_forward.10} parent=11 // pred_check
        %p118 = pneg %p56
      $region14: #{rrdbnet_forward.10} parent=11 // pred_check_branch
        %120 = sbr.rel (%p118) target = $region16
      $region15: #{rrdbnet_forward.10} parent=11 // pred_region
        _
      $region16: #{rrdbnet_forward.10} parent=11 // pred_fallthru
        _
      // Predicated region
      $region17: #{rrdbnet_forward.10} parent=11 // pred_check
        %p121 = pneg %p77
      $region18: #{rrdbnet_forward.10} parent=11 // pred_check_branch
        %123 = sbr.rel (%p121) target = $region20
      $region19: #{rrdbnet_forward.10} parent=11 // pred_region
        _
      $region20: #{rrdbnet_forward.10} parent=11 // pred_fallthru
        _
    $region12: #{rrdbnet_forward.10} parent=5 // pred_fallthru
      _
    %p124 = scmp.lt.s32.totalorder %s9, 2
    // Predicated region
    $region21: #{rrdbnet_forward.10} parent=5 // pred_check
      %p125 = pneg %p124
    $region22: #{rrdbnet_forward.10} parent=5 // pred_check_branch
      %127 = sbr.rel (%p125) target = $region24
    $region23: #{rrdbnet_forward.10} parent=5 // pred_region
      // Predicated region
      $region25: #{rrdbnet_forward.10} parent=23 // pred_check
        %p128 = pneg %p29
      $region26: #{rrdbnet_forward.10} parent=23 // pred_check_branch
        %130 = sbr.rel (%p128) target = $region28
      $region27: #{rrdbnet_forward.10} parent=23 // pred_region
        %p131 = scmp.lt.s32.totalorder %s9, 1
        %s132 = scalar_select %p131, %s9, 1
        %s133 = smul.addr %s132, 4
        %s134 = smul.addr %s133, 8
        %s135 = scalar_lea.vmem %s0, %s134
      $region28: #{rrdbnet_forward.10} parent=23 // pred_fallthru
        _
    $region24: #{rrdbnet_forward.10} parent=5 // pred_fallthru
      _
    %p136 = scmp.le.s32.totalorder 1, %s9
    %p137 = scmp.lt.s32.totalorder %s9, 3
    %p138 = pnand %p136, %p137
    %p139 = pneg %p138
    // Predicated region
    $region29: #{rrdbnet_forward.10} parent=5 // pred_check
      _
    $region30: #{rrdbnet_forward.10} parent=5 // pred_check_branch
      %141 = sbr.rel (%p138) target = $region32
    $region31: #{rrdbnet_forward.10} parent=5 // pred_region
      %s142 = ssub.s32 %s9, 1
      %p143 = scmp.lt.s32.totalorder %s14, 1
      %s144 = scalar_select %p143, %s14, 1
      %s145 = smul.addr %s144, 4
      %s146 = smul.addr %s145, 8
      %s147 = scalar_lea.vmem %s0, %s146
      %p148 = pneg %p35
      %p149 = pneg %p32
      %p150 = pneg %p56
      %p151 = pneg %p53
      %p152 = pneg %p77
      %p153 = pneg %p74
      %p154 = pneg %p103
      %p155 = pneg %p100
      %p156 = scmp.lt.s32.totalorder %s14, 1
      %s157 = scalar_select %p156, %s14, 1
      %s158 = smul.addr %s157, 4
      %s159 = smul.addr %s158, 8
      %s160 = scalar_lea.vmem %s3, %s159
      %p161 = scmp.lt.s32.totalorder %s14, 1
      %s162 = scalar_select %p161, %s14, 1
      %s163 = smul.addr %s162, 4
      %s164 = smul.addr %s163, 8
      %s165 = scalar_lea.vmem %s0, %s164
      %p166 = scmp.lt.s32.totalorder %s14, 1
      %s167 = scalar_select %p166, %s14, 1
      %s168 = smul.addr %s167, 4
      %s169 = smul.addr %s168, 8
      %s170 = scalar_lea.vmem %s3, %s169
      %v171 = vld [vmem:[%s165] sm:$0xff]
      %v172 = vld [vmem:[%s165 + $0x8] sm:$0xff]
      %v173 = vld [vmem:[%s165 + $0x10] sm:$0xff]
      %v174 = vld [vmem:[%s165 + $0x18] sm:$0xff]
      %v175 = vlaneseq
      %v176 = vshrl.u32 %v175, 7
      %v177 = vadd.s32 %v176, 8
      %v178 = vadd.s32 %v176, 16
      %v179 = vadd.s32 %v176, 24
      %v180 = vrot.slane %v171, 7
      %v181 = vrot.slane %v172, 7
      %v182 = vrot.slane %v173, 7
      %v183 = vrot.slane %v174, 7
      %vm184 = vcmp.lt.s32.totalorder %v176, 1
      %v185 = vsel %vm184, %v182, %v183
      %v186 = vsel %vm184, %v181, %v182
      %v187 = vsel %vm184, %v180, %v181
      %v188 = vsel %vm184, %v183, %v180
      %vm189 = vcmp.eq.s32.totalorder %v176, 0
      %vm190 = vcmp.eq.s32.totalorder %v177, 0
      %vm191 = vcmp.eq.s32.totalorder %v178, 0
      %vm192 = vcmp.eq.s32.totalorder %v179, 0
      %v193 = vsel %vm189, 0.0, %v188
      %v194 = vsel %vm190, 0.0, %v187
      %v195 = vsel %vm191, 0.0, %v186
      %v196 = vsel %vm192, 0.0, %v185
      %v197 = vrot.slane %v171, 1
      %v198 = vrot.slane %v172, 1
      %v199 = vrot.slane %v173, 1
      %v200 = vrot.slane %v174, 1
      %vm201 = vcmp.lt.s32.totalorder %v176, 7
      %v202 = vsel %vm201, %v199, %v200
      %v203 = vsel %vm201, %v198, %v199
      %v204 = vsel %vm201, %v197, %v198
      %v205 = vsel %vm201, %v200, %v197
      %vm206 = vcmp.eq.s32.totalorder %v176, 31
      %vm207 = vcmp.eq.s32.totalorder %v177, 31
      %vm208 = vcmp.eq.s32.totalorder %v178, 31
      %vm209 = vcmp.eq.s32.totalorder %v179, 31
      %v210 = vsel %vm206, 0.0, %v204
      %v211 = vsel %vm207, 0.0, %v203
      %v212 = vsel %vm208, 0.0, %v202
      %v213 = vsel %vm209, 0.0, %v205
      %218 = vrot.lane.b32.xlu0 %v171, 32
      %v219 = vpop.permute.xlu0 %218
      %220 = vrot.lane.b32.xlu0 %v172, 32
      %v221 = vpop.permute.xlu0 %220
      %222 = vrot.lane.b32.xlu0 %v173, 32
      %v223 = vpop.permute.xlu0 %222
      %224 = vrot.lane.b32.xlu0 %v174, 32
      %v225 = vpop.permute.xlu0 %224
      %234 = vrot.lane.b32.xlu0 %v210, 64
      %v235 = vpop.permute.xlu0 %234
      %236 = vrot.lane.b32.xlu0 %v211, 64
      %v237 = vpop.permute.xlu0 %236
      %238 = vrot.lane.b32.xlu0 %v212, 64
      %v239 = vpop.permute.xlu0 %238
      %240 = vrot.lane.b32.xlu0 %v213, 64
      %v241 = vpop.permute.xlu0 %240
      %vm246 = vcmask 261120
      %v247 = vsel %vm246, %v193, %v219
      %v248 = vsel %vm246, %v194, %v221
      %v249 = vsel %vm246, %v195, %v223
      %v250 = vsel %vm246, %v196, %v225
      %vm251 = vcmask 523264
      %v252 = vsel %vm251, %v247, %v235
      %v253 = vsel %vm251, %v248, %v237
      %v254 = vsel %vm251, %v249, %v239
      %v255 = vsel %vm251, %v250, %v241
      %v256 = vld [vmem:[%s1] sm:$0xff]
      %v257 = vld [vmem:[%s1 + $0x8] sm:$0xff]
      %v258 = vld [vmem:[%s1 + $0x10] sm:$0xff]
      %v259 = vld [vmem:[%s1 + $0x18] sm:$0xff]
      %v260 = vld [vmem:[%s1 + $0x20] sm:$0xff]
      %v261 = vld [vmem:[%s1 + $0x28] sm:$0xff]
      %v262 = vld [vmem:[%s1 + $0x30] sm:$0xff]
      %v263 = vld [vmem:[%s1 + $0x38] sm:$0xff]
      %v264 = vld [vmem:[%s1 + $0x40] sm:$0xff]
      %v265 = vld [vmem:[%s1 + $0x48] sm:$0xff]
      %v266 = vld [vmem:[%s1 + $0x50] sm:$0xff]
      %v267 = vld [vmem:[%s1 + $0x58] sm:$0xff]
      %v268 = vld [vmem:[%s2] sm:$0x1]
      %v270 = vlaneseq
      %v271 = vshrl.u32 %v270, 7
      %v272 = vsub.s32 0, %v271
      %v273 = vrot.slane %v268, %v272
      %vm275 = vcmask 785408
      %v277 = vsel %vm275, %v252, 0
      %v280 = vsel %vm275, %v253, 0
      %v283 = vsel %vm275, %v254, 0
      %v286 = vsel %vm275, %v255, 0
      %288 = vmatprep.subr.mxu0 0.0
      %289 = vmatpush1.msra.mxu0 %v256
      %290 = vmatprep.subr.mxu0 0.0
      %291 = vmatpush1.msra.mxu0 %v257
      %292 = vmatprep.subr.mxu0 0.0
      %293 = vmatpush1.msra.mxu0 %v258
      %294 = vmatprep.subr.mxu0 0.0
      %295 = vmatpush1.msra.mxu0 %v259
      %296 = vmatprep.subr.mxu0 0.0
      %297 = vmatpush1.msra.mxu0 %v260
      %298 = vmatprep.subr.mxu0 0.0
      %299 = vmatpush1.msra.mxu0 %v261
      %300 = vmatprep.subr.mxu0 0.0
      %301 = vmatpush1.msra.mxu0 %v262
      %302 = vmatprep.subr.mxu0 0.0
      %303 = vmatpush1.msra.mxu0 %v263
      %304 = vmatprep.subr.mxu0 0.0
      %305 = vmatpush1.msra.mxu0 %v264
      %306 = vmatprep.subr.mxu0 0.0
      %307 = vmatpush1.msra.mxu0 %v265
      %308 = vmatprep.subr.mxu0 0.0
      %309 = vmatpush1.msra.mxu0 %v266
      %310 = vmatprep.subr.mxu0 0.0
      %311 = vmatpush1.msra.mxu0 %v267
      %312 = vmatprep.subr.mxu0 0.0
      %313 = vmatpush1.msra.mxu0 0.0
      %314 = vmatprep.subr.mxu0 0.0
      %315 = vmatpush1.msra.mxu0 0.0
      %316 = vmatprep.subr.mxu0 0.0
      %317 = vmatpush1.msra.mxu0 0.0
      %318 = vmatprep.subr.mxu0 0.0
      %319 = vmatpush1.msra.mxu0 0.0
      %320 = vmatprep.subr.mxu0 0.0
      %321 = vmatpush1.msra.mxu0 0.0
      %322 = vmatprep.subr.mxu0 0.0
      %323 = vmatpush1.msra.mxu0 0.0
      %324 = vmatprep.subr.mxu0 0.0
      %325 = vmatpush1.msra.mxu0 0.0
      %326 = vmatprep.subr.mxu0 0.0
      %327 = vmatpush1.msra.mxu0 0.0
      %328 = vmatprep.subr.mxu0 0.0
      %329 = vmatpush1.msra.mxu0 0.0
      %330 = vmatprep.subr.mxu0 0.0
      %331 = vmatpush1.msra.mxu0 0.0
      %332 = vmatprep.subr.mxu0 0.0
      %333 = vmatpush1.msra.mxu0 0.0
      %334 = vmatprep.subr.mxu0 0.0
      %335 = vmatpush1.msra.mxu0 0.0
      %336 = vmatprep.subr.mxu0 0.0
      %337 = vmatpush1.msra.mxu0 0.0
      %338 = vmatprep.subr.mxu0 0.0
      %339 = vmatpush1.msra.mxu0 0.0
      %340 = vmatprep.subr.mxu0 0.0
      %341 = vmatpush1.msra.mxu0 0.0
      %342 = vmatprep.subr.mxu0 0.0
      %343 = vmatpush1.msra.mxu0 0.0
      %344 = vmatprep.subr.mxu0 0.0
      %345 = vmatpush1.msra.mxu0 0.0
      %346 = vmatprep.subr.mxu0 0.0
      %347 = vmatpush1.msra.mxu0 0.0
      %348 = vmatprep.subr.mxu0 0.0
      %349 = vmatpush1.msra.mxu0 0.0
      %350 = vmatprep.subr.mxu0 0.0
      %351 = vmatpush1.msra.mxu0 0.0
      %352 = vmatprep.mubr.f32.mxu0 0.0
      %353 = vmatmul.mubr.f32.gmra.mrb[0].mxu0 %v277
      %v354 = vpop.f32.mrb[0].mxu0
      %v355 = vadd.f32 %v273, %v354
      %v356 = vpop.f32.mrb[0].mxu0
      %357 = vmatprep.mubr.f32.mxu0 0.0
      %358 = vmatmul.mubr.f32.gmra.mrb[0].mxu0 %v280
      %v359 = vpop.f32.mrb[0].mxu0
      %v360 = vadd.f32 %v273, %v359
      %v361 = vpop.f32.mrb[0].mxu0
      %362 = vmatprep.mubr.f32.mxu0 0.0
      %363 = vmatmul.mubr.f32.gmra.mrb[0].mxu0 %v283
      %v364 = vpop.f32.mrb[0].mxu0
      %v365 = vadd.f32 %v273, %v364
      %v366 = vpop.f32.mrb[0].mxu0
      %367 = vmatprep.mubr.f32.mxu0 0.0
      %368 = vmatmul.mubr.f32.gmra.mrb[0].mxu0 %v286
      %v369 = vpop.f32.mrb[0].mxu0
      %v370 = vadd.f32 %v273, %v369
      %v371 = vpop.f32.mrb[0].mxu0
      %372 = vdwg.mxu0
      %vm373 = vcmp.gt.f32.partialorder %v355, 0.0
      %vm374 = vcmp.gt.f32.partialorder %v360, 0.0
      %vm375 = vcmp.gt.f32.partialorder %v365, 0.0
      %vm376 = vcmp.gt.f32.partialorder %v370, 0.0
      %v377 = vmul.f32 %v355, 0.2
      %v378 = vmul.f32 %v360, 0.2
      %v379 = vmul.f32 %v365, 0.2
      %v380 = vmul.f32 %v370, 0.2
      %v381 = vsel %vm373, %v355, %v377
      %v382 = vsel %vm374, %v360, %v378
      %v383 = vsel %vm375, %v365, %v379
      %v384 = vsel %vm376, %v370, %v380
      %385 = vst.msk [vmem:[%s170] sm:$0xff] %vm246, %v381
      %386 = vst.msk [vmem:[%s170 + $0x8] sm:$0xff] %vm246, %v382
      %387 = vst.msk [vmem:[%s170 + $0x10] sm:$0xff] %vm246, %v383
      %388 = vst.msk [vmem:[%s170 + $0x18] sm:$0xff] %vm246, %v384
      %p389 = scmp.lt.s32.totalorder %s14, 1
      %s390 = scalar_select %p389, %s14, 1
      %s391 = smul.addr %s390, 4
      %s392 = smul.addr %s391, 8
      %s393 = scalar_lea.vmem %s3, %s392
      // Predicated region
      $region33: #{rrdbnet_forward.10} parent=31 // pred_check
        %p394 = pneg %p100
      $region34: #{rrdbnet_forward.10} parent=31 // pred_check_branch
        %396 = sbr.rel (%p394) target = $region36
      $region35: #{rrdbnet_forward.10} parent=31 // pred_region
        _
      $region36: #{rrdbnet_forward.10} parent=31 // pred_fallthru
        _
    $region32: #{rrdbnet_forward.10} parent=5 // pred_fallthru
      _
    %p397 = scmp.le.s32.totalorder 2, %s9
    // Predicated region
    $region37: #{rrdbnet_forward.10} parent=5 // pred_check
      %p398 = pneg %p397
    $region38: #{rrdbnet_forward.10} parent=5 // pred_check_branch
      %400 = sbr.rel (%p398) target = $region40
    $region39: #{rrdbnet_forward.10} parent=5 // pred_region
      %s401 = ssub.s32 %s9, 2
      // Predicated region
      $region41: #{rrdbnet_forward.10} parent=39 // pred_check
        %p402 = pneg %p106
      $region42: #{rrdbnet_forward.10} parent=39 // pred_check_branch
        %404 = sbr.rel (%p402) target = $region44
      $region43: #{rrdbnet_forward.10} parent=39 // pred_region
        %p405 = scmp.lt.s32.totalorder %s15, 1
        %s406 = scalar_select %p405, %s15, 1
        %s407 = smul.addr %s406, 4
        %s408 = smul.addr %s407, 8
        %s409 = scalar_lea.vmem %s3, %s408
      $region44: #{rrdbnet_forward.10} parent=39 // pred_fallthru
        _
    $region40: #{rrdbnet_forward.10} parent=5 // pred_fallthru
      _
  $region6: #{rrdbnet_forward.10} parent=0 // loop_footer
    %s13 = sadd.s32 1, %s9
  $region7: #{rrdbnet_forward.10} parent=0 // loop_footer_branch
    %8 = sbr.rel target = $region3
  $region8: #{rrdbnet_forward.10} parent=0 // loop_exit
    _

// kernel: rrdbnet_forward.11
$region0: #{rrdbnet_forward.11}
  #allocation0 [shape = 'u32[]', space=smem, size = 0x4, offset = 0x4, fixed_abs, tag = 'smem constant byte address 0x4 - core index']
  #allocation1 [shape = 'u32[144,128]{1,0:T(1,128)}', space=vmem, size = 0x12000, scoped, tag = 'internal scratch']
  %s0 = inlined_call_operand.vmem [shape: f32[2,64,32], index: 0, kind: input, shape index: {}]
  %s1 = inlined_call_operand.vmem [shape: f32[96,32], index: 1, kind: input, shape index: {}]
  %s2 = inlined_call_operand.vmem [shape: f32[1,32], index: 2, kind: input, shape index: {}]
  %s3 = inlined_call_operand.vmem [shape: f32[2,64,32], index: 3, kind: output, shape index: {}]
  %s4 = sld [smem:[#allocation0]]
  $region45: #{rrdbnet_forward.11} parent=0
    _
  %s6 = ssub.s32 1, %s4
  %s7 = scalar_select 0, %s6, %s4
  loop: start=0, step=1, limit=4
  $region2: #{rrdbnet_forward.11} parent=0 // loop_pre_header
    _
  $region3: #{rrdbnet_forward.11} parent=0 // loop_header
    %s9 = sphi 0, %s13
    %p10 = scmp.ge.s32.totalorder %s9, 4
    %s19 = sphi 0, %s21
    %s22 = sphi 0, %s19
    %s23 = sphi 0, %s22
    %s39 = sphi 0, %s23
    %s43 = sphi 0, %s43
    %s45 = sphi 0, %s43
    %s46 = sphi 0, %s45
    %s60 = sphi 0, %s46
    %s64 = sphi 0, %s64
    %s66 = sphi 0, %s64
    %s67 = sphi 0, %s66
    %s81 = sphi 0, %s67
    %s87 = sphi 0, %s89
    %s90 = sphi 0, %s87
    %s91 = sphi 0, %s90
    %s107 = sphi 0, %s91
  $region4: #{rrdbnet_forward.11} parent=0 // loop_header_branch
    %12 = sbr.rel (%p10) target = $region8
  $region5: #{rrdbnet_forward.11} parent=0 // loop_body
    %s14 = ssub.s32 %s9, 1
    %s15 = ssub.s32 %s9, 2
    %s16 = sadd.s32 %s9, 1
    %s17 = ssub.s32 %s9, %s16
    %p18 = scmp.eq.s32.totalorder %s17, 0
    %s20 = sadd.s32 %s19, 1
    %s21 = scalar_select %p18, %s19, %s20
    %p24 = pneg %p18
    %p25 = scmp.eq.s32.totalorder %s9, 1
    %p26 = por %p24, %p25
    %p27 = scmp.ne.s32.totalorder %s19, %s22
    %p28 = scmp.eq.s32.totalorder %s9, 0
    %p29 = por %p27, %p28
    %p30 = scmp.ne.s32.totalorder %s19, %s22
    %p31 = scmp.eq.s32.totalorder %s14, 1
    %p32 = por %p30, %p31
    %p33 = scmp.ne.s32.totalorder %s22, %s23
    %p34 = scmp.eq.s32.totalorder %s14, 0
    %p35 = por %p33, %p34
    %p36 = scmp.ne.s32.totalorder %s22, %s23
    %p37 = scmp.eq.s32.totalorder %s15, 1
    %p38 = por %p36, %p37
    %p40 = scmp.ne.s32.totalorder %s23, %s39
    %p41 = scmp.eq.s32.totalorder %s15, 0
    %p42 = por %p40, %p41
    %s44 = sadd.s32 %s43, 1
    %p47 = scmp.eq.s32.totalorder %s9, 1
    %p48 = scmp.ne.s32.totalorder %s43, %s45
    %p49 = scmp.eq.s32.totalorder %s9, 0
    %p50 = por %p48, %p49
    %p51 = scmp.ne.s32.totalorder %s43, %s45
    %p52 = scmp.eq.s32.totalorder %s14, 1
    %p53 = por %p51, %p52
    %p54 = scmp.ne.s32.totalorder %s45, %s46
    %p55 = scmp.eq.s32.totalorder %s14, 0
    %p56 = por %p54, %p55
    %p57 = scmp.ne.s32.totalorder %s45, %s46
    %p58 = scmp.eq.s32.totalorder %s15, 1
    %p59 = por %p57, %p58
    %p61 = scmp.ne.s32.totalorder %s46, %s60
    %p62 = scmp.eq.s32.totalorder %s15, 0
    %p63 = por %p61, %p62
    %s65 = sadd.s32 %s64, 1
    %p68 = scmp.eq.s32.totalorder %s9, 1
    %p69 = scmp.ne.s32.totalorder %s64, %s66
    %p70 = scmp.eq.s32.totalorder %s9, 0
    %p71 = por %p69, %p70
    %p72 = scmp.ne.s32.totalorder %s64, %s66
    %p73 = scmp.eq.s32.totalorder %s14, 1
    %p74 = por %p72, %p73
    %p75 = scmp.ne.s32.totalorder %s66, %s67
    %p76 = scmp.eq.s32.totalorder %s14, 0
    %p77 = por %p75, %p76
    %p78 = scmp.ne.s32.totalorder %s66, %s67
    %p79 = scmp.eq.s32.totalorder %s15, 1
    %p80 = por %p78, %p79
    %p82 = scmp.ne.s32.totalorder %s67, %s81
    %p83 = scmp.eq.s32.totalorder %s15, 0
    %p84 = por %p82, %p83
    %s85 = ssub.s32 %s9, %s16
    %p86 = scmp.eq.s32.totalorder %s85, 0
    %s88 = sadd.s32 %s87, 1
    %s89 = scalar_select %p86, %s87, %s88
    %p92 = pneg %p86
    %p93 = scmp.eq.s32.totalorder %s9, 1
    %p94 = por %p92, %p93
    %p95 = scmp.ne.s32.totalorder %s87, %s90
    %p96 = scmp.eq.s32.totalorder %s9, 0
    %p97 = por %p95, %p96
    %p98 = scmp.ne.s32.totalorder %s87, %s90
    %p99 = scmp.eq.s32.totalorder %s14, 1
    %p100 = por %p98, %p99
    %p101 = scmp.ne.s32.totalorder %s90, %s91
    %p102 = scmp.eq.s32.totalorder %s14, 0
    %p103 = por %p101, %p102
    %p104 = scmp.ne.s32.totalorder %s90, %s91
    %p105 = scmp.eq.s32.totalorder %s15, 1
    %p106 = por %p104, %p105
    %p108 = scmp.ne.s32.totalorder %s91, %s107
    %p109 = scmp.eq.s32.totalorder %s15, 0
    %p110 = por %p108, %p109
    %p111 = scmp.le.s32.totalorder 1, %s9
    %p112 = scmp.lt.s32.totalorder %s9, 3
    %p113 = pnand %p111, %p112
    %p114 = pneg %p113
    // Predicated region
    $region9: #{rrdbnet_forward.11} parent=5 // pred_check
      _
    $region10: #{rrdbnet_forward.11} parent=5 // pred_check_branch
      %116 = sbr.rel (%p113) target = $region12
    $region11: #{rrdbnet_forward.11} parent=5 // pred_region
      %s117 = ssub.s32 %s9, 1
      // Predicated region
      $region13: #{rrdbnet_forward.11} parent=11 // pred_check
        %p118 = pneg %p56
      $region14: #{rrdbnet_forward.11} parent=11 // pred_check_branch
        %120 = sbr.rel (%p118) target = $region16
      $region15: #{rrdbnet_forward.11} parent=11 // pred_region
        _
      $region16: #{rrdbnet_forward.11} parent=11 // pred_fallthru
        _
      // Predicated region
      $region17: #{rrdbnet_forward.11} parent=11 // pred_check
        %p121 = pneg %p77
      $region18: #{rrdbnet_forward.11} parent=11 // pred_check_branch
        %123 = sbr.rel (%p121) target = $region20
      $region19: #{rrdbnet_forward.11} parent=11 // pred_region
        _
      $region20: #{rrdbnet_forward.11} parent=11 // pred_fallthru
        _
    $region12: #{rrdbnet_forward.11} parent=5 // pred_fallthru
      _
    %p124 = scmp.lt.s32.totalorder %s9, 2
    // Predicated region
    $region21: #{rrdbnet_forward.11} parent=5 // pred_check
      %p125 = pneg %p124
    $region22: #{rrdbnet_forward.11} parent=5 // pred_check_branch
      %127 = sbr.rel (%p125) target = $region24
    $region23: #{rrdbnet_forward.11} parent=5 // pred_region
      // Predicated region
      $region25: #{rrdbnet_forward.11} parent=23 // pred_check
        %p128 = pneg %p29
      $region26: #{rrdbnet_forward.11} parent=23 // pred_check_branch
        %130 = sbr.rel (%p128) target = $region28
      $region27: #{rrdbnet_forward.11} parent=23 // pred_region
        %p131 = scmp.lt.s32.totalorder %s9, 1
        %s132 = scalar_select %p131, %s9, 1
        %s133 = smul.addr %s132, 8
        %s134 = smul.addr %s133, 8
        %s135 = scalar_lea.vmem %s0, %s134
      $region28: #{rrdbnet_forward.11} parent=23 // pred_fallthru
        _
    $region24: #{rrdbnet_forward.11} parent=5 // pred_fallthru
      _
    %p136 = scmp.le.s32.totalorder 1, %s9
    %p137 = scmp.lt.s32.totalorder %s9, 3
    %p138 = pnand %p136, %p137
    %p139 = pneg %p138
    // Predicated region
    $region29: #{rrdbnet_forward.11} parent=5 // pred_check
      _
    $region30: #{rrdbnet_forward.11} parent=5 // pred_check_branch
      %141 = sbr.rel (%p138) target = $region32
    $region31: #{rrdbnet_forward.11} parent=5 // pred_region
      %s142 = ssub.s32 %s9, 1
      %p143 = scmp.lt.s32.totalorder %s14, 1
      %s144 = scalar_select %p143, %s14, 1
      %s145 = smul.addr %s144, 8
      %s146 = smul.addr %s145, 8
      %s147 = scalar_lea.vmem %s0, %s146
      %p148 = pneg %p35
      %p149 = pneg %p32
      %p150 = pneg %p56
      %p151 = pneg %p53
      %p152 = pneg %p77
      %p153 = pneg %p74
      %p154 = pneg %p103
      %p155 = pneg %p100
      %p156 = scmp.lt.s32.totalorder %s14, 1
      %s157 = scalar_select %p156, %s14, 1
      %s158 = smul.addr %s157, 8
      %s159 = smul.addr %s158, 8
      %s160 = scalar_lea.vmem %s3, %s159
      %p161 = scmp.lt.s32.totalorder %s14, 1
      %s162 = scalar_select %p161, %s14, 1
      %s163 = smul.addr %s162, 8
      %s164 = smul.addr %s163, 8
      %s165 = scalar_lea.vmem %s0, %s164
      %p166 = scmp.lt.s32.totalorder %s14, 1
      %s167 = scalar_select %p166, %s14, 1
      %s168 = smul.addr %s167, 8
      %s169 = smul.addr %s168, 8
      %s170 = scalar_lea.vmem %s3, %s169
      %v171 = vld [vmem:[%s165] sm:$0xff]
      %v172 = vld [vmem:[%s165 + $0x8] sm:$0xff]
      %v173 = vld [vmem:[%s165 + $0x10] sm:$0xff]
      %v174 = vld [vmem:[%s165 + $0x18] sm:$0xff]
      %v175 = vld [vmem:[%s165 + $0x20] sm:$0xff]
      %v176 = vld [vmem:[%s165 + $0x28] sm:$0xff]
      %v177 = vld [vmem:[%s165 + $0x30] sm:$0xff]
      %v178 = vld [vmem:[%s165 + $0x38] sm:$0xff]
      %v179 = vlaneseq
      %v180 = vshrl.u32 %v179, 7
      %v181 = vadd.s32 %v180, 8
      %v182 = vadd.s32 %v180, 16
      %v183 = vadd.s32 %v180, 24
      %v184 = vadd.s32 %v180, 32
      %v185 = vadd.s32 %v180, 40
      %v186 = vadd.s32 %v180, 48
      %v187 = vadd.s32 %v180, 56
      %v188 = vrot.slane %v171, 7
      %v189 = vrot.slane %v172, 7
      %v190 = vrot.slane %v173, 7
      %v191 = vrot.slane %v174, 7
      %v192 = vrot.slane %v175, 7
      %v193 = vrot.slane %v176, 7
      %v194 = vrot.slane %v177, 7
      %v195 = vrot.slane %v178, 7
      %vm196 = vcmp.lt.s32.totalorder %v180, 1
      %v197 = vsel %vm196, %v194, %v195
      %v198 = vsel %vm196, %v193, %v194
      %v199 = vsel %vm196, %v192, %v193
      %v200 = vsel %vm196, %v191, %v192
      %v201 = vsel %vm196, %v190, %v191
      %v202 = vsel %vm196, %v189, %v190
      %v203 = vsel %vm196, %v188, %v189
      %v204 = vsel %vm196, %v195, %v188
      %vm205 = vcmp.eq.s32.totalorder %v180, 0
      %vm206 = vcmp.eq.s32.totalorder %v181, 0
      %vm207 = vcmp.eq.s32.totalorder %v182, 0
      %vm208 = vcmp.eq.s32.totalorder %v183, 0
      %vm209 = vcmp.eq.s32.totalorder %v184, 0
      %vm210 = vcmp.eq.s32.totalorder %v185, 0
      %vm211 = vcmp.eq.s32.totalorder %v186, 0
      %vm212 = vcmp.eq.s32.totalorder %v187, 0
      %v213 = vsel %vm205, 0.0, %v204
      %v214 = vsel %vm206, 0.0, %v203
      %v215 = vsel %vm207, 0.0, %v202
      %v216 = vsel %vm208, 0.0, %v201
      %v217 = vsel %vm209, 0.0, %v200
      %v218 = vsel %vm210, 0.0, %v199
      %v219 = vsel %vm211, 0.0, %v198
      %v220 = vsel %vm212, 0.0, %v197
      %v221 = vrot.slane %v171, 1
      %v222 = vrot.slane %v172, 1
      %v223 = vrot.slane %v173, 1
      %v224 = vrot.slane %v174, 1
      %v225 = vrot.slane %v175, 1
      %v226 = vrot.slane %v176, 1
      %v227 = vrot.slane %v177, 1
      %v228 = vrot.slane %v178, 1
      %vm229 = vcmp.lt.s32.totalorder %v180, 7
      %v230 = vsel %vm229, %v227, %v228
      %v231 = vsel %vm229, %v226, %v227
      %v232 = vsel %vm229, %v225, %v226
      %v233 = vsel %vm229, %v224, %v225
      %v234 = vsel %vm229, %v223, %v224
      %v235 = vsel %vm229, %v222, %v223
      %v236 = vsel %vm229, %v221, %v222
      %v237 = vsel %vm229, %v228, %v221
      %vm238 = vcmp.eq.s32.totalorder %v180, 63
      %vm239 = vcmp.eq.s32.totalorder %v181, 63
      %vm240 = vcmp.eq.s32.totalorder %v182, 63
      %vm241 = vcmp.eq.s32.totalorder %v183, 63
      %vm242 = vcmp.eq.s32.totalorder %v184, 63
      %vm243 = vcmp.eq.s32.totalorder %v185, 63
      %vm244 = vcmp.eq.s32.totalorder %v186, 63
      %vm245 = vcmp.eq.s32.totalorder %v187, 63
      %v246 = vsel %vm238, 0.0, %v236
      %v247 = vsel %vm239, 0.0, %v235
      %v248 = vsel %vm240, 0.0, %v234
      %v249 = vsel %vm241, 0.0, %v233
      %v250 = vsel %vm242, 0.0, %v232
      %v251 = vsel %vm243, 0.0, %v231
      %v252 = vsel %vm244, 0.0, %v230
      %v253 = vsel %vm245, 0.0, %v237
      %262 = vrot.lane.b32.xlu0 %v171, 32
      %v263 = vpop.permute.xlu0 %262
      %264 = vrot.lane.b32.xlu0 %v172, 32
      %v265 = vpop.permute.xlu0 %264
      %266 = vrot.lane.b32.xlu0 %v173, 32
      %v267 = vpop.permute.xlu0 %266
      %268 = vrot.lane.b32.xlu0 %v174, 32
      %v269 = vpop.permute.xlu0 %268
      %270 = vrot.lane.b32.xlu0 %v175, 32
      %v271 = vpop.permute.xlu0 %270
      %272 = vrot.lane.b32.xlu0 %v176, 32
      %v273 = vpop.permute.xlu0 %272
      %274 = vrot.lane.b32.xlu0 %v177, 32
      %v275 = vpop.permute.xlu0 %274
      %276 = vrot.lane.b32.xlu0 %v178, 32
      %v277 = vpop.permute.xlu0 %276
      %294 = vrot.lane.b32.xlu0 %v246, 64
      %v295 = vpop.permute.xlu0 %294
      %296 = vrot.lane.b32.xlu0 %v247, 64
      %v297 = vpop.permute.xlu0 %296
      %298 = vrot.lane.b32.xlu0 %v248, 64
      %v299 = vpop.permute.xlu0 %298
      %300 = vrot.lane.b32.xlu0 %v249, 64
      %v301 = vpop.permute.xlu0 %300
      %302 = vrot.lane.b32.xlu0 %v250, 64
      %v303 = vpop.permute.xlu0 %302
      %304 = vrot.lane.b32.xlu0 %v251, 64
      %v305 = vpop.permute.xlu0 %304
      %306 = vrot.lane.b32.xlu0 %v252, 64
      %v307 = vpop.permute.xlu0 %306
      %308 = vrot.lane.b32.xlu0 %v253, 64
      %v309 = vpop.permute.xlu0 %308
      %vm318 = vcmask 261120
      %v319 = vsel %vm318, %v213, %v263
      %v320 = vsel %vm318, %v214, %v265
      %v321 = vsel %vm318, %v215, %v267
      %v322 = vsel %vm318, %v216, %v269
      %v323 = vsel %vm318, %v217, %v271
      %v324 = vsel %vm318, %v218, %v273
      %v325 = vsel %vm318, %v219, %v275
      %v326 = vsel %vm318, %v220, %v277
      %vm327 = vcmask 523264
      %v328 = vsel %vm327, %v319, %v295
      %v329 = vsel %vm327, %v320, %v297
      %v330 = vsel %vm327, %v321, %v299
      %v331 = vsel %vm327, %v322, %v301
      %v332 = vsel %vm327, %v323, %v303
      %v333 = vsel %vm327, %v324, %v305
      %v334 = vsel %vm327, %v325, %v307
      %v335 = vsel %vm327, %v326, %v309
      %v336 = vld [vmem:[%s1] sm:$0xff]
      %v337 = vld [vmem:[%s1 + $0x8] sm:$0xff]
      %v338 = vld [vmem:[%s1 + $0x10] sm:$0xff]
      %v339 = vld [vmem:[%s1 + $0x18] sm:$0xff]
      %v340 = vld [vmem:[%s1 + $0x20] sm:$0xff]
      %v341 = vld [vmem:[%s1 + $0x28] sm:$0xff]
      %v342 = vld [vmem:[%s1 + $0x30] sm:$0xff]
      %v343 = vld [vmem:[%s1 + $0x38] sm:$0xff]
      %v344 = vld [vmem:[%s1 + $0x40] sm:$0xff]
      %v345 = vld [vmem:[%s1 + $0x48] sm:$0xff]
      %v346 = vld [vmem:[%s1 + $0x50] sm:$0xff]
      %v347 = vld [vmem:[%s1 + $0x58] sm:$0xff]
      %v348 = vld [vmem:[%s2] sm:$0x1]
      %v350 = vlaneseq
      %v351 = vshrl.u32 %v350, 7
      %v352 = vsub.s32 0, %v351
      %v353 = vrot.slane %v348, %v352
      %vm355 = vcmask 785408
      %v357 = vsel %vm355, %v328, 0
      %v360 = vsel %vm355, %v329, 0
      %v363 = vsel %vm355, %v330, 0
      %v366 = vsel %vm355, %v331, 0
      %v369 = vsel %vm355, %v332, 0
      %v372 = vsel %vm355, %v333, 0
      %v375 = vsel %vm355, %v334, 0
      %v378 = vsel %vm355, %v335, 0
      %380 = vmatprep.subr.mxu0 0.0
      %381 = vmatpush1.msra.mxu0 %v336
      %382 = vmatprep.subr.mxu0 0.0
      %383 = vmatpush1.msra.mxu0 %v337
      %384 = vmatprep.subr.mxu0 0.0
      %385 = vmatpush1.msra.mxu0 %v338
      %386 = vmatprep.subr.mxu0 0.0
      %387 = vmatpush1.msra.mxu0 %v339
      %388 = vmatprep.subr.mxu0 0.0
      %389 = vmatpush1.msra.mxu0 %v340
      %390 = vmatprep.subr.mxu0 0.0
      %391 = vmatpush1.msra.mxu0 %v341
      %392 = vmatprep.subr.mxu0 0.0
      %393 = vmatpush1.msra.mxu0 %v342
      %394 = vmatprep.subr.mxu0 0.0
      %395 = vmatpush1.msra.mxu0 %v343
      %396 = vmatprep.subr.mxu0 0.0
      %397 = vmatpush1.msra.mxu0 %v344
      %398 = vmatprep.subr.mxu0 0.0
      %399 = vmatpush1.msra.mxu0 %v345
      %400 = vmatprep.subr.mxu0 0.0
      %401 = vmatpush1.msra.mxu0 %v346
      %402 = vmatprep.subr.mxu0 0.0
      %403 = vmatpush1.msra.mxu0 %v347
      %404 = vmatprep.subr.mxu0 0.0
      %405 = vmatpush1.msra.mxu0 0.0
      %406 = vmatprep.subr.mxu0 0.0
      %407 = vmatpush1.msra.mxu0 0.0
      %408 = vmatprep.subr.mxu0 0.0
      %409 = vmatpush1.msra.mxu0 0.0
      %410 = vmatprep.subr.mxu0 0.0
      %411 = vmatpush1.msra.mxu0 0.0
      %412 = vmatprep.subr.mxu0 0.0
      %413 = vmatpush1.msra.mxu0 0.0
      %414 = vmatprep.subr.mxu0 0.0
      %415 = vmatpush1.msra.mxu0 0.0
      %416 = vmatprep.subr.mxu0 0.0
      %417 = vmatpush1.msra.mxu0 0.0
      %418 = vmatprep.subr.mxu0 0.0
      %419 = vmatpush1.msra.mxu0 0.0
      %420 = vmatprep.subr.mxu0 0.0
      %421 = vmatpush1.msra.mxu0 0.0
      %422 = vmatprep.subr.mxu0 0.0
      %423 = vmatpush1.msra.mxu0 0.0
      %424 = vmatprep.subr.mxu0 0.0
      %425 = vmatpush1.msra.mxu0 0.0
      %426 = vmatprep.subr.mxu0 0.0
      %427 = vmatpush1.msra.mxu0 0.0
      %428 = vmatprep.subr.mxu0 0.0
      %429 = vmatpush1.msra.mxu0 0.0
      %430 = vmatprep.subr.mxu0 0.0
      %431 = vmatpush1.msra.mxu0 0.0
      %432 = vmatprep.subr.mxu0 0.0
      %433 = vmatpush1.msra.mxu0 0.0
      %434 = vmatprep.subr.mxu0 0.0
      %435 = vmatpush1.msra.mxu0 0.0
      %436 = vmatprep.subr.mxu0 0.0
      %437 = vmatpush1.msra.mxu0 0.0
      %438 = vmatprep.subr.mxu0 0.0
      %439 = vmatpush1.msra.mxu0 0.0
      %440 = vmatprep.subr.mxu0 0.0
      %441 = vmatpush1.msra.mxu0 0.0
      %442 = vmatprep.subr.mxu0 0.0
      %443 = vmatpush1.msra.mxu0 0.0
      %444 = vmatprep.mubr.f32.mxu0 0.0
      %445 = vmatmul.mubr.f32.gmra.mrb[0].mxu0 %v357
      %v446 = vpop.f32.mrb[0].mxu0
      %v447 = vadd.f32 %v353, %v446
      %v448 = vpop.f32.mrb[0].mxu0
      %449 = vmatprep.mubr.f32.mxu0 0.0
      %450 = vmatmul.mubr.f32.gmra.mrb[0].mxu0 %v360
      %v451 = vpop.f32.mrb[0].mxu0
      %v452 = vadd.f32 %v353, %v451
      %v453 = vpop.f32.mrb[0].mxu0
      %454 = vmatprep.mubr.f32.mxu0 0.0
      %455 = vmatmul.mubr.f32.gmra.mrb[0].mxu0 %v363
      %v456 = vpop.f32.mrb[0].mxu0
      %v457 = vadd.f32 %v353, %v456
      %v458 = vpop.f32.mrb[0].mxu0
      %459 = vmatprep.mubr.f32.mxu0 0.0
      %460 = vmatmul.mubr.f32.gmra.mrb[0].mxu0 %v366
      %v461 = vpop.f32.mrb[0].mxu0
      %v462 = vadd.f32 %v353, %v461
      %v463 = vpop.f32.mrb[0].mxu0
      %464 = vmatprep.mubr.f32.mxu0 0.0
      %465 = vmatmul.mubr.f32.gmra.mrb[0].mxu0 %v369
      %v466 = vpop.f32.mrb[0].mxu0
      %v467 = vadd.f32 %v353, %v466
      %v468 = vpop.f32.mrb[0].mxu0
      %469 = vmatprep.mubr.f32.mxu0 0.0
      %470 = vmatmul.mubr.f32.gmra.mrb[0].mxu0 %v372
      %v471 = vpop.f32.mrb[0].mxu0
      %v472 = vadd.f32 %v353, %v471
      %v473 = vpop.f32.mrb[0].mxu0
      %474 = vmatprep.mubr.f32.mxu0 0.0
      %475 = vmatmul.mubr.f32.gmra.mrb[0].mxu0 %v375
      %v476 = vpop.f32.mrb[0].mxu0
      %v477 = vadd.f32 %v353, %v476
      %v478 = vpop.f32.mrb[0].mxu0
      %479 = vmatprep.mubr.f32.mxu0 0.0
      %480 = vmatmul.mubr.f32.gmra.mrb[0].mxu0 %v378
      %v481 = vpop.f32.mrb[0].mxu0
      %v482 = vadd.f32 %v353, %v481
      %v483 = vpop.f32.mrb[0].mxu0
      %484 = vdwg.mxu0
      %vm485 = vcmp.gt.f32.partialorder %v447, 0.0
      %vm486 = vcmp.gt.f32.partialorder %v452, 0.0
      %vm487 = vcmp.gt.f32.partialorder %v457, 0.0
      %vm488 = vcmp.gt.f32.partialorder %v462, 0.0
      %vm489 = vcmp.gt.f32.partialorder %v467, 0.0
      %vm490 = vcmp.gt.f32.partialorder %v472, 0.0
      %vm491 = vcmp.gt.f32.partialorder %v477, 0.0
      %vm492 = vcmp.gt.f32.partialorder %v482, 0.0
      %v493 = vmul.f32 %v447, 0.2
      %v494 = vmul.f32 %v452, 0.2
      %v495 = vmul.f32 %v457, 0.2
      %v496 = vmul.f32 %v462, 0.2
      %v497 = vmul.f32 %v467, 0.2
      %v498 = vmul.f32 %v472, 0.2
      %v499 = vmul.f32 %v477, 0.2
      %v500 = vmul.f32 %v482, 0.2
      %v501 = vsel %vm485, %v447, %v493
      %v502 = vsel %vm486, %v452, %v494
      %v503 = vsel %vm487, %v457, %v495
      %v504 = vsel %vm488, %v462, %v496
      %v505 = vsel %vm489, %v467, %v497
      %v506 = vsel %vm490, %v472, %v498
      %v507 = vsel %vm491, %v477, %v499
      %v508 = vsel %vm492, %v482, %v500
      %509 = vst.msk [vmem:[%s170] sm:$0xff] %vm318, %v501
      %510 = vst.msk [vmem:[%s170 + $0x8] sm:$0xff] %vm318, %v502
      %511 = vst.msk [vmem:[%s170 + $0x10] sm:$0xff] %vm318, %v503
      %512 = vst.msk [vmem:[%s170 + $0x18] sm:$0xff] %vm318, %v504
      %513 = vst.msk [vmem:[%s170 + $0x20] sm:$0xff] %vm318, %v505
      %514 = vst.msk [vmem:[%s170 + $0x28] sm:$0xff] %vm318, %v506
      %515 = vst.msk [vmem:[%s170 + $0x30] sm:$0xff] %vm318, %v507
      %516 = vst.msk [vmem:[%s170 + $0x38] sm:$0xff] %vm318, %v508
      %p517 = scmp.lt.s32.totalorder %s14, 1
      %s518 = scalar_select %p517, %s14, 1
      %s519 = smul.addr %s518, 8
      %s520 = smul.addr %s519, 8
      %s521 = scalar_lea.vmem %s3, %s520
      // Predicated region
      $region33: #{rrdbnet_forward.11} parent=31 // pred_check
        %p522 = pneg %p100
      $region34: #{rrdbnet_forward.11} parent=31 // pred_check_branch
        %524 = sbr.rel (%p522) target = $region36
      $region35: #{rrdbnet_forward.11} parent=31 // pred_region
        _
      $region36: #{rrdbnet_forward.11} parent=31 // pred_fallthru
        _
    $region32: #{rrdbnet_forward.11} parent=5 // pred_fallthru
      _
    %p525 = scmp.le.s32.totalorder 2, %s9
    // Predicated region
    $region37: #{rrdbnet_forward.11} parent=5 // pred_check
      %p526 = pneg %p525
    $region38: #{rrdbnet_forward.11} parent=5 // pred_check_branch
      %528 = sbr.rel (%p526) target = $region40
    $region39: #{rrdbnet_forward.11} parent=5 // pred_region
      %s529 = ssub.s32 %s9, 2
      // Predicated region
      $region41: #{rrdbnet_forward.11} parent=39 // pred_check
        %p530 = pneg %p106
      $region42: #{rrdbnet_forward.11} parent=39 // pred_check_branch
        %532 = sbr.rel (%p530) target = $region44
      $region43: #{rrdbnet_forward.11} parent=39 // pred_region
        %p533 = scmp.lt.s32.totalorder %s15, 1
        %s534 = scalar_select %p533, %s15, 1
        %s535 = smul.addr %s534, 8
        %s536 = smul.addr %s535, 8
        %s537 = scalar_lea.vmem %s3, %s536
      $region44: #{rrdbnet_forward.11} parent=39 // pred_fallthru
        _
    $region40: #{rrdbnet_forward.11} parent=5 // pred_fallthru
      _
  $region6: #{rrdbnet_forward.11} parent=0 // loop_footer
    %s13 = sadd.s32 1, %s9
  $region7: #{rrdbnet_forward.11} parent=0 // loop_footer_branch
    %8 = sbr.rel target = $region3
  $region8: #{rrdbnet_forward.11} parent=0 // loop_exit
    _

// kernel: rrdbnet_forward.13
$region0: #{rrdbnet_forward.13}
  #allocation0 [shape = 'u32[]', space=smem, size = 0x4, offset = 0x4, fixed_abs, tag = 'smem constant byte address 0x4 - core index']
  #allocation1 [shape = 'u32[144,128]{1,0:T(1,128)}', space=vmem, size = 0x12000, scoped, tag = 'internal scratch']
  %s0 = inlined_call_operand.vmem [shape: f32[2,64,32], index: 0, kind: input, shape index: {}]
  %s1 = inlined_call_operand.vmem [shape: f32[96,4], index: 1, kind: input, shape index: {}]
  %s2 = inlined_call_operand.vmem [shape: f32[1,4], index: 2, kind: input, shape index: {}]
  %s3 = inlined_call_operand.vmem [shape: f32[2,64,4], index: 3, kind: output, shape index: {}]
  %s4 = sld [smem:[#allocation0]]
  $region45: #{rrdbnet_forward.13} parent=0
    _
  %s6 = ssub.s32 1, %s4
  %s7 = scalar_select 0, %s6, %s4
  loop: start=0, step=1, limit=4
  $region2: #{rrdbnet_forward.13} parent=0 // loop_pre_header
    _
  $region3: #{rrdbnet_forward.13} parent=0 // loop_header
    %s9 = sphi 0, %s13
    %p10 = scmp.ge.s32.totalorder %s9, 4
    %s19 = sphi 0, %s21
    %s22 = sphi 0, %s19
    %s23 = sphi 0, %s22
    %s39 = sphi 0, %s23
    %s43 = sphi 0, %s43
    %s45 = sphi 0, %s43
    %s46 = sphi 0, %s45
    %s60 = sphi 0, %s46
    %s64 = sphi 0, %s64
    %s66 = sphi 0, %s64
    %s67 = sphi 0, %s66
    %s81 = sphi 0, %s67
    %s87 = sphi 0, %s89
    %s90 = sphi 0, %s87
    %s91 = sphi 0, %s90
    %s107 = sphi 0, %s91
  $region4: #{rrdbnet_forward.13} parent=0 // loop_header_branch
    %12 = sbr.rel (%p10) target = $region8
  $region5: #{rrdbnet_forward.13} parent=0 // loop_body
    %s14 = ssub.s32 %s9, 1
    %s15 = ssub.s32 %s9, 2
    %s16 = sadd.s32 %s9, 1
    %s17 = ssub.s32 %s9, %s16
    %p18 = scmp.eq.s32.totalorder %s17, 0
    %s20 = sadd.s32 %s19, 1
    %s21 = scalar_select %p18, %s19, %s20
    %p24 = pneg %p18
    %p25 = scmp.eq.s32.totalorder %s9, 1
    %p26 = por %p24, %p25
    %p27 = scmp.ne.s32.totalorder %s19, %s22
    %p28 = scmp.eq.s32.totalorder %s9, 0
    %p29 = por %p27, %p28
    %p30 = scmp.ne.s32.totalorder %s19, %s22
    %p31 = scmp.eq.s32.totalorder %s14, 1
    %p32 = por %p30, %p31
    %p33 = scmp.ne.s32.totalorder %s22, %s23
    %p34 = scmp.eq.s32.totalorder %s14, 0
    %p35 = por %p33, %p34
    %p36 = scmp.ne.s32.totalorder %s22, %s23
    %p37 = scmp.eq.s32.totalorder %s15, 1
    %p38 = por %p36, %p37
    %p40 = scmp.ne.s32.totalorder %s23, %s39
    %p41 = scmp.eq.s32.totalorder %s15, 0
    %p42 = por %p40, %p41
    %s44 = sadd.s32 %s43, 1
    %p47 = scmp.eq.s32.totalorder %s9, 1
    %p48 = scmp.ne.s32.totalorder %s43, %s45
    %p49 = scmp.eq.s32.totalorder %s9, 0
    %p50 = por %p48, %p49
    %p51 = scmp.ne.s32.totalorder %s43, %s45
    %p52 = scmp.eq.s32.totalorder %s14, 1
    %p53 = por %p51, %p52
    %p54 = scmp.ne.s32.totalorder %s45, %s46
    %p55 = scmp.eq.s32.totalorder %s14, 0
    %p56 = por %p54, %p55
    %p57 = scmp.ne.s32.totalorder %s45, %s46
    %p58 = scmp.eq.s32.totalorder %s15, 1
    %p59 = por %p57, %p58
    %p61 = scmp.ne.s32.totalorder %s46, %s60
    %p62 = scmp.eq.s32.totalorder %s15, 0
    %p63 = por %p61, %p62
    %s65 = sadd.s32 %s64, 1
    %p68 = scmp.eq.s32.totalorder %s9, 1
    %p69 = scmp.ne.s32.totalorder %s64, %s66
    %p70 = scmp.eq.s32.totalorder %s9, 0
    %p71 = por %p69, %p70
    %p72 = scmp.ne.s32.totalorder %s64, %s66
    %p73 = scmp.eq.s32.totalorder %s14, 1
    %p74 = por %p72, %p73
    %p75 = scmp.ne.s32.totalorder %s66, %s67
    %p76 = scmp.eq.s32.totalorder %s14, 0
    %p77 = por %p75, %p76
    %p78 = scmp.ne.s32.totalorder %s66, %s67
    %p79 = scmp.eq.s32.totalorder %s15, 1
    %p80 = por %p78, %p79
    %p82 = scmp.ne.s32.totalorder %s67, %s81
    %p83 = scmp.eq.s32.totalorder %s15, 0
    %p84 = por %p82, %p83
    %s85 = ssub.s32 %s9, %s16
    %p86 = scmp.eq.s32.totalorder %s85, 0
    %s88 = sadd.s32 %s87, 1
    %s89 = scalar_select %p86, %s87, %s88
    %p92 = pneg %p86
    %p93 = scmp.eq.s32.totalorder %s9, 1
    %p94 = por %p92, %p93
    %p95 = scmp.ne.s32.totalorder %s87, %s90
    %p96 = scmp.eq.s32.totalorder %s9, 0
    %p97 = por %p95, %p96
    %p98 = scmp.ne.s32.totalorder %s87, %s90
    %p99 = scmp.eq.s32.totalorder %s14, 1
    %p100 = por %p98, %p99
    %p101 = scmp.ne.s32.totalorder %s90, %s91
    %p102 = scmp.eq.s32.totalorder %s14, 0
    %p103 = por %p101, %p102
    %p104 = scmp.ne.s32.totalorder %s90, %s91
    %p105 = scmp.eq.s32.totalorder %s15, 1
    %p106 = por %p104, %p105
    %p108 = scmp.ne.s32.totalorder %s91, %s107
    %p109 = scmp.eq.s32.totalorder %s15, 0
    %p110 = por %p108, %p109
    %p111 = scmp.le.s32.totalorder 1, %s9
    %p112 = scmp.lt.s32.totalorder %s9, 3
    %p113 = pnand %p111, %p112
    %p114 = pneg %p113
    // Predicated region
    $region9: #{rrdbnet_forward.13} parent=5 // pred_check
      _
    $region10: #{rrdbnet_forward.13} parent=5 // pred_check_branch
      %116 = sbr.rel (%p113) target = $region12
    $region11: #{rrdbnet_forward.13} parent=5 // pred_region
      %s117 = ssub.s32 %s9, 1
      // Predicated region
      $region13: #{rrdbnet_forward.13} parent=11 // pred_check
        %p118 = pneg %p56
      $region14: #{rrdbnet_forward.13} parent=11 // pred_check_branch
        %120 = sbr.rel (%p118) target = $region16
      $region15: #{rrdbnet_forward.13} parent=11 // pred_region
        _
      $region16: #{rrdbnet_forward.13} parent=11 // pred_fallthru
        _
      // Predicated region
      $region17: #{rrdbnet_forward.13} parent=11 // pred_check
        %p121 = pneg %p77
      $region18: #{rrdbnet_forward.13} parent=11 // pred_check_branch
        %123 = sbr.rel (%p121) target = $region20
      $region19: #{rrdbnet_forward.13} parent=11 // pred_region
        _
      $region20: #{rrdbnet_forward.13} parent=11 // pred_fallthru
        _
    $region12: #{rrdbnet_forward.13} parent=5 // pred_fallthru
      _
    %p124 = scmp.lt.s32.totalorder %s9, 2
    // Predicated region
    $region21: #{rrdbnet_forward.13} parent=5 // pred_check
      %p125 = pneg %p124
    $region22: #{rrdbnet_forward.13} parent=5 // pred_check_branch
      %127 = sbr.rel (%p125) target = $region24
    $region23: #{rrdbnet_forward.13} parent=5 // pred_region
      // Predicated region
      $region25: #{rrdbnet_forward.13} parent=23 // pred_check
        %p128 = pneg %p29
      $region26: #{rrdbnet_forward.13} parent=23 // pred_check_branch
        %130 = sbr.rel (%p128) target = $region28
      $region27: #{rrdbnet_forward.13} parent=23 // pred_region
        %p131 = scmp.lt.s32.totalorder %s9, 1
        %s132 = scalar_select %p131, %s9, 1
        %s133 = smul.addr %s132, 8
        %s134 = smul.addr %s133, 8
        %s135 = scalar_lea.vmem %s0, %s134
      $region28: #{rrdbnet_forward.13} parent=23 // pred_fallthru
        _
    $region24: #{rrdbnet_forward.13} parent=5 // pred_fallthru
      _
    %p136 = scmp.le.s32.totalorder 1, %s9
    %p137 = scmp.lt.s32.totalorder %s9, 3
    %p138 = pnand %p136, %p137
    %p139 = pneg %p138
    // Predicated region
    $region29: #{rrdbnet_forward.13} parent=5 // pred_check
      _
    $region30: #{rrdbnet_forward.13} parent=5 // pred_check_branch
      %141 = sbr.rel (%p138) target = $region32
    $region31: #{rrdbnet_forward.13} parent=5 // pred_region
      %s142 = ssub.s32 %s9, 1
      %p143 = scmp.lt.s32.totalorder %s14, 1
      %s144 = scalar_select %p143, %s14, 1
      %s145 = smul.addr %s144, 8
      %s146 = smul.addr %s145, 8
      %s147 = scalar_lea.vmem %s0, %s146
      %p148 = pneg %p35
      %p149 = pneg %p32
      %p150 = pneg %p56
      %p151 = pneg %p53
      %p152 = pneg %p77
      %p153 = pneg %p74
      %p154 = pneg %p103
      %p155 = pneg %p100
      %p156 = scmp.lt.s32.totalorder %s14, 1
      %s157 = scalar_select %p156, %s14, 1
      %s158 = smul.addr %s157, 8
      %s159 = smul.addr %s158, 8
      %s160 = scalar_lea.vmem %s3, %s159
      %p161 = scmp.lt.s32.totalorder %s14, 1
      %s162 = scalar_select %p161, %s14, 1
      %s163 = smul.addr %s162, 8
      %s164 = smul.addr %s163, 8
      %s165 = scalar_lea.vmem %s0, %s164
      %p166 = scmp.lt.s32.totalorder %s14, 1
      %s167 = scalar_select %p166, %s14, 1
      %s168 = smul.addr %s167, 8
      %s169 = smul.addr %s168, 8
      %s170 = scalar_lea.vmem %s3, %s169
      %v171 = vld [vmem:[%s165] sm:$0xff]
      %v172 = vld [vmem:[%s165 + $0x8] sm:$0xff]
      %v173 = vld [vmem:[%s165 + $0x10] sm:$0xff]
      %v174 = vld [vmem:[%s165 + $0x18] sm:$0xff]
      %v175 = vld [vmem:[%s165 + $0x20] sm:$0xff]
      %v176 = vld [vmem:[%s165 + $0x28] sm:$0xff]
      %v177 = vld [vmem:[%s165 + $0x30] sm:$0xff]
      %v178 = vld [vmem:[%s165 + $0x38] sm:$0xff]
      %v179 = vlaneseq
      %v180 = vshrl.u32 %v179, 7
      %v181 = vadd.s32 %v180, 8
      %v182 = vadd.s32 %v180, 16
      %v183 = vadd.s32 %v180, 24
      %v184 = vadd.s32 %v180, 32
      %v185 = vadd.s32 %v180, 40
      %v186 = vadd.s32 %v180, 48
      %v187 = vadd.s32 %v180, 56
      %v188 = vrot.slane %v171, 7
      %v189 = vrot.slane %v172, 7
      %v190 = vrot.slane %v173, 7
      %v191 = vrot.slane %v174, 7
      %v192 = vrot.slane %v175, 7
      %v193 = vrot.slane %v176, 7
      %v194 = vrot.slane %v177, 7
      %v195 = vrot.slane %v178, 7
      %vm196 = vcmp.lt.s32.totalorder %v180, 1
      %v197 = vsel %vm196, %v194, %v195
      %v198 = vsel %vm196, %v193, %v194
      %v199 = vsel %vm196, %v192, %v193
      %v200 = vsel %vm196, %v191, %v192
      %v201 = vsel %vm196, %v190, %v191
      %v202 = vsel %vm196, %v189, %v190
      %v203 = vsel %vm196, %v188, %v189
      %v204 = vsel %vm196, %v195, %v188
      %vm205 = vcmp.eq.s32.totalorder %v180, 0
      %vm206 = vcmp.eq.s32.totalorder %v181, 0
      %vm207 = vcmp.eq.s32.totalorder %v182, 0
      %vm208 = vcmp.eq.s32.totalorder %v183, 0
      %vm209 = vcmp.eq.s32.totalorder %v184, 0
      %vm210 = vcmp.eq.s32.totalorder %v185, 0
      %vm211 = vcmp.eq.s32.totalorder %v186, 0
      %vm212 = vcmp.eq.s32.totalorder %v187, 0
      %v213 = vsel %vm205, 0.0, %v204
      %v214 = vsel %vm206, 0.0, %v203
      %v215 = vsel %vm207, 0.0, %v202
      %v216 = vsel %vm208, 0.0, %v201
      %v217 = vsel %vm209, 0.0, %v200
      %v218 = vsel %vm210, 0.0, %v199
      %v219 = vsel %vm211, 0.0, %v198
      %v220 = vsel %vm212, 0.0, %v197
      %v221 = vrot.slane %v171, 1
      %v222 = vrot.slane %v172, 1
      %v223 = vrot.slane %v173, 1
      %v224 = vrot.slane %v174, 1
      %v225 = vrot.slane %v175, 1
      %v226 = vrot.slane %v176, 1
      %v227 = vrot.slane %v177, 1
      %v228 = vrot.slane %v178, 1
      %vm229 = vcmp.lt.s32.totalorder %v180, 7
      %v230 = vsel %vm229, %v227, %v228
      %v231 = vsel %vm229, %v226, %v227
      %v232 = vsel %vm229, %v225, %v226
      %v233 = vsel %vm229, %v224, %v225
      %v234 = vsel %vm229, %v223, %v224
      %v235 = vsel %vm229, %v222, %v223
      %v236 = vsel %vm229, %v221, %v222
      %v237 = vsel %vm229, %v228, %v221
      %vm238 = vcmp.eq.s32.totalorder %v180, 63
      %vm239 = vcmp.eq.s32.totalorder %v181, 63
      %vm240 = vcmp.eq.s32.totalorder %v182, 63
      %vm241 = vcmp.eq.s32.totalorder %v183, 63
      %vm242 = vcmp.eq.s32.totalorder %v184, 63
      %vm243 = vcmp.eq.s32.totalorder %v185, 63
      %vm244 = vcmp.eq.s32.totalorder %v186, 63
      %vm245 = vcmp.eq.s32.totalorder %v187, 63
      %v246 = vsel %vm238, 0.0, %v236
      %v247 = vsel %vm239, 0.0, %v235
      %v248 = vsel %vm240, 0.0, %v234
      %v249 = vsel %vm241, 0.0, %v233
      %v250 = vsel %vm242, 0.0, %v232
      %v251 = vsel %vm243, 0.0, %v231
      %v252 = vsel %vm244, 0.0, %v230
      %v253 = vsel %vm245, 0.0, %v237
      %262 = vrot.lane.b32.xlu0 %v171, 32
      %v263 = vpop.permute.xlu0 %262
      %264 = vrot.lane.b32.xlu0 %v172, 32
      %v265 = vpop.permute.xlu0 %264
      %266 = vrot.lane.b32.xlu0 %v173, 32
      %v267 = vpop.permute.xlu0 %266
      %268 = vrot.lane.b32.xlu0 %v174, 32
      %v269 = vpop.permute.xlu0 %268
      %270 = vrot.lane.b32.xlu0 %v175, 32
      %v271 = vpop.permute.xlu0 %270
      %272 = vrot.lane.b32.xlu0 %v176, 32
      %v273 = vpop.permute.xlu0 %272
      %274 = vrot.lane.b32.xlu0 %v177, 32
      %v275 = vpop.permute.xlu0 %274
      %276 = vrot.lane.b32.xlu0 %v178, 32
      %v277 = vpop.permute.xlu0 %276
      %294 = vrot.lane.b32.xlu0 %v246, 64
      %v295 = vpop.permute.xlu0 %294
      %296 = vrot.lane.b32.xlu0 %v247, 64
      %v297 = vpop.permute.xlu0 %296
      %298 = vrot.lane.b32.xlu0 %v248, 64
      %v299 = vpop.permute.xlu0 %298
      %300 = vrot.lane.b32.xlu0 %v249, 64
      %v301 = vpop.permute.xlu0 %300
      %302 = vrot.lane.b32.xlu0 %v250, 64
      %v303 = vpop.permute.xlu0 %302
      %304 = vrot.lane.b32.xlu0 %v251, 64
      %v305 = vpop.permute.xlu0 %304
      %306 = vrot.lane.b32.xlu0 %v252, 64
      %v307 = vpop.permute.xlu0 %306
      %308 = vrot.lane.b32.xlu0 %v253, 64
      %v309 = vpop.permute.xlu0 %308
      %vm318 = vcmask 261120
      %v319 = vsel %vm318, %v213, %v263
      %v320 = vsel %vm318, %v214, %v265
      %v321 = vsel %vm318, %v215, %v267
      %v322 = vsel %vm318, %v216, %v269
      %v323 = vsel %vm318, %v217, %v271
      %v324 = vsel %vm318, %v218, %v273
      %v325 = vsel %vm318, %v219, %v275
      %v326 = vsel %vm318, %v220, %v277
      %vm327 = vcmask 523264
      %v328 = vsel %vm327, %v319, %v295
      %v329 = vsel %vm327, %v320, %v297
      %v330 = vsel %vm327, %v321, %v299
      %v331 = vsel %vm327, %v322, %v301
      %v332 = vsel %vm327, %v323, %v303
      %v333 = vsel %vm327, %v324, %v305
      %v334 = vsel %vm327, %v325, %v307
      %v335 = vsel %vm327, %v326, %v309
      %v336 = vld [vmem:[%s1] sm:$0xff]
      %v337 = vld [vmem:[%s1 + $0x8] sm:$0xff]
      %v338 = vld [vmem:[%s1 + $0x10] sm:$0xff]
      %v339 = vld [vmem:[%s1 + $0x18] sm:$0xff]
      %v340 = vld [vmem:[%s1 + $0x20] sm:$0xff]
      %v341 = vld [vmem:[%s1 + $0x28] sm:$0xff]
      %v342 = vld [vmem:[%s1 + $0x30] sm:$0xff]
      %v343 = vld [vmem:[%s1 + $0x38] sm:$0xff]
      %v344 = vld [vmem:[%s1 + $0x40] sm:$0xff]
      %v345 = vld [vmem:[%s1 + $0x48] sm:$0xff]
      %v346 = vld [vmem:[%s1 + $0x50] sm:$0xff]
      %v347 = vld [vmem:[%s1 + $0x58] sm:$0xff]
      %v348 = vld [vmem:[%s2] sm:$0x1]
      %v350 = vlaneseq
      %v351 = vshrl.u32 %v350, 7
      %v352 = vsub.s32 0, %v351
      %v353 = vrot.slane %v348, %v352
      %vm355 = vcmask 785408
      %v357 = vsel %vm355, %v328, 0
      %v360 = vsel %vm355, %v329, 0
      %v363 = vsel %vm355, %v330, 0
      %v366 = vsel %vm355, %v331, 0
      %v369 = vsel %vm355, %v332, 0
      %v372 = vsel %vm355, %v333, 0
      %v375 = vsel %vm355, %v334, 0
      %v378 = vsel %vm355, %v335, 0
      %380 = vmatprep.subr.mxu0 0.0
      %381 = vmatpush1.msra.mxu0 %v336
      %382 = vmatprep.subr.mxu0 0.0
      %383 = vmatpush1.msra.mxu0 %v337
      %384 = vmatprep.subr.mxu0 0.0
      %385 = vmatpush1.msra.mxu0 %v338
      %386 = vmatprep.subr.mxu0 0.0
      %387 = vmatpush1.msra.mxu0 %v339
      %388 = vmatprep.subr.mxu0 0.0
      %389 = vmatpush1.msra.mxu0 %v340
      %390 = vmatprep.subr.mxu0 0.0
      %391 = vmatpush1.msra.mxu0 %v341
      %392 = vmatprep.subr.mxu0 0.0
      %393 = vmatpush1.msra.mxu0 %v342
      %394 = vmatprep.subr.mxu0 0.0
      %395 = vmatpush1.msra.mxu0 %v343
      %396 = vmatprep.subr.mxu0 0.0
      %397 = vmatpush1.msra.mxu0 %v344
      %398 = vmatprep.subr.mxu0 0.0
      %399 = vmatpush1.msra.mxu0 %v345
      %400 = vmatprep.subr.mxu0 0.0
      %401 = vmatpush1.msra.mxu0 %v346
      %402 = vmatprep.subr.mxu0 0.0
      %403 = vmatpush1.msra.mxu0 %v347
      %404 = vmatprep.subr.mxu0 0.0
      %405 = vmatpush1.msra.mxu0 0.0
      %406 = vmatprep.subr.mxu0 0.0
      %407 = vmatpush1.msra.mxu0 0.0
      %408 = vmatprep.subr.mxu0 0.0
      %409 = vmatpush1.msra.mxu0 0.0
      %410 = vmatprep.subr.mxu0 0.0
      %411 = vmatpush1.msra.mxu0 0.0
      %412 = vmatprep.subr.mxu0 0.0
      %413 = vmatpush1.msra.mxu0 0.0
      %414 = vmatprep.subr.mxu0 0.0
      %415 = vmatpush1.msra.mxu0 0.0
      %416 = vmatprep.subr.mxu0 0.0
      %417 = vmatpush1.msra.mxu0 0.0
      %418 = vmatprep.subr.mxu0 0.0
      %419 = vmatpush1.msra.mxu0 0.0
      %420 = vmatprep.subr.mxu0 0.0
      %421 = vmatpush1.msra.mxu0 0.0
      %422 = vmatprep.subr.mxu0 0.0
      %423 = vmatpush1.msra.mxu0 0.0
      %424 = vmatprep.subr.mxu0 0.0
      %425 = vmatpush1.msra.mxu0 0.0
      %426 = vmatprep.subr.mxu0 0.0
      %427 = vmatpush1.msra.mxu0 0.0
      %428 = vmatprep.subr.mxu0 0.0
      %429 = vmatpush1.msra.mxu0 0.0
      %430 = vmatprep.subr.mxu0 0.0
      %431 = vmatpush1.msra.mxu0 0.0
      %432 = vmatprep.subr.mxu0 0.0
      %433 = vmatpush1.msra.mxu0 0.0
      %434 = vmatprep.subr.mxu0 0.0
      %435 = vmatpush1.msra.mxu0 0.0
      %436 = vmatprep.subr.mxu0 0.0
      %437 = vmatpush1.msra.mxu0 0.0
      %438 = vmatprep.subr.mxu0 0.0
      %439 = vmatpush1.msra.mxu0 0.0
      %440 = vmatprep.subr.mxu0 0.0
      %441 = vmatpush1.msra.mxu0 0.0
      %442 = vmatprep.subr.mxu0 0.0
      %443 = vmatpush1.msra.mxu0 0.0
      %444 = vmatprep.mubr.f32.mxu0 0.0
      %445 = vmatmul.mubr.f32.gmra.mrb[0].mxu0 %v357
      %v446 = vpop.f32.mrb[0].mxu0
      %v447 = vadd.f32 %v353, %v446
      %v448 = vpop.f32.mrb[0].mxu0
      %449 = vmatprep.mubr.f32.mxu0 0.0
      %450 = vmatmul.mubr.f32.gmra.mrb[0].mxu0 %v360
      %v451 = vpop.f32.mrb[0].mxu0
      %v452 = vadd.f32 %v353, %v451
      %v453 = vpop.f32.mrb[0].mxu0
      %454 = vmatprep.mubr.f32.mxu0 0.0
      %455 = vmatmul.mubr.f32.gmra.mrb[0].mxu0 %v363
      %v456 = vpop.f32.mrb[0].mxu0
      %v457 = vadd.f32 %v353, %v456
      %v458 = vpop.f32.mrb[0].mxu0
      %459 = vmatprep.mubr.f32.mxu0 0.0
      %460 = vmatmul.mubr.f32.gmra.mrb[0].mxu0 %v366
      %v461 = vpop.f32.mrb[0].mxu0
      %v462 = vadd.f32 %v353, %v461
      %v463 = vpop.f32.mrb[0].mxu0
      %464 = vmatprep.mubr.f32.mxu0 0.0
      %465 = vmatmul.mubr.f32.gmra.mrb[0].mxu0 %v369
      %v466 = vpop.f32.mrb[0].mxu0
      %v467 = vadd.f32 %v353, %v466
      %v468 = vpop.f32.mrb[0].mxu0
      %469 = vmatprep.mubr.f32.mxu0 0.0
      %470 = vmatmul.mubr.f32.gmra.mrb[0].mxu0 %v372
      %v471 = vpop.f32.mrb[0].mxu0
      %v472 = vadd.f32 %v353, %v471
      %v473 = vpop.f32.mrb[0].mxu0
      %474 = vmatprep.mubr.f32.mxu0 0.0
      %475 = vmatmul.mubr.f32.gmra.mrb[0].mxu0 %v375
      %v476 = vpop.f32.mrb[0].mxu0
      %v477 = vadd.f32 %v353, %v476
      %v478 = vpop.f32.mrb[0].mxu0
      %479 = vmatprep.mubr.f32.mxu0 0.0
      %480 = vmatmul.mubr.f32.gmra.mrb[0].mxu0 %v378
      %v481 = vpop.f32.mrb[0].mxu0
      %v482 = vadd.f32 %v353, %v481
      %v483 = vpop.f32.mrb[0].mxu0
      %484 = vdwg.mxu0
      %vm485 = vcmask 31744
      %486 = vst.msk [vmem:[%s170] sm:$0xff] %vm485, %v447
      %487 = vst.msk [vmem:[%s170 + $0x8] sm:$0xff] %vm485, %v452
      %488 = vst.msk [vmem:[%s170 + $0x10] sm:$0xff] %vm485, %v457
      %489 = vst.msk [vmem:[%s170 + $0x18] sm:$0xff] %vm485, %v462
      %490 = vst.msk [vmem:[%s170 + $0x20] sm:$0xff] %vm485, %v467
      %491 = vst.msk [vmem:[%s170 + $0x28] sm:$0xff] %vm485, %v472
      %492 = vst.msk [vmem:[%s170 + $0x30] sm:$0xff] %vm485, %v477
      %493 = vst.msk [vmem:[%s170 + $0x38] sm:$0xff] %vm485, %v482
      %p494 = scmp.lt.s32.totalorder %s14, 1
      %s495 = scalar_select %p494, %s14, 1
      %s496 = smul.addr %s495, 8
      %s497 = smul.addr %s496, 8
      %s498 = scalar_lea.vmem %s3, %s497
      // Predicated region
      $region33: #{rrdbnet_forward.13} parent=31 // pred_check
        %p499 = pneg %p100
      $region34: #{rrdbnet_forward.13} parent=31 // pred_check_branch
        %501 = sbr.rel (%p499) target = $region36
      $region35: #{rrdbnet_forward.13} parent=31 // pred_region
        _
      $region36: #{rrdbnet_forward.13} parent=31 // pred_fallthru
        _
    $region32: #{rrdbnet_forward.13} parent=5 // pred_fallthru
      _
    %p502 = scmp.le.s32.totalorder 2, %s9
    // Predicated region
    $region37: #{rrdbnet_forward.13} parent=5 // pred_check
      %p503 = pneg %p502
    $region38: #{rrdbnet_forward.13} parent=5 // pred_check_branch
      %505 = sbr.rel (%p503) target = $region40
    $region39: #{rrdbnet_forward.13} parent=5 // pred_region
      %s506 = ssub.s32 %s9, 2
      // Predicated region
      $region41: #{rrdbnet_forward.13} parent=39 // pred_check
        %p507 = pneg %p106
      $region42: #{rrdbnet_forward.13} parent=39 // pred_check_branch
        %509 = sbr.rel (%p507) target = $region44
      $region43: #{rrdbnet_forward.13} parent=39 // pred_region
        %p510 = scmp.lt.s32.totalorder %s15, 1
        %s511 = scalar_select %p510, %s15, 1
        %s512 = smul.addr %s511, 8
        %s513 = smul.addr %s512, 8
        %s514 = scalar_lea.vmem %s3, %s513
      $region44: #{rrdbnet_forward.13} parent=39 // pred_fallthru
        _
    $region40: #{rrdbnet_forward.13} parent=5 // pred_fallthru
      _
  $region6: #{rrdbnet_forward.13} parent=0 // loop_footer
    %s13 = sadd.s32 1, %s9
  $region7: #{rrdbnet_forward.13} parent=0 // loop_footer_branch
    %8 = sbr.rel target = $region3
  $region8: #{rrdbnet_forward.13} parent=0 // loop_exit
    _

// kernel: rrdbnet_forward.8
$region0: #{rrdbnet_forward.8}
  #allocation0 [shape = 'u32[]', space=smem, size = 0x4, offset = 0x4, fixed_abs, tag = 'smem constant byte address 0x4 - core index']
  #allocation1 [shape = 'u32[144,128]{1,0:T(1,128)}', space=vmem, size = 0x12000, scoped, tag = 'internal scratch']
  %s0 = inlined_call_operand.smem [shape: u32[32], index: -1, kind: input, shape index: {}]
  %s1 = sld [smem:[%s0]]
  %s2 = scalar_lea.smem %s0, 1
  %s3 = sld [smem:[%s2]]
  %s4 = scalar_lea.smem %s0, 2
  %s5 = sld [smem:[%s4]]
  %s6 = scalar_lea.smem %s0, 3
  %s7 = sld [smem:[%s6]]
  %s8 = scalar_lea.smem %s0, 4
  %s9 = sld [smem:[%s8]]
  %s10 = scalar_lea.smem %s0, 5
  %s11 = sld [smem:[%s10]]
  %s12 = scalar_lea.smem %s0, 6
  %s13 = sld [smem:[%s12]]
  %s14 = scalar_lea.smem %s0, 7
  %s15 = sld [smem:[%s14]]
  %s16 = scalar_lea.smem %s0, 8
  %s17 = sld [smem:[%s16]]
  %s18 = scalar_lea.smem %s0, 9
  %s19 = sld [smem:[%s18]]
  %s20 = scalar_lea.smem %s0, 10
  %s21 = sld [smem:[%s20]]
  %s22 = scalar_lea.smem %s0, 11
  %s23 = sld [smem:[%s22]]
  %s24 = scalar_lea.smem %s0, 12
  %s25 = sld [smem:[%s24]]
  %s26 = scalar_lea.smem %s0, 13
  %s27 = sld [smem:[%s26]]
  %s28 = scalar_lea.smem %s0, 14
  %s29 = sld [smem:[%s28]]
  %s30 = scalar_lea.smem %s0, 15
  %s31 = sld [smem:[%s30]]
  %s32 = scalar_lea.smem %s0, 16
  %s33 = sld [smem:[%s32]]
  %s34 = scalar_lea.smem %s0, 17
  %s35 = sld [smem:[%s34]]
  %s36 = scalar_lea.smem %s0, 18
  %s37 = sld [smem:[%s36]]
  %s38 = scalar_lea.smem %s0, 19
  %s39 = sld [smem:[%s38]]
  %s40 = scalar_lea.smem %s0, 20
  %s41 = sld [smem:[%s40]]
  %s42 = scalar_lea.smem %s0, 21
  %s43 = sld [smem:[%s42]]
  %s44 = scalar_lea.smem %s0, 22
  %s45 = sld [smem:[%s44]]
  %s46 = scalar_lea.smem %s0, 23
  %s47 = sld [smem:[%s46]]
  %s48 = scalar_lea.smem %s0, 24
  %s49 = sld [smem:[%s48]]
  %s50 = scalar_lea.smem %s0, 25
  %s51 = sld [smem:[%s50]]
  %s52 = scalar_lea.smem %s0, 26
  %s53 = sld [smem:[%s52]]
  %s54 = scalar_lea.smem %s0, 27
  %s55 = sld [smem:[%s54]]
  %s56 = scalar_lea.smem %s0, 28
  %s57 = sld [smem:[%s56]]
  %s58 = scalar_lea.smem %s0, 29
  %s59 = sld [smem:[%s58]]
  %s60 = scalar_lea.smem %s0, 30
  %s61 = sld [smem:[%s60]]
  %s62 = scalar_lea.smem %s0, 31
  %s63 = sld [smem:[%s62]]
  %s64 = sld [smem:[#allocation0]]
  $region157: #{rrdbnet_forward.8} parent=0
    _
  %s66 = ssub.s32 1, %s64
  %s67 = scalar_select 0, %s66, %s64
  loop: start=0, step=1, limit=4
  $region2: #{rrdbnet_forward.8} parent=0 // loop_pre_header
    _
  $region3: #{rrdbnet_forward.8} parent=0 // loop_header
    %s69 = sphi 0, %s73
    %p70 = scmp.ge.s32.totalorder %s69, 4
    %s79 = sphi 0, %s81
    %s82 = sphi 0, %s79
    %s83 = sphi 0, %s82
    %s99 = sphi 0, %s83
    %s103 = sphi 0, %s103
    %s105 = sphi 0, %s103
    %s106 = sphi 0, %s105
    %s120 = sphi 0, %s106
    %s124 = sphi 0, %s124
    %s126 = sphi 0, %s124
    %s127 = sphi 0, %s126
    %s141 = sphi 0, %s127
    %s145 = sphi 0, %s145
    %s147 = sphi 0, %s145
    %s148 = sphi 0, %s147
    %s162 = sphi 0, %s148
    %s166 = sphi 0, %s166
    %s168 = sphi 0, %s166
    %s169 = sphi 0, %s168
    %s183 = sphi 0, %s169
    %s187 = sphi 0, %s187
    %s189 = sphi 0, %s187
    %s190 = sphi 0, %s189
    %s204 = sphi 0, %s190
    %s208 = sphi 0, %s208
    %s210 = sphi 0, %s208
    %s211 = sphi 0, %s210
    %s225 = sphi 0, %s211
    %s229 = sphi 0, %s229
    %s231 = sphi 0, %s229
    %s232 = sphi 0, %s231
    %s246 = sphi 0, %s232
    %s250 = sphi 0, %s250
    %s252 = sphi 0, %s250
    %s253 = sphi 0, %s252
    %s267 = sphi 0, %s253
    %s271 = sphi 0, %s271
    %s273 = sphi 0, %s271
    %s274 = sphi 0, %s273
    %s288 = sphi 0, %s274
    %s292 = sphi 0, %s292
    %s294 = sphi 0, %s292
    %s295 = sphi 0, %s294
    %s309 = sphi 0, %s295
    %s313 = sphi 0, %s313
    %s315 = sphi 0, %s313
    %s316 = sphi 0, %s315
    %s330 = sphi 0, %s316
    %s334 = sphi 0, %s334
    %s336 = sphi 0, %s334
    %s337 = sphi 0, %s336
    %s351 = sphi 0, %s337
    %s355 = sphi 0, %s355
    %s357 = sphi 0, %s355
    %s358 = sphi 0, %s357
    %s372 = sphi 0, %s358
    %s376 = sphi 0, %s376
    %s378 = sphi 0, %s376
    %s379 = sphi 0, %s378
    %s393 = sphi 0, %s379
    %s397 = sphi 0, %s397
    %s399 = sphi 0, %s397
    %s400 = sphi 0, %s399
    %s414 = sphi 0, %s400
    %s418 = sphi 0, %s418
    %s420 = sphi 0, %s418
    %s421 = sphi 0, %s420
    %s435 = sphi 0, %s421
    %s439 = sphi 0, %s439
    %s441 = sphi 0, %s439
    %s442 = sphi 0, %s441
    %s456 = sphi 0, %s442
    %s460 = sphi 0, %s460
    %s462 = sphi 0, %s460
    %s463 = sphi 0, %s462
    %s477 = sphi 0, %s463
    %s481 = sphi 0, %s481
    %s483 = sphi 0, %s481
    %s484 = sphi 0, %s483
    %s498 = sphi 0, %s484
    %s502 = sphi 0, %s502
    %s504 = sphi 0, %s502
    %s505 = sphi 0, %s504
    %s519 = sphi 0, %s505
    %s523 = sphi 0, %s523
    %s525 = sphi 0, %s523
    %s526 = sphi 0, %s525
    %s540 = sphi 0, %s526
    %s544 = sphi 0, %s544
    %s546 = sphi 0, %s544
    %s547 = sphi 0, %s546
    %s561 = sphi 0, %s547
    %s565 = sphi 0, %s565
    %s567 = sphi 0, %s565
    %s568 = sphi 0, %s567
    %s582 = sphi 0, %s568
    %s586 = sphi 0, %s586
    %s588 = sphi 0, %s586
    %s589 = sphi 0, %s588
    %s603 = sphi 0, %s589
    %s607 = sphi 0, %s607
    %s609 = sphi 0, %s607
    %s610 = sphi 0, %s609
    %s624 = sphi 0, %s610
    %s628 = sphi 0, %s628
    %s630 = sphi 0, %s628
    %s631 = sphi 0, %s630
    %s645 = sphi 0, %s631
    %s649 = sphi 0, %s649
    %s651 = sphi 0, %s649
    %s652 = sphi 0, %s651
    %s666 = sphi 0, %s652
    %s670 = sphi 0, %s670
    %s672 = sphi 0, %s670
    %s673 = sphi 0, %s672
    %s687 = sphi 0, %s673
    %s691 = sphi 0, %s691
    %s693 = sphi 0, %s691
    %s694 = sphi 0, %s693
    %s708 = sphi 0, %s694
    %s712 = sphi 0, %s712
    %s714 = sphi 0, %s712
    %s715 = sphi 0, %s714
    %s729 = sphi 0, %s715
    %s735 = sphi 0, %s737
    %s738 = sphi 0, %s735
    %s739 = sphi 0, %s738
    %s755 = sphi 0, %s739
  $region4: #{rrdbnet_forward.8} parent=0 // loop_header_branch
    %72 = sbr.rel (%p70) target = $region8
  $region5: #{rrdbnet_forward.8} parent=0 // loop_body
    %s74 = ssub.s32 %s69, 1
    %s75 = ssub.s32 %s69, 2
    %s76 = sadd.s32 %s69, 1
    %s77 = ssub.s32 %s69, %s76
    %p78 = scmp.eq.s32.totalorder %s77, 0
    %s80 = sadd.s32 %s79, 1
    %s81 = scalar_select %p78, %s79, %s80
    %p84 = pneg %p78
    %p85 = scmp.eq.s32.totalorder %s69, 1
    %p86 = por %p84, %p85
    %p87 = scmp.ne.s32.totalorder %s79, %s82
    %p88 = scmp.eq.s32.totalorder %s69, 0
    %p89 = por %p87, %p88
    %p90 = scmp.ne.s32.totalorder %s79, %s82
    %p91 = scmp.eq.s32.totalorder %s74, 1
    %p92 = por %p90, %p91
    %p93 = scmp.ne.s32.totalorder %s82, %s83
    %p94 = scmp.eq.s32.totalorder %s74, 0
    %p95 = por %p93, %p94
    %p96 = scmp.ne.s32.totalorder %s82, %s83
    %p97 = scmp.eq.s32.totalorder %s75, 1
    %p98 = por %p96, %p97
    %p100 = scmp.ne.s32.totalorder %s83, %s99
    %p101 = scmp.eq.s32.totalorder %s75, 0
    %p102 = por %p100, %p101
    %s104 = sadd.s32 %s103, 1
    %p107 = scmp.eq.s32.totalorder %s69, 1
    %p108 = scmp.ne.s32.totalorder %s103, %s105
    %p109 = scmp.eq.s32.totalorder %s69, 0
    %p110 = por %p108, %p109
    %p111 = scmp.ne.s32.totalorder %s103, %s105
    %p112 = scmp.eq.s32.totalorder %s74, 1
    %p113 = por %p111, %p112
    %p114 = scmp.ne.s32.totalorder %s105, %s106
    %p115 = scmp.eq.s32.totalorder %s74, 0
    %p116 = por %p114, %p115
    %p117 = scmp.ne.s32.totalorder %s105, %s106
    %p118 = scmp.eq.s32.totalorder %s75, 1
    %p119 = por %p117, %p118
    %p121 = scmp.ne.s32.totalorder %s106, %s120
    %p122 = scmp.eq.s32.totalorder %s75, 0
    %p123 = por %p121, %p122
    %s125 = sadd.s32 %s124, 1
    %p128 = scmp.eq.s32.totalorder %s69, 1
    %p129 = scmp.ne.s32.totalorder %s124, %s126
    %p130 = scmp.eq.s32.totalorder %s69, 0
    %p131 = por %p129, %p130
    %p132 = scmp.ne.s32.totalorder %s124, %s126
    %p133 = scmp.eq.s32.totalorder %s74, 1
    %p134 = por %p132, %p133
    %p135 = scmp.ne.s32.totalorder %s126, %s127
    %p136 = scmp.eq.s32.totalorder %s74, 0
    %p137 = por %p135, %p136
    %p138 = scmp.ne.s32.totalorder %s126, %s127
    %p139 = scmp.eq.s32.totalorder %s75, 1
    %p140 = por %p138, %p139
    %p142 = scmp.ne.s32.totalorder %s127, %s141
    %p143 = scmp.eq.s32.totalorder %s75, 0
    %p144 = por %p142, %p143
    %s146 = sadd.s32 %s145, 1
    %p149 = scmp.eq.s32.totalorder %s69, 1
    %p150 = scmp.ne.s32.totalorder %s145, %s147
    %p151 = scmp.eq.s32.totalorder %s69, 0
    %p152 = por %p150, %p151
    %p153 = scmp.ne.s32.totalorder %s145, %s147
    %p154 = scmp.eq.s32.totalorder %s74, 1
    %p155 = por %p153, %p154
    %p156 = scmp.ne.s32.totalorder %s147, %s148
    %p157 = scmp.eq.s32.totalorder %s74, 0
    %p158 = por %p156, %p157
    %p159 = scmp.ne.s32.totalorder %s147, %s148
    %p160 = scmp.eq.s32.totalorder %s75, 1
    %p161 = por %p159, %p160
    %p163 = scmp.ne.s32.totalorder %s148, %s162
    %p164 = scmp.eq.s32.totalorder %s75, 0
    %p165 = por %p163, %p164
    %s167 = sadd.s32 %s166, 1
    %p170 = scmp.eq.s32.totalorder %s69, 1
    %p171 = scmp.ne.s32.totalorder %s166, %s168
    %p172 = scmp.eq.s32.totalorder %s69, 0
    %p173 = por %p171, %p172
    %p174 = scmp.ne.s32.totalorder %s166, %s168
    %p175 = scmp.eq.s32.totalorder %s74, 1
    %p176 = por %p174, %p175
    %p177 = scmp.ne.s32.totalorder %s168, %s169
    %p178 = scmp.eq.s32.totalorder %s74, 0
    %p179 = por %p177, %p178
    %p180 = scmp.ne.s32.totalorder %s168, %s169
    %p181 = scmp.eq.s32.totalorder %s75, 1
    %p182 = por %p180, %p181
    %p184 = scmp.ne.s32.totalorder %s169, %s183
    %p185 = scmp.eq.s32.totalorder %s75, 0
    %p186 = por %p184, %p185
    %s188 = sadd.s32 %s187, 1
    %p191 = scmp.eq.s32.totalorder %s69, 1
    %p192 = scmp.ne.s32.totalorder %s187, %s189
    %p193 = scmp.eq.s32.totalorder %s69, 0
    %p194 = por %p192, %p193
    %p195 = scmp.ne.s32.totalorder %s187, %s189
    %p196 = scmp.eq.s32.totalorder %s74, 1
    %p197 = por %p195, %p196
    %p198 = scmp.ne.s32.totalorder %s189, %s190
    %p199 = scmp.eq.s32.totalorder %s74, 0
    %p200 = por %p198, %p199
    %p201 = scmp.ne.s32.totalorder %s189, %s190
    %p202 = scmp.eq.s32.totalorder %s75, 1
    %p203 = por %p201, %p202
    %p205 = scmp.ne.s32.totalorder %s190, %s204
    %p206 = scmp.eq.s32.totalorder %s75, 0
    %p207 = por %p205, %p206
    %s209 = sadd.s32 %s208, 1
    %p212 = scmp.eq.s32.totalorder %s69, 1
    %p213 = scmp.ne.s32.totalorder %s208, %s210
    %p214 = scmp.eq.s32.totalorder %s69, 0
    %p215 = por %p213, %p214
    %p216 = scmp.ne.s32.totalorder %s208, %s210
    %p217 = scmp.eq.s32.totalorder %s74, 1
    %p218 = por %p216, %p217
    %p219 = scmp.ne.s32.totalorder %s210, %s211
    %p220 = scmp.eq.s32.totalorder %s74, 0
    %p221 = por %p219, %p220
    %p222 = scmp.ne.s32.totalorder %s210, %s211
    %p223 = scmp.eq.s32.totalorder %s75, 1
    %p224 = por %p222, %p223
    %p226 = scmp.ne.s32.totalorder %s211, %s225
    %p227 = scmp.eq.s32.totalorder %s75, 0
    %p228 = por %p226, %p227
    %s230 = sadd.s32 %s229, 1
    %p233 = scmp.eq.s32.totalorder %s69, 1
    %p234 = scmp.ne.s32.totalorder %s229, %s231
    %p235 = scmp.eq.s32.totalorder %s69, 0
    %p236 = por %p234, %p235
    %p237 = scmp.ne.s32.totalorder %s229, %s231
    %p238 = scmp.eq.s32.totalorder %s74, 1
    %p239 = por %p237, %p238
    %p240 = scmp.ne.s32.totalorder %s231, %s232
    %p241 = scmp.eq.s32.totalorder %s74, 0
    %p242 = por %p240, %p241
    %p243 = scmp.ne.s32.totalorder %s231, %s232
    %p244 = scmp.eq.s32.totalorder %s75, 1
    %p245 = por %p243, %p244
    %p247 = scmp.ne.s32.totalorder %s232, %s246
    %p248 = scmp.eq.s32.totalorder %s75, 0
    %p249 = por %p247, %p248
    %s251 = sadd.s32 %s250, 1
    %p254 = scmp.eq.s32.totalorder %s69, 1
    %p255 = scmp.ne.s32.totalorder %s250, %s252
    %p256 = scmp.eq.s32.totalorder %s69, 0
    %p257 = por %p255, %p256
    %p258 = scmp.ne.s32.totalorder %s250, %s252
    %p259 = scmp.eq.s32.totalorder %s74, 1
    %p260 = por %p258, %p259
    %p261 = scmp.ne.s32.totalorder %s252, %s253
    %p262 = scmp.eq.s32.totalorder %s74, 0
    %p263 = por %p261, %p262
    %p264 = scmp.ne.s32.totalorder %s252, %s253
    %p265 = scmp.eq.s32.totalorder %s75, 1
    %p266 = por %p264, %p265
    %p268 = scmp.ne.s32.totalorder %s253, %s267
    %p269 = scmp.eq.s32.totalorder %s75, 0
    %p270 = por %p268, %p269
    %s272 = sadd.s32 %s271, 1
    %p275 = scmp.eq.s32.totalorder %s69, 1
    %p276 = scmp.ne.s32.totalorder %s271, %s273
    %p277 = scmp.eq.s32.totalorder %s69, 0
    %p278 = por %p276, %p277
    %p279 = scmp.ne.s32.totalorder %s271, %s273
    %p280 = scmp.eq.s32.totalorder %s74, 1
    %p281 = por %p279, %p280
    %p282 = scmp.ne.s32.totalorder %s273, %s274
    %p283 = scmp.eq.s32.totalorder %s74, 0
    %p284 = por %p282, %p283
    %p285 = scmp.ne.s32.totalorder %s273, %s274
    %p286 = scmp.eq.s32.totalorder %s75, 1
    %p287 = por %p285, %p286
    %p289 = scmp.ne.s32.totalorder %s274, %s288
    %p290 = scmp.eq.s32.totalorder %s75, 0
    %p291 = por %p289, %p290
    %s293 = sadd.s32 %s292, 1
    %p296 = scmp.eq.s32.totalorder %s69, 1
    %p297 = scmp.ne.s32.totalorder %s292, %s294
    %p298 = scmp.eq.s32.totalorder %s69, 0
    %p299 = por %p297, %p298
    %p300 = scmp.ne.s32.totalorder %s292, %s294
    %p301 = scmp.eq.s32.totalorder %s74, 1
    %p302 = por %p300, %p301
    %p303 = scmp.ne.s32.totalorder %s294, %s295
    %p304 = scmp.eq.s32.totalorder %s74, 0
    %p305 = por %p303, %p304
    %p306 = scmp.ne.s32.totalorder %s294, %s295
    %p307 = scmp.eq.s32.totalorder %s75, 1
    %p308 = por %p306, %p307
    %p310 = scmp.ne.s32.totalorder %s295, %s309
    %p311 = scmp.eq.s32.totalorder %s75, 0
    %p312 = por %p310, %p311
    %s314 = sadd.s32 %s313, 1
    %p317 = scmp.eq.s32.totalorder %s69, 1
    %p318 = scmp.ne.s32.totalorder %s313, %s315
    %p319 = scmp.eq.s32.totalorder %s69, 0
    %p320 = por %p318, %p319
    %p321 = scmp.ne.s32.totalorder %s313, %s315
    %p322 = scmp.eq.s32.totalorder %s74, 1
    %p323 = por %p321, %p322
    %p324 = scmp.ne.s32.totalorder %s315, %s316
    %p325 = scmp.eq.s32.totalorder %s74, 0
    %p326 = por %p324, %p325
    %p327 = scmp.ne.s32.totalorder %s315, %s316
    %p328 = scmp.eq.s32.totalorder %s75, 1
    %p329 = por %p327, %p328
    %p331 = scmp.ne.s32.totalorder %s316, %s330
    %p332 = scmp.eq.s32.totalorder %s75, 0
    %p333 = por %p331, %p332
    %s335 = sadd.s32 %s334, 1
    %p338 = scmp.eq.s32.totalorder %s69, 1
    %p339 = scmp.ne.s32.totalorder %s334, %s336
    %p340 = scmp.eq.s32.totalorder %s69, 0
    %p341 = por %p339, %p340
    %p342 = scmp.ne.s32.totalorder %s334, %s336
    %p343 = scmp.eq.s32.totalorder %s74, 1
    %p344 = por %p342, %p343
    %p345 = scmp.ne.s32.totalorder %s336, %s337
    %p346 = scmp.eq.s32.totalorder %s74, 0
    %p347 = por %p345, %p346
    %p348 = scmp.ne.s32.totalorder %s336, %s337
    %p349 = scmp.eq.s32.totalorder %s75, 1
    %p350 = por %p348, %p349
    %p352 = scmp.ne.s32.totalorder %s337, %s351
    %p353 = scmp.eq.s32.totalorder %s75, 0
    %p354 = por %p352, %p353
    %s356 = sadd.s32 %s355, 1
    %p359 = scmp.eq.s32.totalorder %s69, 1
    %p360 = scmp.ne.s32.totalorder %s355, %s357
    %p361 = scmp.eq.s32.totalorder %s69, 0
    %p362 = por %p360, %p361
    %p363 = scmp.ne.s32.totalorder %s355, %s357
    %p364 = scmp.eq.s32.totalorder %s74, 1
    %p365 = por %p363, %p364
    %p366 = scmp.ne.s32.totalorder %s357, %s358
    %p367 = scmp.eq.s32.totalorder %s74, 0
    %p368 = por %p366, %p367
    %p369 = scmp.ne.s32.totalorder %s357, %s358
    %p370 = scmp.eq.s32.totalorder %s75, 1
    %p371 = por %p369, %p370
    %p373 = scmp.ne.s32.totalorder %s358, %s372
    %p374 = scmp.eq.s32.totalorder %s75, 0
    %p375 = por %p373, %p374
    %s377 = sadd.s32 %s376, 1
    %p380 = scmp.eq.s32.totalorder %s69, 1
    %p381 = scmp.ne.s32.totalorder %s376, %s378
    %p382 = scmp.eq.s32.totalorder %s69, 0
    %p383 = por %p381, %p382
    %p384 = scmp.ne.s32.totalorder %s376, %s378
    %p385 = scmp.eq.s32.totalorder %s74, 1
    %p386 = por %p384, %p385
    %p387 = scmp.ne.s32.totalorder %s378, %s379
    %p388 = scmp.eq.s32.totalorder %s74, 0
    %p389 = por %p387, %p388
    %p390 = scmp.ne.s32.totalorder %s378, %s379
    %p391 = scmp.eq.s32.totalorder %s75, 1
    %p392 = por %p390, %p391
    %p394 = scmp.ne.s32.totalorder %s379, %s393
    %p395 = scmp.eq.s32.totalorder %s75, 0
    %p396 = por %p394, %p395
    %s398 = sadd.s32 %s397, 1
    %p401 = scmp.eq.s32.totalorder %s69, 1
    %p402 = scmp.ne.s32.totalorder %s397, %s399
    %p403 = scmp.eq.s32.totalorder %s69, 0
    %p404 = por %p402, %p403
    %p405 = scmp.ne.s32.totalorder %s397, %s399
    %p406 = scmp.eq.s32.totalorder %s74, 1
    %p407 = por %p405, %p406
    %p408 = scmp.ne.s32.totalorder %s399, %s400
    %p409 = scmp.eq.s32.totalorder %s74, 0
    %p410 = por %p408, %p409
    %p411 = scmp.ne.s32.totalorder %s399, %s400
    %p412 = scmp.eq.s32.totalorder %s75, 1
    %p413 = por %p411, %p412
    %p415 = scmp.ne.s32.totalorder %s400, %s414
    %p416 = scmp.eq.s32.totalorder %s75, 0
    %p417 = por %p415, %p416
    %s419 = sadd.s32 %s418, 1
    %p422 = scmp.eq.s32.totalorder %s69, 1
    %p423 = scmp.ne.s32.totalorder %s418, %s420
    %p424 = scmp.eq.s32.totalorder %s69, 0
    %p425 = por %p423, %p424
    %p426 = scmp.ne.s32.totalorder %s418, %s420
    %p427 = scmp.eq.s32.totalorder %s74, 1
    %p428 = por %p426, %p427
    %p429 = scmp.ne.s32.totalorder %s420, %s421
    %p430 = scmp.eq.s32.totalorder %s74, 0
    %p431 = por %p429, %p430
    %p432 = scmp.ne.s32.totalorder %s420, %s421
    %p433 = scmp.eq.s32.totalorder %s75, 1
    %p434 = por %p432, %p433
    %p436 = scmp.ne.s32.totalorder %s421, %s435
    %p437 = scmp.eq.s32.totalorder %s75, 0
    %p438 = por %p436, %p437
    %s440 = sadd.s32 %s439, 1
    %p443 = scmp.eq.s32.totalorder %s69, 1
    %p444 = scmp.ne.s32.totalorder %s439, %s441
    %p445 = scmp.eq.s32.totalorder %s69, 0
    %p446 = por %p444, %p445
    %p447 = scmp.ne.s32.totalorder %s439, %s441
    %p448 = scmp.eq.s32.totalorder %s74, 1
    %p449 = por %p447, %p448
    %p450 = scmp.ne.s32.totalorder %s441, %s442
    %p451 = scmp.eq.s32.totalorder %s74, 0
    %p452 = por %p450, %p451
    %p453 = scmp.ne.s32.totalorder %s441, %s442
    %p454 = scmp.eq.s32.totalorder %s75, 1
    %p455 = por %p453, %p454
    %p457 = scmp.ne.s32.totalorder %s442, %s456
    %p458 = scmp.eq.s32.totalorder %s75, 0
    %p459 = por %p457, %p458
    %s461 = sadd.s32 %s460, 1
    %p464 = scmp.eq.s32.totalorder %s69, 1
    %p465 = scmp.ne.s32.totalorder %s460, %s462
    %p466 = scmp.eq.s32.totalorder %s69, 0
    %p467 = por %p465, %p466
    %p468 = scmp.ne.s32.totalorder %s460, %s462
    %p469 = scmp.eq.s32.totalorder %s74, 1
    %p470 = por %p468, %p469
    %p471 = scmp.ne.s32.totalorder %s462, %s463
    %p472 = scmp.eq.s32.totalorder %s74, 0
    %p473 = por %p471, %p472
    %p474 = scmp.ne.s32.totalorder %s462, %s463
    %p475 = scmp.eq.s32.totalorder %s75, 1
    %p476 = por %p474, %p475
    %p478 = scmp.ne.s32.totalorder %s463, %s477
    %p479 = scmp.eq.s32.totalorder %s75, 0
    %p480 = por %p478, %p479
    %s482 = sadd.s32 %s481, 1
    %p485 = scmp.eq.s32.totalorder %s69, 1
    %p486 = scmp.ne.s32.totalorder %s481, %s483
    %p487 = scmp.eq.s32.totalorder %s69, 0
    %p488 = por %p486, %p487
    %p489 = scmp.ne.s32.totalorder %s481, %s483
    %p490 = scmp.eq.s32.totalorder %s74, 1
    %p491 = por %p489, %p490
    %p492 = scmp.ne.s32.totalorder %s483, %s484
    %p493 = scmp.eq.s32.totalorder %s74, 0
    %p494 = por %p492, %p493
    %p495 = scmp.ne.s32.totalorder %s483, %s484
    %p496 = scmp.eq.s32.totalorder %s75, 1
    %p497 = por %p495, %p496
    %p499 = scmp.ne.s32.totalorder %s484, %s498
    %p500 = scmp.eq.s32.totalorder %s75, 0
    %p501 = por %p499, %p500
    %s503 = sadd.s32 %s502, 1
    %p506 = scmp.eq.s32.totalorder %s69, 1
    %p507 = scmp.ne.s32.totalorder %s502, %s504
    %p508 = scmp.eq.s32.totalorder %s69, 0
    %p509 = por %p507, %p508
    %p510 = scmp.ne.s32.totalorder %s502, %s504
    %p511 = scmp.eq.s32.totalorder %s74, 1
    %p512 = por %p510, %p511
    %p513 = scmp.ne.s32.totalorder %s504, %s505
    %p514 = scmp.eq.s32.totalorder %s74, 0
    %p515 = por %p513, %p514
    %p516 = scmp.ne.s32.totalorder %s504, %s505
    %p517 = scmp.eq.s32.totalorder %s75, 1
    %p518 = por %p516, %p517
    %p520 = scmp.ne.s32.totalorder %s505, %s519
    %p521 = scmp.eq.s32.totalorder %s75, 0
    %p522 = por %p520, %p521
    %s524 = sadd.s32 %s523, 1
    %p527 = scmp.eq.s32.totalorder %s69, 1
    %p528 = scmp.ne.s32.totalorder %s523, %s525
    %p529 = scmp.eq.s32.totalorder %s69, 0
    %p530 = por %p528, %p529
    %p531 = scmp.ne.s32.totalorder %s523, %s525
    %p532 = scmp.eq.s32.totalorder %s74, 1
    %p533 = por %p531, %p532
    %p534 = scmp.ne.s32.totalorder %s525, %s526
    %p535 = scmp.eq.s32.totalorder %s74, 0
    %p536 = por %p534, %p535
    %p537 = scmp.ne.s32.totalorder %s525, %s526
    %p538 = scmp.eq.s32.totalorder %s75, 1
    %p539 = por %p537, %p538
    %p541 = scmp.ne.s32.totalorder %s526, %s540
    %p542 = scmp.eq.s32.totalorder %s75, 0
    %p543 = por %p541, %p542
    %s545 = sadd.s32 %s544, 1
    %p548 = scmp.eq.s32.totalorder %s69, 1
    %p549 = scmp.ne.s32.totalorder %s544, %s546
    %p550 = scmp.eq.s32.totalorder %s69, 0
    %p551 = por %p549, %p550
    %p552 = scmp.ne.s32.totalorder %s544, %s546
    %p553 = scmp.eq.s32.totalorder %s74, 1
    %p554 = por %p552, %p553
    %p555 = scmp.ne.s32.totalorder %s546, %s547
    %p556 = scmp.eq.s32.totalorder %s74, 0
    %p557 = por %p555, %p556
    %p558 = scmp.ne.s32.totalorder %s546, %s547
    %p559 = scmp.eq.s32.totalorder %s75, 1
    %p560 = por %p558, %p559
    %p562 = scmp.ne.s32.totalorder %s547, %s561
    %p563 = scmp.eq.s32.totalorder %s75, 0
    %p564 = por %p562, %p563
    %s566 = sadd.s32 %s565, 1
    %p569 = scmp.eq.s32.totalorder %s69, 1
    %p570 = scmp.ne.s32.totalorder %s565, %s567
    %p571 = scmp.eq.s32.totalorder %s69, 0
    %p572 = por %p570, %p571
    %p573 = scmp.ne.s32.totalorder %s565, %s567
    %p574 = scmp.eq.s32.totalorder %s74, 1
    %p575 = por %p573, %p574
    %p576 = scmp.ne.s32.totalorder %s567, %s568
    %p577 = scmp.eq.s32.totalorder %s74, 0
    %p578 = por %p576, %p577
    %p579 = scmp.ne.s32.totalorder %s567, %s568
    %p580 = scmp.eq.s32.totalorder %s75, 1
    %p581 = por %p579, %p580
    %p583 = scmp.ne.s32.totalorder %s568, %s582
    %p584 = scmp.eq.s32.totalorder %s75, 0
    %p585 = por %p583, %p584
    %s587 = sadd.s32 %s586, 1
    %p590 = scmp.eq.s32.totalorder %s69, 1
    %p591 = scmp.ne.s32.totalorder %s586, %s588
    %p592 = scmp.eq.s32.totalorder %s69, 0
    %p593 = por %p591, %p592
    %p594 = scmp.ne.s32.totalorder %s586, %s588
    %p595 = scmp.eq.s32.totalorder %s74, 1
    %p596 = por %p594, %p595
    %p597 = scmp.ne.s32.totalorder %s588, %s589
    %p598 = scmp.eq.s32.totalorder %s74, 0
    %p599 = por %p597, %p598
    %p600 = scmp.ne.s32.totalorder %s588, %s589
    %p601 = scmp.eq.s32.totalorder %s75, 1
    %p602 = por %p600, %p601
    %p604 = scmp.ne.s32.totalorder %s589, %s603
    %p605 = scmp.eq.s32.totalorder %s75, 0
    %p606 = por %p604, %p605
    %s608 = sadd.s32 %s607, 1
    %p611 = scmp.eq.s32.totalorder %s69, 1
    %p612 = scmp.ne.s32.totalorder %s607, %s609
    %p613 = scmp.eq.s32.totalorder %s69, 0
    %p614 = por %p612, %p613
    %p615 = scmp.ne.s32.totalorder %s607, %s609
    %p616 = scmp.eq.s32.totalorder %s74, 1
    %p617 = por %p615, %p616
    %p618 = scmp.ne.s32.totalorder %s609, %s610
    %p619 = scmp.eq.s32.totalorder %s74, 0
    %p620 = por %p618, %p619
    %p621 = scmp.ne.s32.totalorder %s609, %s610
    %p622 = scmp.eq.s32.totalorder %s75, 1
    %p623 = por %p621, %p622
    %p625 = scmp.ne.s32.totalorder %s610, %s624
    %p626 = scmp.eq.s32.totalorder %s75, 0
    %p627 = por %p625, %p626
    %s629 = sadd.s32 %s628, 1
    %p632 = scmp.eq.s32.totalorder %s69, 1
    %p633 = scmp.ne.s32.totalorder %s628, %s630
    %p634 = scmp.eq.s32.totalorder %s69, 0
    %p635 = por %p633, %p634
    %p636 = scmp.ne.s32.totalorder %s628, %s630
    %p637 = scmp.eq.s32.totalorder %s74, 1
    %p638 = por %p636, %p637
    %p639 = scmp.ne.s32.totalorder %s630, %s631
    %p640 = scmp.eq.s32.totalorder %s74, 0
    %p641 = por %p639, %p640
    %p642 = scmp.ne.s32.totalorder %s630, %s631
    %p643 = scmp.eq.s32.totalorder %s75, 1
    %p644 = por %p642, %p643
    %p646 = scmp.ne.s32.totalorder %s631, %s645
    %p647 = scmp.eq.s32.totalorder %s75, 0
    %p648 = por %p646, %p647
    %s650 = sadd.s32 %s649, 1
    %p653 = scmp.eq.s32.totalorder %s69, 1
    %p654 = scmp.ne.s32.totalorder %s649, %s651
    %p655 = scmp.eq.s32.totalorder %s69, 0
    %p656 = por %p654, %p655
    %p657 = scmp.ne.s32.totalorder %s649, %s651
    %p658 = scmp.eq.s32.totalorder %s74, 1
    %p659 = por %p657, %p658
    %p660 = scmp.ne.s32.totalorder %s651, %s652
    %p661 = scmp.eq.s32.totalorder %s74, 0
    %p662 = por %p660, %p661
    %p663 = scmp.ne.s32.totalorder %s651, %s652
    %p664 = scmp.eq.s32.totalorder %s75, 1
    %p665 = por %p663, %p664
    %p667 = scmp.ne.s32.totalorder %s652, %s666
    %p668 = scmp.eq.s32.totalorder %s75, 0
    %p669 = por %p667, %p668
    %s671 = sadd.s32 %s670, 1
    %p674 = scmp.eq.s32.totalorder %s69, 1
    %p675 = scmp.ne.s32.totalorder %s670, %s672
    %p676 = scmp.eq.s32.totalorder %s69, 0
    %p677 = por %p675, %p676
    %p678 = scmp.ne.s32.totalorder %s670, %s672
    %p679 = scmp.eq.s32.totalorder %s74, 1
    %p680 = por %p678, %p679
    %p681 = scmp.ne.s32.totalorder %s672, %s673
    %p682 = scmp.eq.s32.totalorder %s74, 0
    %p683 = por %p681, %p682
    %p684 = scmp.ne.s32.totalorder %s672, %s673
    %p685 = scmp.eq.s32.totalorder %s75, 1
    %p686 = por %p684, %p685
    %p688 = scmp.ne.s32.totalorder %s673, %s687
    %p689 = scmp.eq.s32.totalorder %s75, 0
    %p690 = por %p688, %p689
    %s692 = sadd.s32 %s691, 1
    %p695 = scmp.eq.s32.totalorder %s69, 1
    %p696 = scmp.ne.s32.totalorder %s691, %s693
    %p697 = scmp.eq.s32.totalorder %s69, 0
    %p698 = por %p696, %p697
    %p699 = scmp.ne.s32.totalorder %s691, %s693
    %p700 = scmp.eq.s32.totalorder %s74, 1
    %p701 = por %p699, %p700
    %p702 = scmp.ne.s32.totalorder %s693, %s694
    %p703 = scmp.eq.s32.totalorder %s74, 0
    %p704 = por %p702, %p703
    %p705 = scmp.ne.s32.totalorder %s693, %s694
    %p706 = scmp.eq.s32.totalorder %s75, 1
    %p707 = por %p705, %p706
    %p709 = scmp.ne.s32.totalorder %s694, %s708
    %p710 = scmp.eq.s32.totalorder %s75, 0
    %p711 = por %p709, %p710
    %s713 = sadd.s32 %s712, 1
    %p716 = scmp.eq.s32.totalorder %s69, 1
    %p717 = scmp.ne.s32.totalorder %s712, %s714
    %p718 = scmp.eq.s32.totalorder %s69, 0
    %p719 = por %p717, %p718
    %p720 = scmp.ne.s32.totalorder %s712, %s714
    %p721 = scmp.eq.s32.totalorder %s74, 1
    %p722 = por %p720, %p721
    %p723 = scmp.ne.s32.totalorder %s714, %s715
    %p724 = scmp.eq.s32.totalorder %s74, 0
    %p725 = por %p723, %p724
    %p726 = scmp.ne.s32.totalorder %s714, %s715
    %p727 = scmp.eq.s32.totalorder %s75, 1
    %p728 = por %p726, %p727
    %p730 = scmp.ne.s32.totalorder %s715, %s729
    %p731 = scmp.eq.s32.totalorder %s75, 0
    %p732 = por %p730, %p731
    %s733 = ssub.s32 %s69, %s76
    %p734 = scmp.eq.s32.totalorder %s733, 0
    %s736 = sadd.s32 %s735, 1
    %s737 = scalar_select %p734, %s735, %s736
    %p740 = pneg %p734
    %p741 = scmp.eq.s32.totalorder %s69, 1
    %p742 = por %p740, %p741
    %p743 = scmp.ne.s32.totalorder %s735, %s738
    %p744 = scmp.eq.s32.totalorder %s69, 0
    %p745 = por %p743, %p744
    %p746 = scmp.ne.s32.totalorder %s735, %s738
    %p747 = scmp.eq.s32.totalorder %s74, 1
    %p748 = por %p746, %p747
    %p749 = scmp.ne.s32.totalorder %s738, %s739
    %p750 = scmp.eq.s32.totalorder %s74, 0
    %p751 = por %p749, %p750
    %p752 = scmp.ne.s32.totalorder %s738, %s739
    %p753 = scmp.eq.s32.totalorder %s75, 1
    %p754 = por %p752, %p753
    %p756 = scmp.ne.s32.totalorder %s739, %s755
    %p757 = scmp.eq.s32.totalorder %s75, 0
    %p758 = por %p756, %p757
    %p759 = scmp.le.s32.totalorder 1, %s69
    %p760 = scmp.lt.s32.totalorder %s69, 3
    %p761 = pnand %p759, %p760
    %p762 = pneg %p761
    // Predicated region
    $region9: #{rrdbnet_forward.8} parent=5 // pred_check
      _
    $region10: #{rrdbnet_forward.8} parent=5 // pred_check_branch
      %764 = sbr.rel (%p761) target = $region12
    $region11: #{rrdbnet_forward.8} parent=5 // pred_region
      %s765 = ssub.s32 %s69, 1
      // Predicated region
      $region13: #{rrdbnet_forward.8} parent=11 // pred_check
        %p766 = pneg %p116
      $region14: #{rrdbnet_forward.8} parent=11 // pred_check_branch
        %768 = sbr.rel (%p766) target = $region16
      $region15: #{rrdbnet_forward.8} parent=11 // pred_region
        _
      $region16: #{rrdbnet_forward.8} parent=11 // pred_fallthru
        _
      // Predicated region
      $region17: #{rrdbnet_forward.8} parent=11 // pred_check
        %p769 = pneg %p137
      $region18: #{rrdbnet_forward.8} parent=11 // pred_check_branch
        %771 = sbr.rel (%p769) target = $region20
      $region19: #{rrdbnet_forward.8} parent=11 // pred_region
        _
      $region20: #{rrdbnet_forward.8} parent=11 // pred_fallthru
        _
      // Predicated region
      $region21: #{rrdbnet_forward.8} parent=11 // pred_check
        %p772 = pneg %p158
      $region22: #{rrdbnet_forward.8} parent=11 // pred_check_branch
        %774 = sbr.rel (%p772) target = $region24
      $region23: #{rrdbnet_forward.8} parent=11 // pred_region
        _
      $region24: #{rrdbnet_forward.8} parent=11 // pred_fallthru
        _
      // Predicated region
      $region25: #{rrdbnet_forward.8} parent=11 // pred_check
        %p775 = pneg %p179
      $region26: #{rrdbnet_forward.8} parent=11 // pred_check_branch
        %777 = sbr.rel (%p775) target = $region28
      $region27: #{rrdbnet_forward.8} parent=11 // pred_region
        _
      $region28: #{rrdbnet_forward.8} parent=11 // pred_fallthru
        _
      // Predicated region
      $region29: #{rrdbnet_forward.8} parent=11 // pred_check
        %p778 = pneg %p200
      $region30: #{rrdbnet_forward.8} parent=11 // pred_check_branch
        %780 = sbr.rel (%p778) target = $region32
      $region31: #{rrdbnet_forward.8} parent=11 // pred_region
        _
      $region32: #{rrdbnet_forward.8} parent=11 // pred_fallthru
        _
      // Predicated region
      $region33: #{rrdbnet_forward.8} parent=11 // pred_check
        %p781 = pneg %p221
      $region34: #{rrdbnet_forward.8} parent=11 // pred_check_branch
        %783 = sbr.rel (%p781) target = $region36
      $region35: #{rrdbnet_forward.8} parent=11 // pred_region
        _
      $region36: #{rrdbnet_forward.8} parent=11 // pred_fallthru
        _
      // Predicated region
      $region37: #{rrdbnet_forward.8} parent=11 // pred_check
        %p784 = pneg %p242
      $region38: #{rrdbnet_forward.8} parent=11 // pred_check_branch
        %786 = sbr.rel (%p784) target = $region40
      $region39: #{rrdbnet_forward.8} parent=11 // pred_region
        _
      $region40: #{rrdbnet_forward.8} parent=11 // pred_fallthru
        _
      // Predicated region
      $region41: #{rrdbnet_forward.8} parent=11 // pred_check
        %p787 = pneg %p263
      $region42: #{rrdbnet_forward.8} parent=11 // pred_check_branch
        %789 = sbr.rel (%p787) target = $region44
      $region43: #{rrdbnet_forward.8} parent=11 // pred_region
        _
      $region44: #{rrdbnet_forward.8} parent=11 // pred_fallthru
        _
      // Predicated region
      $region45: #{rrdbnet_forward.8} parent=11 // pred_check
        %p790 = pneg %p284
      $region46: #{rrdbnet_forward.8} parent=11 // pred_check_branch
        %792 = sbr.rel (%p790) target = $region48
      $region47: #{rrdbnet_forward.8} parent=11 // pred_region
        _
      $region48: #{rrdbnet_forward.8} parent=11 // pred_fallthru
        _
      // Predicated region
      $region49: #{rrdbnet_forward.8} parent=11 // pred_check
        %p793 = pneg %p305
      $region50: #{rrdbnet_forward.8} parent=11 // pred_check_branch
        %795 = sbr.rel (%p793) target = $region52
      $region51: #{rrdbnet_forward.8} parent=11 // pred_region
        _
      $region52: #{rrdbnet_forward.8} parent=11 // pred_fallthru
        _
      // Predicated region
      $region53: #{rrdbnet_forward.8} parent=11 // pred_check
        %p796 = pneg %p326
      $region54: #{rrdbnet_forward.8} parent=11 // pred_check_branch
        %798 = sbr.rel (%p796) target = $region56
      $region55: #{rrdbnet_forward.8} parent=11 // pred_region
        _
      $region56: #{rrdbnet_forward.8} parent=11 // pred_fallthru
        _
      // Predicated region
      $region57: #{rrdbnet_forward.8} parent=11 // pred_check
        %p799 = pneg %p347
      $region58: #{rrdbnet_forward.8} parent=11 // pred_check_branch
        %801 = sbr.rel (%p799) target = $region60
      $region59: #{rrdbnet_forward.8} parent=11 // pred_region
        _
      $region60: #{rrdbnet_forward.8} parent=11 // pred_fallthru
        _
      // Predicated region
      $region61: #{rrdbnet_forward.8} parent=11 // pred_check
        %p802 = pneg %p368
      $region62: #{rrdbnet_forward.8} parent=11 // pred_check_branch
        %804 = sbr.rel (%p802) target = $region64
      $region63: #{rrdbnet_forward.8} parent=11 // pred_region
        _
      $region64: #{rrdbnet_forward.8} parent=11 // pred_fallthru
        _
      // Predicated region
      $region65: #{rrdbnet_forward.8} parent=11 // pred_check
        %p805 = pneg %p389
      $region66: #{rrdbnet_forward.8} parent=11 // pred_check_branch
        %807 = sbr.rel (%p805) target = $region68
      $region67: #{rrdbnet_forward.8} parent=11 // pred_region
        _
      $region68: #{rrdbnet_forward.8} parent=11 // pred_fallthru
        _
      // Predicated region
      $region69: #{rrdbnet_forward.8} parent=11 // pred_check
        %p808 = pneg %p410
      $region70: #{rrdbnet_forward.8} parent=11 // pred_check_branch
        %810 = sbr.rel (%p808) target = $region72
      $region71: #{rrdbnet_forward.8} parent=11 // pred_region
        _
      $region72: #{rrdbnet_forward.8} parent=11 // pred_fallthru
        _
      // Predicated region
      $region73: #{rrdbnet_forward.8} parent=11 // pred_check
        %p811 = pneg %p431
      $region74: #{rrdbnet_forward.8} parent=11 // pred_check_branch
        %813 = sbr.rel (%p811) target = $region76
      $region75: #{rrdbnet_forward.8} parent=11 // pred_region
        _
      $region76: #{rrdbnet_forward.8} parent=11 // pred_fallthru
        _
      // Predicated region
      $region77: #{rrdbnet_forward.8} parent=11 // pred_check
        %p814 = pneg %p452
      $region78: #{rrdbnet_forward.8} parent=11 // pred_check_branch
        %816 = sbr.rel (%p814) target = $region80
      $region79: #{rrdbnet_forward.8} parent=11 // pred_region
        _
      $region80: #{rrdbnet_forward.8} parent=11 // pred_fallthru
        _
      // Predicated region
      $region81: #{rrdbnet_forward.8} parent=11 // pred_check
        %p817 = pneg %p473
      $region82: #{rrdbnet_forward.8} parent=11 // pred_check_branch
        %819 = sbr.rel (%p817) target = $region84
      $region83: #{rrdbnet_forward.8} parent=11 // pred_region
        _
      $region84: #{rrdbnet_forward.8} parent=11 // pred_fallthru
        _
      // Predicated region
      $region85: #{rrdbnet_forward.8} parent=11 // pred_check
        %p820 = pneg %p494
      $region86: #{rrdbnet_forward.8} parent=11 // pred_check_branch
        %822 = sbr.rel (%p820) target = $region88
      $region87: #{rrdbnet_forward.8} parent=11 // pred_region
        _
      $region88: #{rrdbnet_forward.8} parent=11 // pred_fallthru
        _
      // Predicated region
      $region89: #{rrdbnet_forward.8} parent=11 // pred_check
        %p823 = pneg %p515
      $region90: #{rrdbnet_forward.8} parent=11 // pred_check_branch
        %825 = sbr.rel (%p823) target = $region92
      $region91: #{rrdbnet_forward.8} parent=11 // pred_region
        _
      $region92: #{rrdbnet_forward.8} parent=11 // pred_fallthru
        _
      // Predicated region
      $region93: #{rrdbnet_forward.8} parent=11 // pred_check
        %p826 = pneg %p536
      $region94: #{rrdbnet_forward.8} parent=11 // pred_check_branch
        %828 = sbr.rel (%p826) target = $region96
      $region95: #{rrdbnet_forward.8} parent=11 // pred_region
        _
      $region96: #{rrdbnet_forward.8} parent=11 // pred_fallthru
        _
      // Predicated region
      $region97: #{rrdbnet_forward.8} parent=11 // pred_check
        %p829 = pneg %p557
      $region98: #{rrdbnet_forward.8} parent=11 // pred_check_branch
        %831 = sbr.rel (%p829) target = $region100
      $region99: #{rrdbnet_forward.8} parent=11 // pred_region
        _
      $region100: #{rrdbnet_forward.8} parent=11 // pred_fallthru
        _
      // Predicated region
      $region101: #{rrdbnet_forward.8} parent=11 // pred_check
        %p832 = pneg %p578
      $region102: #{rrdbnet_forward.8} parent=11 // pred_check_branch
        %834 = sbr.rel (%p832) target = $region104
      $region103: #{rrdbnet_forward.8} parent=11 // pred_region
        _
      $region104: #{rrdbnet_forward.8} parent=11 // pred_fallthru
        _
      // Predicated region
      $region105: #{rrdbnet_forward.8} parent=11 // pred_check
        %p835 = pneg %p599
      $region106: #{rrdbnet_forward.8} parent=11 // pred_check_branch
        %837 = sbr.rel (%p835) target = $region108
      $region107: #{rrdbnet_forward.8} parent=11 // pred_region
        _
      $region108: #{rrdbnet_forward.8} parent=11 // pred_fallthru
        _
      // Predicated region
      $region109: #{rrdbnet_forward.8} parent=11 // pred_check
        %p838 = pneg %p620
      $region110: #{rrdbnet_forward.8} parent=11 // pred_check_branch
        %840 = sbr.rel (%p838) target = $region112
      $region111: #{rrdbnet_forward.8} parent=11 // pred_region
        _
      $region112: #{rrdbnet_forward.8} parent=11 // pred_fallthru
        _
      // Predicated region
      $region113: #{rrdbnet_forward.8} parent=11 // pred_check
        %p841 = pneg %p641
      $region114: #{rrdbnet_forward.8} parent=11 // pred_check_branch
        %843 = sbr.rel (%p841) target = $region116
      $region115: #{rrdbnet_forward.8} parent=11 // pred_region
        _
      $region116: #{rrdbnet_forward.8} parent=11 // pred_fallthru
        _
      // Predicated region
      $region117: #{rrdbnet_forward.8} parent=11 // pred_check
        %p844 = pneg %p662
      $region118: #{rrdbnet_forward.8} parent=11 // pred_check_branch
        %846 = sbr.rel (%p844) target = $region120
      $region119: #{rrdbnet_forward.8} parent=11 // pred_region
        _
      $region120: #{rrdbnet_forward.8} parent=11 // pred_fallthru
        _
      // Predicated region
      $region121: #{rrdbnet_forward.8} parent=11 // pred_check
        %p847 = pneg %p683
      $region122: #{rrdbnet_forward.8} parent=11 // pred_check_branch
        %849 = sbr.rel (%p847) target = $region124
      $region123: #{rrdbnet_forward.8} parent=11 // pred_region
        _
      $region124: #{rrdbnet_forward.8} parent=11 // pred_fallthru
        _
      // Predicated region
      $region125: #{rrdbnet_forward.8} parent=11 // pred_check
        %p850 = pneg %p704
      $region126: #{rrdbnet_forward.8} parent=11 // pred_check_branch
        %852 = sbr.rel (%p850) target = $region128
      $region127: #{rrdbnet_forward.8} parent=11 // pred_region
        _
      $region128: #{rrdbnet_forward.8} parent=11 // pred_fallthru
        _
      // Predicated region
      $region129: #{rrdbnet_forward.8} parent=11 // pred_check
        %p853 = pneg %p725
      $region130: #{rrdbnet_forward.8} parent=11 // pred_check_branch
        %855 = sbr.rel (%p853) target = $region132
      $region131: #{rrdbnet_forward.8} parent=11 // pred_region
        _
      $region132: #{rrdbnet_forward.8} parent=11 // pred_fallthru
        _
    $region12: #{rrdbnet_forward.8} parent=5 // pred_fallthru
      _
    %p856 = scmp.lt.s32.totalorder %s69, 2
    // Predicated region
    $region133: #{rrdbnet_forward.8} parent=5 // pred_check
      %p857 = pneg %p856
    $region134: #{rrdbnet_forward.8} parent=5 // pred_check_branch
      %859 = sbr.rel (%p857) target = $region136
    $region135: #{rrdbnet_forward.8} parent=5 // pred_region
      // Predicated region
      $region137: #{rrdbnet_forward.8} parent=135 // pred_check
        %p860 = pneg %p89
      $region138: #{rrdbnet_forward.8} parent=135 // pred_check_branch
        %862 = sbr.rel (%p860) target = $region140
      $region139: #{rrdbnet_forward.8} parent=135 // pred_region
        %p863 = scmp.lt.s32.totalorder %s69, 1
        %s864 = scalar_select %p863, %s69, 1
        %s865 = smul.addr %s864, 2
        %s866 = smul.addr %s865, 8
        %s867 = scalar_lea.vmem %s1, %s866
      $region140: #{rrdbnet_forward.8} parent=135 // pred_fallthru
        _
    $region136: #{rrdbnet_forward.8} parent=5 // pred_fallthru
      _
    %p868 = scmp.le.s32.totalorder 1, %s69
    %p869 = scmp.lt.s32.totalorder %s69, 3
    %p870 = pnand %p868, %p869
    %p871 = pneg %p870
    // Predicated region
    $region141: #{rrdbnet_forward.8} parent=5 // pred_check
      _
    $region142: #{rrdbnet_forward.8} parent=5 // pred_check_branch
      %873 = sbr.rel (%p870) target = $region144
    $region143: #{rrdbnet_forward.8} parent=5 // pred_region
      %s874 = ssub.s32 %s69, 1
      %p875 = scmp.lt.s32.totalorder %s74, 1
      %s876 = scalar_select %p875, %s74, 1
      %s877 = smul.addr %s876, 2
      %s878 = smul.addr %s877, 8
      %s879 = scalar_lea.vmem %s1, %s878
      %p880 = pneg %p95
      %p881 = pneg %p92
      %p882 = pneg %p116
      %p883 = pneg %p113
      %p884 = pneg %p137
      %p885 = pneg %p134
      %p886 = pneg %p158
      %p887 = pneg %p155
      %p888 = pneg %p179
      %p889 = pneg %p176
      %p890 = pneg %p200
      %p891 = pneg %p197
      %p892 = pneg %p221
      %p893 = pneg %p218
      %p894 = pneg %p242
      %p895 = pneg %p239
      %p896 = pneg %p263
      %p897 = pneg %p260
      %p898 = pneg %p284
      %p899 = pneg %p281
      %p900 = pneg %p305
      %p901 = pneg %p302
      %p902 = pneg %p326
      %p903 = pneg %p323
      %p904 = pneg %p347
      %p905 = pneg %p344
      %p906 = pneg %p368
      %p907 = pneg %p365
      %p908 = pneg %p389
      %p909 = pneg %p386
      %p910 = pneg %p410
      %p911 = pneg %p407
      %p912 = pneg %p431
      %p913 = pneg %p428
      %p914 = pneg %p452
      %p915 = pneg %p449
      %p916 = pneg %p473
      %p917 = pneg %p470
      %p918 = pneg %p494
      %p919 = pneg %p491
      %p920 = pneg %p515
      %p921 = pneg %p512
      %p922 = pneg %p536
      %p923 = pneg %p533
      %p924 = pneg %p557
      %p925 = pneg %p554
      %p926 = pneg %p578
      %p927 = pneg %p575
      %p928 = pneg %p599
      %p929 = pneg %p596
      %p930 = pneg %p620
      %p931 = pneg %p617
      %p932 = pneg %p641
      %p933 = pneg %p638
      %p934 = pneg %p662
      %p935 = pneg %p659
      %p936 = pneg %p683
      %p937 = pneg %p680
      %p938 = pneg %p704
      %p939 = pneg %p701
      %p940 = pneg %p725
      %p941 = pneg %p722
      %p942 = pneg %p751
      %p943 = pneg %p748
      %p944 = scmp.lt.s32.totalorder %s74, 1
      %s945 = scalar_select %p944, %s74, 1
      %s946 = smul.addr %s945, 2
      %s947 = smul.addr %s946, 8
      %s948 = scalar_lea.vmem %s63, %s947
      %p949 = scmp.lt.s32.totalorder %s74, 1
      %s950 = scalar_select %p949, %s74, 1
      %s951 = smul.addr %s950, 2
      %s952 = smul.addr %s951, 8
      %s953 = scalar_lea.vmem %s1, %s952
      %p954 = scmp.lt.s32.totalorder %s74, 1
      %s955 = scalar_select %p954, %s74, 1
      %s956 = smul.addr %s955, 2
      %s957 = smul.addr %s956, 8
      %s958 = scalar_lea.vmem %s63, %s957
      %v959 = vld [vmem:[%s953] sm:$0xff]
      %v960 = vld [vmem:[%s953 + $0x8] sm:$0xff]
      %v961 = vlaneseq
      %v962 = vshrl.u32 %v961, 7
      %v963 = vadd.s32 %v962, 8
      %v964 = vrot.slane %v959, 7
      %v965 = vrot.slane %v960, 7
      %vm966 = vcmp.lt.s32.totalorder %v962, 1
      %v967 = vsel %vm966, %v964, %v965
      %v968 = vsel %vm966, %v965, %v964
      %vm969 = vcmp.eq.s32.totalorder %v962, 0
      %vm970 = vcmp.eq.s32.totalorder %v963, 0
      %v971 = vsel %vm969, 0.0, %v968
      %v972 = vsel %vm970, 0.0, %v967
      %v973 = vrot.slane %v959, 1
      %v974 = vrot.slane %v960, 1
      %vm975 = vcmp.lt.s32.totalorder %v962, 7
      %v976 = vsel %vm975, %v973, %v974
      %v977 = vsel %vm975, %v974, %v973
      %vm978 = vcmp.eq.s32.totalorder %v962, 15
      %vm979 = vcmp.eq.s32.totalorder %v963, 15
      %v980 = vsel %vm978, 0.0, %v976
      %v981 = vsel %vm979, 0.0, %v977
      %984 = vrot.lane.b32.xlu0 %v959, 32
      %v985 = vpop.permute.xlu0 %984
      %986 = vrot.lane.b32.xlu0 %v960, 32
      %v987 = vpop.permute.xlu0 %986
      %992 = vrot.lane.b32.xlu0 %v980, 64
      %v993 = vpop.permute.xlu0 %992
      %994 = vrot.lane.b32.xlu0 %v981, 64
      %v995 = vpop.permute.xlu0 %994
      %vm998 = vcmask 261120
      %v999 = vsel %vm998, %v971, %v985
      %v1000 = vsel %vm998, %v972, %v987
      %vm1001 = vcmask 523264
      %v1002 = vsel %vm1001, %v999, %v993
      %v1003 = vsel %vm1001, %v1000, %v995
      %v1004 = vld [vmem:[%s3] sm:$0xff]
      %v1005 = vld [vmem:[%s3 + $0x8] sm:$0xff]
      %v1006 = vld [vmem:[%s3 + $0x10] sm:$0xff]
      %v1007 = vld [vmem:[%s3 + $0x18] sm:$0xff]
      %v1008 = vld [vmem:[%s3 + $0x20] sm:$0xff]
      %v1009 = vld [vmem:[%s3 + $0x28] sm:$0xff]
      %v1010 = vld [vmem:[%s3 + $0x30] sm:$0xff]
      %v1011 = vld [vmem:[%s3 + $0x38] sm:$0xff]
      %v1012 = vld [vmem:[%s3 + $0x40] sm:$0xff]
      %v1013 = vld [vmem:[%s3 + $0x48] sm:$0xff]
      %v1014 = vld [vmem:[%s3 + $0x50] sm:$0xff]
      %v1015 = vld [vmem:[%s3 + $0x58] sm:$0xff]
      %v1016 = vld [vmem:[%s5] sm:$0x1]
      %v1018 = vlaneseq
      %v1019 = vshrl.u32 %v1018, 7
      %v1020 = vsub.s32 0, %v1019
      %v1021 = vrot.slane %v1016, %v1020
      %vm1023 = vcmask 785408
      %v1025 = vsel %vm1023, %v1002, 0
      %v1028 = vsel %vm1023, %v1003, 0
      %1030 = vmatprep.subr.mxu0 0.0
      %1031 = vmatpush1.msra.mxu0 %v1004
      %1032 = vmatprep.subr.mxu0 0.0
      %1033 = vmatpush1.msra.mxu0 %v1005
      %1034 = vmatprep.subr.mxu0 0.0
      %1035 = vmatpush1.msra.mxu0 %v1006
      %1036 = vmatprep.subr.mxu0 0.0
      %1037 = vmatpush1.msra.mxu0 %v1007
      %1038 = vmatprep.subr.mxu0 0.0
      %1039 = vmatpush1.msra.mxu0 %v1008
      %1040 = vmatprep.subr.mxu0 0.0
      %1041 = vmatpush1.msra.mxu0 %v1009
      %1042 = vmatprep.subr.mxu0 0.0
      %1043 = vmatpush1.msra.mxu0 %v1010
      %1044 = vmatprep.subr.mxu0 0.0
      %1045 = vmatpush1.msra.mxu0 %v1011
      %1046 = vmatprep.subr.mxu0 0.0
      %1047 = vmatpush1.msra.mxu0 %v1012
      %1048 = vmatprep.subr.mxu0 0.0
      %1049 = vmatpush1.msra.mxu0 %v1013
      %1050 = vmatprep.subr.mxu0 0.0
      %1051 = vmatpush1.msra.mxu0 %v1014
      %1052 = vmatprep.subr.mxu0 0.0
      %1053 = vmatpush1.msra.mxu0 %v1015
      %1054 = vmatprep.subr.mxu0 0.0
      %1055 = vmatpush1.msra.mxu0 0.0
      %1056 = vmatprep.subr.mxu0 0.0
      %1057 = vmatpush1.msra.mxu0 0.0
      %1058 = vmatprep.subr.mxu0 0.0
      %1059 = vmatpush1.msra.mxu0 0.0
      %1060 = vmatprep.subr.mxu0 0.0
      %1061 = vmatpush1.msra.mxu0 0.0
      %1062 = vmatprep.subr.mxu0 0.0
      %1063 = vmatpush1.msra.mxu0 0.0
      %1064 = vmatprep.subr.mxu0 0.0
      %1065 = vmatpush1.msra.mxu0 0.0
      %1066 = vmatprep.subr.mxu0 0.0
      %1067 = vmatpush1.msra.mxu0 0.0
      %1068 = vmatprep.subr.mxu0 0.0
      %1069 = vmatpush1.msra.mxu0 0.0
      %1070 = vmatprep.subr.mxu0 0.0
      %1071 = vmatpush1.msra.mxu0 0.0
      %1072 = vmatprep.subr.mxu0 0.0
      %1073 = vmatpush1.msra.mxu0 0.0
      %1074 = vmatprep.subr.mxu0 0.0
      %1075 = vmatpush1.msra.mxu0 0.0
      %1076 = vmatprep.subr.mxu0 0.0
      %1077 = vmatpush1.msra.mxu0 0.0
      %1078 = vmatprep.subr.mxu0 0.0
      %1079 = vmatpush1.msra.mxu0 0.0
      %1080 = vmatprep.subr.mxu0 0.0
      %1081 = vmatpush1.msra.mxu0 0.0
      %1082 = vmatprep.subr.mxu0 0.0
      %1083 = vmatpush1.msra.mxu0 0.0
      %1084 = vmatprep.subr.mxu0 0.0
      %1085 = vmatpush1.msra.mxu0 0.0
      %1086 = vmatprep.subr.mxu0 0.0
      %1087 = vmatpush1.msra.mxu0 0.0
      %1088 = vmatprep.subr.mxu0 0.0
      %1089 = vmatpush1.msra.mxu0 0.0
      %1090 = vmatprep.subr.mxu0 0.0
      %1091 = vmatpush1.msra.mxu0 0.0
      %1092 = vmatprep.subr.mxu0 0.0
      %1093 = vmatpush1.msra.mxu0 0.0
      %1094 = vmatprep.mubr.f32.mxu0 0.0
      %1095 = vmatmul.mubr.f32.gmra.mrb[0].mxu0 %v1025
      %v1096 = vpop.f32.mrb[0].mxu0
      %v1097 = vadd.f32 %v1021, %v1096
      %v1098 = vpop.f32.mrb[0].mxu0
      %1099 = vmatprep.mubr.f32.mxu0 0.0
      %1100 = vmatmul.mubr.f32.gmra.mrb[0].mxu0 %v1028
      %v1101 = vpop.f32.mrb[0].mxu0
      %v1102 = vadd.f32 %v1021, %v1101
      %v1103 = vpop.f32.mrb[0].mxu0
      %1104 = vdwg.mxu0
      %vm1105 = vcmp.gt.f32.partialorder %v1097, 0.0
      %vm1106 = vcmp.gt.f32.partialorder %v1102, 0.0
      %v1107 = vmul.f32 %v1097, 0.2
      %v1108 = vmul.f32 %v1102, 0.2
      %v1109 = vsel %vm1105, %v1097, %v1107
      %v1110 = vsel %vm1106, %v1102, %v1108
      %1113 = vrot.lane.b32.xlu0 %v1109, 32
      %v1114 = vpop.permute.xlu0 %1113
      %1115 = vrot.lane.b32.xlu0 %v1110, 32
      %v1116 = vpop.permute.xlu0 %1115
      %v1119 = vsel %vm998, %v959, %v1114
      %v1120 = vsel %vm998, %v960, %v1116
      %v1121 = vrot.slane %v1119, 7
      %v1122 = vrot.slane %v1120, 7
      %v1123 = vsel %vm966, %v1121, %v1122
      %v1124 = vsel %vm966, %v1122, %v1121
      %v1125 = vsel %vm969, 0.0, %v1124
      %v1126 = vsel %vm970, 0.0, %v1123
      %v1127 = vrot.slane %v1119, 1
      %v1128 = vrot.slane %v1120, 1
      %v1129 = vsel %vm975, %v1127, %v1128
      %v1130 = vsel %vm975, %v1128, %v1127
      %v1131 = vsel %vm978, 0.0, %v1129
      %v1132 = vsel %vm979, 0.0, %v1130
      %1135 = vrot.lane.b32.xlu0 %v1119, 48
      %v1136 = vpop.permute.xlu0 %1135
      %1137 = vrot.lane.b32.xlu0 %v1120, 48
      %v1138 = vpop.permute.xlu0 %1137
      %1143 = vrot.lane.b32.xlu0 %v1131, 96
      %v1144 = vpop.permute.xlu0 %1143
      %1145 = vrot.lane.b32.xlu0 %v1132, 96
      %v1146 = vpop.permute.xlu0 %1145
      %vm1149 = vcmask 392192
      %v1150 = vsel %vm1149, %v1125, %v1136
      %v1151 = vsel %vm1149, %v1126, %v1138
      %v1152 = vsel %vm1023, %v1150, %v1144
      %v1153 = vsel %vm1023, %v1151, %v1146
      %v1154 = vld [vmem:[%s7] sm:$0xff]
      %v1155 = vld [vmem:[%s7 + $0x8] sm:$0xff]
      %v1156 = vld [vmem:[%s7 + $0x10] sm:$0xff]
      %v1157 = vld [vmem:[%s7 + $0x18] sm:$0xff]
      %v1158 = vld [vmem:[%s7 + $0x20] sm:$0xff]
      %v1159 = vld [vmem:[%s7 + $0x28] sm:$0xff]
      %v1160 = vld [vmem:[%s7 + $0x30] sm:$0xff]
      %v1161 = vld [vmem:[%s7 + $0x38] sm:$0xff]
      %v1162 = vld [vmem:[%s7 + $0x40] sm:$0xff]
      %v1163 = vld [vmem:[%s7 + $0x48] sm:$0xff]
      %v1164 = vld [vmem:[%s7 + $0x50] sm:$0xff]
      %v1165 = vld [vmem:[%s7 + $0x58] sm:$0xff]
      %v1166 = vld [vmem:[%s7 + $0x60] sm:$0xff]
      %v1167 = vld [vmem:[%s7 + $0x68] sm:$0xff]
      %v1168 = vld [vmem:[%s7 + $0x70] sm:$0xff]
      %v1169 = vld [vmem:[%s7 + $0x78] sm:$0xff]
      %v1170 = vld [vmem:[%s7 + $0x80] sm:$0xff]
      %v1171 = vld [vmem:[%s7 + $0x88] sm:$0xff]
      %v1172 = vld [vmem:[%s9] sm:$0x1]
      %v1174 = vlaneseq
      %v1175 = vshrl.u32 %v1174, 7
      %v1176 = vsub.s32 0, %v1175
      %v1177 = vrot.slane %v1172, %v1176
      %vm1179 = vcmask 130048
      %v1180 = vsel %vm1179, %v1144, 0
      %v1182 = vsel %vm1179, %v1146, 0
      %1184 = vmatprep.subr.mxu0 0.0
      %1185 = vmatpush1.msra.mxu0 %v1154
      %1186 = vmatprep.subr.mxu0 0.0
      %1187 = vmatpush1.msra.mxu0 %v1155
      %1188 = vmatprep.subr.mxu0 0.0
      %1189 = vmatpush1.msra.mxu0 %v1156
      %1190 = vmatprep.subr.mxu0 0.0
      %1191 = vmatpush1.msra.mxu0 %v1157
      %1192 = vmatprep.subr.mxu0 0.0
      %1193 = vmatpush1.msra.mxu0 %v1158
      %1194 = vmatprep.subr.mxu0 0.0
      %1195 = vmatpush1.msra.mxu0 %v1159
      %1196 = vmatprep.subr.mxu0 0.0
      %1197 = vmatpush1.msra.mxu0 %v1160
      %1198 = vmatprep.subr.mxu0 0.0
      %1199 = vmatpush1.msra.mxu0 %v1161
      %1200 = vmatprep.subr.mxu0 0.0
      %1201 = vmatpush1.msra.mxu0 %v1162
      %1202 = vmatprep.subr.mxu0 0.0
      %1203 = vmatpush1.msra.mxu0 %v1163
      %1204 = vmatprep.subr.mxu0 0.0
      %1205 = vmatpush1.msra.mxu0 %v1164
      %1206 = vmatprep.subr.mxu0 0.0
      %1207 = vmatpush1.msra.mxu0 %v1165
      %1208 = vmatprep.subr.mxu0 0.0
      %1209 = vmatpush1.msra.mxu0 %v1166
      %1210 = vmatprep.subr.mxu0 0.0
      %1211 = vmatpush1.msra.mxu0 %v1167
      %1212 = vmatprep.subr.mxu0 0.0
      %1213 = vmatpush1.msra.mxu0 %v1168
      %1214 = vmatprep.subr.mxu0 0.0
      %1215 = vmatpush1.msra.mxu0 %v1169
      %1216 = vmatprep.subr.mxu0 0.0
      %1217 = vmatpush1.msra.mxu0 %v1170
      %1218 = vmatprep.subr.mxu0 0.0
      %1219 = vmatpush1.msra.mxu0 %v1171
      %1220 = vmatprep.subr.mxu0 0.0
      %1221 = vmatpush1.msra.mxu0 0.0
      %1222 = vmatprep.subr.mxu0 0.0
      %1223 = vmatpush1.msra.mxu0 0.0
      %1224 = vmatprep.subr.mxu0 0.0
      %1225 = vmatpush1.msra.mxu0 0.0
      %1226 = vmatprep.subr.mxu0 0.0
      %1227 = vmatpush1.msra.mxu0 0.0
      %1228 = vmatprep.subr.mxu0 0.0
      %1229 = vmatpush1.msra.mxu0 0.0
      %1230 = vmatprep.subr.mxu0 0.0
      %1231 = vmatpush1.msra.mxu0 0.0
      %1232 = vmatprep.subr.mxu0 0.0
      %1233 = vmatpush1.msra.mxu0 0.0
      %1234 = vmatprep.subr.mxu0 0.0
      %1235 = vmatpush1.msra.mxu0 0.0
      %1236 = vmatprep.subr.mxu0 0.0
      %1237 = vmatpush1.msra.mxu0 0.0
      %1238 = vmatprep.subr.mxu0 0.0
      %1239 = vmatpush1.msra.mxu0 0.0
      %1240 = vmatprep.subr.mxu0 0.0
      %1241 = vmatpush1.msra.mxu0 0.0
      %1242 = vmatprep.subr.mxu0 0.0
      %1243 = vmatpush1.msra.mxu0 0.0
      %1244 = vmatprep.subr.mxu0 0.0
      %1245 = vmatpush1.msra.mxu0 0.0
      %1246 = vmatprep.subr.mxu0 0.0
      %1247 = vmatpush1.msra.mxu0 0.0
      %1248 = vmatprep.mubr.f32.mxu0 %v1180
      %1249 = vmatmul.mubr.f32.gmra.mrb[0].mxu0 %v1152
      %v1250 = vpop.f32.mrb[0].mxu0
      %v1251 = vadd.f32 %v1177, %v1250
      %v1252 = vpop.f32.mrb[0].mxu0
      %1253 = vmatprep.mubr.f32.mxu0 %v1182
      %1254 = vmatmul.mubr.f32.gmra.mrb[0].mxu0 %v1153
      %v1255 = vpop.f32.mrb[0].mxu0
      %v1256 = vadd.f32 %v1177, %v1255
      %v1257 = vpop.f32.mrb[0].mxu0
      %1258 = vdwg.mxu0
      %vm1259 = vcmp.gt.f32.partialorder %v1251, 0.0
      %vm1260 = vcmp.gt.f32.partialorder %v1256, 0.0
      %v1261 = vmul.f32 %v1251, 0.2
      %v1262 = vmul.f32 %v1256, 0.2
      %v1263 = vsel %vm1259, %v1251, %v1261
      %v1264 = vsel %vm1260, %v1256, %v1262
      %1267 = vrot.lane.b32.xlu0 %v1263, 48
      %v1268 = vpop.permute.xlu0 %1267
      %1269 = vrot.lane.b32.xlu0 %v1264, 48
      %v1270 = vpop.permute.xlu0 %1269
      %v1273 = vsel %vm1149, %v1119, %v1268
      %v1274 = vsel %vm1149, %v1120, %v1270
      %v1275 = vrot.slane %v1273, 7
      %v1276 = vrot.slane %v1274, 7
      %v1277 = vsel %vm966, %v1275, %v1276
      %v1278 = vsel %vm966, %v1276, %v1275
      %v1279 = vsel %vm969, 0.0, %v1278
      %v1280 = vsel %vm970, 0.0, %v1277
      %v1281 = vrot.slane %v1273, 1
      %v1282 = vrot.slane %v1274, 1
      %v1283 = vsel %vm975, %v1281, %v1282
      %v1284 = vsel %vm975, %v1282, %v1281
      %v1285 = vsel %vm978, 0.0, %v1283
      %v1286 = vsel %vm979, 0.0, %v1284
      %1289 = vrot.lane.b32.xlu0 %v1273, 64
      %v1290 = vpop.permute.xlu0 %1289
      %1291 = vrot.lane.b32.xlu0 %v1274, 64
      %v1292 = vpop.permute.xlu0 %1291
      %v1295 = vsel %vm1001, %v1279, %v1290
      %v1296 = vsel %vm1001, %v1280, %v1292
      %v1297 = vld [vmem:[%s11] sm:$0xff]
      %v1298 = vld [vmem:[%s11 + $0x8] sm:$0xff]
      %v1299 = vld [vmem:[%s11 + $0x10] sm:$0xff]
      %v1300 = vld [vmem:[%s11 + $0x18] sm:$0xff]
      %v1301 = vld [vmem:[%s11 + $0x20] sm:$0xff]
      %v1302 = vld [vmem:[%s11 + $0x28] sm:$0xff]
      %v1303 = vld [vmem:[%s11 + $0x30] sm:$0xff]
      %v1304 = vld [vmem:[%s11 + $0x38] sm:$0xff]
      %v1305 = vld [vmem:[%s11 + $0x40] sm:$0xff]
      %v1306 = vld [vmem:[%s11 + $0x48] sm:$0xff]
      %v1307 = vld [vmem:[%s11 + $0x50] sm:$0xff]
      %v1308 = vld [vmem:[%s11 + $0x58] sm:$0xff]
      %v1309 = vld [vmem:[%s11 + $0x60] sm:$0xff]
      %v1310 = vld [vmem:[%s11 + $0x68] sm:$0xff]
      %v1311 = vld [vmem:[%s11 + $0x70] sm:$0xff]
      %v1312 = vld [vmem:[%s11 + $0x78] sm:$0xff]
      %v1313 = vld [vmem:[%s11 + $0x80] sm:$0xff]
      %v1314 = vld [vmem:[%s11 + $0x88] sm:$0xff]
      %v1315 = vld [vmem:[%s11 + $0x90] sm:$0xff]
      %v1316 = vld [vmem:[%s11 + $0x98] sm:$0xff]
      %v1317 = vld [vmem:[%s11 + $0xa0] sm:$0xff]
      %v1318 = vld [vmem:[%s11 + $0xa8] sm:$0xff]
      %v1319 = vld [vmem:[%s11 + $0xb0] sm:$0xff]
      %v1320 = vld [vmem:[%s11 + $0xb8] sm:$0xff]
      %v1321 = vld [vmem:[%s13] sm:$0x1]
      %v1323 = vlaneseq
      %v1324 = vshrl.u32 %v1323, 7
      %v1325 = vsub.s32 0, %v1324
      %v1326 = vrot.slane %v1321, %v1325
      %v1329 = vsel %vm1001, %v1285, 0
      %v1332 = vsel %vm1001, %v1286, 0
      %1334 = vmatprep.subr.mxu0 0.0
      %1335 = vmatpush1.msra.mxu0 %v1297
      %1336 = vmatprep.subr.mxu0 0.0
      %1337 = vmatpush1.msra.mxu0 %v1298
      %1338 = vmatprep.subr.mxu0 0.0
      %1339 = vmatpush1.msra.mxu0 %v1299
      %1340 = vmatprep.subr.mxu0 0.0
      %1341 = vmatpush1.msra.mxu0 %v1300
      %1342 = vmatprep.subr.mxu0 0.0
      %1343 = vmatpush1.msra.mxu0 %v1301
      %1344 = vmatprep.subr.mxu0 0.0
      %1345 = vmatpush1.msra.mxu0 %v1302
      %1346 = vmatprep.subr.mxu0 0.0
      %1347 = vmatpush1.msra.mxu0 %v1303
      %1348 = vmatprep.subr.mxu0 0.0
      %1349 = vmatpush1.msra.mxu0 %v1304
      %1350 = vmatprep.subr.mxu0 0.0
      %1351 = vmatpush1.msra.mxu0 %v1305
      %1352 = vmatprep.subr.mxu0 0.0
      %1353 = vmatpush1.msra.mxu0 %v1306
      %1354 = vmatprep.subr.mxu0 0.0
      %1355 = vmatpush1.msra.mxu0 %v1307
      %1356 = vmatprep.subr.mxu0 0.0
      %1357 = vmatpush1.msra.mxu0 %v1308
      %1358 = vmatprep.subr.mxu0 0.0
      %1359 = vmatpush1.msra.mxu0 %v1309
      %1360 = vmatprep.subr.mxu0 0.0
      %1361 = vmatpush1.msra.mxu0 %v1310
      %1362 = vmatprep.subr.mxu0 0.0
      %1363 = vmatpush1.msra.mxu0 %v1311
      %1364 = vmatprep.subr.mxu0 0.0
      %1365 = vmatpush1.msra.mxu0 %v1312
      %1366 = vmatprep.subr.mxu0 0.0
      %1367 = vmatpush1.msra.mxu0 %v1313
      %1368 = vmatprep.subr.mxu0 0.0
      %1369 = vmatpush1.msra.mxu0 %v1314
      %1370 = vmatprep.subr.mxu0 0.0
      %1371 = vmatpush1.msra.mxu0 %v1315
      %1372 = vmatprep.subr.mxu0 0.0
      %1373 = vmatpush1.msra.mxu0 %v1316
      %1374 = vmatprep.subr.mxu0 0.0
      %1375 = vmatpush1.msra.mxu0 %v1317
      %1376 = vmatprep.subr.mxu0 0.0
      %1377 = vmatpush1.msra.mxu0 %v1318
      %1378 = vmatprep.subr.mxu0 0.0
      %1379 = vmatpush1.msra.mxu0 %v1319
      %1380 = vmatprep.subr.mxu0 0.0
      %1381 = vmatpush1.msra.mxu0 %v1320
      %1382 = vmatprep.subr.mxu0 0.0
      %1383 = vmatpush1.msra.mxu0 0.0
      %1384 = vmatprep.subr.mxu0 0.0
      %1385 = vmatpush1.msra.mxu0 0.0
      %1386 = vmatprep.subr.mxu0 0.0
      %1387 = vmatpush1.msra.mxu0 0.0
      %1388 = vmatprep.subr.mxu0 0.0
      %1389 = vmatpush1.msra.mxu0 0.0
      %1390 = vmatprep.subr.mxu0 0.0
      %1391 = vmatpush1.msra.mxu0 0.0
      %1392 = vmatprep.subr.mxu0 0.0
      %1393 = vmatpush1.msra.mxu0 0.0
      %1394 = vmatprep.subr.mxu0 0.0
      %1395 = vmatpush1.msra.mxu0 0.0
      %1396 = vmatprep.subr.mxu0 0.0
      %1397 = vmatpush1.msra.mxu0 0.0
      %1398 = vmatprep.mubr.f32.mxu0 %v1329
      %1399 = vmatmul.mubr.f32.gmra.mrb[0].mxu0 %v1295
      %v1400 = vpop.f32.mrb[0].mxu0
      %v1401 = vadd.f32 %v1326, %v1400
      %v1402 = vpop.f32.mrb[0].mxu0
      %1403 = vmatprep.mubr.f32.mxu0 %v1332
      %1404 = vmatmul.mubr.f32.gmra.mrb[0].mxu0 %v1296
      %v1405 = vpop.f32.mrb[0].mxu0
      %v1406 = vadd.f32 %v1326, %v1405
      %v1407 = vpop.f32.mrb[0].mxu0
      %1408 = vdwg.mxu0
      %vm1409 = vcmp.gt.f32.partialorder %v1401, 0.0
      %vm1410 = vcmp.gt.f32.partialorder %v1406, 0.0
      %v1411 = vmul.f32 %v1401, 0.2
      %v1412 = vmul.f32 %v1406, 0.2
      %v1413 = vsel %vm1409, %v1401, %v1411
      %v1414 = vsel %vm1410, %v1406, %v1412
      %1417 = vrot.lane.b32.xlu0 %v1413, 64
      %v1418 = vpop.permute.xlu0 %1417
      %1419 = vrot.lane.b32.xlu0 %v1414, 64
      %v1420 = vpop.permute.xlu0 %1419
      %v1423 = vsel %vm1001, %v1273, %v1418
      %v1424 = vsel %vm1001, %v1274, %v1420
      %v1425 = vrot.slane %v1423, 7
      %v1426 = vrot.slane %v1424, 7
      %v1427 = vsel %vm966, %v1425, %v1426
      %v1428 = vsel %vm966, %v1426, %v1425
      %v1429 = vsel %vm969, 0.0, %v1428
      %v1430 = vsel %vm970, 0.0, %v1427
      %v1431 = vrot.slane %v1423, 1
      %v1432 = vrot.slane %v1424, 1
      %v1433 = vsel %vm975, %v1431, %v1432
      %v1434 = vsel %vm975, %v1432, %v1431
      %v1435 = vsel %vm978, 0.0, %v1433
      %v1436 = vsel %vm979, 0.0, %v1434
      %1439 = vrot.lane.b32.xlu0 %v1423, 80
      %v1440 = vpop.permute.xlu0 %1439
      %1441 = vrot.lane.b32.xlu0 %v1424, 80
      %v1442 = vpop.permute.xlu0 %1441
      %1447 = vrot.lane.b32.xlu0 %v1435, 32
      %v1448 = vpop.permute.xlu0 %1447
      %1449 = vrot.lane.b32.xlu0 %v1436, 32
      %v1450 = vpop.permute.xlu0 %1449
      %vm1453 = vcmask 654336
      %v1454 = vsel %vm1453, %v1429, %v1440
      %v1455 = vsel %vm1453, %v1430, %v1442
      %v1456 = vsel %vm998, %v1440, %v1448
      %v1457 = vsel %vm998, %v1442, %v1450
      %v1458 = vld [vmem:[%s15] sm:$0xff]
      %v1459 = vld [vmem:[%s15 + $0x8] sm:$0xff]
      %v1460 = vld [vmem:[%s15 + $0x10] sm:$0xff]
      %v1461 = vld [vmem:[%s15 + $0x18] sm:$0xff]
      %v1462 = vld [vmem:[%s15 + $0x20] sm:$0xff]
      %v1463 = vld [vmem:[%s15 + $0x28] sm:$0xff]
      %v1464 = vld [vmem:[%s15 + $0x30] sm:$0xff]
      %v1465 = vld [vmem:[%s15 + $0x38] sm:$0xff]
      %v1466 = vld [vmem:[%s15 + $0x40] sm:$0xff]
      %v1467 = vld [vmem:[%s15 + $0x48] sm:$0xff]
      %v1468 = vld [vmem:[%s15 + $0x50] sm:$0xff]
      %v1469 = vld [vmem:[%s15 + $0x58] sm:$0xff]
      %v1470 = vld [vmem:[%s15 + $0x60] sm:$0xff]
      %v1471 = vld [vmem:[%s15 + $0x68] sm:$0xff]
      %v1472 = vld [vmem:[%s15 + $0x70] sm:$0xff]
      %v1473 = vld [vmem:[%s15 + $0x78] sm:$0xff]
      %v1474 = vld [vmem:[%s15 + $0x80] sm:$0xff]
      %v1475 = vld [vmem:[%s15 + $0x88] sm:$0xff]
      %v1476 = vld [vmem:[%s15 + $0x90] sm:$0xff]
      %v1477 = vld [vmem:[%s15 + $0x98] sm:$0xff]
      %v1478 = vld [vmem:[%s15 + $0xa0] sm:$0xff]
      %v1479 = vld [vmem:[%s15 + $0xa8] sm:$0xff]
      %v1480 = vld [vmem:[%s15 + $0xb0] sm:$0xff]
      %v1481 = vld [vmem:[%s15 + $0xb8] sm:$0xff]
      %v1482 = vld [vmem:[%s15 + $0xc0] sm:$0xff]
      %v1483 = vld [vmem:[%s15 + $0xc8] sm:$0xff]
      %v1484 = vld [vmem:[%s15 + $0xd0] sm:$0xff]
      %v1485 = vld [vmem:[%s15 + $0xd8] sm:$0xff]
      %v1486 = vld [vmem:[%s15 + $0xe0] sm:$0xff]
      %v1487 = vld [vmem:[%s15 + $0xe8] sm:$0xff]
      %v1488 = vld [vmem:[%s17] sm:$0x1]
      %v1490 = vlaneseq
      %v1491 = vshrl.u32 %v1490, 7
      %v1492 = vsub.s32 0, %v1491
      %v1493 = vrot.slane %v1488, %v1492
      %vm1495 = vcmask 916480
      %v1497 = vsel %vm1495, %v1456, 0
      %v1500 = vsel %vm1495, %v1457, 0
      %1502 = vmatprep.subr.mxu0 0.0
      %1503 = vmatpush1.msra.mxu0 %v1458
      %1504 = vmatprep.subr.mxu0 0.0
      %1505 = vmatpush1.msra.mxu0 %v1459
      %1506 = vmatprep.subr.mxu0 0.0
      %1507 = vmatpush1.msra.mxu0 %v1460
      %1508 = vmatprep.subr.mxu0 0.0
      %1509 = vmatpush1.msra.mxu0 %v1461
      %1510 = vmatprep.subr.mxu0 0.0
      %1511 = vmatpush1.msra.mxu0 %v1462
      %1512 = vmatprep.subr.mxu0 0.0
      %1513 = vmatpush1.msra.mxu0 %v1463
      %1514 = vmatprep.subr.mxu0 0.0
      %1515 = vmatpush1.msra.mxu0 %v1464
      %1516 = vmatprep.subr.mxu0 0.0
      %1517 = vmatpush1.msra.mxu0 %v1465
      %1518 = vmatprep.subr.mxu0 0.0
      %1519 = vmatpush1.msra.mxu0 %v1466
      %1520 = vmatprep.subr.mxu0 0.0
      %1521 = vmatpush1.msra.mxu0 %v1467
      %1522 = vmatprep.subr.mxu0 0.0
      %1523 = vmatpush1.msra.mxu0 %v1468
      %1524 = vmatprep.subr.mxu0 0.0
      %1525 = vmatpush1.msra.mxu0 %v1469
      %1526 = vmatprep.subr.mxu0 0.0
      %1527 = vmatpush1.msra.mxu0 %v1470
      %1528 = vmatprep.subr.mxu0 0.0
      %1529 = vmatpush1.msra.mxu0 %v1471
      %1530 = vmatprep.subr.mxu0 0.0
      %1531 = vmatpush1.msra.mxu0 %v1472
      %1532 = vmatprep.subr.mxu0 0.0
      %1533 = vmatpush1.msra.mxu0 %v1473
      %1534 = vmatprep.subr.mxu0 0.0
      %1535 = vmatpush1.msra.mxu0 %v1474
      %1536 = vmatprep.subr.mxu0 0.0
      %1537 = vmatpush1.msra.mxu0 %v1475
      %1538 = vmatprep.subr.mxu0 0.0
      %1539 = vmatpush1.msra.mxu0 %v1476
      %1540 = vmatprep.subr.mxu0 0.0
      %1541 = vmatpush1.msra.mxu0 %v1477
      %1542 = vmatprep.subr.mxu0 0.0
      %1543 = vmatpush1.msra.mxu0 %v1478
      %1544 = vmatprep.subr.mxu0 0.0
      %1545 = vmatpush1.msra.mxu0 %v1479
      %1546 = vmatprep.subr.mxu0 0.0
      %1547 = vmatpush1.msra.mxu0 %v1480
      %1548 = vmatprep.subr.mxu0 0.0
      %1549 = vmatpush1.msra.mxu0 %v1481
      %1550 = vmatprep.subr.mxu0 0.0
      %1551 = vmatpush1.msra.mxu0 %v1482
      %1552 = vmatprep.subr.mxu0 0.0
      %1553 = vmatpush1.msra.mxu0 %v1483
      %1554 = vmatprep.subr.mxu0 0.0
      %1555 = vmatpush1.msra.mxu0 %v1484
      %1556 = vmatprep.subr.mxu0 0.0
      %1557 = vmatpush1.msra.mxu0 %v1485
      %1558 = vmatprep.subr.mxu0 0.0
      %1559 = vmatpush1.msra.mxu0 %v1486
      %1560 = vmatprep.subr.mxu0 0.0
      %1561 = vmatpush1.msra.mxu0 %v1487
      %1562 = vmatprep.subr.mxu0 0.0
      %1563 = vmatpush1.msra.mxu0 0.0
      %1564 = vmatprep.subr.mxu0 0.0
      %1565 = vmatpush1.msra.mxu0 0.0
      %1566 = vmatprep.mubr.f32.mxu0 %v1497
      %1567 = vmatmul.mubr.f32.gmra.mrb[0].mxu0 %v1454
      %v1568 = vpop.f32.mrb[0].mxu0
      %v1569 = vadd.f32 %v1493, %v1568
      %v1570 = vpop.f32.mrb[0].mxu0
      %1571 = vmatprep.mubr.f32.mxu0 %v1500
      %1572 = vmatmul.mubr.f32.gmra.mrb[0].mxu0 %v1455
      %v1573 = vpop.f32.mrb[0].mxu0
      %v1574 = vadd.f32 %v1493, %v1573
      %v1575 = vpop.f32.mrb[0].mxu0
      %1576 = vdwg.mxu0
      %vm1577 = vcmp.gt.f32.partialorder %v1569, 0.0
      %vm1578 = vcmp.gt.f32.partialorder %v1574, 0.0
      %v1579 = vmul.f32 %v1569, 0.2
      %v1580 = vmul.f32 %v1574, 0.2
      %v1581 = vsel %vm1577, %v1569, %v1579
      %v1582 = vsel %vm1578, %v1574, %v1580
      %1585 = vrot.lane.b32.xlu0 %v1581, 80
      %v1586 = vpop.permute.xlu0 %1585
      %1587 = vrot.lane.b32.xlu0 %v1582, 80
      %v1588 = vpop.permute.xlu0 %1587
      %v1591 = vsel %vm1453, %v1423, %v1586
      %v1592 = vsel %vm1453, %v1424, %v1588
      %v1593 = vrot.slane %v1591, 7
      %v1594 = vrot.slane %v1592, 7
      %v1595 = vsel %vm966, %v1593, %v1594
      %v1596 = vsel %vm966, %v1594, %v1593
      %v1597 = vsel %vm969, 0.0, %v1596
      %v1598 = vsel %vm970, 0.0, %v1595
      %v1599 = vrot.slane %v1591, 1
      %v1600 = vrot.slane %v1592, 1
      %v1601 = vsel %vm975, %v1599, %v1600
      %v1602 = vsel %vm975, %v1600, %v1599
      %v1603 = vsel %vm978, 0.0, %v1601
      %v1604 = vsel %vm979, 0.0, %v1602
      %1607 = vrot.lane.b32.xlu0 %v1591, 96
      %v1608 = vpop.permute.xlu0 %1607
      %1609 = vrot.lane.b32.xlu0 %v1592, 96
      %v1610 = vpop.permute.xlu0 %1609
      %1615 = vrot.lane.b32.xlu0 %v1603, 64
      %v1616 = vpop.permute.xlu0 %1615
      %1617 = vrot.lane.b32.xlu0 %v1604, 64
      %v1618 = vpop.permute.xlu0 %1617
      %v1621 = vsel %vm1023, %v1597, %v1608
      %v1622 = vsel %vm1023, %v1598, %v1610
      %v1623 = vsel %vm1001, %v1608, %v1616
      %v1624 = vsel %vm1001, %v1610, %v1618
      %v1625 = vld [vmem:[%s19] sm:$0xff]
      %v1626 = vld [vmem:[%s19 + $0x8] sm:$0xff]
      %v1627 = vld [vmem:[%s19 + $0x10] sm:$0xff]
      %v1628 = vld [vmem:[%s19 + $0x18] sm:$0xff]
      %v1629 = vld [vmem:[%s19 + $0x20] sm:$0xff]
      %v1630 = vld [vmem:[%s19 + $0x28] sm:$0xff]
      %v1631 = vld [vmem:[%s19 + $0x30] sm:$0xff]
      %v1632 = vld [vmem:[%s19 + $0x38] sm:$0xff]
      %v1633 = vld [vmem:[%s19 + $0x40] sm:$0xff]
      %v1634 = vld [vmem:[%s19 + $0x48] sm:$0xff]
      %v1635 = vld [vmem:[%s19 + $0x50] sm:$0xff]
      %v1636 = vld [vmem:[%s19 + $0x58] sm:$0xff]
      %v1637 = vld [vmem:[%s19 + $0x60] sm:$0xff]
      %v1638 = vld [vmem:[%s19 + $0x68] sm:$0xff]
      %v1639 = vld [vmem:[%s19 + $0x70] sm:$0xff]
      %v1640 = vld [vmem:[%s19 + $0x78] sm:$0xff]
      %v1641 = vld [vmem:[%s19 + $0x80] sm:$0xff]
      %v1642 = vld [vmem:[%s19 + $0x88] sm:$0xff]
      %v1643 = vld [vmem:[%s19 + $0x90] sm:$0xff]
      %v1644 = vld [vmem:[%s19 + $0x98] sm:$0xff]
      %v1645 = vld [vmem:[%s19 + $0xa0] sm:$0xff]
      %v1646 = vld [vmem:[%s19 + $0xa8] sm:$0xff]
      %v1647 = vld [vmem:[%s19 + $0xb0] sm:$0xff]
      %v1648 = vld [vmem:[%s19 + $0xb8] sm:$0xff]
      %v1649 = vld [vmem:[%s19 + $0xc0] sm:$0xff]
      %v1650 = vld [vmem:[%s19 + $0xc8] sm:$0xff]
      %v1651 = vld [vmem:[%s19 + $0xd0] sm:$0xff]
      %v1652 = vld [vmem:[%s19 + $0xd8] sm:$0xff]
      %v1653 = vld [vmem:[%s19 + $0xe0] sm:$0xff]
      %v1654 = vld [vmem:[%s19 + $0xe8] sm:$0xff]
      %v1655 = vld [vmem:[%s19 + $0xf0] sm:$0xff]
      %v1656 = vld [vmem:[%s19 + $0xf8] sm:$0xff]
      %v1657 = vld [vmem:[%s19 + $0x100] sm:$0xff]
      %v1658 = vld [vmem:[%s19 + $0x108] sm:$0xff]
      %v1659 = vld [vmem:[%s19 + $0x110] sm:$0xff]
      %v1660 = vld [vmem:[%s19 + $0x118] sm:$0xff]
      %v1661 = vld [vmem:[%s21] sm:$0x1]
      %v1663 = vlaneseq
      %v1664 = vshrl.u32 %v1663, 7
      %v1665 = vsub.s32 0, %v1664
      %v1666 = vrot.slane %v1661, %v1665
      %v1668 = vsel %vm998, %v1616, 0
      %v1670 = vsel %vm998, %v1618, 0
      %1672 = vmatprep.subr.mxu0 0.0
      %1673 = vmatpush1.msra.mxu0 %v1625
      %1674 = vmatprep.subr.mxu0 0.0
      %1675 = vmatpush1.msra.mxu0 %v1626
      %1676 = vmatprep.subr.mxu0 0.0
      %1677 = vmatpush1.msra.mxu0 %v1627
      %1678 = vmatprep.subr.mxu0 0.0
      %1679 = vmatpush1.msra.mxu0 %v1628
      %1680 = vmatprep.subr.mxu0 0.0
      %1681 = vmatpush1.msra.mxu0 %v1629
      %1682 = vmatprep.subr.mxu0 0.0
      %1683 = vmatpush1.msra.mxu0 %v1630
      %1684 = vmatprep.subr.mxu0 0.0
      %1685 = vmatpush1.msra.mxu0 %v1631
      %1686 = vmatprep.subr.mxu0 0.0
      %1687 = vmatpush1.msra.mxu0 %v1632
      %1688 = vmatprep.subr.mxu0 0.0
      %1689 = vmatpush1.msra.mxu0 %v1633
      %1690 = vmatprep.subr.mxu0 0.0
      %1691 = vmatpush1.msra.mxu0 %v1634
      %1692 = vmatprep.subr.mxu0 0.0
      %1693 = vmatpush1.msra.mxu0 %v1635
      %1694 = vmatprep.subr.mxu0 0.0
      %1695 = vmatpush1.msra.mxu0 %v1636
      %1696 = vmatprep.subr.mxu0 0.0
      %1697 = vmatpush1.msra.mxu0 %v1637
      %1698 = vmatprep.subr.mxu0 0.0
      %1699 = vmatpush1.msra.mxu0 %v1638
      %1700 = vmatprep.subr.mxu0 0.0
      %1701 = vmatpush1.msra.mxu0 %v1639
      %1702 = vmatprep.subr.mxu0 0.0
      %1703 = vmatpush1.msra.mxu0 %v1640
      %1704 = vmatprep.subr.mxu0 0.0
      %1705 = vmatpush1.msra.mxu0 %v1641
      %1706 = vmatprep.subr.mxu0 0.0
      %1707 = vmatpush1.msra.mxu0 %v1642
      %1708 = vmatprep.subr.mxu0 0.0
      %1709 = vmatpush1.msra.mxu0 %v1643
      %1710 = vmatprep.subr.mxu0 0.0
      %1711 = vmatpush1.msra.mxu0 %v1644
      %1712 = vmatprep.subr.mxu0 0.0
      %1713 = vmatpush1.msra.mxu0 %v1645
      %1714 = vmatprep.subr.mxu0 0.0
      %1715 = vmatpush1.msra.mxu0 %v1646
      %1716 = vmatprep.subr.mxu0 0.0
      %1717 = vmatpush1.msra.mxu0 %v1647
      %1718 = vmatprep.subr.mxu0 0.0
      %1719 = vmatpush1.msra.mxu0 %v1648
      %1720 = vmatprep.subr.mxu0 0.0
      %1721 = vmatpush1.msra.mxu0 %v1649
      %1722 = vmatprep.subr.mxu0 0.0
      %1723 = vmatpush1.msra.mxu0 %v1650
      %1724 = vmatprep.subr.mxu0 0.0
      %1725 = vmatpush1.msra.mxu0 %v1651
      %1726 = vmatprep.subr.mxu0 0.0
      %1727 = vmatpush1.msra.mxu0 %v1652
      %1728 = vmatprep.subr.mxu0 0.0
      %1729 = vmatpush1.msra.mxu0 %v1653
      %1730 = vmatprep.subr.mxu0 0.0
      %1731 = vmatpush1.msra.mxu0 %v1654
      %1732 = vmatprep.subr.mxu0 0.0
      %1733 = vmatpush1.msra.mxu0 %v1655
      %1734 = vmatprep.subr.mxu0 0.0
      %1735 = vmatpush1.msra.mxu0 %v1656
      %1736 = vmatprep.mubr.f32.mxu0 %v1623
      %1737 = vmatmul.mubr.f32.gmra.mrb[0].mxu0 %v1621
      %v1738 = vpop.f32.mrb[0].mxu0
      %v1739 = vadd.f32 %v1666, %v1738
      %v1740 = vpop.f32.mrb[0].mxu0
      %1741 = vmatprep.mubr.f32.mxu0 %v1624
      %1742 = vmatmul.mubr.f32.gmra.mrb[0].mxu0 %v1622
      %v1743 = vpop.f32.mrb[0].mxu0
      %v1744 = vadd.f32 %v1666, %v1743
      %v1745 = vpop.f32.mrb[0].mxu0
      %1746 = vdwg.mxu0
      %1747 = vmatprep.subr.mxu0 0.0
      %1748 = vmatpush1.msra.mxu0 %v1657
      %1749 = vmatprep.subr.mxu0 0.0
      %1750 = vmatpush1.msra.mxu0 %v1658
      %1751 = vmatprep.subr.mxu0 0.0
      %1752 = vmatpush1.msra.mxu0 %v1659
      %1753 = vmatprep.subr.mxu0 0.0
      %1754 = vmatpush1.msra.mxu0 %v1660
      %1755 = vmatprep.subr.mxu0 0.0
      %1756 = vmatpush1.msra.mxu0 0.0
      %1757 = vmatprep.subr.mxu0 0.0
      %1758 = vmatpush1.msra.mxu0 0.0
      %1759 = vmatprep.subr.mxu0 0.0
      %1760 = vmatpush1.msra.mxu0 0.0
      %1761 = vmatprep.subr.mxu0 0.0
      %1762 = vmatpush1.msra.mxu0 0.0
      %1763 = vmatprep.subr.mxu0 0.0
      %1764 = vmatpush1.msra.mxu0 0.0
      %1765 = vmatprep.subr.mxu0 0.0
      %1766 = vmatpush1.msra.mxu0 0.0
      %1767 = vmatprep.subr.mxu0 0.0
      %1768 = vmatpush1.msra.mxu0 0.0
      %1769 = vmatprep.subr.mxu0 0.0
      %1770 = vmatpush1.msra.mxu0 0.0
      %1771 = vmatprep.subr.mxu0 0.0
      %1772 = vmatpush1.msra.mxu0 0.0
      %1773 = vmatprep.subr.mxu0 0.0
      %1774 = vmatpush1.msra.mxu0 0.0
      %1775 = vmatprep.subr.mxu0 0.0
      %1776 = vmatpush1.msra.mxu0 0.0
      %1777 = vmatprep.subr.mxu0 0.0
      %1778 = vmatpush1.msra.mxu0 0.0
      %1779 = vmatprep.subr.mxu0 0.0
      %1780 = vmatpush1.msra.mxu0 0.0
      %1781 = vmatprep.subr.mxu0 0.0
      %1782 = vmatpush1.msra.mxu0 0.0
      %1783 = vmatprep.subr.mxu0 0.0
      %1784 = vmatpush1.msra.mxu0 0.0
      %1785 = vmatprep.subr.mxu0 0.0
      %1786 = vmatpush1.msra.mxu0 0.0
      %1787 = vmatprep.subr.mxu0 0.0
      %1788 = vmatpush1.msra.mxu0 0.0
      %1789 = vmatprep.subr.mxu0 0.0
      %1790 = vmatpush1.msra.mxu0 0.0
      %1791 = vmatprep.subr.mxu0 0.0
      %1792 = vmatpush1.msra.mxu0 0.0
      %1793 = vmatprep.subr.mxu0 0.0
      %1794 = vmatpush1.msra.mxu0 0.0
      %1795 = vmatprep.subr.mxu0 0.0
      %1796 = vmatpush1.msra.mxu0 0.0
      %1797 = vmatprep.subr.mxu0 0.0
      %1798 = vmatpush1.msra.mxu0 0.0
      %1799 = vmatprep.subr.mxu0 0.0
      %1800 = vmatpush1.msra.mxu0 0.0
      %1801 = vmatprep.subr.mxu0 0.0
      %1802 = vmatpush1.msra.mxu0 0.0
      %1803 = vmatprep.subr.mxu0 0.0
      %1804 = vmatpush1.msra.mxu0 0.0
      %1805 = vmatprep.subr.mxu0 0.0
      %1806 = vmatpush1.msra.mxu0 0.0
      %1807 = vmatprep.subr.mxu0 0.0
      %1808 = vmatpush1.msra.mxu0 0.0
      %1809 = vmatprep.subr.mxu0 0.0
      %1810 = vmatpush1.msra.mxu0 0.0
      %1811 = vmatprep.mubr.f32.mxu0 0.0
      %1812 = vmatmul.mubr.f32.gmra.mrb[0].mxu0 %v1668
      %v1813 = vpop.f32.mrb[0].mxu0
      %v1814 = vadd.f32 %v1739, %v1813
      %v1815 = vpop.f32.mrb[0].mxu0
      %1816 = vmatprep.mubr.f32.mxu0 0.0
      %1817 = vmatmul.mubr.f32.gmra.mrb[0].mxu0 %v1670
      %v1818 = vpop.f32.mrb[0].mxu0
      %v1819 = vadd.f32 %v1744, %v1818
      %v1820 = vpop.f32.mrb[0].mxu0
      %1821 = vdwg.mxu0
      %v1822 = vmul.f32 %v1814, 0.2
      %v1823 = vmul.f32 %v1819, 0.2
      %v1824 = vadd.f32 %v1822, %v959
      %v1825 = vadd.f32 %v1823, %v960
      %v1826 = vrot.slane %v1824, 7
      %v1827 = vrot.slane %v1825, 7
      %v1828 = vsel %vm966, %v1826, %v1827
      %v1829 = vsel %vm966, %v1827, %v1826
      %v1830 = vsel %vm969, 0.0, %v1829
      %v1831 = vsel %vm970, 0.0, %v1828
      %v1832 = vrot.slane %v1824, 1
      %v1833 = vrot.slane %v1825, 1
      %v1834 = vsel %vm975, %v1832, %v1833
      %v1835 = vsel %vm975, %v1833, %v1832
      %v1836 = vsel %vm978, 0.0, %v1834
      %v1837 = vsel %vm979, 0.0, %v1835
      %1840 = vrot.lane.b32.xlu0 %v1824, 32
      %v1841 = vpop.permute.xlu0 %1840
      %1842 = vrot.lane.b32.xlu0 %v1825, 32
      %v1843 = vpop.permute.xlu0 %1842
      %1848 = vrot.lane.b32.xlu0 %v1836, 64
      %v1849 = vpop.permute.xlu0 %1848
      %1850 = vrot.lane.b32.xlu0 %v1837, 64
      %v1851 = vpop.permute.xlu0 %1850
      %v1854 = vsel %vm998, %v1830, %v1841
      %v1855 = vsel %vm998, %v1831, %v1843
      %v1856 = vsel %vm1001, %v1854, %v1849
      %v1857 = vsel %vm1001, %v1855, %v1851
      %v1858 = vld [vmem:[%s23] sm:$0xff]
      %v1859 = vld [vmem:[%s23 + $0x8] sm:$0xff]
      %v1860 = vld [vmem:[%s23 + $0x10] sm:$0xff]
      %v1861 = vld [vmem:[%s23 + $0x18] sm:$0xff]
      %v1862 = vld [vmem:[%s23 + $0x20] sm:$0xff]
      %v1863 = vld [vmem:[%s23 + $0x28] sm:$0xff]
      %v1864 = vld [vmem:[%s23 + $0x30] sm:$0xff]
      %v1865 = vld [vmem:[%s23 + $0x38] sm:$0xff]
      %v1866 = vld [vmem:[%s23 + $0x40] sm:$0xff]
      %v1867 = vld [vmem:[%s23 + $0x48] sm:$0xff]
      %v1868 = vld [vmem:[%s23 + $0x50] sm:$0xff]
      %v1869 = vld [vmem:[%s23 + $0x58] sm:$0xff]
      %v1870 = vld [vmem:[%s25] sm:$0x1]
      %v1872 = vlaneseq
      %v1873 = vshrl.u32 %v1872, 7
      %v1874 = vsub.s32 0, %v1873
      %v1875 = vrot.slane %v1870, %v1874
      %v1878 = vsel %vm1023, %v1856, 0
      %v1881 = vsel %vm1023, %v1857, 0
      %1883 = vmatprep.subr.mxu0 0.0
      %1884 = vmatpush1.msra.mxu0 %v1858
      %1885 = vmatprep.subr.mxu0 0.0
      %1886 = vmatpush1.msra.mxu0 %v1859
      %1887 = vmatprep.subr.mxu0 0.0
      %1888 = vmatpush1.msra.mxu0 %v1860
      %1889 = vmatprep.subr.mxu0 0.0
      %1890 = vmatpush1.msra.mxu0 %v1861
      %1891 = vmatprep.subr.mxu0 0.0
      %1892 = vmatpush1.msra.mxu0 %v1862
      %1893 = vmatprep.subr.mxu0 0.0
      %1894 = vmatpush1.msra.mxu0 %v1863
      %1895 = vmatprep.subr.mxu0 0.0
      %1896 = vmatpush1.msra.mxu0 %v1864
      %1897 = vmatprep.subr.mxu0 0.0
      %1898 = vmatpush1.msra.mxu0 %v1865
      %1899 = vmatprep.subr.mxu0 0.0
      %1900 = vmatpush1.msra.mxu0 %v1866
      %1901 = vmatprep.subr.mxu0 0.0
      %1902 = vmatpush1.msra.mxu0 %v1867
      %1903 = vmatprep.subr.mxu0 0.0
      %1904 = vmatpush1.msra.mxu0 %v1868
      %1905 = vmatprep.subr.mxu0 0.0
      %1906 = vmatpush1.msra.mxu0 %v1869
      %1907 = vmatprep.subr.mxu0 0.0
      %1908 = vmatpush1.msra.mxu0 0.0
      %1909 = vmatprep.subr.mxu0 0.0
      %1910 = vmatpush1.msra.mxu0 0.0
      %1911 = vmatprep.subr.mxu0 0.0
      %1912 = vmatpush1.msra.mxu0 0.0
      %1913 = vmatprep.subr.mxu0 0.0
      %1914 = vmatpush1.msra.mxu0 0.0
      %1915 = vmatprep.subr.mxu0 0.0
      %1916 = vmatpush1.msra.mxu0 0.0
      %1917 = vmatprep.subr.mxu0 0.0
      %1918 = vmatpush1.msra.mxu0 0.0
      %1919 = vmatprep.subr.mxu0 0.0
      %1920 = vmatpush1.msra.mxu0 0.0
      %1921 = vmatprep.subr.mxu0 0.0
      %1922 = vmatpush1.msra.mxu0 0.0
      %1923 = vmatprep.subr.mxu0 0.0
      %1924 = vmatpush1.msra.mxu0 0.0
      %1925 = vmatprep.subr.mxu0 0.0
      %1926 = vmatpush1.msra.mxu0 0.0
      %1927 = vmatprep.subr.mxu0 0.0
      %1928 = vmatpush1.msra.mxu0 0.0
      %1929 = vmatprep.subr.mxu0 0.0
      %1930 = vmatpush1.msra.mxu0 0.0
      %1931 = vmatprep.subr.mxu0 0.0
      %1932 = vmatpush1.msra.mxu0 0.0
      %1933 = vmatprep.subr.mxu0 0.0
      %1934 = vmatpush1.msra.mxu0 0.0
      %1935 = vmatprep.subr.mxu0 0.0
      %1936 = vmatpush1.msra.mxu0 0.0
      %1937 = vmatprep.subr.mxu0 0.0
      %1938 = vmatpush1.msra.mxu0 0.0
      %1939 = vmatprep.subr.mxu0 0.0
      %1940 = vmatpush1.msra.mxu0 0.0
      %1941 = vmatprep.subr.mxu0 0.0
      %1942 = vmatpush1.msra.mxu0 0.0
      %1943 = vmatprep.subr.mxu0 0.0
      %1944 = vmatpush1.msra.mxu0 0.0
      %1945 = vmatprep.subr.mxu0 0.0
      %1946 = vmatpush1.msra.mxu0 0.0
      %1947 = vmatprep.mubr.f32.mxu0 0.0
      %1948 = vmatmul.mubr.f32.gmra.mrb[0].mxu0 %v1878
      %v1949 = vpop.f32.mrb[0].mxu0
      %v1950 = vadd.f32 %v1875, %v1949
      %v1951 = vpop.f32.mrb[0].mxu0
      %1952 = vmatprep.mubr.f32.mxu0 0.0
      %1953 = vmatmul.mubr.f32.gmra.mrb[0].mxu0 %v1881
      %v1954 = vpop.f32.mrb[0].mxu0
      %v1955 = vadd.f32 %v1875, %v1954
      %v1956 = vpop.f32.mrb[0].mxu0
      %1957 = vdwg.mxu0
      %vm1958 = vcmp.gt.f32.partialorder %v1950, 0.0
      %vm1959 = vcmp.gt.f32.partialorder %v1955, 0.0
      %v1960 = vmul.f32 %v1950, 0.2
      %v1961 = vmul.f32 %v1955, 0.2
      %v1962 = vsel %vm1958, %v1950, %v1960
      %v1963 = vsel %vm1959, %v1955, %v1961
      %1966 = vrot.lane.b32.xlu0 %v1962, 32
      %v1967 = vpop.permute.xlu0 %1966
      %1968 = vrot.lane.b32.xlu0 %v1963, 32
      %v1969 = vpop.permute.xlu0 %1968
      %v1972 = vsel %vm998, %v1824, %v1967
      %v1973 = vsel %vm998, %v1825, %v1969
      %v1974 = vrot.slane %v1972, 7
      %v1975 = vrot.slane %v1973, 7
      %v1976 = vsel %vm966, %v1974, %v1975
      %v1977 = vsel %vm966, %v1975, %v1974
      %v1978 = vsel %vm969, 0.0, %v1977
      %v1979 = vsel %vm970, 0.0, %v1976
      %v1980 = vrot.slane %v1972, 1
      %v1981 = vrot.slane %v1973, 1
      %v1982 = vsel %vm975, %v1980, %v1981
      %v1983 = vsel %vm975, %v1981, %v1980
      %v1984 = vsel %vm978, 0.0, %v1982
      %v1985 = vsel %vm979, 0.0, %v1983
      %1988 = vrot.lane.b32.xlu0 %v1972, 48
      %v1989 = vpop.permute.xlu0 %1988
      %1990 = vrot.lane.b32.xlu0 %v1973, 48
      %v1991 = vpop.permute.xlu0 %1990
      %1996 = vrot.lane.b32.xlu0 %v1984, 96
      %v1997 = vpop.permute.xlu0 %1996
      %1998 = vrot.lane.b32.xlu0 %v1985, 96
      %v1999 = vpop.permute.xlu0 %1998
      %v2002 = vsel %vm1149, %v1978, %v1989
      %v2003 = vsel %vm1149, %v1979, %v1991
      %v2004 = vsel %vm1023, %v2002, %v1997
      %v2005 = vsel %vm1023, %v2003, %v1999
      %v2006 = vld [vmem:[%s27] sm:$0xff]
      %v2007 = vld [vmem:[%s27 + $0x8] sm:$0xff]
      %v2008 = vld [vmem:[%s27 + $0x10] sm:$0xff]
      %v2009 = vld [vmem:[%s27 + $0x18] sm:$0xff]
      %v2010 = vld [vmem:[%s27 + $0x20] sm:$0xff]
      %v2011 = vld [vmem:[%s27 + $0x28] sm:$0xff]
      %v2012 = vld [vmem:[%s27 + $0x30] sm:$0xff]
      %v2013 = vld [vmem:[%s27 + $0x38] sm:$0xff]
      %v2014 = vld [vmem:[%s27 + $0x40] sm:$0xff]
      %v2015 = vld [vmem:[%s27 + $0x48] sm:$0xff]
      %v2016 = vld [vmem:[%s27 + $0x50] sm:$0xff]
      %v2017 = vld [vmem:[%s27 + $0x58] sm:$0xff]
      %v2018 = vld [vmem:[%s27 + $0x60] sm:$0xff]
      %v2019 = vld [vmem:[%s27 + $0x68] sm:$0xff]
      %v2020 = vld [vmem:[%s27 + $0x70] sm:$0xff]
      %v2021 = vld [vmem:[%s27 + $0x78] sm:$0xff]
      %v2022 = vld [vmem:[%s27 + $0x80] sm:$0xff]
      %v2023 = vld [vmem:[%s27 + $0x88] sm:$0xff]
      %v2024 = vld [vmem:[%s29] sm:$0x1]
      %v2026 = vlaneseq
      %v2027 = vshrl.u32 %v2026, 7
      %v2028 = vsub.s32 0, %v2027
      %v2029 = vrot.slane %v2024, %v2028
      %v2031 = vsel %vm1179, %v1997, 0
      %v2033 = vsel %vm1179, %v1999, 0
      %2035 = vmatprep.subr.mxu0 0.0
      %2036 = vmatpush1.msra.mxu0 %v2006
      %2037 = vmatprep.subr.mxu0 0.0
      %2038 = vmatpush1.msra.mxu0 %v2007
      %2039 = vmatprep.subr.mxu0 0.0
      %2040 = vmatpush1.msra.mxu0 %v2008
      %2041 = vmatprep.subr.mxu0 0.0
      %2042 = vmatpush1.msra.mxu0 %v2009
      %2043 = vmatprep.subr.mxu0 0.0
      %2044 = vmatpush1.msra.mxu0 %v2010
      %2045 = vmatprep.subr.mxu0 0.0
      %2046 = vmatpush1.msra.mxu0 %v2011
      %2047 = vmatprep.subr.mxu0 0.0
      %2048 = vmatpush1.msra.mxu0 %v2012
      %2049 = vmatprep.subr.mxu0 0.0
      %2050 = vmatpush1.msra.mxu0 %v2013
      %2051 = vmatprep.subr.mxu0 0.0
      %2052 = vmatpush1.msra.mxu0 %v2014
      %2053 = vmatprep.subr.mxu0 0.0
      %2054 = vmatpush1.msra.mxu0 %v2015
      %2055 = vmatprep.subr.mxu0 0.0
      %2056 = vmatpush1.msra.mxu0 %v2016
      %2057 = vmatprep.subr.mxu0 0.0
      %2058 = vmatpush1.msra.mxu0 %v2017
      %2059 = vmatprep.subr.mxu0 0.0
      %2060 = vmatpush1.msra.mxu0 %v2018
      %2061 = vmatprep.subr.mxu0 0.0
      %2062 = vmatpush1.msra.mxu0 %v2019
      %2063 = vmatprep.subr.mxu0 0.0
      %2064 = vmatpush1.msra.mxu0 %v2020
      %2065 = vmatprep.subr.mxu0 0.0
      %2066 = vmatpush1.msra.mxu0 %v2021
      %2067 = vmatprep.subr.mxu0 0.0
      %2068 = vmatpush1.msra.mxu0 %v2022
      %2069 = vmatprep.subr.mxu0 0.0
      %2070 = vmatpush1.msra.mxu0 %v2023
      %2071 = vmatprep.subr.mxu0 0.0
      %2072 = vmatpush1.msra.mxu0 0.0
      %2073 = vmatprep.subr.mxu0 0.0
      %2074 = vmatpush1.msra.mxu0 0.0
      %2075 = vmatprep.subr.mxu0 0.0
      %2076 = vmatpush1.msra.mxu0 0.0
      %2077 = vmatprep.subr.mxu0 0.0
      %2078 = vmatpush1.msra.mxu0 0.0
      %2079 = vmatprep.subr.mxu0 0.0
      %2080 = vmatpush1.msra.mxu0 0.0
      %2081 = vmatprep.subr.mxu0 0.0
      %2082 = vmatpush1.msra.mxu0 0.0
      %2083 = vmatprep.subr.mxu0 0.0
      %2084 = vmatpush1.msra.mxu0 0.0
      %2085 = vmatprep.subr.mxu0 0.0
      %2086 = vmatpush1.msra.mxu0 0.0
      %2087 = vmatprep.subr.mxu0 0.0
      %2088 = vmatpush1.msra.mxu0 0.0
      %2089 = vmatprep.subr.mxu0 0.0
      %2090 = vmatpush1.msra.mxu0 0.0
      %2091 = vmatprep.subr.mxu0 0.0
      %2092 = vmatpush1.msra.mxu0 0.0
      %2093 = vmatprep.subr.mxu0 0.0
      %2094 = vmatpush1.msra.mxu0 0.0
      %2095 = vmatprep.subr.mxu0 0.0
      %2096 = vmatpush1.msra.mxu0 0.0
      %2097 = vmatprep.subr.mxu0 0.0
      %2098 = vmatpush1.msra.mxu0 0.0
      %2099 = vmatprep.mubr.f32.mxu0 %v2031
      %2100 = vmatmul.mubr.f32.gmra.mrb[0].mxu0 %v2004
      %v2101 = vpop.f32.mrb[0].mxu0
      %v2102 = vadd.f32 %v2029, %v2101
      %v2103 = vpop.f32.mrb[0].mxu0
      %2104 = vmatprep.mubr.f32.mxu0 %v2033
      %2105 = vmatmul.mubr.f32.gmra.mrb[0].mxu0 %v2005
      %v2106 = vpop.f32.mrb[0].mxu0
      %v2107 = vadd.f32 %v2029, %v2106
      %v2108 = vpop.f32.mrb[0].mxu0
      %2109 = vdwg.mxu0
      %vm2110 = vcmp.gt.f32.partialorder %v2102, 0.0
      %vm2111 = vcmp.gt.f32.partialorder %v2107, 0.0
      %v2112 = vmul.f32 %v2102, 0.2
      %v2113 = vmul.f32 %v2107, 0.2
      %v2114 = vsel %vm2110, %v2102, %v2112
      %v2115 = vsel %vm2111, %v2107, %v2113
      %2118 = vrot.lane.b32.xlu0 %v2114, 48
      %v2119 = vpop.permute.xlu0 %2118
      %2120 = vrot.lane.b32.xlu0 %v2115, 48
      %v2121 = vpop.permute.xlu0 %2120
      %v2124 = vsel %vm1149, %v1972, %v2119
      %v2125 = vsel %vm1149, %v1973, %v2121
      %v2126 = vrot.slane %v2124, 7
      %v2127 = vrot.slane %v2125, 7
      %v2128 = vsel %vm966, %v2126, %v2127
      %v2129 = vsel %vm966, %v2127, %v2126
      %v2130 = vsel %vm969, 0.0, %v2129
      %v2131 = vsel %vm970, 0.0, %v2128
      %v2132 = vrot.slane %v2124, 1
      %v2133 = vrot.slane %v2125, 1
      %v2134 = vsel %vm975, %v2132, %v2133
      %v2135 = vsel %vm975, %v2133, %v2132
      %v2136 = vsel %vm978, 0.0, %v2134
      %v2137 = vsel %vm979, 0.0, %v2135
      %2140 = vrot.lane.b32.xlu0 %v2124, 64
      %v2141 = vpop.permute.xlu0 %2140
      %2142 = vrot.lane.b32.xlu0 %v2125, 64
      %v2143 = vpop.permute.xlu0 %2142
      %v2146 = vsel %vm1001, %v2130, %v2141
      %v2147 = vsel %vm1001, %v2131, %v2143
      %v2148 = vld [vmem:[%s31] sm:$0xff]
      %v2149 = vld [vmem:[%s31 + $0x8] sm:$0xff]
      %v2150 = vld [vmem:[%s31 + $0x10] sm:$0xff]
      %v2151 = vld [vmem:[%s31 + $0x18] sm:$0xff]
      %v2152 = vld [vmem:[%s31 + $0x20] sm:$0xff]
      %v2153 = vld [vmem:[%s31 + $0x28] sm:$0xff]
      %v2154 = vld [vmem:[%s31 + $0x30] sm:$0xff]
      %v2155 = vld [vmem:[%s31 + $0x38] sm:$0xff]
      %v2156 = vld [vmem:[%s31 + $0x40] sm:$0xff]
      %v2157 = vld [vmem:[%s31 + $0x48] sm:$0xff]
      %v2158 = vld [vmem:[%s31 + $0x50] sm:$0xff]
      %v2159 = vld [vmem:[%s31 + $0x58] sm:$0xff]
      %v2160 = vld [vmem:[%s31 + $0x60] sm:$0xff]
      %v2161 = vld [vmem:[%s31 + $0x68] sm:$0xff]
      %v2162 = vld [vmem:[%s31 + $0x70] sm:$0xff]
      %v2163 = vld [vmem:[%s31 + $0x78] sm:$0xff]
      %v2164 = vld [vmem:[%s31 + $0x80] sm:$0xff]
      %v2165 = vld [vmem:[%s31 + $0x88] sm:$0xff]
      %v2166 = vld [vmem:[%s31 + $0x90] sm:$0xff]
      %v2167 = vld [vmem:[%s31 + $0x98] sm:$0xff]
      %v2168 = vld [vmem:[%s31 + $0xa0] sm:$0xff]
      %v2169 = vld [vmem:[%s31 + $0xa8] sm:$0xff]
      %v2170 = vld [vmem:[%s31 + $0xb0] sm:$0xff]
      %v2171 = vld [vmem:[%s31 + $0xb8] sm:$0xff]
      %v2172 = vld [vmem:[%s33] sm:$0x1]
      %v2174 = vlaneseq
      %v2175 = vshrl.u32 %v2174, 7
      %v2176 = vsub.s32 0, %v2175
      %v2177 = vrot.slane %v2172, %v2176
      %v2180 = vsel %vm1001, %v2136, 0
      %v2183 = vsel %vm1001, %v2137, 0
      %2185 = vmatprep.subr.mxu0 0.0
      %2186 = vmatpush1.msra.mxu0 %v2148
      %2187 = vmatprep.subr.mxu0 0.0
      %2188 = vmatpush1.msra.mxu0 %v2149
      %2189 = vmatprep.subr.mxu0 0.0
      %2190 = vmatpush1.msra.mxu0 %v2150
      %2191 = vmatprep.subr.mxu0 0.0
      %2192 = vmatpush1.msra.mxu0 %v2151
      %2193 = vmatprep.subr.mxu0 0.0
      %2194 = vmatpush1.msra.mxu0 %v2152
      %2195 = vmatprep.subr.mxu0 0.0
      %2196 = vmatpush1.msra.mxu0 %v2153
      %2197 = vmatprep.subr.mxu0 0.0
      %2198 = vmatpush1.msra.mxu0 %v2154
      %2199 = vmatprep.subr.mxu0 0.0
      %2200 = vmatpush1.msra.mxu0 %v2155
      %2201 = vmatprep.subr.mxu0 0.0
      %2202 = vmatpush1.msra.mxu0 %v2156
      %2203 = vmatprep.subr.mxu0 0.0
      %2204 = vmatpush1.msra.mxu0 %v2157
      %2205 = vmatprep.subr.mxu0 0.0
      %2206 = vmatpush1.msra.mxu0 %v2158
      %2207 = vmatprep.subr.mxu0 0.0
      %2208 = vmatpush1.msra.mxu0 %v2159
      %2209 = vmatprep.subr.mxu0 0.0
      %2210 = vmatpush1.msra.mxu0 %v2160
      %2211 = vmatprep.subr.mxu0 0.0
      %2212 = vmatpush1.msra.mxu0 %v2161
      %2213 = vmatprep.subr.mxu0 0.0
      %2214 = vmatpush1.msra.mxu0 %v2162
      %2215 = vmatprep.subr.mxu0 0.0
      %2216 = vmatpush1.msra.mxu0 %v2163
      %2217 = vmatprep.subr.mxu0 0.0
      %2218 = vmatpush1.msra.mxu0 %v2164
      %2219 = vmatprep.subr.mxu0 0.0
      %2220 = vmatpush1.msra.mxu0 %v2165
      %2221 = vmatprep.subr.mxu0 0.0
      %2222 = vmatpush1.msra.mxu0 %v2166
      %2223 = vmatprep.subr.mxu0 0.0
      %2224 = vmatpush1.msra.mxu0 %v2167
      %2225 = vmatprep.subr.mxu0 0.0
      %2226 = vmatpush1.msra.mxu0 %v2168
      %2227 = vmatprep.subr.mxu0 0.0
      %2228 = vmatpush1.msra.mxu0 %v2169
      %2229 = vmatprep.subr.mxu0 0.0
      %2230 = vmatpush1.msra.mxu0 %v2170
      %2231 = vmatprep.subr.mxu0 0.0
      %2232 = vmatpush1.msra.mxu0 %v2171
      %2233 = vmatprep.subr.mxu0 0.0
      %2234 = vmatpush1.msra.mxu0 0.0
      %2235 = vmatprep.subr.mxu0 0.0
      %2236 = vmatpush1.msra.mxu0 0.0
      %2237 = vmatprep.subr.mxu0 0.0
      %2238 = vmatpush1.msra.mxu0 0.0
      %2239 = vmatprep.subr.mxu0 0.0
      %2240 = vmatpush1.msra.mxu0 0.0
      %2241 = vmatprep.subr.mxu0 0.0
      %2242 = vmatpush1.msra.mxu0 0.0
      %2243 = vmatprep.subr.mxu0 0.0
      %2244 = vmatpush1.msra.mxu0 0.0
      %2245 = vmatprep.subr.mxu0 0.0
      %2246 = vmatpush1.msra.mxu0 0.0
      %2247 = vmatprep.subr.mxu0 0.0
      %2248 = vmatpush1.msra.mxu0 0.0
      %2249 = vmatprep.mubr.f32.mxu0 %v2180
      %2250 = vmatmul.mubr.f32.gmra.mrb[0].mxu0 %v2146
      %v2251 = vpop.f32.mrb[0].mxu0
      %v2252 = vadd.f32 %v2177, %v2251
      %v2253 = vpop.f32.mrb[0].mxu0
      %2254 = vmatprep.mubr.f32.mxu0 %v2183
      %2255 = vmatmul.mubr.f32.gmra.mrb[0].mxu0 %v2147
      %v2256 = vpop.f32.mrb[0].mxu0
      %v2257 = vadd.f32 %v2177, %v2256
      %v2258 = vpop.f32.mrb[0].mxu0
      %2259 = vdwg.mxu0
      %vm2260 = vcmp.gt.f32.partialorder %v2252, 0.0
      %vm2261 = vcmp.gt.f32.partialorder %v2257, 0.0
      %v2262 = vmul.f32 %v2252, 0.2
      %v2263 = vmul.f32 %v2257, 0.2
      %v2264 = vsel %vm2260, %v2252, %v2262
      %v2265 = vsel %vm2261, %v2257, %v2263
      %2268 = vrot.lane.b32.xlu0 %v2264, 64
      %v2269 = vpop.permute.xlu0 %2268
      %2270 = vrot.lane.b32.xlu0 %v2265, 64
      %v2271 = vpop.permute.xlu0 %2270
      %v2274 = vsel %vm1001, %v2124, %v2269
      %v2275 = vsel %vm1001, %v2125, %v2271
      %v2276 = vrot.slane %v2274, 7
      %v2277 = vrot.slane %v2275, 7
      %v2278 = vsel %vm966, %v2276, %v2277
      %v2279 = vsel %vm966, %v2277, %v2276
      %v2280 = vsel %vm969, 0.0, %v2279
      %v2281 = vsel %vm970, 0.0, %v2278
      %v2282 = vrot.slane %v2274, 1
      %v2283 = vrot.slane %v2275, 1
      %v2284 = vsel %vm975, %v2282, %v2283
      %v2285 = vsel %vm975, %v2283, %v2282
      %v2286 = vsel %vm978, 0.0, %v2284
      %v2287 = vsel %vm979, 0.0, %v2285
      %2290 = vrot.lane.b32.xlu0 %v2274, 80
      %v2291 = vpop.permute.xlu0 %2290
      %2292 = vrot.lane.b32.xlu0 %v2275, 80
      %v2293 = vpop.permute.xlu0 %2292
      %2298 = vrot.lane.b32.xlu0 %v2286, 32
      %v2299 = vpop.permute.xlu0 %2298
      %2300 = vrot.lane.b32.xlu0 %v2287, 32
      %v2301 = vpop.permute.xlu0 %2300
      %v2304 = vsel %vm1453, %v2280, %v2291
      %v2305 = vsel %vm1453, %v2281, %v2293
      %v2306 = vsel %vm998, %v2291, %v2299
      %v2307 = vsel %vm998, %v2293, %v2301
      %v2308 = vld [vmem:[%s35] sm:$0xff]
      %v2309 = vld [vmem:[%s35 + $0x8] sm:$0xff]
      %v2310 = vld [vmem:[%s35 + $0x10] sm:$0xff]
      %v2311 = vld [vmem:[%s35 + $0x18] sm:$0xff]
      %v2312 = vld [vmem:[%s35 + $0x20] sm:$0xff]
      %v2313 = vld [vmem:[%s35 + $0x28] sm:$0xff]
      %v2314 = vld [vmem:[%s35 + $0x30] sm:$0xff]
      %v2315 = vld [vmem:[%s35 + $0x38] sm:$0xff]
      %v2316 = vld [vmem:[%s35 + $0x40] sm:$0xff]
      %v2317 = vld [vmem:[%s35 + $0x48] sm:$0xff]
      %v2318 = vld [vmem:[%s35 + $0x50] sm:$0xff]
      %v2319 = vld [vmem:[%s35 + $0x58] sm:$0xff]
      %v2320 = vld [vmem:[%s35 + $0x60] sm:$0xff]
      %v2321 = vld [vmem:[%s35 + $0x68] sm:$0xff]
      %v2322 = vld [vmem:[%s35 + $0x70] sm:$0xff]
      %v2323 = vld [vmem:[%s35 + $0x78] sm:$0xff]
      %v2324 = vld [vmem:[%s35 + $0x80] sm:$0xff]
      %v2325 = vld [vmem:[%s35 + $0x88] sm:$0xff]
      %v2326 = vld [vmem:[%s35 + $0x90] sm:$0xff]
      %v2327 = vld [vmem:[%s35 + $0x98] sm:$0xff]
      %v2328 = vld [vmem:[%s35 + $0xa0] sm:$0xff]
      %v2329 = vld [vmem:[%s35 + $0xa8] sm:$0xff]
      %v2330 = vld [vmem:[%s35 + $0xb0] sm:$0xff]
      %v2331 = vld [vmem:[%s35 + $0xb8] sm:$0xff]
      %v2332 = vld [vmem:[%s35 + $0xc0] sm:$0xff]
      %v2333 = vld [vmem:[%s35 + $0xc8] sm:$0xff]
      %v2334 = vld [vmem:[%s35 + $0xd0] sm:$0xff]
      %v2335 = vld [vmem:[%s35 + $0xd8] sm:$0xff]
      %v2336 = vld [vmem:[%s35 + $0xe0] sm:$0xff]
      %v2337 = vld [vmem:[%s35 + $0xe8] sm:$0xff]
      %v2338 = vld [vmem:[%s37] sm:$0x1]
      %v2340 = vlaneseq
      %v2341 = vshrl.u32 %v2340, 7
      %v2342 = vsub.s32 0, %v2341
      %v2343 = vrot.slane %v2338, %v2342
      %v2346 = vsel %vm1495, %v2306, 0
      %v2349 = vsel %vm1495, %v2307, 0
      %2351 = vmatprep.subr.mxu0 0.0
      %2352 = vmatpush1.msra.mxu0 %v2308
      %2353 = vmatprep.subr.mxu0 0.0
      %2354 = vmatpush1.msra.mxu0 %v2309
      %2355 = vmatprep.subr.mxu0 0.0
      %2356 = vmatpush1.msra.mxu0 %v2310
      %2357 = vmatprep.subr.mxu0 0.0
      %2358 = vmatpush1.msra.mxu0 %v2311
      %2359 = vmatprep.subr.mxu0 0.0
      %2360 = vmatpush1.msra.mxu0 %v2312
      %2361 = vmatprep.subr.mxu0 0.0
      %2362 = vmatpush1.msra.mxu0 %v2313
      %2363 = vmatprep.subr.mxu0 0.0
      %2364 = vmatpush1.msra.mxu0 %v2314
      %2365 = vmatprep.subr.mxu0 0.0
      %2366 = vmatpush1.msra.mxu0 %v2315
      %2367 = vmatprep.subr.mxu0 0.0
      %2368 = vmatpush1.msra.mxu0 %v2316
      %2369 = vmatprep.subr.mxu0 0.0
      %2370 = vmatpush1.msra.mxu0 %v2317
      %2371 = vmatprep.subr.mxu0 0.0
      %2372 = vmatpush1.msra.mxu0 %v2318
      %2373 = vmatprep.subr.mxu0 0.0
      %2374 = vmatpush1.msra.mxu0 %v2319
      %2375 = vmatprep.subr.mxu0 0.0
      %2376 = vmatpush1.msra.mxu0 %v2320
      %2377 = vmatprep.subr.mxu0 0.0
      %2378 = vmatpush1.msra.mxu0 %v2321
      %2379 = vmatprep.subr.mxu0 0.0
      %2380 = vmatpush1.msra.mxu0 %v2322
      %2381 = vmatprep.subr.mxu0 0.0
      %2382 = vmatpush1.msra.mxu0 %v2323
      %2383 = vmatprep.subr.mxu0 0.0
      %2384 = vmatpush1.msra.mxu0 %v2324
      %2385 = vmatprep.subr.mxu0 0.0
      %2386 = vmatpush1.msra.mxu0 %v2325
      %2387 = vmatprep.subr.mxu0 0.0
      %2388 = vmatpush1.msra.mxu0 %v2326
      %2389 = vmatprep.subr.mxu0 0.0
      %2390 = vmatpush1.msra.mxu0 %v2327
      %2391 = vmatprep.subr.mxu0 0.0
      %2392 = vmatpush1.msra.mxu0 %v2328
      %2393 = vmatprep.subr.mxu0 0.0
      %2394 = vmatpush1.msra.mxu0 %v2329
      %2395 = vmatprep.subr.mxu0 0.0
      %2396 = vmatpush1.msra.mxu0 %v2330
      %2397 = vmatprep.subr.mxu0 0.0
      %2398 = vmatpush1.msra.mxu0 %v2331
      %2399 = vmatprep.subr.mxu0 0.0
      %2400 = vmatpush1.msra.mxu0 %v2332
      %2401 = vmatprep.subr.mxu0 0.0
      %2402 = vmatpush1.msra.mxu0 %v2333
      %2403 = vmatprep.subr.mxu0 0.0
      %2404 = vmatpush1.msra.mxu0 %v2334
      %2405 = vmatprep.subr.mxu0 0.0
      %2406 = vmatpush1.msra.mxu0 %v2335
      %2407 = vmatprep.subr.mxu0 0.0
      %2408 = vmatpush1.msra.mxu0 %v2336
      %2409 = vmatprep.subr.mxu0 0.0
      %2410 = vmatpush1.msra.mxu0 %v2337
      %2411 = vmatprep.subr.mxu0 0.0
      %2412 = vmatpush1.msra.mxu0 0.0
      %2413 = vmatprep.subr.mxu0 0.0
      %2414 = vmatpush1.msra.mxu0 0.0
      %2415 = vmatprep.mubr.f32.mxu0 %v2346
      %2416 = vmatmul.mubr.f32.gmra.mrb[0].mxu0 %v2304
      %v2417 = vpop.f32.mrb[0].mxu0
      %v2418 = vadd.f32 %v2343, %v2417
      %v2419 = vpop.f32.mrb[0].mxu0
      %2420 = vmatprep.mubr.f32.mxu0 %v2349
      %2421 = vmatmul.mubr.f32.gmra.mrb[0].mxu0 %v2305
      %v2422 = vpop.f32.mrb[0].mxu0
      %v2423 = vadd.f32 %v2343, %v2422
      %v2424 = vpop.f32.mrb[0].mxu0
      %2425 = vdwg.mxu0
      %vm2426 = vcmp.gt.f32.partialorder %v2418, 0.0
      %vm2427 = vcmp.gt.f32.partialorder %v2423, 0.0
      %v2428 = vmul.f32 %v2418, 0.2
      %v2429 = vmul.f32 %v2423, 0.2
      %v2430 = vsel %vm2426, %v2418, %v2428
      %v2431 = vsel %vm2427, %v2423, %v2429
      %2434 = vrot.lane.b32.xlu0 %v2430, 80
      %v2435 = vpop.permute.xlu0 %2434
      %2436 = vrot.lane.b32.xlu0 %v2431, 80
      %v2437 = vpop.permute.xlu0 %2436
      %v2440 = vsel %vm1453, %v2274, %v2435
      %v2441 = vsel %vm1453, %v2275, %v2437
      %v2442 = vrot.slane %v2440, 7
      %v2443 = vrot.slane %v2441, 7
      %v2444 = vsel %vm966, %v2442, %v2443
      %v2445 = vsel %vm966, %v2443, %v2442
      %v2446 = vsel %vm969, 0.0, %v2445
      %v2447 = vsel %vm970, 0.0, %v2444
      %v2448 = vrot.slane %v2440, 1
      %v2449 = vrot.slane %v2441, 1
      %v2450 = vsel %vm975, %v2448, %v2449
      %v2451 = vsel %vm975, %v2449, %v2448
      %v2452 = vsel %vm978, 0.0, %v2450
      %v2453 = vsel %vm979, 0.0, %v2451
      %2456 = vrot.lane.b32.xlu0 %v2440, 96
      %v2457 = vpop.permute.xlu0 %2456
      %2458 = vrot.lane.b32.xlu0 %v2441, 96
      %v2459 = vpop.permute.xlu0 %2458
      %2464 = vrot.lane.b32.xlu0 %v2452, 64
      %v2465 = vpop.permute.xlu0 %2464
      %2466 = vrot.lane.b32.xlu0 %v2453, 64
      %v2467 = vpop.permute.xlu0 %2466
      %v2470 = vsel %vm1023, %v2446, %v2457
      %v2471 = vsel %vm1023, %v2447, %v2459
      %v2472 = vsel %vm1001, %v2457, %v2465
      %v2473 = vsel %vm1001, %v2459, %v2467
      %v2474 = vld [vmem:[%s39] sm:$0xff]
      %v2475 = vld [vmem:[%s39 + $0x8] sm:$0xff]
      %v2476 = vld [vmem:[%s39 + $0x10] sm:$0xff]
      %v2477 = vld [vmem:[%s39 + $0x18] sm:$0xff]
      %v2478 = vld [vmem:[%s39 + $0x20] sm:$0xff]
      %v2479 = vld [vmem:[%s39 + $0x28] sm:$0xff]
      %v2480 = vld [vmem:[%s39 + $0x30] sm:$0xff]
      %v2481 = vld [vmem:[%s39 + $0x38] sm:$0xff]
      %v2482 = vld [vmem:[%s39 + $0x40] sm:$0xff]
      %v2483 = vld [vmem:[%s39 + $0x48] sm:$0xff]
      %v2484 = vld [vmem:[%s39 + $0x50] sm:$0xff]
      %v2485 = vld [vmem:[%s39 + $0x58] sm:$0xff]
      %v2486 = vld [vmem:[%s39 + $0x60] sm:$0xff]
      %v2487 = vld [vmem:[%s39 + $0x68] sm:$0xff]
      %v2488 = vld [vmem:[%s39 + $0x70] sm:$0xff]
      %v2489 = vld [vmem:[%s39 + $0x78] sm:$0xff]
      %v2490 = vld [vmem:[%s39 + $0x80] sm:$0xff]
      %v2491 = vld [vmem:[%s39 + $0x88] sm:$0xff]
      %v2492 = vld [vmem:[%s39 + $0x90] sm:$0xff]
      %v2493 = vld [vmem:[%s39 + $0x98] sm:$0xff]
      %v2494 = vld [vmem:[%s39 + $0xa0] sm:$0xff]
      %v2495 = vld [vmem:[%s39 + $0xa8] sm:$0xff]
      %v2496 = vld [vmem:[%s39 + $0xb0] sm:$0xff]
      %v2497 = vld [vmem:[%s39 + $0xb8] sm:$0xff]
      %v2498 = vld [vmem:[%s39 + $0xc0] sm:$0xff]
      %v2499 = vld [vmem:[%s39 + $0xc8] sm:$0xff]
      %v2500 = vld [vmem:[%s39 + $0xd0] sm:$0xff]
      %v2501 = vld [vmem:[%s39 + $0xd8] sm:$0xff]
      %v2502 = vld [vmem:[%s39 + $0xe0] sm:$0xff]
      %v2503 = vld [vmem:[%s39 + $0xe8] sm:$0xff]
      %v2504 = vld [vmem:[%s39 + $0xf0] sm:$0xff]
      %v2505 = vld [vmem:[%s39 + $0xf8] sm:$0xff]
      %v2506 = vld [vmem:[%s39 + $0x100] sm:$0xff]
      %v2507 = vld [vmem:[%s39 + $0x108] sm:$0xff]
      %v2508 = vld [vmem:[%s39 + $0x110] sm:$0xff]
      %v2509 = vld [vmem:[%s39 + $0x118] sm:$0xff]
      %v2510 = vld [vmem:[%s41] sm:$0x1]
      %v2512 = vlaneseq
      %v2513 = vshrl.u32 %v2512, 7
      %v2514 = vsub.s32 0, %v2513
      %v2515 = vrot.slane %v2510, %v2514
      %v2517 = vsel %vm998, %v2465, 0
      %v2519 = vsel %vm998, %v2467, 0
      %2521 = vmatprep.subr.mxu0 0.0
      %2522 = vmatpush1.msra.mxu0 %v2474
      %2523 = vmatprep.subr.mxu0 0.0
      %2524 = vmatpush1.msra.mxu0 %v2475
      %2525 = vmatprep.subr.mxu0 0.0
      %2526 = vmatpush1.msra.mxu0 %v2476
      %2527 = vmatprep.subr.mxu0 0.0
      %2528 = vmatpush1.msra.mxu0 %v2477
      %2529 = vmatprep.subr.mxu0 0.0
      %2530 = vmatpush1.msra.mxu0 %v2478
      %2531 = vmatprep.subr.mxu0 0.0
      %2532 = vmatpush1.msra.mxu0 %v2479
      %2533 = vmatprep.subr.mxu0 0.0
      %2534 = vmatpush1.msra.mxu0 %v2480
      %2535 = vmatprep.subr.mxu0 0.0
      %2536 = vmatpush1.msra.mxu0 %v2481
      %2537 = vmatprep.subr.mxu0 0.0
      %2538 = vmatpush1.msra.mxu0 %v2482
      %2539 = vmatprep.subr.mxu0 0.0
      %2540 = vmatpush1.msra.mxu0 %v2483
      %2541 = vmatprep.subr.mxu0 0.0
      %2542 = vmatpush1.msra.mxu0 %v2484
      %2543 = vmatprep.subr.mxu0 0.0
      %2544 = vmatpush1.msra.mxu0 %v2485
      %2545 = vmatprep.subr.mxu0 0.0
      %2546 = vmatpush1.msra.mxu0 %v2486
      %2547 = vmatprep.subr.mxu0 0.0
      %2548 = vmatpush1.msra.mxu0 %v2487
      %2549 = vmatprep.subr.mxu0 0.0
      %2550 = vmatpush1.msra.mxu0 %v2488
      %2551 = vmatprep.subr.mxu0 0.0
      %2552 = vmatpush1.msra.mxu0 %v2489
      %2553 = vmatprep.subr.mxu0 0.0
      %2554 = vmatpush1.msra.mxu0 %v2490
      %2555 = vmatprep.subr.mxu0 0.0
      %2556 = vmatpush1.msra.mxu0 %v2491
      %2557 = vmatprep.subr.mxu0 0.0
      %2558 = vmatpush1.msra.mxu0 %v2492
      %2559 = vmatprep.subr.mxu0 0.0
      %2560 = vmatpush1.msra.mxu0 %v2493
      %2561 = vmatprep.subr.mxu0 0.0
      %2562 = vmatpush1.msra.mxu0 %v2494
      %2563 = vmatprep.subr.mxu0 0.0
      %2564 = vmatpush1.msra.mxu0 %v2495
      %2565 = vmatprep.subr.mxu0 0.0
      %2566 = vmatpush1.msra.mxu0 %v2496
      %2567 = vmatprep.subr.mxu0 0.0
      %2568 = vmatpush1.msra.mxu0 %v2497
      %2569 = vmatprep.subr.mxu0 0.0
      %2570 = vmatpush1.msra.mxu0 %v2498
      %2571 = vmatprep.subr.mxu0 0.0
      %2572 = vmatpush1.msra.mxu0 %v2499
      %2573 = vmatprep.subr.mxu0 0.0
      %2574 = vmatpush1.msra.mxu0 %v2500
      %2575 = vmatprep.subr.mxu0 0.0
      %2576 = vmatpush1.msra.mxu0 %v2501
      %2577 = vmatprep.subr.mxu0 0.0
      %2578 = vmatpush1.msra.mxu0 %v2502
      %2579 = vmatprep.subr.mxu0 0.0
      %2580 = vmatpush1.msra.mxu0 %v2503
      %2581 = vmatprep.subr.mxu0 0.0
      %2582 = vmatpush1.msra.mxu0 %v2504
      %2583 = vmatprep.subr.mxu0 0.0
      %2584 = vmatpush1.msra.mxu0 %v2505
      %2585 = vmatprep.mubr.f32.mxu0 %v2472
      %2586 = vmatmul.mubr.f32.gmra.mrb[0].mxu0 %v2470
      %v2587 = vpop.f32.mrb[0].mxu0
      %v2588 = vadd.f32 %v2515, %v2587
      %v2589 = vpop.f32.mrb[0].mxu0
      %2590 = vmatprep.mubr.f32.mxu0 %v2473
      %2591 = vmatmul.mubr.f32.gmra.mrb[0].mxu0 %v2471
      %v2592 = vpop.f32.mrb[0].mxu0
      %v2593 = vadd.f32 %v2515, %v2592
      %v2594 = vpop.f32.mrb[0].mxu0
      %2595 = vdwg.mxu0
      %2596 = vmatprep.subr.mxu0 0.0
      %2597 = vmatpush1.msra.mxu0 %v2506
      %2598 = vmatprep.subr.mxu0 0.0
      %2599 = vmatpush1.msra.mxu0 %v2507
      %2600 = vmatprep.subr.mxu0 0.0
      %2601 = vmatpush1.msra.mxu0 %v2508
      %2602 = vmatprep.subr.mxu0 0.0
      %2603 = vmatpush1.msra.mxu0 %v2509
      %2604 = vmatprep.subr.mxu0 0.0
      %2605 = vmatpush1.msra.mxu0 0.0
      %2606 = vmatprep.subr.mxu0 0.0
      %2607 = vmatpush1.msra.mxu0 0.0
      %2608 = vmatprep.subr.mxu0 0.0
      %2609 = vmatpush1.msra.mxu0 0.0
      %2610 = vmatprep.subr.mxu0 0.0
      %2611 = vmatpush1.msra.mxu0 0.0
      %2612 = vmatprep.subr.mxu0 0.0
      %2613 = vmatpush1.msra.mxu0 0.0
      %2614 = vmatprep.subr.mxu0 0.0
      %2615 = vmatpush1.msra.mxu0 0.0
      %2616 = vmatprep.subr.mxu0 0.0
      %2617 = vmatpush1.msra.mxu0 0.0
      %2618 = vmatprep.subr.mxu0 0.0
      %2619 = vmatpush1.msra.mxu0 0.0
      %2620 = vmatprep.subr.mxu0 0.0
      %2621 = vmatpush1.msra.mxu0 0.0
      %2622 = vmatprep.subr.mxu0 0.0
      %2623 = vmatpush1.msra.mxu0 0.0
      %2624 = vmatprep.subr.mxu0 0.0
      %2625 = vmatpush1.msra.mxu0 0.0
      %2626 = vmatprep.subr.mxu0 0.0
      %2627 = vmatpush1.msra.mxu0 0.0
      %2628 = vmatprep.subr.mxu0 0.0
      %2629 = vmatpush1.msra.mxu0 0.0
      %2630 = vmatprep.subr.mxu0 0.0
      %2631 = vmatpush1.msra.mxu0 0.0
      %2632 = vmatprep.subr.mxu0 0.0
      %2633 = vmatpush1.msra.mxu0 0.0
      %2634 = vmatprep.subr.mxu0 0.0
      %2635 = vmatpush1.msra.mxu0 0.0
      %2636 = vmatprep.subr.mxu0 0.0
      %2637 = vmatpush1.msra.mxu0 0.0
      %2638 = vmatprep.subr.mxu0 0.0
      %2639 = vmatpush1.msra.mxu0 0.0
      %2640 = vmatprep.subr.mxu0 0.0
      %2641 = vmatpush1.msra.mxu0 0.0
      %2642 = vmatprep.subr.mxu0 0.0
      %2643 = vmatpush1.msra.mxu0 0.0
      %2644 = vmatprep.subr.mxu0 0.0
      %2645 = vmatpush1.msra.mxu0 0.0
      %2646 = vmatprep.subr.mxu0 0.0
      %2647 = vmatpush1.msra.mxu0 0.0
      %2648 = vmatprep.subr.mxu0 0.0
      %2649 = vmatpush1.msra.mxu0 0.0
      %2650 = vmatprep.subr.mxu0 0.0
      %2651 = vmatpush1.msra.mxu0 0.0
      %2652 = vmatprep.subr.mxu0 0.0
      %2653 = vmatpush1.msra.mxu0 0.0
      %2654 = vmatprep.subr.mxu0 0.0
      %2655 = vmatpush1.msra.mxu0 0.0
      %2656 = vmatprep.subr.mxu0 0.0
      %2657 = vmatpush1.msra.mxu0 0.0
      %2658 = vmatprep.subr.mxu0 0.0
      %2659 = vmatpush1.msra.mxu0 0.0
      %2660 = vmatprep.mubr.f32.mxu0 0.0
      %2661 = vmatmul.mubr.f32.gmra.mrb[0].mxu0 %v2517
      %v2662 = vpop.f32.mrb[0].mxu0
      %v2663 = vadd.f32 %v2588, %v2662
      %v2664 = vpop.f32.mrb[0].mxu0
      %2665 = vmatprep.mubr.f32.mxu0 0.0
      %2666 = vmatmul.mubr.f32.gmra.mrb[0].mxu0 %v2519
      %v2667 = vpop.f32.mrb[0].mxu0
      %v2668 = vadd.f32 %v2593, %v2667
      %v2669 = vpop.f32.mrb[0].mxu0
      %2670 = vdwg.mxu0
      %v2671 = vmul.f32 %v2663, 0.2
      %v2672 = vmul.f32 %v2668, 0.2
      %v2673 = vadd.f32 %v2671, %v1824
      %v2674 = vadd.f32 %v2672, %v1825
      %v2675 = vrot.slane %v2673, 7
      %v2676 = vrot.slane %v2674, 7
      %v2677 = vsel %vm966, %v2675, %v2676
      %v2678 = vsel %vm966, %v2676, %v2675
      %v2679 = vsel %vm969, 0.0, %v2678
      %v2680 = vsel %vm970, 0.0, %v2677
      %v2681 = vrot.slane %v2673, 1
      %v2682 = vrot.slane %v2674, 1
      %v2683 = vsel %vm975, %v2681, %v2682
      %v2684 = vsel %vm975, %v2682, %v2681
      %v2685 = vsel %vm978, 0.0, %v2683
      %v2686 = vsel %vm979, 0.0, %v2684
      %2689 = vrot.lane.b32.xlu0 %v2673, 32
      %v2690 = vpop.permute.xlu0 %2689
      %2691 = vrot.lane.b32.xlu0 %v2674, 32
      %v2692 = vpop.permute.xlu0 %2691
      %2697 = vrot.lane.b32.xlu0 %v2685, 64
      %v2698 = vpop.permute.xlu0 %2697
      %2699 = vrot.lane.b32.xlu0 %v2686, 64
      %v2700 = vpop.permute.xlu0 %2699
      %v2703 = vsel %vm998, %v2679, %v2690
      %v2704 = vsel %vm998, %v2680, %v2692
      %v2705 = vsel %vm1001, %v2703, %v2698
      %v2706 = vsel %vm1001, %v2704, %v2700
      %v2707 = vld [vmem:[%s43] sm:$0xff]
      %v2708 = vld [vmem:[%s43 + $0x8] sm:$0xff]
      %v2709 = vld [vmem:[%s43 + $0x10] sm:$0xff]
      %v2710 = vld [vmem:[%s43 + $0x18] sm:$0xff]
      %v2711 = vld [vmem:[%s43 + $0x20] sm:$0xff]
      %v2712 = vld [vmem:[%s43 + $0x28] sm:$0xff]
      %v2713 = vld [vmem:[%s43 + $0x30] sm:$0xff]
      %v2714 = vld [vmem:[%s43 + $0x38] sm:$0xff]
      %v2715 = vld [vmem:[%s43 + $0x40] sm:$0xff]
      %v2716 = vld [vmem:[%s43 + $0x48] sm:$0xff]
      %v2717 = vld [vmem:[%s43 + $0x50] sm:$0xff]
      %v2718 = vld [vmem:[%s43 + $0x58] sm:$0xff]
      %v2719 = vld [vmem:[%s45] sm:$0x1]
      %v2721 = vlaneseq
      %v2722 = vshrl.u32 %v2721, 7
      %v2723 = vsub.s32 0, %v2722
      %v2724 = vrot.slane %v2719, %v2723
      %v2727 = vsel %vm1023, %v2705, 0
      %v2730 = vsel %vm1023, %v2706, 0
      %2732 = vmatprep.subr.mxu0 0.0
      %2733 = vmatpush1.msra.mxu0 %v2707
      %2734 = vmatprep.subr.mxu0 0.0
      %2735 = vmatpush1.msra.mxu0 %v2708
      %2736 = vmatprep.subr.mxu0 0.0
      %2737 = vmatpush1.msra.mxu0 %v2709
      %2738 = vmatprep.subr.mxu0 0.0
      %2739 = vmatpush1.msra.mxu0 %v2710
      %2740 = vmatprep.subr.mxu0 0.0
      %2741 = vmatpush1.msra.mxu0 %v2711
      %2742 = vmatprep.subr.mxu0 0.0
      %2743 = vmatpush1.msra.mxu0 %v2712
      %2744 = vmatprep.subr.mxu0 0.0
      %2745 = vmatpush1.msra.mxu0 %v2713
      %2746 = vmatprep.subr.mxu0 0.0
      %2747 = vmatpush1.msra.mxu0 %v2714
      %2748 = vmatprep.subr.mxu0 0.0
      %2749 = vmatpush1.msra.mxu0 %v2715
      %2750 = vmatprep.subr.mxu0 0.0
      %2751 = vmatpush1.msra.mxu0 %v2716
      %2752 = vmatprep.subr.mxu0 0.0
      %2753 = vmatpush1.msra.mxu0 %v2717
      %2754 = vmatprep.subr.mxu0 0.0
      %2755 = vmatpush1.msra.mxu0 %v2718
      %2756 = vmatprep.subr.mxu0 0.0
      %2757 = vmatpush1.msra.mxu0 0.0
      %2758 = vmatprep.subr.mxu0 0.0
      %2759 = vmatpush1.msra.mxu0 0.0
      %2760 = vmatprep.subr.mxu0 0.0
      %2761 = vmatpush1.msra.mxu0 0.0
      %2762 = vmatprep.subr.mxu0 0.0
      %2763 = vmatpush1.msra.mxu0 0.0
      %2764 = vmatprep.subr.mxu0 0.0
      %2765 = vmatpush1.msra.mxu0 0.0
      %2766 = vmatprep.subr.mxu0 0.0
      %2767 = vmatpush1.msra.mxu0 0.0
      %2768 = vmatprep.subr.mxu0 0.0
      %2769 = vmatpush1.msra.mxu0 0.0
      %2770 = vmatprep.subr.mxu0 0.0
      %2771 = vmatpush1.msra.mxu0 0.0
      %2772 = vmatprep.subr.mxu0 0.0
      %2773 = vmatpush1.msra.mxu0 0.0
      %2774 = vmatprep.subr.mxu0 0.0
      %2775 = vmatpush1.msra.mxu0 0.0
      %2776 = vmatprep.subr.mxu0 0.0
      %2777 = vmatpush1.msra.mxu0 0.0
      %2778 = vmatprep.subr.mxu0 0.0
      %2779 = vmatpush1.msra.mxu0 0.0
      %2780 = vmatprep.subr.mxu0 0.0
      %2781 = vmatpush1.msra.mxu0 0.0
      %2782 = vmatprep.subr.mxu0 0.0
      %2783 = vmatpush1.msra.mxu0 0.0
      %2784 = vmatprep.subr.mxu0 0.0
      %2785 = vmatpush1.msra.mxu0 0.0
      %2786 = vmatprep.subr.mxu0 0.0
      %2787 = vmatpush1.msra.mxu0 0.0
      %2788 = vmatprep.subr.mxu0 0.0
      %2789 = vmatpush1.msra.mxu0 0.0
      %2790 = vmatprep.subr.mxu0 0.0
      %2791 = vmatpush1.msra.mxu0 0.0
      %2792 = vmatprep.subr.mxu0 0.0
      %2793 = vmatpush1.msra.mxu0 0.0
      %2794 = vmatprep.subr.mxu0 0.0
      %2795 = vmatpush1.msra.mxu0 0.0
      %2796 = vmatprep.mubr.f32.mxu0 0.0
      %2797 = vmatmul.mubr.f32.gmra.mrb[0].mxu0 %v2727
      %v2798 = vpop.f32.mrb[0].mxu0
      %v2799 = vadd.f32 %v2724, %v2798
      %v2800 = vpop.f32.mrb[0].mxu0
      %2801 = vmatprep.mubr.f32.mxu0 0.0
      %2802 = vmatmul.mubr.f32.gmra.mrb[0].mxu0 %v2730
      %v2803 = vpop.f32.mrb[0].mxu0
      %v2804 = vadd.f32 %v2724, %v2803
      %v2805 = vpop.f32.mrb[0].mxu0
      %2806 = vdwg.mxu0
      %vm2807 = vcmp.gt.f32.partialorder %v2799, 0.0
      %vm2808 = vcmp.gt.f32.partialorder %v2804, 0.0
      %v2809 = vmul.f32 %v2799, 0.2
      %v2810 = vmul.f32 %v2804, 0.2
      %v2811 = vsel %vm2807, %v2799, %v2809
      %v2812 = vsel %vm2808, %v2804, %v2810
      %2815 = vrot.lane.b32.xlu0 %v2811, 32
      %v2816 = vpop.permute.xlu0 %2815
      %2817 = vrot.lane.b32.xlu0 %v2812, 32
      %v2818 = vpop.permute.xlu0 %2817
      %v2821 = vsel %vm998, %v2673, %v2816
      %v2822 = vsel %vm998, %v2674, %v2818
      %v2823 = vrot.slane %v2821, 7
      %v2824 = vrot.slane %v2822, 7
      %v2825 = vsel %vm966, %v2823, %v2824
      %v2826 = vsel %vm966, %v2824, %v2823
      %v2827 = vsel %vm969, 0.0, %v2826
      %v2828 = vsel %vm970, 0.0, %v2825
      %v2829 = vrot.slane %v2821, 1
      %v2830 = vrot.slane %v2822, 1
      %v2831 = vsel %vm975, %v2829, %v2830
      %v2832 = vsel %vm975, %v2830, %v2829
      %v2833 = vsel %vm978, 0.0, %v2831
      %v2834 = vsel %vm979, 0.0, %v2832
      %2837 = vrot.lane.b32.xlu0 %v2821, 48
      %v2838 = vpop.permute.xlu0 %2837
      %2839 = vrot.lane.b32.xlu0 %v2822, 48
      %v2840 = vpop.permute.xlu0 %2839
      %2845 = vrot.lane.b32.xlu0 %v2833, 96
      %v2846 = vpop.permute.xlu0 %2845
      %2847 = vrot.lane.b32.xlu0 %v2834, 96
      %v2848 = vpop.permute.xlu0 %2847
      %v2851 = vsel %vm1149, %v2827, %v2838
      %v2852 = vsel %vm1149, %v2828, %v2840
      %v2853 = vsel %vm1023, %v2851, %v2846
      %v2854 = vsel %vm1023, %v2852, %v2848
      %v2855 = vld [vmem:[%s47] sm:$0xff]
      %v2856 = vld [vmem:[%s47 + $0x8] sm:$0xff]
      %v2857 = vld [vmem:[%s47 + $0x10] sm:$0xff]
      %v2858 = vld [vmem:[%s47 + $0x18] sm:$0xff]
      %v2859 = vld [vmem:[%s47 + $0x20] sm:$0xff]
      %v2860 = vld [vmem:[%s47 + $0x28] sm:$0xff]
      %v2861 = vld [vmem:[%s47 + $0x30] sm:$0xff]
      %v2862 = vld [vmem:[%s47 + $0x38] sm:$0xff]
      %v2863 = vld [vmem:[%s47 + $0x40] sm:$0xff]
      %v2864 = vld [vmem:[%s47 + $0x48] sm:$0xff]
      %v2865 = vld [vmem:[%s47 + $0x50] sm:$0xff]
      %v2866 = vld [vmem:[%s47 + $0x58] sm:$0xff]
      %v2867 = vld [vmem:[%s47 + $0x60] sm:$0xff]
      %v2868 = vld [vmem:[%s47 + $0x68] sm:$0xff]
      %v2869 = vld [vmem:[%s47 + $0x70] sm:$0xff]
      %v2870 = vld [vmem:[%s47 + $0x78] sm:$0xff]
      %v2871 = vld [vmem:[%s47 + $0x80] sm:$0xff]
      %v2872 = vld [vmem:[%s47 + $0x88] sm:$0xff]
      %v2873 = vld [vmem:[%s49] sm:$0x1]
      %v2875 = vlaneseq
      %v2876 = vshrl.u32 %v2875, 7
      %v2877 = vsub.s32 0, %v2876
      %v2878 = vrot.slane %v2873, %v2877
      %v2880 = vsel %vm1179, %v2846, 0
      %v2882 = vsel %vm1179, %v2848, 0
      %2884 = vmatprep.subr.mxu0 0.0
      %2885 = vmatpush1.msra.mxu0 %v2855
      %2886 = vmatprep.subr.mxu0 0.0
      %2887 = vmatpush1.msra.mxu0 %v2856
      %2888 = vmatprep.subr.mxu0 0.0
      %2889 = vmatpush1.msra.mxu0 %v2857
      %2890 = vmatprep.subr.mxu0 0.0
      %2891 = vmatpush1.msra.mxu0 %v2858
      %2892 = vmatprep.subr.mxu0 0.0
      %2893 = vmatpush1.msra.mxu0 %v2859
      %2894 = vmatprep.subr.mxu0 0.0
      %2895 = vmatpush1.msra.mxu0 %v2860
      %2896 = vmatprep.subr.mxu0 0.0
      %2897 = vmatpush1.msra.mxu0 %v2861
      %2898 = vmatprep.subr.mxu0 0.0
      %2899 = vmatpush1.msra.mxu0 %v2862
      %2900 = vmatprep.subr.mxu0 0.0
      %2901 = vmatpush1.msra.mxu0 %v2863
      %2902 = vmatprep.subr.mxu0 0.0
      %2903 = vmatpush1.msra.mxu0 %v2864
      %2904 = vmatprep.subr.mxu0 0.0
      %2905 = vmatpush1.msra.mxu0 %v2865
      %2906 = vmatprep.subr.mxu0 0.0
      %2907 = vmatpush1.msra.mxu0 %v2866
      %2908 = vmatprep.subr.mxu0 0.0
      %2909 = vmatpush1.msra.mxu0 %v2867
      %2910 = vmatprep.subr.mxu0 0.0
      %2911 = vmatpush1.msra.mxu0 %v2868
      %2912 = vmatprep.subr.mxu0 0.0
      %2913 = vmatpush1.msra.mxu0 %v2869
      %2914 = vmatprep.subr.mxu0 0.0
      %2915 = vmatpush1.msra.mxu0 %v2870
      %2916 = vmatprep.subr.mxu0 0.0
      %2917 = vmatpush1.msra.mxu0 %v2871
      %2918 = vmatprep.subr.mxu0 0.0
      %2919 = vmatpush1.msra.mxu0 %v2872
      %2920 = vmatprep.subr.mxu0 0.0
      %2921 = vmatpush1.msra.mxu0 0.0
      %2922 = vmatprep.subr.mxu0 0.0
      %2923 = vmatpush1.msra.mxu0 0.0
      %2924 = vmatprep.subr.mxu0 0.0
      %2925 = vmatpush1.msra.mxu0 0.0
      %2926 = vmatprep.subr.mxu0 0.0
      %2927 = vmatpush1.msra.mxu0 0.0
      %2928 = vmatprep.subr.mxu0 0.0
      %2929 = vmatpush1.msra.mxu0 0.0
      %2930 = vmatprep.subr.mxu0 0.0
      %2931 = vmatpush1.msra.mxu0 0.0
      %2932 = vmatprep.subr.mxu0 0.0
      %2933 = vmatpush1.msra.mxu0 0.0
      %2934 = vmatprep.subr.mxu0 0.0
      %2935 = vmatpush1.msra.mxu0 0.0
      %2936 = vmatprep.subr.mxu0 0.0
      %2937 = vmatpush1.msra.mxu0 0.0
      %2938 = vmatprep.subr.mxu0 0.0
      %2939 = vmatpush1.msra.mxu0 0.0
      %2940 = vmatprep.subr.mxu0 0.0
      %2941 = vmatpush1.msra.mxu0 0.0
      %2942 = vmatprep.subr.mxu0 0.0
      %2943 = vmatpush1.msra.mxu0 0.0
      %2944 = vmatprep.subr.mxu0 0.0
      %2945 = vmatpush1.msra.mxu0 0.0
      %2946 = vmatprep.subr.mxu0 0.0
      %2947 = vmatpush1.msra.mxu0 0.0
      %2948 = vmatprep.mubr.f32.mxu0 %v2880
      %2949 = vmatmul.mubr.f32.gmra.mrb[0].mxu0 %v2853
      %v2950 = vpop.f32.mrb[0].mxu0
      %v2951 = vadd.f32 %v2878, %v2950
      %v2952 = vpop.f32.mrb[0].mxu0
      %2953 = vmatprep.mubr.f32.mxu0 %v2882
      %2954 = vmatmul.mubr.f32.gmra.mrb[0].mxu0 %v2854
      %v2955 = vpop.f32.mrb[0].mxu0
      %v2956 = vadd.f32 %v2878, %v2955
      %v2957 = vpop.f32.mrb[0].mxu0
      %2958 = vdwg.mxu0
      %vm2959 = vcmp.gt.f32.partialorder %v2951, 0.0
      %vm2960 = vcmp.gt.f32.partialorder %v2956, 0.0
      %v2961 = vmul.f32 %v2951, 0.2
      %v2962 = vmul.f32 %v2956, 0.2
      %v2963 = vsel %vm2959, %v2951, %v2961
      %v2964 = vsel %vm2960, %v2956, %v2962
      %2967 = vrot.lane.b32.xlu0 %v2963, 48
      %v2968 = vpop.permute.xlu0 %2967
      %2969 = vrot.lane.b32.xlu0 %v2964, 48
      %v2970 = vpop.permute.xlu0 %2969
      %v2973 = vsel %vm1149, %v2821, %v2968
      %v2974 = vsel %vm1149, %v2822, %v2970
      %v2975 = vrot.slane %v2973, 7
      %v2976 = vrot.slane %v2974, 7
      %v2977 = vsel %vm966, %v2975, %v2976
      %v2978 = vsel %vm966, %v2976, %v2975
      %v2979 = vsel %vm969, 0.0, %v2978
      %v2980 = vsel %vm970, 0.0, %v2977
      %v2981 = vrot.slane %v2973, 1
      %v2982 = vrot.slane %v2974, 1
      %v2983 = vsel %vm975, %v2981, %v2982
      %v2984 = vsel %vm975, %v2982, %v2981
      %v2985 = vsel %vm978, 0.0, %v2983
      %v2986 = vsel %vm979, 0.0, %v2984
      %2989 = vrot.lane.b32.xlu0 %v2973, 64
      %v2990 = vpop.permute.xlu0 %2989
      %2991 = vrot.lane.b32.xlu0 %v2974, 64
      %v2992 = vpop.permute.xlu0 %2991
      %v2995 = vsel %vm1001, %v2979, %v2990
      %v2996 = vsel %vm1001, %v2980, %v2992
      %v2997 = vld [vmem:[%s51] sm:$0xff]
      %v2998 = vld [vmem:[%s51 + $0x8] sm:$0xff]
      %v2999 = vld [vmem:[%s51 + $0x10] sm:$0xff]
      %v3000 = vld [vmem:[%s51 + $0x18] sm:$0xff]
      %v3001 = vld [vmem:[%s51 + $0x20] sm:$0xff]
      %v3002 = vld [vmem:[%s51 + $0x28] sm:$0xff]
      %v3003 = vld [vmem:[%s51 + $0x30] sm:$0xff]
      %v3004 = vld [vmem:[%s51 + $0x38] sm:$0xff]
      %v3005 = vld [vmem:[%s51 + $0x40] sm:$0xff]
      %v3006 = vld [vmem:[%s51 + $0x48] sm:$0xff]
      %v3007 = vld [vmem:[%s51 + $0x50] sm:$0xff]
      %v3008 = vld [vmem:[%s51 + $0x58] sm:$0xff]
      %v3009 = vld [vmem:[%s51 + $0x60] sm:$0xff]
      %v3010 = vld [vmem:[%s51 + $0x68] sm:$0xff]
      %v3011 = vld [vmem:[%s51 + $0x70] sm:$0xff]
      %v3012 = vld [vmem:[%s51 + $0x78] sm:$0xff]
      %v3013 = vld [vmem:[%s51 + $0x80] sm:$0xff]
      %v3014 = vld [vmem:[%s51 + $0x88] sm:$0xff]
      %v3015 = vld [vmem:[%s51 + $0x90] sm:$0xff]
      %v3016 = vld [vmem:[%s51 + $0x98] sm:$0xff]
      %v3017 = vld [vmem:[%s51 + $0xa0] sm:$0xff]
      %v3018 = vld [vmem:[%s51 + $0xa8] sm:$0xff]
      %v3019 = vld [vmem:[%s51 + $0xb0] sm:$0xff]
      %v3020 = vld [vmem:[%s51 + $0xb8] sm:$0xff]
      %v3021 = vld [vmem:[%s53] sm:$0x1]
      %v3023 = vlaneseq
      %v3024 = vshrl.u32 %v3023, 7
      %v3025 = vsub.s32 0, %v3024
      %v3026 = vrot.slane %v3021, %v3025
      %v3029 = vsel %vm1001, %v2985, 0
      %v3032 = vsel %vm1001, %v2986, 0
      %3034 = vmatprep.subr.mxu0 0.0
      %3035 = vmatpush1.msra.mxu0 %v2997
      %3036 = vmatprep.subr.mxu0 0.0
      %3037 = vmatpush1.msra.mxu0 %v2998
      %3038 = vmatprep.subr.mxu0 0.0
      %3039 = vmatpush1.msra.mxu0 %v2999
      %3040 = vmatprep.subr.mxu0 0.0
      %3041 = vmatpush1.msra.mxu0 %v3000
      %3042 = vmatprep.subr.mxu0 0.0
      %3043 = vmatpush1.msra.mxu0 %v3001
      %3044 = vmatprep.subr.mxu0 0.0
      %3045 = vmatpush1.msra.mxu0 %v3002
      %3046 = vmatprep.subr.mxu0 0.0
      %3047 = vmatpush1.msra.mxu0 %v3003
      %3048 = vmatprep.subr.mxu0 0.0
      %3049 = vmatpush1.msra.mxu0 %v3004
      %3050 = vmatprep.subr.mxu0 0.0
      %3051 = vmatpush1.msra.mxu0 %v3005
      %3052 = vmatprep.subr.mxu0 0.0
      %3053 = vmatpush1.msra.mxu0 %v3006
      %3054 = vmatprep.subr.mxu0 0.0
      %3055 = vmatpush1.msra.mxu0 %v3007
      %3056 = vmatprep.subr.mxu0 0.0
      %3057 = vmatpush1.msra.mxu0 %v3008
      %3058 = vmatprep.subr.mxu0 0.0
      %3059 = vmatpush1.msra.mxu0 %v3009
      %3060 = vmatprep.subr.mxu0 0.0
      %3061 = vmatpush1.msra.mxu0 %v3010
      %3062 = vmatprep.subr.mxu0 0.0
      %3063 = vmatpush1.msra.mxu0 %v3011
      %3064 = vmatprep.subr.mxu0 0.0
      %3065 = vmatpush1.msra.mxu0 %v3012
      %3066 = vmatprep.subr.mxu0 0.0
      %3067 = vmatpush1.msra.mxu0 %v3013
      %3068 = vmatprep.subr.mxu0 0.0
      %3069 = vmatpush1.msra.mxu0 %v3014
      %3070 = vmatprep.subr.mxu0 0.0
      %3071 = vmatpush1.msra.mxu0 %v3015
      %3072 = vmatprep.subr.mxu0 0.0
      %3073 = vmatpush1.msra.mxu0 %v3016
      %3074 = vmatprep.subr.mxu0 0.0
      %3075 = vmatpush1.msra.mxu0 %v3017
      %3076 = vmatprep.subr.mxu0 0.0
      %3077 = vmatpush1.msra.mxu0 %v3018
      %3078 = vmatprep.subr.mxu0 0.0
      %3079 = vmatpush1.msra.mxu0 %v3019
      %3080 = vmatprep.subr.mxu0 0.0
      %3081 = vmatpush1.msra.mxu0 %v3020
      %3082 = vmatprep.subr.mxu0 0.0
      %3083 = vmatpush1.msra.mxu0 0.0
      %3084 = vmatprep.subr.mxu0 0.0
      %3085 = vmatpush1.msra.mxu0 0.0
      %3086 = vmatprep.subr.mxu0 0.0
      %3087 = vmatpush1.msra.mxu0 0.0
      %3088 = vmatprep.subr.mxu0 0.0
      %3089 = vmatpush1.msra.mxu0 0.0
      %3090 = vmatprep.subr.mxu0 0.0
      %3091 = vmatpush1.msra.mxu0 0.0
      %3092 = vmatprep.subr.mxu0 0.0
      %3093 = vmatpush1.msra.mxu0 0.0
      %3094 = vmatprep.subr.mxu0 0.0
      %3095 = vmatpush1.msra.mxu0 0.0
      %3096 = vmatprep.subr.mxu0 0.0
      %3097 = vmatpush1.msra.mxu0 0.0
      %3098 = vmatprep.mubr.f32.mxu0 %v3029
      %3099 = vmatmul.mubr.f32.gmra.mrb[0].mxu0 %v2995
      %v3100 = vpop.f32.mrb[0].mxu0
      %v3101 = vadd.f32 %v3026, %v3100
      %v3102 = vpop.f32.mrb[0].mxu0
      %3103 = vmatprep.mubr.f32.mxu0 %v3032
      %3104 = vmatmul.mubr.f32.gmra.mrb[0].mxu0 %v2996
      %v3105 = vpop.f32.mrb[0].mxu0
      %v3106 = vadd.f32 %v3026, %v3105
      %v3107 = vpop.f32.mrb[0].mxu0
      %3108 = vdwg.mxu0
      %vm3109 = vcmp.gt.f32.partialorder %v3101, 0.0
      %vm3110 = vcmp.gt.f32.partialorder %v3106, 0.0
      %v3111 = vmul.f32 %v3101, 0.2
      %v3112 = vmul.f32 %v3106, 0.2
      %v3113 = vsel %vm3109, %v3101, %v3111
      %v3114 = vsel %vm3110, %v3106, %v3112
      %3117 = vrot.lane.b32.xlu0 %v3113, 64
      %v3118 = vpop.permute.xlu0 %3117
      %3119 = vrot.lane.b32.xlu0 %v3114, 64
      %v3120 = vpop.permute.xlu0 %3119
      %v3123 = vsel %vm1001, %v2973, %v3118
      %v3124 = vsel %vm1001, %v2974, %v3120
      %v3125 = vrot.slane %v3123, 7
      %v3126 = vrot.slane %v3124, 7
      %v3127 = vsel %vm966, %v3125, %v3126
      %v3128 = vsel %vm966, %v3126, %v3125
      %v3129 = vsel %vm969, 0.0, %v3128
      %v3130 = vsel %vm970, 0.0, %v3127
      %v3131 = vrot.slane %v3123, 1
      %v3132 = vrot.slane %v3124, 1
      %v3133 = vsel %vm975, %v3131, %v3132
      %v3134 = vsel %vm975, %v3132, %v3131
      %v3135 = vsel %vm978, 0.0, %v3133
      %v3136 = vsel %vm979, 0.0, %v3134
      %3139 = vrot.lane.b32.xlu0 %v3123, 80
      %v3140 = vpop.permute.xlu0 %3139
      %3141 = vrot.lane.b32.xlu0 %v3124, 80
      %v3142 = vpop.permute.xlu0 %3141
      %3147 = vrot.lane.b32.xlu0 %v3135, 32
      %v3148 = vpop.permute.xlu0 %3147
      %3149 = vrot.lane.b32.xlu0 %v3136, 32
      %v3150 = vpop.permute.xlu0 %3149
      %v3153 = vsel %vm1453, %v3129, %v3140
      %v3154 = vsel %vm1453, %v3130, %v3142
      %v3155 = vsel %vm998, %v3140, %v3148
      %v3156 = vsel %vm998, %v3142, %v3150
      %v3157 = vld [vmem:[%s55] sm:$0xff]
      %v3158 = vld [vmem:[%s55 + $0x8] sm:$0xff]
      %v3159 = vld [vmem:[%s55 + $0x10] sm:$0xff]
      %v3160 = vld [vmem:[%s55 + $0x18] sm:$0xff]
      %v3161 = vld [vmem:[%s55 + $0x20] sm:$0xff]
      %v3162 = vld [vmem:[%s55 + $0x28] sm:$0xff]
      %v3163 = vld [vmem:[%s55 + $0x30] sm:$0xff]
      %v3164 = vld [vmem:[%s55 + $0x38] sm:$0xff]
      %v3165 = vld [vmem:[%s55 + $0x40] sm:$0xff]
      %v3166 = vld [vmem:[%s55 + $0x48] sm:$0xff]
      %v3167 = vld [vmem:[%s55 + $0x50] sm:$0xff]
      %v3168 = vld [vmem:[%s55 + $0x58] sm:$0xff]
      %v3169 = vld [vmem:[%s55 + $0x60] sm:$0xff]
      %v3170 = vld [vmem:[%s55 + $0x68] sm:$0xff]
      %v3171 = vld [vmem:[%s55 + $0x70] sm:$0xff]
      %v3172 = vld [vmem:[%s55 + $0x78] sm:$0xff]
      %v3173 = vld [vmem:[%s55 + $0x80] sm:$0xff]
      %v3174 = vld [vmem:[%s55 + $0x88] sm:$0xff]
      %v3175 = vld [vmem:[%s55 + $0x90] sm:$0xff]
      %v3176 = vld [vmem:[%s55 + $0x98] sm:$0xff]
      %v3177 = vld [vmem:[%s55 + $0xa0] sm:$0xff]
      %v3178 = vld [vmem:[%s55 + $0xa8] sm:$0xff]
      %v3179 = vld [vmem:[%s55 + $0xb0] sm:$0xff]
      %v3180 = vld [vmem:[%s55 + $0xb8] sm:$0xff]
      %v3181 = vld [vmem:[%s55 + $0xc0] sm:$0xff]
      %v3182 = vld [vmem:[%s55 + $0xc8] sm:$0xff]
      %v3183 = vld [vmem:[%s55 + $0xd0] sm:$0xff]
      %v3184 = vld [vmem:[%s55 + $0xd8] sm:$0xff]
      %v3185 = vld [vmem:[%s55 + $0xe0] sm:$0xff]
      %v3186 = vld [vmem:[%s55 + $0xe8] sm:$0xff]
      %v3187 = vld [vmem:[%s57] sm:$0x1]
      %v3189 = vlaneseq
      %v3190 = vshrl.u32 %v3189, 7
      %v3191 = vsub.s32 0, %v3190
      %v3192 = vrot.slane %v3187, %v3191
      %v3195 = vsel %vm1495, %v3155, 0
      %v3198 = vsel %vm1495, %v3156, 0
      %3200 = vmatprep.subr.mxu0 0.0
      %3201 = vmatpush1.msra.mxu0 %v3157
      %3202 = vmatprep.subr.mxu0 0.0
      %3203 = vmatpush1.msra.mxu0 %v3158
      %3204 = vmatprep.subr.mxu0 0.0
      %3205 = vmatpush1.msra.mxu0 %v3159
      %3206 = vmatprep.subr.mxu0 0.0
      %3207 = vmatpush1.msra.mxu0 %v3160
      %3208 = vmatprep.subr.mxu0 0.0
      %3209 = vmatpush1.msra.mxu0 %v3161
      %3210 = vmatprep.subr.mxu0 0.0
      %3211 = vmatpush1.msra.mxu0 %v3162
      %3212 = vmatprep.subr.mxu0 0.0
      %3213 = vmatpush1.msra.mxu0 %v3163
      %3214 = vmatprep.subr.mxu0 0.0
      %3215 = vmatpush1.msra.mxu0 %v3164
      %3216 = vmatprep.subr.mxu0 0.0
      %3217 = vmatpush1.msra.mxu0 %v3165
      %3218 = vmatprep.subr.mxu0 0.0
      %3219 = vmatpush1.msra.mxu0 %v3166
      %3220 = vmatprep.subr.mxu0 0.0
      %3221 = vmatpush1.msra.mxu0 %v3167
      %3222 = vmatprep.subr.mxu0 0.0
      %3223 = vmatpush1.msra.mxu0 %v3168
      %3224 = vmatprep.subr.mxu0 0.0
      %3225 = vmatpush1.msra.mxu0 %v3169
      %3226 = vmatprep.subr.mxu0 0.0
      %3227 = vmatpush1.msra.mxu0 %v3170
      %3228 = vmatprep.subr.mxu0 0.0
      %3229 = vmatpush1.msra.mxu0 %v3171
      %3230 = vmatprep.subr.mxu0 0.0
      %3231 = vmatpush1.msra.mxu0 %v3172
      %3232 = vmatprep.subr.mxu0 0.0
      %3233 = vmatpush1.msra.mxu0 %v3173
      %3234 = vmatprep.subr.mxu0 0.0
      %3235 = vmatpush1.msra.mxu0 %v3174
      %3236 = vmatprep.subr.mxu0 0.0
      %3237 = vmatpush1.msra.mxu0 %v3175
      %3238 = vmatprep.subr.mxu0 0.0
      %3239 = vmatpush1.msra.mxu0 %v3176
      %3240 = vmatprep.subr.mxu0 0.0
      %3241 = vmatpush1.msra.mxu0 %v3177
      %3242 = vmatprep.subr.mxu0 0.0
      %3243 = vmatpush1.msra.mxu0 %v3178
      %3244 = vmatprep.subr.mxu0 0.0
      %3245 = vmatpush1.msra.mxu0 %v3179
      %3246 = vmatprep.subr.mxu0 0.0
      %3247 = vmatpush1.msra.mxu0 %v3180
      %3248 = vmatprep.subr.mxu0 0.0
      %3249 = vmatpush1.msra.mxu0 %v3181
      %3250 = vmatprep.subr.mxu0 0.0
      %3251 = vmatpush1.msra.mxu0 %v3182
      %3252 = vmatprep.subr.mxu0 0.0
      %3253 = vmatpush1.msra.mxu0 %v3183
      %3254 = vmatprep.subr.mxu0 0.0
      %3255 = vmatpush1.msra.mxu0 %v3184
      %3256 = vmatprep.subr.mxu0 0.0
      %3257 = vmatpush1.msra.mxu0 %v3185
      %3258 = vmatprep.subr.mxu0 0.0
      %3259 = vmatpush1.msra.mxu0 %v3186
      %3260 = vmatprep.subr.mxu0 0.0
      %3261 = vmatpush1.msra.mxu0 0.0
      %3262 = vmatprep.subr.mxu0 0.0
      %3263 = vmatpush1.msra.mxu0 0.0
      %3264 = vmatprep.mubr.f32.mxu0 %v3195
      %3265 = vmatmul.mubr.f32.gmra.mrb[0].mxu0 %v3153
      %v3266 = vpop.f32.mrb[0].mxu0
      %v3267 = vadd.f32 %v3192, %v3266
      %v3268 = vpop.f32.mrb[0].mxu0
      %3269 = vmatprep.mubr.f32.mxu0 %v3198
      %3270 = vmatmul.mubr.f32.gmra.mrb[0].mxu0 %v3154
      %v3271 = vpop.f32.mrb[0].mxu0
      %v3272 = vadd.f32 %v3192, %v3271
      %v3273 = vpop.f32.mrb[0].mxu0
      %3274 = vdwg.mxu0
      %vm3275 = vcmp.gt.f32.partialorder %v3267, 0.0
      %vm3276 = vcmp.gt.f32.partialorder %v3272, 0.0
      %v3277 = vmul.f32 %v3267, 0.2
      %v3278 = vmul.f32 %v3272, 0.2
      %v3279 = vsel %vm3275, %v3267, %v3277
      %v3280 = vsel %vm3276, %v3272, %v3278
      %3283 = vrot.lane.b32.xlu0 %v3279, 80
      %v3284 = vpop.permute.xlu0 %3283
      %3285 = vrot.lane.b32.xlu0 %v3280, 80
      %v3286 = vpop.permute.xlu0 %3285
      %v3289 = vsel %vm1453, %v3123, %v3284
      %v3290 = vsel %vm1453, %v3124, %v3286
      %v3291 = vrot.slane %v3289, 7
      %v3292 = vrot.slane %v3290, 7
      %v3293 = vsel %vm966, %v3291, %v3292
      %v3294 = vsel %vm966, %v3292, %v3291
      %v3295 = vsel %vm969, 0.0, %v3294
      %v3296 = vsel %vm970, 0.0, %v3293
      %v3297 = vrot.slane %v3289, 1
      %v3298 = vrot.slane %v3290, 1
      %v3299 = vsel %vm975, %v3297, %v3298
      %v3300 = vsel %vm975, %v3298, %v3297
      %v3301 = vsel %vm978, 0.0, %v3299
      %v3302 = vsel %vm979, 0.0, %v3300
      %3305 = vrot.lane.b32.xlu0 %v3289, 96
      %v3306 = vpop.permute.xlu0 %3305
      %3307 = vrot.lane.b32.xlu0 %v3290, 96
      %v3308 = vpop.permute.xlu0 %3307
      %3313 = vrot.lane.b32.xlu0 %v3301, 64
      %v3314 = vpop.permute.xlu0 %3313
      %3315 = vrot.lane.b32.xlu0 %v3302, 64
      %v3316 = vpop.permute.xlu0 %3315
      %v3319 = vsel %vm1023, %v3295, %v3306
      %v3320 = vsel %vm1023, %v3296, %v3308
      %v3321 = vsel %vm1001, %v3306, %v3314
      %v3322 = vsel %vm1001, %v3308, %v3316
      %v3323 = vld [vmem:[%s59] sm:$0xff]
      %v3324 = vld [vmem:[%s59 + $0x8] sm:$0xff]
      %v3325 = vld [vmem:[%s59 + $0x10] sm:$0xff]
      %v3326 = vld [vmem:[%s59 + $0x18] sm:$0xff]
      %v3327 = vld [vmem:[%s59 + $0x20] sm:$0xff]
      %v3328 = vld [vmem:[%s59 + $0x28] sm:$0xff]
      %v3329 = vld [vmem:[%s59 + $0x30] sm:$0xff]
      %v3330 = vld [vmem:[%s59 + $0x38] sm:$0xff]
      %v3331 = vld [vmem:[%s59 + $0x40] sm:$0xff]
      %v3332 = vld [vmem:[%s59 + $0x48] sm:$0xff]
      %v3333 = vld [vmem:[%s59 + $0x50] sm:$0xff]
      %v3334 = vld [vmem:[%s59 + $0x58] sm:$0xff]
      %v3335 = vld [vmem:[%s59 + $0x60] sm:$0xff]
      %v3336 = vld [vmem:[%s59 + $0x68] sm:$0xff]
      %v3337 = vld [vmem:[%s59 + $0x70] sm:$0xff]
      %v3338 = vld [vmem:[%s59 + $0x78] sm:$0xff]
      %v3339 = vld [vmem:[%s59 + $0x80] sm:$0xff]
      %v3340 = vld [vmem:[%s59 + $0x88] sm:$0xff]
      %v3341 = vld [vmem:[%s59 + $0x90] sm:$0xff]
      %v3342 = vld [vmem:[%s59 + $0x98] sm:$0xff]
      %v3343 = vld [vmem:[%s59 + $0xa0] sm:$0xff]
      %v3344 = vld [vmem:[%s59 + $0xa8] sm:$0xff]
      %v3345 = vld [vmem:[%s59 + $0xb0] sm:$0xff]
      %v3346 = vld [vmem:[%s59 + $0xb8] sm:$0xff]
      %v3347 = vld [vmem:[%s59 + $0xc0] sm:$0xff]
      %v3348 = vld [vmem:[%s59 + $0xc8] sm:$0xff]
      %v3349 = vld [vmem:[%s59 + $0xd0] sm:$0xff]
      %v3350 = vld [vmem:[%s59 + $0xd8] sm:$0xff]
      %v3351 = vld [vmem:[%s59 + $0xe0] sm:$0xff]
      %v3352 = vld [vmem:[%s59 + $0xe8] sm:$0xff]
      %v3353 = vld [vmem:[%s59 + $0xf0] sm:$0xff]
      %v3354 = vld [vmem:[%s59 + $0xf8] sm:$0xff]
      %v3355 = vld [vmem:[%s59 + $0x100] sm:$0xff]
      %v3356 = vld [vmem:[%s59 + $0x108] sm:$0xff]
      %v3357 = vld [vmem:[%s59 + $0x110] sm:$0xff]
      %v3358 = vld [vmem:[%s59 + $0x118] sm:$0xff]
      %v3359 = vld [vmem:[%s61] sm:$0x1]
      %v3361 = vlaneseq
      %v3362 = vshrl.u32 %v3361, 7
      %v3363 = vsub.s32 0, %v3362
      %v3364 = vrot.slane %v3359, %v3363
      %v3366 = vsel %vm998, %v3314, 0
      %v3368 = vsel %vm998, %v3316, 0
      %3370 = vmatprep.subr.mxu0 0.0
      %3371 = vmatpush1.msra.mxu0 %v3323
      %3372 = vmatprep.subr.mxu0 0.0
      %3373 = vmatpush1.msra.mxu0 %v3324
      %3374 = vmatprep.subr.mxu0 0.0
      %3375 = vmatpush1.msra.mxu0 %v3325
      %3376 = vmatprep.subr.mxu0 0.0
      %3377 = vmatpush1.msra.mxu0 %v3326
      %3378 = vmatprep.subr.mxu0 0.0
      %3379 = vmatpush1.msra.mxu0 %v3327
      %3380 = vmatprep.subr.mxu0 0.0
      %3381 = vmatpush1.msra.mxu0 %v3328
      %3382 = vmatprep.subr.mxu0 0.0
      %3383 = vmatpush1.msra.mxu0 %v3329
      %3384 = vmatprep.subr.mxu0 0.0
      %3385 = vmatpush1.msra.mxu0 %v3330
      %3386 = vmatprep.subr.mxu0 0.0
      %3387 = vmatpush1.msra.mxu0 %v3331
      %3388 = vmatprep.subr.mxu0 0.0
      %3389 = vmatpush1.msra.mxu0 %v3332
      %3390 = vmatprep.subr.mxu0 0.0
      %3391 = vmatpush1.msra.mxu0 %v3333
      %3392 = vmatprep.subr.mxu0 0.0
      %3393 = vmatpush1.msra.mxu0 %v3334
      %3394 = vmatprep.subr.mxu0 0.0
      %3395 = vmatpush1.msra.mxu0 %v3335
      %3396 = vmatprep.subr.mxu0 0.0
      %3397 = vmatpush1.msra.mxu0 %v3336
      %3398 = vmatprep.subr.mxu0 0.0
      %3399 = vmatpush1.msra.mxu0 %v3337
      %3400 = vmatprep.subr.mxu0 0.0
      %3401 = vmatpush1.msra.mxu0 %v3338
      %3402 = vmatprep.subr.mxu0 0.0
      %3403 = vmatpush1.msra.mxu0 %v3339
      %3404 = vmatprep.subr.mxu0 0.0
      %3405 = vmatpush1.msra.mxu0 %v3340
      %3406 = vmatprep.subr.mxu0 0.0
      %3407 = vmatpush1.msra.mxu0 %v3341
      %3408 = vmatprep.subr.mxu0 0.0
      %3409 = vmatpush1.msra.mxu0 %v3342
      %3410 = vmatprep.subr.mxu0 0.0
      %3411 = vmatpush1.msra.mxu0 %v3343
      %3412 = vmatprep.subr.mxu0 0.0
      %3413 = vmatpush1.msra.mxu0 %v3344
      %3414 = vmatprep.subr.mxu0 0.0
      %3415 = vmatpush1.msra.mxu0 %v3345
      %3416 = vmatprep.subr.mxu0 0.0
      %3417 = vmatpush1.msra.mxu0 %v3346
      %3418 = vmatprep.subr.mxu0 0.0
      %3419 = vmatpush1.msra.mxu0 %v3347
      %3420 = vmatprep.subr.mxu0 0.0
      %3421 = vmatpush1.msra.mxu0 %v3348
      %3422 = vmatprep.subr.mxu0 0.0
      %3423 = vmatpush1.msra.mxu0 %v3349
      %3424 = vmatprep.subr.mxu0 0.0
      %3425 = vmatpush1.msra.mxu0 %v3350
      %3426 = vmatprep.subr.mxu0 0.0
      %3427 = vmatpush1.msra.mxu0 %v3351
      %3428 = vmatprep.subr.mxu0 0.0
      %3429 = vmatpush1.msra.mxu0 %v3352
      %3430 = vmatprep.subr.mxu0 0.0
      %3431 = vmatpush1.msra.mxu0 %v3353
      %3432 = vmatprep.subr.mxu0 0.0
      %3433 = vmatpush1.msra.mxu0 %v3354
      %3434 = vmatprep.mubr.f32.mxu0 %v3321
      %3435 = vmatmul.mubr.f32.gmra.mrb[0].mxu0 %v3319
      %v3436 = vpop.f32.mrb[0].mxu0
      %v3437 = vadd.f32 %v3364, %v3436
      %v3438 = vpop.f32.mrb[0].mxu0
      %3439 = vmatprep.mubr.f32.mxu0 %v3322
      %3440 = vmatmul.mubr.f32.gmra.mrb[0].mxu0 %v3320
      %v3441 = vpop.f32.mrb[0].mxu0
      %v3442 = vadd.f32 %v3364, %v3441
      %v3443 = vpop.f32.mrb[0].mxu0
      %3444 = vdwg.mxu0
      %3445 = vmatprep.subr.mxu0 0.0
      %3446 = vmatpush1.msra.mxu0 %v3355
      %3447 = vmatprep.subr.mxu0 0.0
      %3448 = vmatpush1.msra.mxu0 %v3356
      %3449 = vmatprep.subr.mxu0 0.0
      %3450 = vmatpush1.msra.mxu0 %v3357
      %3451 = vmatprep.subr.mxu0 0.0
      %3452 = vmatpush1.msra.mxu0 %v3358
      %3453 = vmatprep.subr.mxu0 0.0
      %3454 = vmatpush1.msra.mxu0 0.0
      %3455 = vmatprep.subr.mxu0 0.0
      %3456 = vmatpush1.msra.mxu0 0.0
      %3457 = vmatprep.subr.mxu0 0.0
      %3458 = vmatpush1.msra.mxu0 0.0
      %3459 = vmatprep.subr.mxu0 0.0
      %3460 = vmatpush1.msra.mxu0 0.0
      %3461 = vmatprep.subr.mxu0 0.0
      %3462 = vmatpush1.msra.mxu0 0.0
      %3463 = vmatprep.subr.mxu0 0.0
      %3464 = vmatpush1.msra.mxu0 0.0
      %3465 = vmatprep.subr.mxu0 0.0
      %3466 = vmatpush1.msra.mxu0 0.0
      %3467 = vmatprep.subr.mxu0 0.0
      %3468 = vmatpush1.msra.mxu0 0.0
      %3469 = vmatprep.subr.mxu0 0.0
      %3470 = vmatpush1.msra.mxu0 0.0
      %3471 = vmatprep.subr.mxu0 0.0
      %3472 = vmatpush1.msra.mxu0 0.0
      %3473 = vmatprep.subr.mxu0 0.0
      %3474 = vmatpush1.msra.mxu0 0.0
      %3475 = vmatprep.subr.mxu0 0.0
      %3476 = vmatpush1.msra.mxu0 0.0
      %3477 = vmatprep.subr.mxu0 0.0
      %3478 = vmatpush1.msra.mxu0 0.0
      %3479 = vmatprep.subr.mxu0 0.0
      %3480 = vmatpush1.msra.mxu0 0.0
      %3481 = vmatprep.subr.mxu0 0.0
      %3482 = vmatpush1.msra.mxu0 0.0
      %3483 = vmatprep.subr.mxu0 0.0
      %3484 = vmatpush1.msra.mxu0 0.0
      %3485 = vmatprep.subr.mxu0 0.0
      %3486 = vmatpush1.msra.mxu0 0.0
      %3487 = vmatprep.subr.mxu0 0.0
      %3488 = vmatpush1.msra.mxu0 0.0
      %3489 = vmatprep.subr.mxu0 0.0
      %3490 = vmatpush1.msra.mxu0 0.0
      %3491 = vmatprep.subr.mxu0 0.0
      %3492 = vmatpush1.msra.mxu0 0.0
      %3493 = vmatprep.subr.mxu0 0.0
      %3494 = vmatpush1.msra.mxu0 0.0
      %3495 = vmatprep.subr.mxu0 0.0
      %3496 = vmatpush1.msra.mxu0 0.0
      %3497 = vmatprep.subr.mxu0 0.0
      %3498 = vmatpush1.msra.mxu0 0.0
      %3499 = vmatprep.subr.mxu0 0.0
      %3500 = vmatpush1.msra.mxu0 0.0
      %3501 = vmatprep.subr.mxu0 0.0
      %3502 = vmatpush1.msra.mxu0 0.0
      %3503 = vmatprep.subr.mxu0 0.0
      %3504 = vmatpush1.msra.mxu0 0.0
      %3505 = vmatprep.subr.mxu0 0.0
      %3506 = vmatpush1.msra.mxu0 0.0
      %3507 = vmatprep.subr.mxu0 0.0
      %3508 = vmatpush1.msra.mxu0 0.0
      %3509 = vmatprep.mubr.f32.mxu0 0.0
      %3510 = vmatmul.mubr.f32.gmra.mrb[0].mxu0 %v3366
      %v3511 = vpop.f32.mrb[0].mxu0
      %v3512 = vadd.f32 %v3437, %v3511
      %v3513 = vpop.f32.mrb[0].mxu0
      %3514 = vmatprep.mubr.f32.mxu0 0.0
      %3515 = vmatmul.mubr.f32.gmra.mrb[0].mxu0 %v3368
      %v3516 = vpop.f32.mrb[0].mxu0
      %v3517 = vadd.f32 %v3442, %v3516
      %v3518 = vpop.f32.mrb[0].mxu0
      %3519 = vdwg.mxu0
      %v3520 = vmul.f32 %v3512, 0.2
      %v3521 = vmul.f32 %v3517, 0.2
      %v3522 = vadd.f32 %v3520, %v2673
      %v3523 = vadd.f32 %v3521, %v2674
      %v3524 = vmul.f32 %v3522, 0.2
      %v3525 = vmul.f32 %v3523, 0.2
      %v3526 = vadd.f32 %v3524, %v959
      %v3527 = vadd.f32 %v3525, %v960
      %3528 = vst.msk [vmem:[%s958] sm:$0xff] %vm998, %v3526
      %3529 = vst.msk [vmem:[%s958 + $0x8] sm:$0xff] %vm998, %v3527
      %p3530 = scmp.lt.s32.totalorder %s74, 1
      %s3531 = scalar_select %p3530, %s74, 1
      %s3532 = smul.addr %s3531, 2
      %s3533 = smul.addr %s3532, 8
      %s3534 = scalar_lea.vmem %s63, %s3533
      // Predicated region
      $region145: #{rrdbnet_forward.8} parent=143 // pred_check
        %p3535 = pneg %p748
      $region146: #{rrdbnet_forward.8} parent=143 // pred_check_branch
        %3537 = sbr.rel (%p3535) target = $region148
      $region147: #{rrdbnet_forward.8} parent=143 // pred_region
        _
      $region148: #{rrdbnet_forward.8} parent=143 // pred_fallthru
        _
    $region144: #{rrdbnet_forward.8} parent=5 // pred_fallthru
      _
    %p3538 = scmp.le.s32.totalorder 2, %s69
    // Predicated region
    $region149: #{rrdbnet_forward.8} parent=5 // pred_check
      %p3539 = pneg %p3538
    $region150: #{rrdbnet_forward.8} parent=5 // pred_check_branch
      %3541 = sbr.rel (%p3539) target = $region152
    $region151: #{rrdbnet_forward.8} parent=5 // pred_region
      %s3542 = ssub.s32 %s69, 2
      // Predicated region
      $region153: #{rrdbnet_forward.8} parent=151 // pred_check
        %p3543 = pneg %p754
      $region154: #{rrdbnet_forward.8} parent=151 // pred_check_branch
        %3545 = sbr.rel (%p3543) target = $region156
      $region155: #{rrdbnet_forward.8} parent=151 // pred_region
        %p3546 = scmp.lt.s32.totalorder %s75, 1
        %s3547 = scalar_select %p3546, %s75, 1
        %s3548 = smul.addr %s3547, 2
        %s3549 = smul.addr %s3548, 8
        %s3550 = scalar_lea.vmem %s63, %s3549
      $region156: #{rrdbnet_forward.8} parent=151 // pred_fallthru
        _
    $region152: #{rrdbnet_forward.8} parent=5 // pred_fallthru
      _
  $region6: #{rrdbnet_forward.8} parent=0 // loop_footer
    %s73 = sadd.s32 1, %s69
  $region7: #{rrdbnet_forward.8} parent=0 // loop_footer_branch
    %68 = sbr.rel target = $region3
  $region8: #{rrdbnet_forward.8} parent=0 // loop_exit
    _

</llo_original>
